<compile_context>
chip_gen: v6e
topology: v6e:2x2x1
jax: 0.10.0
libtpu: 0.0.40
codegen_flags: <defaults>
</compile_context>

<pallas_src>
import functools

import numpy as np
import jax
import jax.numpy as jnp
from jax import lax
from jax.experimental import pallas as pl
from jax.experimental.pallas import tpu as pltpu


def _round_up(x, m):
    return (x + m - 1) // m * m


def _default_vmem_limit_bytes():
    """Generation-aware scoped-VMEM limit (headroom on v7x, big on v5e/v6e)."""
    cap = 0
    try:
        cap = int(getattr(pltpu.get_tpu_info(), "vmem_capacity_bytes", 0))
    except Exception:
        cap = 0
    if cap and cap <= 64 * 1024 * 1024:        # v7x: 64 MiB physical per TC
        return 48 * 1024 * 1024
    if cap:                                    # v5e/v6e: 128 MiB physical
        return 112 * 1024 * 1024
    return 64 * 1024 * 1024                    # unknown: conservative


def _rev_st_kernel(flow_ref, out_ref,
                   bd_ref, bvx_ref, bvy_ref, bvz_ref, *,
                   size, tq, tj, n_j_tiles, r2, unroll):
    D, H, W = size
    hw = float(H * W)
    wf = float(W)

    def decode(idx_f):
        # flat index -> (d, h, w) voxel coordinates; guarded f32 floor-division
        # (exact for indices < 2^24, asserted in the wrapper).
        d = jnp.floor(idx_f / hw)
        rem = idx_f - d * hw
        d = jnp.where(rem < 0.0, d - 1.0, d)
        rem = jnp.where(rem < 0.0, rem + hw, rem)
        d = jnp.where(rem >= hw, d + 1.0, d)
        rem = jnp.where(rem >= hw, rem - hw, rem)
        h = jnp.floor(rem / wf)
        w = rem - h * wf
        h = jnp.where(w < 0.0, h - 1.0, h)
        w = jnp.where(w < 0.0, w + wf, w)
        h = jnp.where(w >= wf, h + 1.0, h)
        w = jnp.where(w >= wf, w - wf, w)
        return d, h, w

    qi = pl.program_id(1)
    q0 = qi * tq

    # Query voxel-center coordinates, queries along sublanes -> (TQ, 1).
    qf = (q0 + lax.broadcasted_iota(jnp.int32, (tq, 1), 0)).astype(jnp.float32)
    gqd, gqh, gqw = decode(qf)

    # Running per-lane best distance.  The best-value channels need no init:
    # iteration 0 writes every lane (d2 < 1e38 always, padded d2 ~ 3e18).
    bd_ref[...] = jnp.full((tq, tj), 1e38, jnp.float32)

    lane_i = lax.broadcasted_iota(jnp.int32, (1, tj), 1)

    def body(t, carry):
        j0 = pl.multiple_of(t * tj, 128)
        # Lane-dense (1, TJ) candidate rows, decoded + warped in-kernel:
        #   p_j = g_j + flow_j   (bit-exact with the reference precompute).
        jf = (j0 + lane_i).astype(jnp.float32)
        gjd, gjh, gjw = decode(jf)
        fx = flow_ref[0:1, pl.ds(j0, tj)]
        fy = flow_ref[1:2, pl.ds(j0, tj)]
        fz = flow_ref[2:3, pl.ds(j0, tj)]

        dx = gqd - (gjd + fx)
        dy = gqh - (gjh + fy)
        dz = gqw - (gjw + fz)
        d2 = dx * dx + dy * dy + dz * dz          # (TQ, TJ), exact differences

        bd = bd_ref[...]
        better = d2 < bd                          # strict <: earliest tile wins
        bd_ref[...] = jnp.where(better, d2, bd)
        # Masked stores: no load / select of the carried value channels.
        pltpu.store(bvx_ref, jnp.broadcast_to(fx, (tq, tj)), mask=better)
        pltpu.store(bvy_ref, jnp.broadcast_to(fy, (tq, tj)), mask=better)
        pltpu.store(bvz_ref, jnp.broadcast_to(fz, (tq, tj)), mask=better)
        return carry

    lax.fori_loop(0, n_j_tiles, body, 0, unroll=unroll)

    # One cross-lane reduction per query tile (amortized over all j tiles).
    bd = bd_ref[...]
    m = jnp.min(bd, axis=1, keepdims=True)                         # (TQ, 1)
    lane = lax.broadcasted_iota(jnp.int32, (tq, tj), 1)
    first = jnp.min(jnp.where(bd == m, lane, tj), axis=1, keepdims=True)
    onehot = (lane == first).astype(jnp.float32)                   # one 1 / row
    # Carried channels are flow_j; the reverse-flow value is -flow_j.
    sx = -jnp.sum(onehot * bvx_ref[...], axis=1, keepdims=True)
    sy = -jnp.sum(onehot * bvy_ref[...], axis=1, keepdims=True)
    sz = -jnp.sum(onehot * bvz_ref[...], axis=1, keepdims=True)

    valid = m <= r2
    zero = jnp.zeros_like(sx)
    # Per-step output is only ~3 KB; lane-dense out_spec (review "minor") is
    # intentionally skipped to avoid an extra per-tile transpose.
    out_ref[:, 0:1] = jnp.where(valid, sx, zero)
    out_ref[:, 1:2] = jnp.where(valid, sy, zero)
    out_ref[:, 2:3] = jnp.where(valid, sz, zero)


def rev_spatial_transformer(flow, size, k=1, *, tq=256, tj=512,
                            vmem_limit_bytes=None):
    """Pallas implementation of RevSpatialTransformer.forward (k must be 1)."""
    assert k == 1, "module reshape only supports k=1"
    D, H, W = size
    bs = flow.shape[0]
    assert flow.shape[1:] == (3, D, H, W), flow.shape
    n = D * H * W
    r = size[0] / 10.0

    # Tile sizes: queries along sublanes (TQ, mult. of 8), candidates along
    # lanes (TJ, mult. of 128).  Raising tq (not tj) is the amortization lever
    # on v5e/v6e; tj only inflates scratch and the epilogue reduction.
    tj = min(tj, _round_up(n, 128))
    tq = min(tq, _round_up(n, 8))
    n_pad = _round_up(n, tj)           # candidate-axis padding
    nq_pad = _round_up(n, tq)          # query-axis padding
    n_j_tiles = n_pad // tj
    n_q_tiles = nq_pad // tq
    assert n_pad < 2 ** 24, "f32 index decode requires N < 2^24"

    # Only flow is passed in; warped points p = g + flow and values -flow are
    # derived in-kernel.  Pad candidates with a huge flow so padded lanes have
    # d2 ~ 3e18 and never win (and never pass the radius test).
    flow_flat = flow.reshape(bs, 3, n).astype(jnp.float32)
    if n_pad > n:
        flow_flat = jnp.pad(flow_flat, ((0, 0), (0, 0), (0, n_pad - n)),
                            constant_values=1e9)

    if vmem_limit_bytes is None:
        vmem_limit_bytes = _default_vmem_limit_bytes()

    # The flow slab's block index only changes with the batch index, so
    # double-buffering it just doubles VMEM.  Single-buffer it once it is big
    # enough to matter (key for 128^3 volumes on v7x's 64 MiB per TC).
    flow_spec_kwargs = {}
    if 3 * n_pad * 4 >= 8 * 1024 * 1024:
        flow_spec_kwargs["pipeline_mode"] = pl.Buffered(1)

    kernel = functools.partial(
        _rev_st_kernel, size=(D, H, W), tq=tq, tj=tj, n_j_tiles=n_j_tiles,
        r2=float(r * r), unroll=int(max(1, min(n_j_tiles, 4))))

    out = pl.pallas_call(
        kernel,
        out_shape=jax.ShapeDtypeStruct((bs, nq_pad, 3), jnp.float32),
        grid_spec=pltpu.PrefetchScalarGridSpec(
            num_scalar_prefetch=0,
            grid=(bs, n_q_tiles),
            in_specs=[pl.BlockSpec((None, 3, n_pad), lambda b, q: (b, 0, 0),
                                   **flow_spec_kwargs)],
            out_specs=pl.BlockSpec((None, tq, 3), lambda b, q: (b, q, 0)),
            scratch_shapes=[pltpu.VMEM((tq, tj), jnp.float32)] * 4,
        ),
        compiler_params=pltpu.CompilerParams(
            dimension_semantics=("parallel", "parallel"),
            vmem_limit_bytes=vmem_limit_bytes),
    )(flow_flat)

    rev = out[:, :n, :].reshape(bs, D, H, W, 3)
    return jnp.transpose(rev, (0, 4, 1, 2, 3))                 # (bs, 3, D, H, W)


def rev_spatial_transformer_ref(flow, size, k=1):
    """Pure-JAX reference (brute-force NN, identical semantics for k=1)."""
    D, H, W = size
    bs = flow.shape[0]
    n = D * H * W
    r = size[0] / 10.0
    grids = jnp.meshgrid(*[jnp.arange(s, dtype=jnp.float32) for s in size],
                         indexing="ij")
    g = jnp.stack(grids, axis=-1).reshape(n, 3)
    f = jnp.transpose(flow, (0, 2, 3, 4, 1)).reshape(bs, n, 3)
    pts = g[None] + f
    d2 = jnp.sum((g[None, :, None, :] - pts[:, None, :, :]) ** 2, axis=-1)
    idx = jnp.argmin(d2, axis=-1)
    mind = jnp.min(d2, axis=-1)
    gathered = jnp.take_along_axis(-f, idx[..., None], axis=1)
    rev = jnp.where((mind <= r * r)[..., None], gathered, 0.0)
    return jnp.transpose(rev.reshape(bs, D, H, W, 3), (0, 4, 1, 2, 3))


if __name__ == "__main__":
    size = (8, 8, 8)          # D, H, W  (module's `size`)
    bs = 2
    key = jax.random.PRNGKey(0)
    flow = jax.random.normal(key, (bs, 3, *size), dtype=jnp.float32)

    out = rev_spatial_transformer(flow, size, k=1)
    out = jax.block_until_ready(out)

    ref = jax.block_until_ready(rev_spatial_transformer_ref(flow, size, k=1))
    assert out.shape == (bs, 3, *size), out.shape
    np.testing.assert_allclose(np.asarray(out), np.asarray(ref),
                               rtol=1e-5, atol=1e-5)
    print("KERNEL_OK")
</pallas_src>

<mosaic_0001>
module attributes {stable_mosaic.version = 11 : i64} {
  func.func @_rev_st_kernel(%arg0: i32, %arg1: i32, %arg2: memref<1x3x512xf32, #tpu.memory_space<vmem>>, %arg3: memref<1x256x3xf32, #tpu.memory_space<vmem>>, %arg4: memref<256x512xf32, #tpu.memory_space<vmem>>, %arg5: memref<256x512xf32, #tpu.memory_space<vmem>>, %arg6: memref<256x512xf32, #tpu.memory_space<vmem>>, %arg7: memref<256x512xf32, #tpu.memory_space<vmem>>) attributes {dimension_semantics = [#tpu.dimension_semantics<parallel>, #tpu.dimension_semantics<parallel>], iteration_bounds = array<i64: 2, 2>, scalar_prefetch = 0 : i64, scratch_operands = 4 : i64, tpu.core_type = #tpu.core_type<tc>, window_params = [{transform_indices = @transform_0, window_bounds = array<i64: 1, 3, 512>}, {transform_indices = @transform_1, window_bounds = array<i64: 1, 256, 3>}]} {
    %c256_i32 = arith.constant 256 : i32
    %0 = arith.muli %arg1, %c256_i32 : i32
    %1 = tpu.iota {dimensions = array<i32: 0>} : vector<256x1xi32>
    %2 = vector.broadcast %0 : i32 to vector<256x1xi32>
    %3 = arith.addi %2, %1 : vector<256x1xi32>
    %4 = arith.sitofp %3 : vector<256x1xi32> to vector<256x1xf32>
    %cst = arith.constant 6.400000e+01 : f32
    %5 = vector.broadcast %cst : f32 to vector<256x1xf32>
    %6 = arith.divf %4, %5 : vector<256x1xf32>
    %7 = math.floor %6 : vector<256x1xf32>
    %cst_0 = arith.constant 6.400000e+01 : f32
    %8 = vector.broadcast %cst_0 : f32 to vector<256x1xf32>
    %9 = arith.mulf %7, %8 : vector<256x1xf32>
    %10 = arith.subf %4, %9 : vector<256x1xf32>
    %cst_1 = arith.constant 0.000000e+00 : f32
    %11 = vector.broadcast %cst_1 : f32 to vector<256x1xf32>
    %12 = arith.cmpf olt, %10, %11 : vector<256x1xf32>
    %cst_2 = arith.constant 1.000000e+00 : f32
    %13 = vector.broadcast %cst_2 : f32 to vector<256x1xf32>
    %14 = arith.subf %7, %13 : vector<256x1xf32>
    %15 = arith.select %12, %14, %7 : vector<256x1xi1>, vector<256x1xf32>
    %cst_3 = arith.constant 0.000000e+00 : f32
    %16 = vector.broadcast %cst_3 : f32 to vector<256x1xf32>
    %17 = arith.cmpf olt, %10, %16 : vector<256x1xf32>
    %cst_4 = arith.constant 6.400000e+01 : f32
    %18 = vector.broadcast %cst_4 : f32 to vector<256x1xf32>
    %19 = arith.addf %10, %18 : vector<256x1xf32>
    %20 = arith.select %17, %19, %10 : vector<256x1xi1>, vector<256x1xf32>
    %cst_5 = arith.constant 6.400000e+01 : f32
    %21 = vector.broadcast %cst_5 : f32 to vector<256x1xf32>
    %22 = arith.cmpf oge, %20, %21 : vector<256x1xf32>
    %cst_6 = arith.constant 1.000000e+00 : f32
    %23 = vector.broadcast %cst_6 : f32 to vector<256x1xf32>
    %24 = arith.addf %15, %23 : vector<256x1xf32>
    %25 = arith.select %22, %24, %15 : vector<256x1xi1>, vector<256x1xf32>
    %cst_7 = arith.constant 6.400000e+01 : f32
    %26 = vector.broadcast %cst_7 : f32 to vector<256x1xf32>
    %27 = arith.cmpf oge, %20, %26 : vector<256x1xf32>
    %cst_8 = arith.constant 6.400000e+01 : f32
    %28 = vector.broadcast %cst_8 : f32 to vector<256x1xf32>
    %29 = arith.subf %20, %28 : vector<256x1xf32>
    %30 = arith.select %27, %29, %20 : vector<256x1xi1>, vector<256x1xf32>
    %cst_9 = arith.constant 8.000000e+00 : f32
    %31 = vector.broadcast %cst_9 : f32 to vector<256x1xf32>
    %32 = arith.divf %30, %31 : vector<256x1xf32>
    %33 = math.floor %32 : vector<256x1xf32>
    %cst_10 = arith.constant 8.000000e+00 : f32
    %34 = vector.broadcast %cst_10 : f32 to vector<256x1xf32>
    %35 = arith.mulf %33, %34 : vector<256x1xf32>
    %36 = arith.subf %30, %35 : vector<256x1xf32>
    %cst_11 = arith.constant 0.000000e+00 : f32
    %37 = vector.broadcast %cst_11 : f32 to vector<256x1xf32>
    %38 = arith.cmpf olt, %36, %37 : vector<256x1xf32>
    %cst_12 = arith.constant 1.000000e+00 : f32
    %39 = vector.broadcast %cst_12 : f32 to vector<256x1xf32>
    %40 = arith.subf %33, %39 : vector<256x1xf32>
    %41 = arith.select %38, %40, %33 : vector<256x1xi1>, vector<256x1xf32>
    %cst_13 = arith.constant 0.000000e+00 : f32
    %42 = vector.broadcast %cst_13 : f32 to vector<256x1xf32>
    %43 = arith.cmpf olt, %36, %42 : vector<256x1xf32>
    %cst_14 = arith.constant 8.000000e+00 : f32
    %44 = vector.broadcast %cst_14 : f32 to vector<256x1xf32>
    %45 = arith.addf %36, %44 : vector<256x1xf32>
    %46 = arith.select %43, %45, %36 : vector<256x1xi1>, vector<256x1xf32>
    %cst_15 = arith.constant 8.000000e+00 : f32
    %47 = vector.broadcast %cst_15 : f32 to vector<256x1xf32>
    %48 = arith.cmpf oge, %46, %47 : vector<256x1xf32>
    %cst_16 = arith.constant 1.000000e+00 : f32
    %49 = vector.broadcast %cst_16 : f32 to vector<256x1xf32>
    %50 = arith.addf %41, %49 : vector<256x1xf32>
    %51 = arith.select %48, %50, %41 : vector<256x1xi1>, vector<256x1xf32>
    %cst_17 = arith.constant 8.000000e+00 : f32
    %52 = vector.broadcast %cst_17 : f32 to vector<256x1xf32>
    %53 = arith.cmpf oge, %46, %52 : vector<256x1xf32>
    %cst_18 = arith.constant 8.000000e+00 : f32
    %54 = vector.broadcast %cst_18 : f32 to vector<256x1xf32>
    %55 = arith.subf %46, %54 : vector<256x1xf32>
    %56 = arith.select %53, %55, %46 : vector<256x1xi1>, vector<256x1xf32>
    %cst_19 = arith.constant 9.99999968E+37 : f32
    %57 = vector.broadcast %cst_19 : f32 to vector<256x512xf32>
    %c0 = arith.constant 0 : index
    %c0_20 = arith.constant 0 : index
    %58 = vector.load %arg4[%c0, %c0_20] : memref<256x512xf32, #tpu.memory_space<vmem>>, vector<256x512xf32>
    tpu.vector_store %arg4[%c0, %c0_20], %57 {strides = array<i32>} : memref<256x512xf32, #tpu.memory_space<vmem>>, vector<256x512xf32>,
    %59 = tpu.iota {dimensions = array<i32: 1>} : vector<1x512xi32>
    %c0_i32 = arith.constant 0 : i32
    %c512_i32 = arith.constant 512 : i32
    %60 = arith.muli %c0_i32, %c512_i32 : i32
    %61 = tpu.assume_multiple %60, 128 : i32
    %62 = vector.broadcast %61 : i32 to vector<1x512xi32>
    %63 = arith.addi %62, %59 : vector<1x512xi32>
    %64 = arith.sitofp %63 : vector<1x512xi32> to vector<1x512xf32>
    %cst_21 = arith.constant 6.400000e+01 : f32
    %65 = vector.broadcast %cst_21 : f32 to vector<1x512xf32>
    %66 = arith.divf %64, %65 : vector<1x512xf32>
    %67 = math.floor %66 : vector<1x512xf32>
    %cst_22 = arith.constant 6.400000e+01 : f32
    %68 = vector.broadcast %cst_22 : f32 to vector<1x512xf32>
    %69 = arith.mulf %67, %68 : vector<1x512xf32>
    %70 = arith.subf %64, %69 : vector<1x512xf32>
    %cst_23 = arith.constant 0.000000e+00 : f32
    %71 = vector.broadcast %cst_23 : f32 to vector<1x512xf32>
    %72 = arith.cmpf olt, %70, %71 : vector<1x512xf32>
    %cst_24 = arith.constant 1.000000e+00 : f32
    %73 = vector.broadcast %cst_24 : f32 to vector<1x512xf32>
    %74 = arith.subf %67, %73 : vector<1x512xf32>
    %75 = arith.select %72, %74, %67 : vector<1x512xi1>, vector<1x512xf32>
    %cst_25 = arith.constant 0.000000e+00 : f32
    %76 = vector.broadcast %cst_25 : f32 to vector<1x512xf32>
    %77 = arith.cmpf olt, %70, %76 : vector<1x512xf32>
    %cst_26 = arith.constant 6.400000e+01 : f32
    %78 = vector.broadcast %cst_26 : f32 to vector<1x512xf32>
    %79 = arith.addf %70, %78 : vector<1x512xf32>
    %80 = arith.select %77, %79, %70 : vector<1x512xi1>, vector<1x512xf32>
    %cst_27 = arith.constant 6.400000e+01 : f32
    %81 = vector.broadcast %cst_27 : f32 to vector<1x512xf32>
    %82 = arith.cmpf oge, %80, %81 : vector<1x512xf32>
    %cst_28 = arith.constant 1.000000e+00 : f32
    %83 = vector.broadcast %cst_28 : f32 to vector<1x512xf32>
    %84 = arith.addf %75, %83 : vector<1x512xf32>
    %85 = arith.select %82, %84, %75 : vector<1x512xi1>, vector<1x512xf32>
    %cst_29 = arith.constant 6.400000e+01 : f32
    %86 = vector.broadcast %cst_29 : f32 to vector<1x512xf32>
    %87 = arith.cmpf oge, %80, %86 : vector<1x512xf32>
    %cst_30 = arith.constant 6.400000e+01 : f32
    %88 = vector.broadcast %cst_30 : f32 to vector<1x512xf32>
    %89 = arith.subf %80, %88 : vector<1x512xf32>
    %90 = arith.select %87, %89, %80 : vector<1x512xi1>, vector<1x512xf32>
    %cst_31 = arith.constant 8.000000e+00 : f32
    %91 = vector.broadcast %cst_31 : f32 to vector<1x512xf32>
    %92 = arith.divf %90, %91 : vector<1x512xf32>
    %93 = math.floor %92 : vector<1x512xf32>
    %cst_32 = arith.constant 8.000000e+00 : f32
    %94 = vector.broadcast %cst_32 : f32 to vector<1x512xf32>
    %95 = arith.mulf %93, %94 : vector<1x512xf32>
    %96 = arith.subf %90, %95 : vector<1x512xf32>
    %cst_33 = arith.constant 0.000000e+00 : f32
    %97 = vector.broadcast %cst_33 : f32 to vector<1x512xf32>
    %98 = arith.cmpf olt, %96, %97 : vector<1x512xf32>
    %cst_34 = arith.constant 1.000000e+00 : f32
    %99 = vector.broadcast %cst_34 : f32 to vector<1x512xf32>
    %100 = arith.subf %93, %99 : vector<1x512xf32>
    %101 = arith.select %98, %100, %93 : vector<1x512xi1>, vector<1x512xf32>
    %cst_35 = arith.constant 0.000000e+00 : f32
    %102 = vector.broadcast %cst_35 : f32 to vector<1x512xf32>
    %103 = arith.cmpf olt, %96, %102 : vector<1x512xf32>
    %cst_36 = arith.constant 8.000000e+00 : f32
    %104 = vector.broadcast %cst_36 : f32 to vector<1x512xf32>
    %105 = arith.addf %96, %104 : vector<1x512xf32>
    %106 = arith.select %103, %105, %96 : vector<1x512xi1>, vector<1x512xf32>
    %cst_37 = arith.constant 8.000000e+00 : f32
    %107 = vector.broadcast %cst_37 : f32 to vector<1x512xf32>
    %108 = arith.cmpf oge, %106, %107 : vector<1x512xf32>
    %cst_38 = arith.constant 1.000000e+00 : f32
    %109 = vector.broadcast %cst_38 : f32 to vector<1x512xf32>
    %110 = arith.addf %101, %109 : vector<1x512xf32>
    %111 = arith.select %108, %110, %101 : vector<1x512xi1>, vector<1x512xf32>
    %cst_39 = arith.constant 8.000000e+00 : f32
    %112 = vector.broadcast %cst_39 : f32 to vector<1x512xf32>
    %113 = arith.cmpf oge, %106, %112 : vector<1x512xf32>
    %cst_40 = arith.constant 8.000000e+00 : f32
    %114 = vector.broadcast %cst_40 : f32 to vector<1x512xf32>
    %115 = arith.subf %106, %114 : vector<1x512xf32>
    %116 = arith.select %113, %115, %106 : vector<1x512xi1>, vector<1x512xf32>
    %c0_41 = arith.constant 0 : index
    %c0_42 = arith.constant 0 : index
    %117 = arith.index_cast %61 : i32 to index
    %118 = vector.load %arg2[%c0_41, %c0_42, %117] : memref<1x3x512xf32, #tpu.memory_space<vmem>>, vector<1x1x512xf32>
    %119 = vector.shape_cast %118 : vector<1x1x512xf32> to vector<1x512xf32>
    %c0_43 = arith.constant 0 : index
    %c1 = arith.constant 1 : index
    %120 = arith.index_cast %61 : i32 to index
    %121 = vector.load %arg2[%c0_43, %c1, %120] : memref<1x3x512xf32, #tpu.memory_space<vmem>>, vector<1x1x512xf32>
    %122 = vector.shape_cast %121 : vector<1x1x512xf32> to vector<1x512xf32>
    %c0_44 = arith.constant 0 : index
    %c2 = arith.constant 2 : index
    %123 = arith.index_cast %61 : i32 to index
    %124 = vector.load %arg2[%c0_44, %c2, %123] : memref<1x3x512xf32, #tpu.memory_space<vmem>>, vector<1x1x512xf32>
    %125 = vector.shape_cast %124 : vector<1x1x512xf32> to vector<1x512xf32>
    %126 = arith.addf %85, %119 : vector<1x512xf32>
    %127 = vector.broadcast %25 : vector<256x1xf32> to vector<256x512xf32>
    %128 = vector.broadcast %126 : vector<1x512xf32> to vector<256x512xf32>
    %129 = arith.subf %127, %128 : vector<256x512xf32>
    %130 = arith.addf %111, %122 : vector<1x512xf32>
    %131 = vector.broadcast %51 : vector<256x1xf32> to vector<256x512xf32>
    %132 = vector.broadcast %130 : vector<1x512xf32> to vector<256x512xf32>
    %133 = arith.subf %131, %132 : vector<256x512xf32>
    %134 = arith.addf %116, %125 : vector<1x512xf32>
    %135 = vector.broadcast %56 : vector<256x1xf32> to vector<256x512xf32>
    %136 = vector.broadcast %134 : vector<1x512xf32> to vector<256x512xf32>
    %137 = arith.subf %135, %136 : vector<256x512xf32>
    %138 = arith.mulf %129, %129 : vector<256x512xf32>
    %139 = arith.mulf %133, %133 : vector<256x512xf32>
    %140 = arith.addf %138, %139 : vector<256x512xf32>
    %141 = arith.mulf %137, %137 : vector<256x512xf32>
    %142 = arith.addf %140, %141 : vector<256x512xf32>
    %c0_45 = arith.constant 0 : index
    %c0_46 = arith.constant 0 : index
    %143 = vector.load %arg4[%c0_45, %c0_46] : memref<256x512xf32, #tpu.memory_space<vmem>>, vector<256x512xf32>
    %144 = arith.cmpf olt, %142, %143 : vector<256x512xf32>
    %145 = arith.select %144, %142, %143 : vector<256x512xi1>, vector<256x512xf32>
    %c0_47 = arith.constant 0 : index
    %c0_48 = arith.constant 0 : index
    %146 = vector.load %arg4[%c0_47, %c0_48] : memref<256x512xf32, #tpu.memory_space<vmem>>, vector<256x512xf32>
    tpu.vector_store %arg4[%c0_47, %c0_48], %145 {strides = array<i32>} : memref<256x512xf32, #tpu.memory_space<vmem>>, vector<256x512xf32>,
    %147 = vector.shape_cast %119 : vector<1x512xf32> to vector<1x512xf32>
    %148 = vector.broadcast %147 : vector<1x512xf32> to vector<256x512xf32>
    %c0_49 = arith.constant 0 : index
    %c0_50 = arith.constant 0 : index
    %149 = vector.load %arg5[%c0_49, %c0_50] : memref<256x512xf32, #tpu.memory_space<vmem>>, vector<256x512xf32>
    tpu.vector_store %arg5[%c0_49, %c0_50], %148 masked %144 {strides = array<i32>} : memref<256x512xf32, #tpu.memory_space<vmem>>, vector<256x512xf32>, vector<256x512xi1>
    %150 = vector.shape_cast %122 : vector<1x512xf32> to vector<1x512xf32>
    %151 = vector.broadcast %150 : vector<1x512xf32> to vector<256x512xf32>
    %c0_51 = arith.constant 0 : index
    %c0_52 = arith.constant 0 : index
    %152 = vector.load %arg6[%c0_51, %c0_52] : memref<256x512xf32, #tpu.memory_space<vmem>>, vector<256x512xf32>
    tpu.vector_store %arg6[%c0_51, %c0_52], %151 masked %144 {strides = array<i32>} : memref<256x512xf32, #tpu.memory_space<vmem>>, vector<256x512xf32>, vector<256x512xi1>
    %153 = vector.shape_cast %125 : vector<1x512xf32> to vector<1x512xf32>
    %154 = vector.broadcast %153 : vector<1x512xf32> to vector<256x512xf32>
    %c0_53 = arith.constant 0 : index
    %c0_54 = arith.constant 0 : index
    %155 = vector.load %arg7[%c0_53, %c0_54] : memref<256x512xf32, #tpu.memory_space<vmem>>, vector<256x512xf32>
    tpu.vector_store %arg7[%c0_53, %c0_54], %154 masked %144 {strides = array<i32>} : memref<256x512xf32, #tpu.memory_space<vmem>>, vector<256x512xf32>, vector<256x512xi1>
    %c1_i32 = arith.constant 1 : i32
    %c0_55 = arith.constant 0 : index
    %c0_56 = arith.constant 0 : index
    %156 = vector.load %arg4[%c0_55, %c0_56] : memref<256x512xf32, #tpu.memory_space<vmem>>, vector<256x512xf32>
    %cst_57 = arith.constant dense<0x7F800000> : vector<256xf32>
    %157 = vector.multi_reduction <minimumf>, %156, %cst_57 [1] : vector<256x512xf32> to vector<256xf32>
    %158 = vector.shape_cast %157 : vector<256xf32> to vector<256x1xf32>
    %159 = tpu.iota {dimensions = array<i32: 1>} : vector<256x512xi32>
    %160 = vector.broadcast %158 : vector<256x1xf32> to vector<256x512xf32>
    %161 = arith.cmpf oeq, %156, %160 : vector<256x512xf32>
    %c512_i32_58 = arith.constant 512 : i32
    %162 = vector.broadcast %c512_i32_58 : i32 to vector<256x512xi32>
    %163 = arith.select %161, %159, %162 : vector<256x512xi1>, vector<256x512xi32>
    %cst_59 = arith.constant dense<2147483647> : vector<256xi32>
    %164 = vector.multi_reduction <minsi>, %163, %cst_59 [1] : vector<256x512xi32> to vector<256xi32>
    %165 = vector.shape_cast %164 : vector<256xi32> to vector<256x1xi32>
    %166 = vector.broadcast %165 : vector<256x1xi32> to vector<256x512xi32>
    %167 = arith.cmpi eq, %159, %166 : vector<256x512xi32>
    %168 = arith.extui %167 : vector<256x512xi1> to vector<256x512xi32>
    %169 = arith.sitofp %168 : vector<256x512xi32> to vector<256x512xf32>
    %c0_60 = arith.constant 0 : index
    %c0_61 = arith.constant 0 : index
    %170 = vector.load %arg5[%c0_60, %c0_61] : memref<256x512xf32, #tpu.memory_space<vmem>>, vector<256x512xf32>
    %171 = arith.mulf %169, %170 : vector<256x512xf32>
    %cst_62 = arith.constant dense<0.000000e+00> : vector<256xf32>
    %172 = vector.multi_reduction <add>, %171, %cst_62 [1] : vector<256x512xf32> to vector<256xf32>
    %173 = vector.shape_cast %172 : vector<256xf32> to vector<256x1xf32>
    %cst_63 = arith.constant 0.000000e+00 : f32
    %174 = vector.broadcast %cst_63 : f32 to vector<256x1xf32>
    %175 = arith.subf %174, %173 : vector<256x1xf32>
    %c0_64 = arith.constant 0 : index
    %c0_65 = arith.constant 0 : index
    %176 = vector.load %arg6[%c0_64, %c0_65] : memref<256x512xf32, #tpu.memory_space<vmem>>, vector<256x512xf32>
    %177 = arith.mulf %169, %176 : vector<256x512xf32>
    %cst_66 = arith.constant dense<0.000000e+00> : vector<256xf32>
    %178 = vector.multi_reduction <add>, %177, %cst_66 [1] : vector<256x512xf32> to vector<256xf32>
    %179 = vector.shape_cast %178 : vector<256xf32> to vector<256x1xf32>
    %cst_67 = arith.constant 0.000000e+00 : f32
    %180 = vector.broadcast %cst_67 : f32 to vector<256x1xf32>
    %181 = arith.subf %180, %179 : vector<256x1xf32>
    %c0_68 = arith.constant 0 : index
    %c0_69 = arith.constant 0 : index
    %182 = vector.load %arg7[%c0_68, %c0_69] : memref<256x512xf32, #tpu.memory_space<vmem>>, vector<256x512xf32>
    %183 = arith.mulf %169, %182 : vector<256x512xf32>
    %cst_70 = arith.constant dense<0.000000e+00> : vector<256xf32>
    %184 = vector.multi_reduction <add>, %183, %cst_70 [1] : vector<256x512xf32> to vector<256xf32>
    %185 = vector.shape_cast %184 : vector<256xf32> to vector<256x1xf32>
    %cst_71 = arith.constant 0.000000e+00 : f32
    %186 = vector.broadcast %cst_71 : f32 to vector<256x1xf32>
    %187 = arith.subf %186, %185 : vector<256x1xf32>
    %cst_72 = arith.constant 6.400000e-01 : f32
    %188 = vector.broadcast %cst_72 : f32 to vector<256x1xf32>
    %189 = arith.cmpf ole, %158, %188 : vector<256x1xf32>
    %cst_73 = arith.constant 0.000000e+00 : f32
    %190 = vector.broadcast %cst_73 : f32 to vector<256x1xf32>
    %191 = arith.select %189, %175, %190 : vector<256x1xi1>, vector<256x1xf32>
    %c0_74 = arith.constant 0 : index
    %c0_75 = arith.constant 0 : index
    %c0_76 = arith.constant 0 : index
    %192 = vector.load %arg3[%c0_74, %c0_75, %c0_76] : memref<1x256x3xf32, #tpu.memory_space<vmem>>, vector<1x256x1xf32>
    %193 = vector.shape_cast %192 : vector<1x256x1xf32> to vector<256x1xf32>
    %194 = vector.shape_cast %191 : vector<256x1xf32> to vector<1x256x1xf32>
    tpu.vector_store %arg3[%c0_74, %c0_75, %c0_76], %194 {strides = array<i32>} : memref<1x256x3xf32, #tpu.memory_space<vmem>>, vector<1x256x1xf32>,
    %195 = arith.select %189, %181, %190 : vector<256x1xi1>, vector<256x1xf32>
    %c0_77 = arith.constant 0 : index
    %c0_78 = arith.constant 0 : index
    %c1_79 = arith.constant 1 : index
    %196 = vector.load %arg3[%c0_77, %c0_78, %c1_79] : memref<1x256x3xf32, #tpu.memory_space<vmem>>, vector<1x256x1xf32>
    %197 = vector.shape_cast %196 : vector<1x256x1xf32> to vector<256x1xf32>
    %198 = vector.shape_cast %195 : vector<256x1xf32> to vector<1x256x1xf32>
    tpu.vector_store %arg3[%c0_77, %c0_78, %c1_79], %198 {strides = array<i32>} : memref<1x256x3xf32, #tpu.memory_space<vmem>>, vector<1x256x1xf32>,
    %199 = arith.select %189, %187, %190 : vector<256x1xi1>, vector<256x1xf32>
    %c0_80 = arith.constant 0 : index
    %c0_81 = arith.constant 0 : index
    %c2_82 = arith.constant 2 : index
    %200 = vector.load %arg3[%c0_80, %c0_81, %c2_82] : memref<1x256x3xf32, #tpu.memory_space<vmem>>, vector<1x256x1xf32>
    %201 = vector.shape_cast %200 : vector<1x256x1xf32> to vector<256x1xf32>
    %202 = vector.shape_cast %199 : vector<256x1xf32> to vector<1x256x1xf32>
    tpu.vector_store %arg3[%c0_80, %c0_81, %c2_82], %202 {strides = array<i32>} : memref<1x256x3xf32, #tpu.memory_space<vmem>>, vector<1x256x1xf32>,
    return
  }
  func.func @transform_0(%arg0: i32, %arg1: i32) -> (i32, i32, i32) {
    %c0_i32 = arith.constant 0 : i32
    %c0_i32_0 = arith.constant 0 : i32
    %c0_i32_1 = arith.constant 0 : i32
    return %arg0, %c0_i32, %c0_i32_0 : i32, i32, i32
  }
  func.func @transform_1(%arg0: i32, %arg1: i32) -> (i32, i32, i32) {
    %c0_i32 = arith.constant 0 : i32
    %c0_i32_0 = arith.constant 0 : i32
    return %arg0, %arg1, %c0_i32 : i32, i32, i32
  }
}

</mosaic_0001>

<llo_original>
// kernel: tpu_custom_call.1
$region0: #{tpu_custom_call.1}
  #allocation0 [shape = 'u32[]', space=smem, size = 0x4, offset = 0x4, fixed_abs, tag = 'smem constant byte address 0x4 - core index']
  #allocation1 [shape = 'u32[144,128]{1,0:T(1,128)}', space=vmem, size = 0x12000, scoped, tag = 'internal scratch']
  #allocation2 [shape = 'f32[256,512]{1,0:T(8,128)}', space=vmem, size = 0x80000, scoped, tag = 'scratch operand']
  #allocation3 [shape = 'f32[256,512]{1,0:T(8,128)}', space=vmem, size = 0x80000, scoped, tag = 'scratch operand']
  #allocation4 [shape = 'f32[256,512]{1,0:T(8,128)}', space=vmem, size = 0x80000, scoped, tag = 'scratch operand']
  #allocation5 [shape = 'f32[256,512]{1,0:T(8,128)}', space=vmem, size = 0x80000, scoped, tag = 'scratch operand']
  %s0 = inlined_call_operand.vmem [shape: f32[2,3,512], index: 0, kind: input, shape index: {}]
  %s1 = inlined_call_operand.vmem [shape: f32[2,512,3], index: 1, kind: output, shape index: {}]
  %s2 = sld [smem:[#allocation0]]
  $region37: #{tpu_custom_call.1} parent=0
    _
  %s4 = ssub.s32 1, %s2
  %s5 = scalar_select 0, %s4, %s2
  loop: start=0, step=1, limit=6
  $region2: #{tpu_custom_call.1} parent=0 // loop_pre_header
    _
  $region3: #{tpu_custom_call.1} parent=0 // loop_header
    %s7 = sphi 0, %s11
    %p8 = scmp.ge.s32.totalorder %s7, 6
    %s14 = sphi 0, %s26
    %s15 = sphi 0, %s22
    %s16 = sphi 0, %s14
    %s17 = sphi 0, %s15
    %s18 = sphi 0, %s16
    %s19 = sphi 0, %s17
    %s29 = sphi 0, %s31
    %s32 = sphi 0, %s29
    %s33 = sphi 0, %s32
    %s49 = sphi 0, %s33
    %s57 = sphi 0, %s59
    %s60 = sphi 0, %s57
    %s61 = sphi 0, %s60
    %s77 = sphi 0, %s61
  $region4: #{tpu_custom_call.1} parent=0 // loop_header_branch
    %10 = sbr.rel (%p8) target = $region8
  $region5: #{tpu_custom_call.1} parent=0 // loop_body
    %s12 = ssub.s32 %s7, 1
    %s13 = ssub.s32 %s7, 2
    %s20 = sadd.s32 1, %s15
    %p21 = scmp.ge.s32.totalorder %s20, 2
    %s22 = scalar_select %p21, 0, %s20
    %s23 = sadd.s32 1, %s14
    %s24 = scalar_select %p21, %s23, %s14
    %p25 = scmp.ge.s32.totalorder %s24, 2
    %s26 = scalar_select %p25, 0, %s24
    %s27 = ssub.s32 %s14, %s26
    %p28 = scmp.eq.s32.totalorder %s27, 0
    %s30 = sadd.s32 %s29, 1
    %s31 = scalar_select %p28, %s29, %s30
    %p34 = pneg %p28
    %p35 = scmp.eq.s32.totalorder %s7, 3
    %p36 = por %p34, %p35
    %p37 = scmp.ne.s32.totalorder %s29, %s32
    %p38 = scmp.eq.s32.totalorder %s7, 0
    %p39 = por %p37, %p38
    %p40 = scmp.ne.s32.totalorder %s29, %s32
    %p41 = scmp.eq.s32.totalorder %s12, 3
    %p42 = por %p40, %p41
    %p43 = scmp.ne.s32.totalorder %s32, %s33
    %p44 = scmp.eq.s32.totalorder %s12, 0
    %p45 = por %p43, %p44
    %p46 = scmp.ne.s32.totalorder %s32, %s33
    %p47 = scmp.eq.s32.totalorder %s13, 3
    %p48 = por %p46, %p47
    %p50 = scmp.ne.s32.totalorder %s33, %s49
    %p51 = scmp.eq.s32.totalorder %s13, 0
    %p52 = por %p50, %p51
    %s53 = ssub.s32 %s14, %s26
    %s54 = ssub.s32 %s15, %s22
    %s55 = sor.u32 %s53, %s54
    %p56 = scmp.eq.s32.totalorder %s55, 0
    %s58 = sadd.s32 %s57, 1
    %s59 = scalar_select %p56, %s57, %s58
    %p62 = pneg %p56
    %p63 = scmp.eq.s32.totalorder %s7, 3
    %p64 = por %p62, %p63
    %p65 = scmp.ne.s32.totalorder %s57, %s60
    %p66 = scmp.eq.s32.totalorder %s7, 0
    %p67 = por %p65, %p66
    %p68 = scmp.ne.s32.totalorder %s57, %s60
    %p69 = scmp.eq.s32.totalorder %s12, 3
    %p70 = por %p68, %p69
    %p71 = scmp.ne.s32.totalorder %s60, %s61
    %p72 = scmp.eq.s32.totalorder %s12, 0
    %p73 = por %p71, %p72
    %p74 = scmp.ne.s32.totalorder %s60, %s61
    %p75 = scmp.eq.s32.totalorder %s13, 3
    %p76 = por %p74, %p75
    %p78 = scmp.ne.s32.totalorder %s61, %s77
    %p79 = scmp.eq.s32.totalorder %s13, 0
    %p80 = por %p78, %p79
    %p81 = scmp.le.s32.totalorder 1, %s7
    %p82 = scmp.lt.s32.totalorder %s7, 5
    %p83 = pnand %p81, %p82
    %p84 = pneg %p83
    // Predicated region
    $region9: #{tpu_custom_call.1} parent=5 // pred_check
      _
    $region10: #{tpu_custom_call.1} parent=5 // pred_check_branch
      %86 = sbr.rel (%p83) target = $region12
    $region11: #{tpu_custom_call.1} parent=5 // pred_region
      %s87 = ssub.s32 %s7, 1
    $region12: #{tpu_custom_call.1} parent=5 // pred_fallthru
      _
    %p88 = scmp.lt.s32.totalorder %s7, 4
    // Predicated region
    $region13: #{tpu_custom_call.1} parent=5 // pred_check
      %p89 = pneg %p88
    $region14: #{tpu_custom_call.1} parent=5 // pred_check_branch
      %91 = sbr.rel (%p89) target = $region16
    $region15: #{tpu_custom_call.1} parent=5 // pred_region
      // Predicated region
      $region17: #{tpu_custom_call.1} parent=15 // pred_check
        %p92 = pneg %p39
      $region18: #{tpu_custom_call.1} parent=15 // pred_check_branch
        %94 = sbr.rel (%p92) target = $region20
      $region19: #{tpu_custom_call.1} parent=15 // pred_region
        %p95 = scmp.lt.s32.totalorder %s14, 1
        %s96 = scalar_select %p95, %s14, 1
        %s97 = smul.addr %s96, 4
        %s98 = smul.addr %s97, 4
        %s99 = scalar_lea.vmem %s0, %s98
      $region20: #{tpu_custom_call.1} parent=15 // pred_fallthru
        _
    $region16: #{tpu_custom_call.1} parent=5 // pred_fallthru
      _
    %p100 = scmp.le.s32.totalorder 1, %s7
    %p101 = scmp.lt.s32.totalorder %s7, 5
    %p102 = pnand %p100, %p101
    %p103 = pneg %p102
    // Predicated region
    $region21: #{tpu_custom_call.1} parent=5 // pred_check
      _
    $region22: #{tpu_custom_call.1} parent=5 // pred_check_branch
      %105 = sbr.rel (%p102) target = $region24
    $region23: #{tpu_custom_call.1} parent=5 // pred_region
      %s106 = ssub.s32 %s7, 1
      %p107 = scmp.lt.s32.totalorder %s16, 1
      %s108 = scalar_select %p107, %s16, 1
      %s109 = smul.addr %s108, 4
      %s110 = smul.addr %s109, 4
      %s111 = scalar_lea.vmem %s0, %s110
      %p112 = pneg %p45
      %p113 = pneg %p42
      %p114 = pneg %p73
      %p115 = pneg %p70
      %s116 = smul.u32 32, %s17
      %p117 = scmp.lt.s32.totalorder %s16, 1
      %s118 = scalar_select %p117, %s16, 1
      %p119 = scmp.lt.s32.totalorder %s116, 63
      %s120 = scalar_select %p119, %s116, 63
      %s121 = smul.addr %s118, 64
      %s122 = sadd.s32 %s120, %s121
      %s123 = smul.addr %s122, 8
      %s124 = scalar_lea.vmem %s1, %s123
      %p125 = scmp.lt.s32.totalorder %s16, 1
      %s126 = scalar_select %p125, %s16, 1
      %s127 = smul.addr %s126, 4
      %s128 = smul.addr %s127, 4
      %s129 = scalar_lea.vmem %s0, %s128
      %s130 = smul.u32 32, %s17
      %p131 = scmp.lt.s32.totalorder %s16, 1
      %s132 = scalar_select %p131, %s16, 1
      %p133 = scmp.lt.s32.totalorder %s130, 63
      %s134 = scalar_select %p133, %s130, 63
      %s135 = smul.addr %s132, 64
      %s136 = sadd.s32 %s134, %s135
      %s137 = smul.addr %s136, 8
      %s138 = scalar_lea.vmem %s1, %s137
      %s139 = smul.u32 32, %s17
      %s140 = smul.u32 %s17, 256
      %v141 = vlaneseq
      %v142 = vshrl.u32 %v141, 7
      %v143 = vadd.s32 %v142, 8
      %v144 = vadd.s32 %v142, 16
      %v145 = vadd.s32 %v142, 24
      %v146 = vadd.s32 %v142, 32
      %v147 = vadd.s32 %v142, 40
      %v148 = vadd.s32 %v142, 48
      %v149 = vadd.s32 %v142, 56
      %v150 = vadd.s32 %v142, 64
      %v151 = vadd.s32 %v142, 72
      %v152 = vadd.s32 %v142, 80
      %v153 = vadd.s32 %v142, 88
      %v154 = vadd.s32 %v142, 96
      %v155 = vadd.s32 %v142, 104
      %v156 = vadd.s32 %v142, 112
      %v157 = vadd.s32 %v142, 120
      %v158 = vadd.s32 %v142, 128
      %v159 = vadd.s32 %v142, 136
      %v160 = vadd.s32 %v142, 144
      %v161 = vadd.s32 %v142, 152
      %v162 = vadd.s32 %v142, 160
      %v163 = vadd.s32 %v142, 168
      %v164 = vadd.s32 %v142, 176
      %v165 = vadd.s32 %v142, 184
      %v166 = vadd.s32 %v142, 192
      %v167 = vadd.s32 %v142, 200
      %v168 = vadd.s32 %v142, 208
      %v169 = vadd.s32 %v142, 216
      %v170 = vadd.s32 %v142, 224
      %v171 = vadd.s32 %v142, 232
      %v172 = vadd.s32 %v142, 240
      %v173 = vadd.s32 %v142, 248
      %v174 = vstv %s140
      %v175 = vadd.s32 %v174, %v142
      %v176 = vadd.s32 %v174, %v143
      %v177 = vadd.s32 %v174, %v144
      %v178 = vadd.s32 %v174, %v145
      %v179 = vadd.s32 %v174, %v146
      %v180 = vadd.s32 %v174, %v147
      %v181 = vadd.s32 %v174, %v148
      %v182 = vadd.s32 %v174, %v149
      %v183 = vadd.s32 %v174, %v150
      %v184 = vadd.s32 %v174, %v151
      %v185 = vadd.s32 %v174, %v152
      %v186 = vadd.s32 %v174, %v153
      %v187 = vadd.s32 %v174, %v154
      %v188 = vadd.s32 %v174, %v155
      %v189 = vadd.s32 %v174, %v156
      %v190 = vadd.s32 %v174, %v157
      %v191 = vadd.s32 %v174, %v158
      %v192 = vadd.s32 %v174, %v159
      %v193 = vadd.s32 %v174, %v160
      %v194 = vadd.s32 %v174, %v161
      %v195 = vadd.s32 %v174, %v162
      %v196 = vadd.s32 %v174, %v163
      %v197 = vadd.s32 %v174, %v164
      %v198 = vadd.s32 %v174, %v165
      %v199 = vadd.s32 %v174, %v166
      %v200 = vadd.s32 %v174, %v167
      %v201 = vadd.s32 %v174, %v168
      %v202 = vadd.s32 %v174, %v169
      %v203 = vadd.s32 %v174, %v170
      %v204 = vadd.s32 %v174, %v171
      %v205 = vadd.s32 %v174, %v172
      %v206 = vadd.s32 %v174, %v173
      %v207 = vcvt.s32.f32 %v175
      %v208 = vcvt.s32.f32 %v176
      %v209 = vcvt.s32.f32 %v177
      %v210 = vcvt.s32.f32 %v178
      %v211 = vcvt.s32.f32 %v179
      %v212 = vcvt.s32.f32 %v180
      %v213 = vcvt.s32.f32 %v181
      %v214 = vcvt.s32.f32 %v182
      %v215 = vcvt.s32.f32 %v183
      %v216 = vcvt.s32.f32 %v184
      %v217 = vcvt.s32.f32 %v185
      %v218 = vcvt.s32.f32 %v186
      %v219 = vcvt.s32.f32 %v187
      %v220 = vcvt.s32.f32 %v188
      %v221 = vcvt.s32.f32 %v189
      %v222 = vcvt.s32.f32 %v190
      %v223 = vcvt.s32.f32 %v191
      %v224 = vcvt.s32.f32 %v192
      %v225 = vcvt.s32.f32 %v193
      %v226 = vcvt.s32.f32 %v194
      %v227 = vcvt.s32.f32 %v195
      %v228 = vcvt.s32.f32 %v196
      %v229 = vcvt.s32.f32 %v197
      %v230 = vcvt.s32.f32 %v198
      %v231 = vcvt.s32.f32 %v199
      %v232 = vcvt.s32.f32 %v200
      %v233 = vcvt.s32.f32 %v201
      %v234 = vcvt.s32.f32 %v202
      %v235 = vcvt.s32.f32 %v203
      %v236 = vcvt.s32.f32 %v204
      %v237 = vcvt.s32.f32 %v205
      %v238 = vcvt.s32.f32 %v206
      %v239 = vrcp.pop 64.0
      %v240 = vmul.f32 %v207, %v239
      %v241 = vmul.f32 %v208, %v239
      %v242 = vmul.f32 %v209, %v239
      %v243 = vmul.f32 %v210, %v239
      %v244 = vmul.f32 %v211, %v239
      %v245 = vmul.f32 %v212, %v239
      %v246 = vmul.f32 %v213, %v239
      %v247 = vmul.f32 %v214, %v239
      %v248 = vmul.f32 %v215, %v239
      %v249 = vmul.f32 %v216, %v239
      %v250 = vmul.f32 %v217, %v239
      %v251 = vmul.f32 %v218, %v239
      %v252 = vmul.f32 %v219, %v239
      %v253 = vmul.f32 %v220, %v239
      %v254 = vmul.f32 %v221, %v239
      %v255 = vmul.f32 %v222, %v239
      %v256 = vmul.f32 %v223, %v239
      %v257 = vmul.f32 %v224, %v239
      %v258 = vmul.f32 %v225, %v239
      %v259 = vmul.f32 %v226, %v239
      %v260 = vmul.f32 %v227, %v239
      %v261 = vmul.f32 %v228, %v239
      %v262 = vmul.f32 %v229, %v239
      %v263 = vmul.f32 %v230, %v239
      %v264 = vmul.f32 %v231, %v239
      %v265 = vmul.f32 %v232, %v239
      %v266 = vmul.f32 %v233, %v239
      %v267 = vmul.f32 %v234, %v239
      %v268 = vmul.f32 %v235, %v239
      %v269 = vmul.f32 %v236, %v239
      %v270 = vmul.f32 %v237, %v239
      %v271 = vmul.f32 %v238, %v239
      %v272 = vfloor.f32 %v240
      %v273 = vfloor.f32 %v241
      %v274 = vfloor.f32 %v242
      %v275 = vfloor.f32 %v243
      %v276 = vfloor.f32 %v244
      %v277 = vfloor.f32 %v245
      %v278 = vfloor.f32 %v246
      %v279 = vfloor.f32 %v247
      %v280 = vfloor.f32 %v248
      %v281 = vfloor.f32 %v249
      %v282 = vfloor.f32 %v250
      %v283 = vfloor.f32 %v251
      %v284 = vfloor.f32 %v252
      %v285 = vfloor.f32 %v253
      %v286 = vfloor.f32 %v254
      %v287 = vfloor.f32 %v255
      %v288 = vfloor.f32 %v256
      %v289 = vfloor.f32 %v257
      %v290 = vfloor.f32 %v258
      %v291 = vfloor.f32 %v259
      %v292 = vfloor.f32 %v260
      %v293 = vfloor.f32 %v261
      %v294 = vfloor.f32 %v262
      %v295 = vfloor.f32 %v263
      %v296 = vfloor.f32 %v264
      %v297 = vfloor.f32 %v265
      %v298 = vfloor.f32 %v266
      %v299 = vfloor.f32 %v267
      %v300 = vfloor.f32 %v268
      %v301 = vfloor.f32 %v269
      %v302 = vfloor.f32 %v270
      %v303 = vfloor.f32 %v271
      %v304 = vmul.f32 %v272, 64.0
      %v305 = vmul.f32 %v273, 64.0
      %v306 = vmul.f32 %v274, 64.0
      %v307 = vmul.f32 %v275, 64.0
      %v308 = vmul.f32 %v276, 64.0
      %v309 = vmul.f32 %v277, 64.0
      %v310 = vmul.f32 %v278, 64.0
      %v311 = vmul.f32 %v279, 64.0
      %v312 = vmul.f32 %v280, 64.0
      %v313 = vmul.f32 %v281, 64.0
      %v314 = vmul.f32 %v282, 64.0
      %v315 = vmul.f32 %v283, 64.0
      %v316 = vmul.f32 %v284, 64.0
      %v317 = vmul.f32 %v285, 64.0
      %v318 = vmul.f32 %v286, 64.0
      %v319 = vmul.f32 %v287, 64.0
      %v320 = vmul.f32 %v288, 64.0
      %v321 = vmul.f32 %v289, 64.0
      %v322 = vmul.f32 %v290, 64.0
      %v323 = vmul.f32 %v291, 64.0
      %v324 = vmul.f32 %v292, 64.0
      %v325 = vmul.f32 %v293, 64.0
      %v326 = vmul.f32 %v294, 64.0
      %v327 = vmul.f32 %v295, 64.0
      %v328 = vmul.f32 %v296, 64.0
      %v329 = vmul.f32 %v297, 64.0
      %v330 = vmul.f32 %v298, 64.0
      %v331 = vmul.f32 %v299, 64.0
      %v332 = vmul.f32 %v300, 64.0
      %v333 = vmul.f32 %v301, 64.0
      %v334 = vmul.f32 %v302, 64.0
      %v335 = vmul.f32 %v303, 64.0
      %v336 = vsub.f32 %v207, %v304
      %v337 = vsub.f32 %v208, %v305
      %v338 = vsub.f32 %v209, %v306
      %v339 = vsub.f32 %v210, %v307
      %v340 = vsub.f32 %v211, %v308
      %v341 = vsub.f32 %v212, %v309
      %v342 = vsub.f32 %v213, %v310
      %v343 = vsub.f32 %v214, %v311
      %v344 = vsub.f32 %v215, %v312
      %v345 = vsub.f32 %v216, %v313
      %v346 = vsub.f32 %v217, %v314
      %v347 = vsub.f32 %v218, %v315
      %v348 = vsub.f32 %v219, %v316
      %v349 = vsub.f32 %v220, %v317
      %v350 = vsub.f32 %v221, %v318
      %v351 = vsub.f32 %v222, %v319
      %v352 = vsub.f32 %v223, %v320
      %v353 = vsub.f32 %v224, %v321
      %v354 = vsub.f32 %v225, %v322
      %v355 = vsub.f32 %v226, %v323
      %v356 = vsub.f32 %v227, %v324
      %v357 = vsub.f32 %v228, %v325
      %v358 = vsub.f32 %v229, %v326
      %v359 = vsub.f32 %v230, %v327
      %v360 = vsub.f32 %v231, %v328
      %v361 = vsub.f32 %v232, %v329
      %v362 = vsub.f32 %v233, %v330
      %v363 = vsub.f32 %v234, %v331
      %v364 = vsub.f32 %v235, %v332
      %v365 = vsub.f32 %v236, %v333
      %v366 = vsub.f32 %v237, %v334
      %v367 = vsub.f32 %v238, %v335
      %vm368 = vcmp.lt.f32.partialorder %v336, 0.0
      %vm369 = vcmp.lt.f32.partialorder %v337, 0.0
      %vm370 = vcmp.lt.f32.partialorder %v338, 0.0
      %vm371 = vcmp.lt.f32.partialorder %v339, 0.0
      %vm372 = vcmp.lt.f32.partialorder %v340, 0.0
      %vm373 = vcmp.lt.f32.partialorder %v341, 0.0
      %vm374 = vcmp.lt.f32.partialorder %v342, 0.0
      %vm375 = vcmp.lt.f32.partialorder %v343, 0.0
      %vm376 = vcmp.lt.f32.partialorder %v344, 0.0
      %vm377 = vcmp.lt.f32.partialorder %v345, 0.0
      %vm378 = vcmp.lt.f32.partialorder %v346, 0.0
      %vm379 = vcmp.lt.f32.partialorder %v347, 0.0
      %vm380 = vcmp.lt.f32.partialorder %v348, 0.0
      %vm381 = vcmp.lt.f32.partialorder %v349, 0.0
      %vm382 = vcmp.lt.f32.partialorder %v350, 0.0
      %vm383 = vcmp.lt.f32.partialorder %v351, 0.0
      %vm384 = vcmp.lt.f32.partialorder %v352, 0.0
      %vm385 = vcmp.lt.f32.partialorder %v353, 0.0
      %vm386 = vcmp.lt.f32.partialorder %v354, 0.0
      %vm387 = vcmp.lt.f32.partialorder %v355, 0.0
      %vm388 = vcmp.lt.f32.partialorder %v356, 0.0
      %vm389 = vcmp.lt.f32.partialorder %v357, 0.0
      %vm390 = vcmp.lt.f32.partialorder %v358, 0.0
      %vm391 = vcmp.lt.f32.partialorder %v359, 0.0
      %vm392 = vcmp.lt.f32.partialorder %v360, 0.0
      %vm393 = vcmp.lt.f32.partialorder %v361, 0.0
      %vm394 = vcmp.lt.f32.partialorder %v362, 0.0
      %vm395 = vcmp.lt.f32.partialorder %v363, 0.0
      %vm396 = vcmp.lt.f32.partialorder %v364, 0.0
      %vm397 = vcmp.lt.f32.partialorder %v365, 0.0
      %vm398 = vcmp.lt.f32.partialorder %v366, 0.0
      %vm399 = vcmp.lt.f32.partialorder %v367, 0.0
      %v400 = vsub.f32 %v272, 1.0
      %v401 = vsub.f32 %v273, 1.0
      %v402 = vsub.f32 %v274, 1.0
      %v403 = vsub.f32 %v275, 1.0
      %v404 = vsub.f32 %v276, 1.0
      %v405 = vsub.f32 %v277, 1.0
      %v406 = vsub.f32 %v278, 1.0
      %v407 = vsub.f32 %v279, 1.0
      %v408 = vsub.f32 %v280, 1.0
      %v409 = vsub.f32 %v281, 1.0
      %v410 = vsub.f32 %v282, 1.0
      %v411 = vsub.f32 %v283, 1.0
      %v412 = vsub.f32 %v284, 1.0
      %v413 = vsub.f32 %v285, 1.0
      %v414 = vsub.f32 %v286, 1.0
      %v415 = vsub.f32 %v287, 1.0
      %v416 = vsub.f32 %v288, 1.0
      %v417 = vsub.f32 %v289, 1.0
      %v418 = vsub.f32 %v290, 1.0
      %v419 = vsub.f32 %v291, 1.0
      %v420 = vsub.f32 %v292, 1.0
      %v421 = vsub.f32 %v293, 1.0
      %v422 = vsub.f32 %v294, 1.0
      %v423 = vsub.f32 %v295, 1.0
      %v424 = vsub.f32 %v296, 1.0
      %v425 = vsub.f32 %v297, 1.0
      %v426 = vsub.f32 %v298, 1.0
      %v427 = vsub.f32 %v299, 1.0
      %v428 = vsub.f32 %v300, 1.0
      %v429 = vsub.f32 %v301, 1.0
      %v430 = vsub.f32 %v302, 1.0
      %v431 = vsub.f32 %v303, 1.0
      %v432 = vsel %vm368, %v400, %v272
      %v433 = vsel %vm369, %v401, %v273
      %v434 = vsel %vm370, %v402, %v274
      %v435 = vsel %vm371, %v403, %v275
      %v436 = vsel %vm372, %v404, %v276
      %v437 = vsel %vm373, %v405, %v277
      %v438 = vsel %vm374, %v406, %v278
      %v439 = vsel %vm375, %v407, %v279
      %v440 = vsel %vm376, %v408, %v280
      %v441 = vsel %vm377, %v409, %v281
      %v442 = vsel %vm378, %v410, %v282
      %v443 = vsel %vm379, %v411, %v283
      %v444 = vsel %vm380, %v412, %v284
      %v445 = vsel %vm381, %v413, %v285
      %v446 = vsel %vm382, %v414, %v286
      %v447 = vsel %vm383, %v415, %v287
      %v448 = vsel %vm384, %v416, %v288
      %v449 = vsel %vm385, %v417, %v289
      %v450 = vsel %vm386, %v418, %v290
      %v451 = vsel %vm387, %v419, %v291
      %v452 = vsel %vm388, %v420, %v292
      %v453 = vsel %vm389, %v421, %v293
      %v454 = vsel %vm390, %v422, %v294
      %v455 = vsel %vm391, %v423, %v295
      %v456 = vsel %vm392, %v424, %v296
      %v457 = vsel %vm393, %v425, %v297
      %v458 = vsel %vm394, %v426, %v298
      %v459 = vsel %vm395, %v427, %v299
      %v460 = vsel %vm396, %v428, %v300
      %v461 = vsel %vm397, %v429, %v301
      %v462 = vsel %vm398, %v430, %v302
      %v463 = vsel %vm399, %v431, %v303
      %v464 = vadd.f32 %v336, 64.0
      %v465 = vadd.f32 %v337, 64.0
      %v466 = vadd.f32 %v338, 64.0
      %v467 = vadd.f32 %v339, 64.0
      %v468 = vadd.f32 %v340, 64.0
      %v469 = vadd.f32 %v341, 64.0
      %v470 = vadd.f32 %v342, 64.0
      %v471 = vadd.f32 %v343, 64.0
      %v472 = vadd.f32 %v344, 64.0
      %v473 = vadd.f32 %v345, 64.0
      %v474 = vadd.f32 %v346, 64.0
      %v475 = vadd.f32 %v347, 64.0
      %v476 = vadd.f32 %v348, 64.0
      %v477 = vadd.f32 %v349, 64.0
      %v478 = vadd.f32 %v350, 64.0
      %v479 = vadd.f32 %v351, 64.0
      %v480 = vadd.f32 %v352, 64.0
      %v481 = vadd.f32 %v353, 64.0
      %v482 = vadd.f32 %v354, 64.0
      %v483 = vadd.f32 %v355, 64.0
      %v484 = vadd.f32 %v356, 64.0
      %v485 = vadd.f32 %v357, 64.0
      %v486 = vadd.f32 %v358, 64.0
      %v487 = vadd.f32 %v359, 64.0
      %v488 = vadd.f32 %v360, 64.0
      %v489 = vadd.f32 %v361, 64.0
      %v490 = vadd.f32 %v362, 64.0
      %v491 = vadd.f32 %v363, 64.0
      %v492 = vadd.f32 %v364, 64.0
      %v493 = vadd.f32 %v365, 64.0
      %v494 = vadd.f32 %v366, 64.0
      %v495 = vadd.f32 %v367, 64.0
      %v496 = vsel %vm368, %v464, %v336
      %v497 = vsel %vm369, %v465, %v337
      %v498 = vsel %vm370, %v466, %v338
      %v499 = vsel %vm371, %v467, %v339
      %v500 = vsel %vm372, %v468, %v340
      %v501 = vsel %vm373, %v469, %v341
      %v502 = vsel %vm374, %v470, %v342
      %v503 = vsel %vm375, %v471, %v343
      %v504 = vsel %vm376, %v472, %v344
      %v505 = vsel %vm377, %v473, %v345
      %v506 = vsel %vm378, %v474, %v346
      %v507 = vsel %vm379, %v475, %v347
      %v508 = vsel %vm380, %v476, %v348
      %v509 = vsel %vm381, %v477, %v349
      %v510 = vsel %vm382, %v478, %v350
      %v511 = vsel %vm383, %v479, %v351
      %v512 = vsel %vm384, %v480, %v352
      %v513 = vsel %vm385, %v481, %v353
      %v514 = vsel %vm386, %v482, %v354
      %v515 = vsel %vm387, %v483, %v355
      %v516 = vsel %vm388, %v484, %v356
      %v517 = vsel %vm389, %v485, %v357
      %v518 = vsel %vm390, %v486, %v358
      %v519 = vsel %vm391, %v487, %v359
      %v520 = vsel %vm392, %v488, %v360
      %v521 = vsel %vm393, %v489, %v361
      %v522 = vsel %vm394, %v490, %v362
      %v523 = vsel %vm395, %v491, %v363
      %v524 = vsel %vm396, %v492, %v364
      %v525 = vsel %vm397, %v493, %v365
      %v526 = vsel %vm398, %v494, %v366
      %v527 = vsel %vm399, %v495, %v367
      %vm528 = vcmp.ge.f32.partialorder %v496, 64.0
      %vm529 = vcmp.ge.f32.partialorder %v497, 64.0
      %vm530 = vcmp.ge.f32.partialorder %v498, 64.0
      %vm531 = vcmp.ge.f32.partialorder %v499, 64.0
      %vm532 = vcmp.ge.f32.partialorder %v500, 64.0
      %vm533 = vcmp.ge.f32.partialorder %v501, 64.0
      %vm534 = vcmp.ge.f32.partialorder %v502, 64.0
      %vm535 = vcmp.ge.f32.partialorder %v503, 64.0
      %vm536 = vcmp.ge.f32.partialorder %v504, 64.0
      %vm537 = vcmp.ge.f32.partialorder %v505, 64.0
      %vm538 = vcmp.ge.f32.partialorder %v506, 64.0
      %vm539 = vcmp.ge.f32.partialorder %v507, 64.0
      %vm540 = vcmp.ge.f32.partialorder %v508, 64.0
      %vm541 = vcmp.ge.f32.partialorder %v509, 64.0
      %vm542 = vcmp.ge.f32.partialorder %v510, 64.0
      %vm543 = vcmp.ge.f32.partialorder %v511, 64.0
      %vm544 = vcmp.ge.f32.partialorder %v512, 64.0
      %vm545 = vcmp.ge.f32.partialorder %v513, 64.0
      %vm546 = vcmp.ge.f32.partialorder %v514, 64.0
      %vm547 = vcmp.ge.f32.partialorder %v515, 64.0
      %vm548 = vcmp.ge.f32.partialorder %v516, 64.0
      %vm549 = vcmp.ge.f32.partialorder %v517, 64.0
      %vm550 = vcmp.ge.f32.partialorder %v518, 64.0
      %vm551 = vcmp.ge.f32.partialorder %v519, 64.0
      %vm552 = vcmp.ge.f32.partialorder %v520, 64.0
      %vm553 = vcmp.ge.f32.partialorder %v521, 64.0
      %vm554 = vcmp.ge.f32.partialorder %v522, 64.0
      %vm555 = vcmp.ge.f32.partialorder %v523, 64.0
      %vm556 = vcmp.ge.f32.partialorder %v524, 64.0
      %vm557 = vcmp.ge.f32.partialorder %v525, 64.0
      %vm558 = vcmp.ge.f32.partialorder %v526, 64.0
      %vm559 = vcmp.ge.f32.partialorder %v527, 64.0
      %v560 = vadd.f32 %v432, 1.0
      %v561 = vadd.f32 %v433, 1.0
      %v562 = vadd.f32 %v434, 1.0
      %v563 = vadd.f32 %v435, 1.0
      %v564 = vadd.f32 %v436, 1.0
      %v565 = vadd.f32 %v437, 1.0
      %v566 = vadd.f32 %v438, 1.0
      %v567 = vadd.f32 %v439, 1.0
      %v568 = vadd.f32 %v440, 1.0
      %v569 = vadd.f32 %v441, 1.0
      %v570 = vadd.f32 %v442, 1.0
      %v571 = vadd.f32 %v443, 1.0
      %v572 = vadd.f32 %v444, 1.0
      %v573 = vadd.f32 %v445, 1.0
      %v574 = vadd.f32 %v446, 1.0
      %v575 = vadd.f32 %v447, 1.0
      %v576 = vadd.f32 %v448, 1.0
      %v577 = vadd.f32 %v449, 1.0
      %v578 = vadd.f32 %v450, 1.0
      %v579 = vadd.f32 %v451, 1.0
      %v580 = vadd.f32 %v452, 1.0
      %v581 = vadd.f32 %v453, 1.0
      %v582 = vadd.f32 %v454, 1.0
      %v583 = vadd.f32 %v455, 1.0
      %v584 = vadd.f32 %v456, 1.0
      %v585 = vadd.f32 %v457, 1.0
      %v586 = vadd.f32 %v458, 1.0
      %v587 = vadd.f32 %v459, 1.0
      %v588 = vadd.f32 %v460, 1.0
      %v589 = vadd.f32 %v461, 1.0
      %v590 = vadd.f32 %v462, 1.0
      %v591 = vadd.f32 %v463, 1.0
      %v592 = vsel %vm528, %v560, %v432
      %v593 = vsel %vm529, %v561, %v433
      %v594 = vsel %vm530, %v562, %v434
      %v595 = vsel %vm531, %v563, %v435
      %v596 = vsel %vm532, %v564, %v436
      %v597 = vsel %vm533, %v565, %v437
      %v598 = vsel %vm534, %v566, %v438
      %v599 = vsel %vm535, %v567, %v439
      %v600 = vsel %vm536, %v568, %v440
      %v601 = vsel %vm537, %v569, %v441
      %v602 = vsel %vm538, %v570, %v442
      %v603 = vsel %vm539, %v571, %v443
      %v604 = vsel %vm540, %v572, %v444
      %v605 = vsel %vm541, %v573, %v445
      %v606 = vsel %vm542, %v574, %v446
      %v607 = vsel %vm543, %v575, %v447
      %v608 = vsel %vm544, %v576, %v448
      %v609 = vsel %vm545, %v577, %v449
      %v610 = vsel %vm546, %v578, %v450
      %v611 = vsel %vm547, %v579, %v451
      %v612 = vsel %vm548, %v580, %v452
      %v613 = vsel %vm549, %v581, %v453
      %v614 = vsel %vm550, %v582, %v454
      %v615 = vsel %vm551, %v583, %v455
      %v616 = vsel %vm552, %v584, %v456
      %v617 = vsel %vm553, %v585, %v457
      %v618 = vsel %vm554, %v586, %v458
      %v619 = vsel %vm555, %v587, %v459
      %v620 = vsel %vm556, %v588, %v460
      %v621 = vsel %vm557, %v589, %v461
      %v622 = vsel %vm558, %v590, %v462
      %v623 = vsel %vm559, %v591, %v463
      %v624 = vsub.f32 %v496, 64.0
      %v625 = vsub.f32 %v497, 64.0
      %v626 = vsub.f32 %v498, 64.0
      %v627 = vsub.f32 %v499, 64.0
      %v628 = vsub.f32 %v500, 64.0
      %v629 = vsub.f32 %v501, 64.0
      %v630 = vsub.f32 %v502, 64.0
      %v631 = vsub.f32 %v503, 64.0
      %v632 = vsub.f32 %v504, 64.0
      %v633 = vsub.f32 %v505, 64.0
      %v634 = vsub.f32 %v506, 64.0
      %v635 = vsub.f32 %v507, 64.0
      %v636 = vsub.f32 %v508, 64.0
      %v637 = vsub.f32 %v509, 64.0
      %v638 = vsub.f32 %v510, 64.0
      %v639 = vsub.f32 %v511, 64.0
      %v640 = vsub.f32 %v512, 64.0
      %v641 = vsub.f32 %v513, 64.0
      %v642 = vsub.f32 %v514, 64.0
      %v643 = vsub.f32 %v515, 64.0
      %v644 = vsub.f32 %v516, 64.0
      %v645 = vsub.f32 %v517, 64.0
      %v646 = vsub.f32 %v518, 64.0
      %v647 = vsub.f32 %v519, 64.0
      %v648 = vsub.f32 %v520, 64.0
      %v649 = vsub.f32 %v521, 64.0
      %v650 = vsub.f32 %v522, 64.0
      %v651 = vsub.f32 %v523, 64.0
      %v652 = vsub.f32 %v524, 64.0
      %v653 = vsub.f32 %v525, 64.0
      %v654 = vsub.f32 %v526, 64.0
      %v655 = vsub.f32 %v527, 64.0
      %v656 = vsel %vm528, %v624, %v496
      %v657 = vsel %vm529, %v625, %v497
      %v658 = vsel %vm530, %v626, %v498
      %v659 = vsel %vm531, %v627, %v499
      %v660 = vsel %vm532, %v628, %v500
      %v661 = vsel %vm533, %v629, %v501
      %v662 = vsel %vm534, %v630, %v502
      %v663 = vsel %vm535, %v631, %v503
      %v664 = vsel %vm536, %v632, %v504
      %v665 = vsel %vm537, %v633, %v505
      %v666 = vsel %vm538, %v634, %v506
      %v667 = vsel %vm539, %v635, %v507
      %v668 = vsel %vm540, %v636, %v508
      %v669 = vsel %vm541, %v637, %v509
      %v670 = vsel %vm542, %v638, %v510
      %v671 = vsel %vm543, %v639, %v511
      %v672 = vsel %vm544, %v640, %v512
      %v673 = vsel %vm545, %v641, %v513
      %v674 = vsel %vm546, %v642, %v514
      %v675 = vsel %vm547, %v643, %v515
      %v676 = vsel %vm548, %v644, %v516
      %v677 = vsel %vm549, %v645, %v517
      %v678 = vsel %vm550, %v646, %v518
      %v679 = vsel %vm551, %v647, %v519
      %v680 = vsel %vm552, %v648, %v520
      %v681 = vsel %vm553, %v649, %v521
      %v682 = vsel %vm554, %v650, %v522
      %v683 = vsel %vm555, %v651, %v523
      %v684 = vsel %vm556, %v652, %v524
      %v685 = vsel %vm557, %v653, %v525
      %v686 = vsel %vm558, %v654, %v526
      %v687 = vsel %vm559, %v655, %v527
      %v688 = vrcp.pop 8.0
      %v689 = vmul.f32 %v656, %v688
      %v690 = vmul.f32 %v657, %v688
      %v691 = vmul.f32 %v658, %v688
      %v692 = vmul.f32 %v659, %v688
      %v693 = vmul.f32 %v660, %v688
      %v694 = vmul.f32 %v661, %v688
      %v695 = vmul.f32 %v662, %v688
      %v696 = vmul.f32 %v663, %v688
      %v697 = vmul.f32 %v664, %v688
      %v698 = vmul.f32 %v665, %v688
      %v699 = vmul.f32 %v666, %v688
      %v700 = vmul.f32 %v667, %v688
      %v701 = vmul.f32 %v668, %v688
      %v702 = vmul.f32 %v669, %v688
      %v703 = vmul.f32 %v670, %v688
      %v704 = vmul.f32 %v671, %v688
      %v705 = vmul.f32 %v672, %v688
      %v706 = vmul.f32 %v673, %v688
      %v707 = vmul.f32 %v674, %v688
      %v708 = vmul.f32 %v675, %v688
      %v709 = vmul.f32 %v676, %v688
      %v710 = vmul.f32 %v677, %v688
      %v711 = vmul.f32 %v678, %v688
      %v712 = vmul.f32 %v679, %v688
      %v713 = vmul.f32 %v680, %v688
      %v714 = vmul.f32 %v681, %v688
      %v715 = vmul.f32 %v682, %v688
      %v716 = vmul.f32 %v683, %v688
      %v717 = vmul.f32 %v684, %v688
      %v718 = vmul.f32 %v685, %v688
      %v719 = vmul.f32 %v686, %v688
      %v720 = vmul.f32 %v687, %v688
      %v721 = vfloor.f32 %v689
      %v722 = vfloor.f32 %v690
      %v723 = vfloor.f32 %v691
      %v724 = vfloor.f32 %v692
      %v725 = vfloor.f32 %v693
      %v726 = vfloor.f32 %v694
      %v727 = vfloor.f32 %v695
      %v728 = vfloor.f32 %v696
      %v729 = vfloor.f32 %v697
      %v730 = vfloor.f32 %v698
      %v731 = vfloor.f32 %v699
      %v732 = vfloor.f32 %v700
      %v733 = vfloor.f32 %v701
      %v734 = vfloor.f32 %v702
      %v735 = vfloor.f32 %v703
      %v736 = vfloor.f32 %v704
      %v737 = vfloor.f32 %v705
      %v738 = vfloor.f32 %v706
      %v739 = vfloor.f32 %v707
      %v740 = vfloor.f32 %v708
      %v741 = vfloor.f32 %v709
      %v742 = vfloor.f32 %v710
      %v743 = vfloor.f32 %v711
      %v744 = vfloor.f32 %v712
      %v745 = vfloor.f32 %v713
      %v746 = vfloor.f32 %v714
      %v747 = vfloor.f32 %v715
      %v748 = vfloor.f32 %v716
      %v749 = vfloor.f32 %v717
      %v750 = vfloor.f32 %v718
      %v751 = vfloor.f32 %v719
      %v752 = vfloor.f32 %v720
      %v753 = vmul.f32 %v721, 8.0
      %v754 = vmul.f32 %v722, 8.0
      %v755 = vmul.f32 %v723, 8.0
      %v756 = vmul.f32 %v724, 8.0
      %v757 = vmul.f32 %v725, 8.0
      %v758 = vmul.f32 %v726, 8.0
      %v759 = vmul.f32 %v727, 8.0
      %v760 = vmul.f32 %v728, 8.0
      %v761 = vmul.f32 %v729, 8.0
      %v762 = vmul.f32 %v730, 8.0
      %v763 = vmul.f32 %v731, 8.0
      %v764 = vmul.f32 %v732, 8.0
      %v765 = vmul.f32 %v733, 8.0
      %v766 = vmul.f32 %v734, 8.0
      %v767 = vmul.f32 %v735, 8.0
      %v768 = vmul.f32 %v736, 8.0
      %v769 = vmul.f32 %v737, 8.0
      %v770 = vmul.f32 %v738, 8.0
      %v771 = vmul.f32 %v739, 8.0
      %v772 = vmul.f32 %v740, 8.0
      %v773 = vmul.f32 %v741, 8.0
      %v774 = vmul.f32 %v742, 8.0
      %v775 = vmul.f32 %v743, 8.0
      %v776 = vmul.f32 %v744, 8.0
      %v777 = vmul.f32 %v745, 8.0
      %v778 = vmul.f32 %v746, 8.0
      %v779 = vmul.f32 %v747, 8.0
      %v780 = vmul.f32 %v748, 8.0
      %v781 = vmul.f32 %v749, 8.0
      %v782 = vmul.f32 %v750, 8.0
      %v783 = vmul.f32 %v751, 8.0
      %v784 = vmul.f32 %v752, 8.0
      %v785 = vsub.f32 %v656, %v753
      %v786 = vsub.f32 %v657, %v754
      %v787 = vsub.f32 %v658, %v755
      %v788 = vsub.f32 %v659, %v756
      %v789 = vsub.f32 %v660, %v757
      %v790 = vsub.f32 %v661, %v758
      %v791 = vsub.f32 %v662, %v759
      %v792 = vsub.f32 %v663, %v760
      %v793 = vsub.f32 %v664, %v761
      %v794 = vsub.f32 %v665, %v762
      %v795 = vsub.f32 %v666, %v763
      %v796 = vsub.f32 %v667, %v764
      %v797 = vsub.f32 %v668, %v765
      %v798 = vsub.f32 %v669, %v766
      %v799 = vsub.f32 %v670, %v767
      %v800 = vsub.f32 %v671, %v768
      %v801 = vsub.f32 %v672, %v769
      %v802 = vsub.f32 %v673, %v770
      %v803 = vsub.f32 %v674, %v771
      %v804 = vsub.f32 %v675, %v772
      %v805 = vsub.f32 %v676, %v773
      %v806 = vsub.f32 %v677, %v774
      %v807 = vsub.f32 %v678, %v775
      %v808 = vsub.f32 %v679, %v776
      %v809 = vsub.f32 %v680, %v777
      %v810 = vsub.f32 %v681, %v778
      %v811 = vsub.f32 %v682, %v779
      %v812 = vsub.f32 %v683, %v780
      %v813 = vsub.f32 %v684, %v781
      %v814 = vsub.f32 %v685, %v782
      %v815 = vsub.f32 %v686, %v783
      %v816 = vsub.f32 %v687, %v784
      %vm817 = vcmp.lt.f32.partialorder %v785, 0.0
      %vm818 = vcmp.lt.f32.partialorder %v786, 0.0
      %vm819 = vcmp.lt.f32.partialorder %v787, 0.0
      %vm820 = vcmp.lt.f32.partialorder %v788, 0.0
      %vm821 = vcmp.lt.f32.partialorder %v789, 0.0
      %vm822 = vcmp.lt.f32.partialorder %v790, 0.0
      %vm823 = vcmp.lt.f32.partialorder %v791, 0.0
      %vm824 = vcmp.lt.f32.partialorder %v792, 0.0
      %vm825 = vcmp.lt.f32.partialorder %v793, 0.0
      %vm826 = vcmp.lt.f32.partialorder %v794, 0.0
      %vm827 = vcmp.lt.f32.partialorder %v795, 0.0
      %vm828 = vcmp.lt.f32.partialorder %v796, 0.0
      %vm829 = vcmp.lt.f32.partialorder %v797, 0.0
      %vm830 = vcmp.lt.f32.partialorder %v798, 0.0
      %vm831 = vcmp.lt.f32.partialorder %v799, 0.0
      %vm832 = vcmp.lt.f32.partialorder %v800, 0.0
      %vm833 = vcmp.lt.f32.partialorder %v801, 0.0
      %vm834 = vcmp.lt.f32.partialorder %v802, 0.0
      %vm835 = vcmp.lt.f32.partialorder %v803, 0.0
      %vm836 = vcmp.lt.f32.partialorder %v804, 0.0
      %vm837 = vcmp.lt.f32.partialorder %v805, 0.0
      %vm838 = vcmp.lt.f32.partialorder %v806, 0.0
      %vm839 = vcmp.lt.f32.partialorder %v807, 0.0
      %vm840 = vcmp.lt.f32.partialorder %v808, 0.0
      %vm841 = vcmp.lt.f32.partialorder %v809, 0.0
      %vm842 = vcmp.lt.f32.partialorder %v810, 0.0
      %vm843 = vcmp.lt.f32.partialorder %v811, 0.0
      %vm844 = vcmp.lt.f32.partialorder %v812, 0.0
      %vm845 = vcmp.lt.f32.partialorder %v813, 0.0
      %vm846 = vcmp.lt.f32.partialorder %v814, 0.0
      %vm847 = vcmp.lt.f32.partialorder %v815, 0.0
      %vm848 = vcmp.lt.f32.partialorder %v816, 0.0
      %v849 = vsub.f32 %v721, 1.0
      %v850 = vsub.f32 %v722, 1.0
      %v851 = vsub.f32 %v723, 1.0
      %v852 = vsub.f32 %v724, 1.0
      %v853 = vsub.f32 %v725, 1.0
      %v854 = vsub.f32 %v726, 1.0
      %v855 = vsub.f32 %v727, 1.0
      %v856 = vsub.f32 %v728, 1.0
      %v857 = vsub.f32 %v729, 1.0
      %v858 = vsub.f32 %v730, 1.0
      %v859 = vsub.f32 %v731, 1.0
      %v860 = vsub.f32 %v732, 1.0
      %v861 = vsub.f32 %v733, 1.0
      %v862 = vsub.f32 %v734, 1.0
      %v863 = vsub.f32 %v735, 1.0
      %v864 = vsub.f32 %v736, 1.0
      %v865 = vsub.f32 %v737, 1.0
      %v866 = vsub.f32 %v738, 1.0
      %v867 = vsub.f32 %v739, 1.0
      %v868 = vsub.f32 %v740, 1.0
      %v869 = vsub.f32 %v741, 1.0
      %v870 = vsub.f32 %v742, 1.0
      %v871 = vsub.f32 %v743, 1.0
      %v872 = vsub.f32 %v744, 1.0
      %v873 = vsub.f32 %v745, 1.0
      %v874 = vsub.f32 %v746, 1.0
      %v875 = vsub.f32 %v747, 1.0
      %v876 = vsub.f32 %v748, 1.0
      %v877 = vsub.f32 %v749, 1.0
      %v878 = vsub.f32 %v750, 1.0
      %v879 = vsub.f32 %v751, 1.0
      %v880 = vsub.f32 %v752, 1.0
      %v881 = vsel %vm817, %v849, %v721
      %v882 = vsel %vm818, %v850, %v722
      %v883 = vsel %vm819, %v851, %v723
      %v884 = vsel %vm820, %v852, %v724
      %v885 = vsel %vm821, %v853, %v725
      %v886 = vsel %vm822, %v854, %v726
      %v887 = vsel %vm823, %v855, %v727
      %v888 = vsel %vm824, %v856, %v728
      %v889 = vsel %vm825, %v857, %v729
      %v890 = vsel %vm826, %v858, %v730
      %v891 = vsel %vm827, %v859, %v731
      %v892 = vsel %vm828, %v860, %v732
      %v893 = vsel %vm829, %v861, %v733
      %v894 = vsel %vm830, %v862, %v734
      %v895 = vsel %vm831, %v863, %v735
      %v896 = vsel %vm832, %v864, %v736
      %v897 = vsel %vm833, %v865, %v737
      %v898 = vsel %vm834, %v866, %v738
      %v899 = vsel %vm835, %v867, %v739
      %v900 = vsel %vm836, %v868, %v740
      %v901 = vsel %vm837, %v869, %v741
      %v902 = vsel %vm838, %v870, %v742
      %v903 = vsel %vm839, %v871, %v743
      %v904 = vsel %vm840, %v872, %v744
      %v905 = vsel %vm841, %v873, %v745
      %v906 = vsel %vm842, %v874, %v746
      %v907 = vsel %vm843, %v875, %v747
      %v908 = vsel %vm844, %v876, %v748
      %v909 = vsel %vm845, %v877, %v749
      %v910 = vsel %vm846, %v878, %v750
      %v911 = vsel %vm847, %v879, %v751
      %v912 = vsel %vm848, %v880, %v752
      %v913 = vadd.f32 %v785, 8.0
      %v914 = vadd.f32 %v786, 8.0
      %v915 = vadd.f32 %v787, 8.0
      %v916 = vadd.f32 %v788, 8.0
      %v917 = vadd.f32 %v789, 8.0
      %v918 = vadd.f32 %v790, 8.0
      %v919 = vadd.f32 %v791, 8.0
      %v920 = vadd.f32 %v792, 8.0
      %v921 = vadd.f32 %v793, 8.0
      %v922 = vadd.f32 %v794, 8.0
      %v923 = vadd.f32 %v795, 8.0
      %v924 = vadd.f32 %v796, 8.0
      %v925 = vadd.f32 %v797, 8.0
      %v926 = vadd.f32 %v798, 8.0
      %v927 = vadd.f32 %v799, 8.0
      %v928 = vadd.f32 %v800, 8.0
      %v929 = vadd.f32 %v801, 8.0
      %v930 = vadd.f32 %v802, 8.0
      %v931 = vadd.f32 %v803, 8.0
      %v932 = vadd.f32 %v804, 8.0
      %v933 = vadd.f32 %v805, 8.0
      %v934 = vadd.f32 %v806, 8.0
      %v935 = vadd.f32 %v807, 8.0
      %v936 = vadd.f32 %v808, 8.0
      %v937 = vadd.f32 %v809, 8.0
      %v938 = vadd.f32 %v810, 8.0
      %v939 = vadd.f32 %v811, 8.0
      %v940 = vadd.f32 %v812, 8.0
      %v941 = vadd.f32 %v813, 8.0
      %v942 = vadd.f32 %v814, 8.0
      %v943 = vadd.f32 %v815, 8.0
      %v944 = vadd.f32 %v816, 8.0
      %v945 = vsel %vm817, %v913, %v785
      %v946 = vsel %vm818, %v914, %v786
      %v947 = vsel %vm819, %v915, %v787
      %v948 = vsel %vm820, %v916, %v788
      %v949 = vsel %vm821, %v917, %v789
      %v950 = vsel %vm822, %v918, %v790
      %v951 = vsel %vm823, %v919, %v791
      %v952 = vsel %vm824, %v920, %v792
      %v953 = vsel %vm825, %v921, %v793
      %v954 = vsel %vm826, %v922, %v794
      %v955 = vsel %vm827, %v923, %v795
      %v956 = vsel %vm828, %v924, %v796
      %v957 = vsel %vm829, %v925, %v797
      %v958 = vsel %vm830, %v926, %v798
      %v959 = vsel %vm831, %v927, %v799
      %v960 = vsel %vm832, %v928, %v800
      %v961 = vsel %vm833, %v929, %v801
      %v962 = vsel %vm834, %v930, %v802
      %v963 = vsel %vm835, %v931, %v803
      %v964 = vsel %vm836, %v932, %v804
      %v965 = vsel %vm837, %v933, %v805
      %v966 = vsel %vm838, %v934, %v806
      %v967 = vsel %vm839, %v935, %v807
      %v968 = vsel %vm840, %v936, %v808
      %v969 = vsel %vm841, %v937, %v809
      %v970 = vsel %vm842, %v938, %v810
      %v971 = vsel %vm843, %v939, %v811
      %v972 = vsel %vm844, %v940, %v812
      %v973 = vsel %vm845, %v941, %v813
      %v974 = vsel %vm846, %v942, %v814
      %v975 = vsel %vm847, %v943, %v815
      %v976 = vsel %vm848, %v944, %v816
      %vm977 = vcmp.ge.f32.partialorder %v945, 8.0
      %vm978 = vcmp.ge.f32.partialorder %v946, 8.0
      %vm979 = vcmp.ge.f32.partialorder %v947, 8.0
      %vm980 = vcmp.ge.f32.partialorder %v948, 8.0
      %vm981 = vcmp.ge.f32.partialorder %v949, 8.0
      %vm982 = vcmp.ge.f32.partialorder %v950, 8.0
      %vm983 = vcmp.ge.f32.partialorder %v951, 8.0
      %vm984 = vcmp.ge.f32.partialorder %v952, 8.0
      %vm985 = vcmp.ge.f32.partialorder %v953, 8.0
      %vm986 = vcmp.ge.f32.partialorder %v954, 8.0
      %vm987 = vcmp.ge.f32.partialorder %v955, 8.0
      %vm988 = vcmp.ge.f32.partialorder %v956, 8.0
      %vm989 = vcmp.ge.f32.partialorder %v957, 8.0
      %vm990 = vcmp.ge.f32.partialorder %v958, 8.0
      %vm991 = vcmp.ge.f32.partialorder %v959, 8.0
      %vm992 = vcmp.ge.f32.partialorder %v960, 8.0
      %vm993 = vcmp.ge.f32.partialorder %v961, 8.0
      %vm994 = vcmp.ge.f32.partialorder %v962, 8.0
      %vm995 = vcmp.ge.f32.partialorder %v963, 8.0
      %vm996 = vcmp.ge.f32.partialorder %v964, 8.0
      %vm997 = vcmp.ge.f32.partialorder %v965, 8.0
      %vm998 = vcmp.ge.f32.partialorder %v966, 8.0
      %vm999 = vcmp.ge.f32.partialorder %v967, 8.0
      %vm1000 = vcmp.ge.f32.partialorder %v968, 8.0
      %vm1001 = vcmp.ge.f32.partialorder %v969, 8.0
      %vm1002 = vcmp.ge.f32.partialorder %v970, 8.0
      %vm1003 = vcmp.ge.f32.partialorder %v971, 8.0
      %vm1004 = vcmp.ge.f32.partialorder %v972, 8.0
      %vm1005 = vcmp.ge.f32.partialorder %v973, 8.0
      %vm1006 = vcmp.ge.f32.partialorder %v974, 8.0
      %vm1007 = vcmp.ge.f32.partialorder %v975, 8.0
      %vm1008 = vcmp.ge.f32.partialorder %v976, 8.0
      %v1009 = vadd.f32 %v881, 1.0
      %v1010 = vadd.f32 %v882, 1.0
      %v1011 = vadd.f32 %v883, 1.0
      %v1012 = vadd.f32 %v884, 1.0
      %v1013 = vadd.f32 %v885, 1.0
      %v1014 = vadd.f32 %v886, 1.0
      %v1015 = vadd.f32 %v887, 1.0
      %v1016 = vadd.f32 %v888, 1.0
      %v1017 = vadd.f32 %v889, 1.0
      %v1018 = vadd.f32 %v890, 1.0
      %v1019 = vadd.f32 %v891, 1.0
      %v1020 = vadd.f32 %v892, 1.0
      %v1021 = vadd.f32 %v893, 1.0
      %v1022 = vadd.f32 %v894, 1.0
      %v1023 = vadd.f32 %v895, 1.0
      %v1024 = vadd.f32 %v896, 1.0
      %v1025 = vadd.f32 %v897, 1.0
      %v1026 = vadd.f32 %v898, 1.0
      %v1027 = vadd.f32 %v899, 1.0
      %v1028 = vadd.f32 %v900, 1.0
      %v1029 = vadd.f32 %v901, 1.0
      %v1030 = vadd.f32 %v902, 1.0
      %v1031 = vadd.f32 %v903, 1.0
      %v1032 = vadd.f32 %v904, 1.0
      %v1033 = vadd.f32 %v905, 1.0
      %v1034 = vadd.f32 %v906, 1.0
      %v1035 = vadd.f32 %v907, 1.0
      %v1036 = vadd.f32 %v908, 1.0
      %v1037 = vadd.f32 %v909, 1.0
      %v1038 = vadd.f32 %v910, 1.0
      %v1039 = vadd.f32 %v911, 1.0
      %v1040 = vadd.f32 %v912, 1.0
      %v1041 = vsel %vm977, %v1009, %v881
      %v1042 = vsel %vm978, %v1010, %v882
      %v1043 = vsel %vm979, %v1011, %v883
      %v1044 = vsel %vm980, %v1012, %v884
      %v1045 = vsel %vm981, %v1013, %v885
      %v1046 = vsel %vm982, %v1014, %v886
      %v1047 = vsel %vm983, %v1015, %v887
      %v1048 = vsel %vm984, %v1016, %v888
      %v1049 = vsel %vm985, %v1017, %v889
      %v1050 = vsel %vm986, %v1018, %v890
      %v1051 = vsel %vm987, %v1019, %v891
      %v1052 = vsel %vm988, %v1020, %v892
      %v1053 = vsel %vm989, %v1021, %v893
      %v1054 = vsel %vm990, %v1022, %v894
      %v1055 = vsel %vm991, %v1023, %v895
      %v1056 = vsel %vm992, %v1024, %v896
      %v1057 = vsel %vm993, %v1025, %v897
      %v1058 = vsel %vm994, %v1026, %v898
      %v1059 = vsel %vm995, %v1027, %v899
      %v1060 = vsel %vm996, %v1028, %v900
      %v1061 = vsel %vm997, %v1029, %v901
      %v1062 = vsel %vm998, %v1030, %v902
      %v1063 = vsel %vm999, %v1031, %v903
      %v1064 = vsel %vm1000, %v1032, %v904
      %v1065 = vsel %vm1001, %v1033, %v905
      %v1066 = vsel %vm1002, %v1034, %v906
      %v1067 = vsel %vm1003, %v1035, %v907
      %v1068 = vsel %vm1004, %v1036, %v908
      %v1069 = vsel %vm1005, %v1037, %v909
      %v1070 = vsel %vm1006, %v1038, %v910
      %v1071 = vsel %vm1007, %v1039, %v911
      %v1072 = vsel %vm1008, %v1040, %v912
      %v1073 = vsub.f32 %v945, 8.0
      %v1074 = vsub.f32 %v946, 8.0
      %v1075 = vsub.f32 %v947, 8.0
      %v1076 = vsub.f32 %v948, 8.0
      %v1077 = vsub.f32 %v949, 8.0
      %v1078 = vsub.f32 %v950, 8.0
      %v1079 = vsub.f32 %v951, 8.0
      %v1080 = vsub.f32 %v952, 8.0
      %v1081 = vsub.f32 %v953, 8.0
      %v1082 = vsub.f32 %v954, 8.0
      %v1083 = vsub.f32 %v955, 8.0
      %v1084 = vsub.f32 %v956, 8.0
      %v1085 = vsub.f32 %v957, 8.0
      %v1086 = vsub.f32 %v958, 8.0
      %v1087 = vsub.f32 %v959, 8.0
      %v1088 = vsub.f32 %v960, 8.0
      %v1089 = vsub.f32 %v961, 8.0
      %v1090 = vsub.f32 %v962, 8.0
      %v1091 = vsub.f32 %v963, 8.0
      %v1092 = vsub.f32 %v964, 8.0
      %v1093 = vsub.f32 %v965, 8.0
      %v1094 = vsub.f32 %v966, 8.0
      %v1095 = vsub.f32 %v967, 8.0
      %v1096 = vsub.f32 %v968, 8.0
      %v1097 = vsub.f32 %v969, 8.0
      %v1098 = vsub.f32 %v970, 8.0
      %v1099 = vsub.f32 %v971, 8.0
      %v1100 = vsub.f32 %v972, 8.0
      %v1101 = vsub.f32 %v973, 8.0
      %v1102 = vsub.f32 %v974, 8.0
      %v1103 = vsub.f32 %v975, 8.0
      %v1104 = vsub.f32 %v976, 8.0
      %v1105 = vsel %vm977, %v1073, %v945
      %v1106 = vsel %vm978, %v1074, %v946
      %v1107 = vsel %vm979, %v1075, %v947
      %v1108 = vsel %vm980, %v1076, %v948
      %v1109 = vsel %vm981, %v1077, %v949
      %v1110 = vsel %vm982, %v1078, %v950
      %v1111 = vsel %vm983, %v1079, %v951
      %v1112 = vsel %vm984, %v1080, %v952
      %v1113 = vsel %vm985, %v1081, %v953
      %v1114 = vsel %vm986, %v1082, %v954
      %v1115 = vsel %vm987, %v1083, %v955
      %v1116 = vsel %vm988, %v1084, %v956
      %v1117 = vsel %vm989, %v1085, %v957
      %v1118 = vsel %vm990, %v1086, %v958
      %v1119 = vsel %vm991, %v1087, %v959
      %v1120 = vsel %vm992, %v1088, %v960
      %v1121 = vsel %vm993, %v1089, %v961
      %v1122 = vsel %vm994, %v1090, %v962
      %v1123 = vsel %vm995, %v1091, %v963
      %v1124 = vsel %vm996, %v1092, %v964
      %v1125 = vsel %vm997, %v1093, %v965
      %v1126 = vsel %vm998, %v1094, %v966
      %v1127 = vsel %vm999, %v1095, %v967
      %v1128 = vsel %vm1000, %v1096, %v968
      %v1129 = vsel %vm1001, %v1097, %v969
      %v1130 = vsel %vm1002, %v1098, %v970
      %v1131 = vsel %vm1003, %v1099, %v971
      %v1132 = vsel %vm1004, %v1100, %v972
      %v1133 = vsel %vm1005, %v1101, %v973
      %v1134 = vsel %vm1006, %v1102, %v974
      %v1135 = vsel %vm1007, %v1103, %v975
      %v1136 = vsel %vm1008, %v1104, %v976
      %1137 = vst [vmem:[#allocation2] sm:$0xff] 1e+38
      %1138 = vst [vmem:[#allocation2 + $0x8] sm:$0xff] 1e+38
      %1139 = vst [vmem:[#allocation2 + $0x10] sm:$0xff] 1e+38
      %1140 = vst [vmem:[#allocation2 + $0x18] sm:$0xff] 1e+38
      %1141 = vst [vmem:[#allocation2 + $0x20] sm:$0xff] 1e+38
      %1142 = vst [vmem:[#allocation2 + $0x28] sm:$0xff] 1e+38
      %1143 = vst [vmem:[#allocation2 + $0x30] sm:$0xff] 1e+38
      %1144 = vst [vmem:[#allocation2 + $0x38] sm:$0xff] 1e+38
      %1145 = vst [vmem:[#allocation2 + $0x40] sm:$0xff] 1e+38
      %1146 = vst [vmem:[#allocation2 + $0x48] sm:$0xff] 1e+38
      %1147 = vst [vmem:[#allocation2 + $0x50] sm:$0xff] 1e+38
      %1148 = vst [vmem:[#allocation2 + $0x58] sm:$0xff] 1e+38
      %1149 = vst [vmem:[#allocation2 + $0x60] sm:$0xff] 1e+38
      %1150 = vst [vmem:[#allocation2 + $0x68] sm:$0xff] 1e+38
      %1151 = vst [vmem:[#allocation2 + $0x70] sm:$0xff] 1e+38
      %1152 = vst [vmem:[#allocation2 + $0x78] sm:$0xff] 1e+38
      %1153 = vst [vmem:[#allocation2 + $0x80] sm:$0xff] 1e+38
      %1154 = vst [vmem:[#allocation2 + $0x88] sm:$0xff] 1e+38
      %1155 = vst [vmem:[#allocation2 + $0x90] sm:$0xff] 1e+38
      %1156 = vst [vmem:[#allocation2 + $0x98] sm:$0xff] 1e+38
      %1157 = vst [vmem:[#allocation2 + $0xa0] sm:$0xff] 1e+38
      %1158 = vst [vmem:[#allocation2 + $0xa8] sm:$0xff] 1e+38
      %1159 = vst [vmem:[#allocation2 + $0xb0] sm:$0xff] 1e+38
      %1160 = vst [vmem:[#allocation2 + $0xb8] sm:$0xff] 1e+38
      %1161 = vst [vmem:[#allocation2 + $0xc0] sm:$0xff] 1e+38
      %1162 = vst [vmem:[#allocation2 + $0xc8] sm:$0xff] 1e+38
      %1163 = vst [vmem:[#allocation2 + $0xd0] sm:$0xff] 1e+38
      %1164 = vst [vmem:[#allocation2 + $0xd8] sm:$0xff] 1e+38
      %1165 = vst [vmem:[#allocation2 + $0xe0] sm:$0xff] 1e+38
      %1166 = vst [vmem:[#allocation2 + $0xe8] sm:$0xff] 1e+38
      %1167 = vst [vmem:[#allocation2 + $0xf0] sm:$0xff] 1e+38
      %1168 = vst [vmem:[#allocation2 + $0xf8] sm:$0xff] 1e+38
      %1169 = vst [vmem:[#allocation2 + $0x100] sm:$0xff] 1e+38
      %1170 = vst [vmem:[#allocation2 + $0x108] sm:$0xff] 1e+38
      %1171 = vst [vmem:[#allocation2 + $0x110] sm:$0xff] 1e+38
      %1172 = vst [vmem:[#allocation2 + $0x118] sm:$0xff] 1e+38
      %1173 = vst [vmem:[#allocation2 + $0x120] sm:$0xff] 1e+38
      %1174 = vst [vmem:[#allocation2 + $0x128] sm:$0xff] 1e+38
      %1175 = vst [vmem:[#allocation2 + $0x130] sm:$0xff] 1e+38
      %1176 = vst [vmem:[#allocation2 + $0x138] sm:$0xff] 1e+38
      %1177 = vst [vmem:[#allocation2 + $0x140] sm:$0xff] 1e+38
      %1178 = vst [vmem:[#allocation2 + $0x148] sm:$0xff] 1e+38
      %1179 = vst [vmem:[#allocation2 + $0x150] sm:$0xff] 1e+38
      %1180 = vst [vmem:[#allocation2 + $0x158] sm:$0xff] 1e+38
      %1181 = vst [vmem:[#allocation2 + $0x160] sm:$0xff] 1e+38
      %1182 = vst [vmem:[#allocation2 + $0x168] sm:$0xff] 1e+38
      %1183 = vst [vmem:[#allocation2 + $0x170] sm:$0xff] 1e+38
      %1184 = vst [vmem:[#allocation2 + $0x178] sm:$0xff] 1e+38
      %1185 = vst [vmem:[#allocation2 + $0x180] sm:$0xff] 1e+38
      %1186 = vst [vmem:[#allocation2 + $0x188] sm:$0xff] 1e+38
      %1187 = vst [vmem:[#allocation2 + $0x190] sm:$0xff] 1e+38
      %1188 = vst [vmem:[#allocation2 + $0x198] sm:$0xff] 1e+38
      %1189 = vst [vmem:[#allocation2 + $0x1a0] sm:$0xff] 1e+38
      %1190 = vst [vmem:[#allocation2 + $0x1a8] sm:$0xff] 1e+38
      %1191 = vst [vmem:[#allocation2 + $0x1b0] sm:$0xff] 1e+38
      %1192 = vst [vmem:[#allocation2 + $0x1b8] sm:$0xff] 1e+38
      %1193 = vst [vmem:[#allocation2 + $0x1c0] sm:$0xff] 1e+38
      %1194 = vst [vmem:[#allocation2 + $0x1c8] sm:$0xff] 1e+38
      %1195 = vst [vmem:[#allocation2 + $0x1d0] sm:$0xff] 1e+38
      %1196 = vst [vmem:[#allocation2 + $0x1d8] sm:$0xff] 1e+38
      %1197 = vst [vmem:[#allocation2 + $0x1e0] sm:$0xff] 1e+38
      %1198 = vst [vmem:[#allocation2 + $0x1e8] sm:$0xff] 1e+38
      %1199 = vst [vmem:[#allocation2 + $0x1f0] sm:$0xff] 1e+38
      %1200 = vst [vmem:[#allocation2 + $0x1f8] sm:$0xff] 1e+38
      %1201 = vst [vmem:[#allocation2 + $0x200] sm:$0xff] 1e+38
      %1202 = vst [vmem:[#allocation2 + $0x208] sm:$0xff] 1e+38
      %1203 = vst [vmem:[#allocation2 + $0x210] sm:$0xff] 1e+38
      %1204 = vst [vmem:[#allocation2 + $0x218] sm:$0xff] 1e+38
      %1205 = vst [vmem:[#allocation2 + $0x220] sm:$0xff] 1e+38
      %1206 = vst [vmem:[#allocation2 + $0x228] sm:$0xff] 1e+38
      %1207 = vst [vmem:[#allocation2 + $0x230] sm:$0xff] 1e+38
      %1208 = vst [vmem:[#allocation2 + $0x238] sm:$0xff] 1e+38
      %1209 = vst [vmem:[#allocation2 + $0x240] sm:$0xff] 1e+38
      %1210 = vst [vmem:[#allocation2 + $0x248] sm:$0xff] 1e+38
      %1211 = vst [vmem:[#allocation2 + $0x250] sm:$0xff] 1e+38
      %1212 = vst [vmem:[#allocation2 + $0x258] sm:$0xff] 1e+38
      %1213 = vst [vmem:[#allocation2 + $0x260] sm:$0xff] 1e+38
      %1214 = vst [vmem:[#allocation2 + $0x268] sm:$0xff] 1e+38
      %1215 = vst [vmem:[#allocation2 + $0x270] sm:$0xff] 1e+38
      %1216 = vst [vmem:[#allocation2 + $0x278] sm:$0xff] 1e+38
      %1217 = vst [vmem:[#allocation2 + $0x280] sm:$0xff] 1e+38
      %1218 = vst [vmem:[#allocation2 + $0x288] sm:$0xff] 1e+38
      %1219 = vst [vmem:[#allocation2 + $0x290] sm:$0xff] 1e+38
      %1220 = vst [vmem:[#allocation2 + $0x298] sm:$0xff] 1e+38
      %1221 = vst [vmem:[#allocation2 + $0x2a0] sm:$0xff] 1e+38
      %1222 = vst [vmem:[#allocation2 + $0x2a8] sm:$0xff] 1e+38
      %1223 = vst [vmem:[#allocation2 + $0x2b0] sm:$0xff] 1e+38
      %1224 = vst [vmem:[#allocation2 + $0x2b8] sm:$0xff] 1e+38
      %1225 = vst [vmem:[#allocation2 + $0x2c0] sm:$0xff] 1e+38
      %1226 = vst [vmem:[#allocation2 + $0x2c8] sm:$0xff] 1e+38
      %1227 = vst [vmem:[#allocation2 + $0x2d0] sm:$0xff] 1e+38
      %1228 = vst [vmem:[#allocation2 + $0x2d8] sm:$0xff] 1e+38
      %1229 = vst [vmem:[#allocation2 + $0x2e0] sm:$0xff] 1e+38
      %1230 = vst [vmem:[#allocation2 + $0x2e8] sm:$0xff] 1e+38
      %1231 = vst [vmem:[#allocation2 + $0x2f0] sm:$0xff] 1e+38
      %1232 = vst [vmem:[#allocation2 + $0x2f8] sm:$0xff] 1e+38
      %1233 = vst [vmem:[#allocation2 + $0x300] sm:$0xff] 1e+38
      %1234 = vst [vmem:[#allocation2 + $0x308] sm:$0xff] 1e+38
      %1235 = vst [vmem:[#allocation2 + $0x310] sm:$0xff] 1e+38
      %1236 = vst [vmem:[#allocation2 + $0x318] sm:$0xff] 1e+38
      %1237 = vst [vmem:[#allocation2 + $0x320] sm:$0xff] 1e+38
      %1238 = vst [vmem:[#allocation2 + $0x328] sm:$0xff] 1e+38
      %1239 = vst [vmem:[#allocation2 + $0x330] sm:$0xff] 1e+38
      %1240 = vst [vmem:[#allocation2 + $0x338] sm:$0xff] 1e+38
      %1241 = vst [vmem:[#allocation2 + $0x340] sm:$0xff] 1e+38
      %1242 = vst [vmem:[#allocation2 + $0x348] sm:$0xff] 1e+38
      %1243 = vst [vmem:[#allocation2 + $0x350] sm:$0xff] 1e+38
      %1244 = vst [vmem:[#allocation2 + $0x358] sm:$0xff] 1e+38
      %1245 = vst [vmem:[#allocation2 + $0x360] sm:$0xff] 1e+38
      %1246 = vst [vmem:[#allocation2 + $0x368] sm:$0xff] 1e+38
      %1247 = vst [vmem:[#allocation2 + $0x370] sm:$0xff] 1e+38
      %1248 = vst [vmem:[#allocation2 + $0x378] sm:$0xff] 1e+38
      %1249 = vst [vmem:[#allocation2 + $0x380] sm:$0xff] 1e+38
      %1250 = vst [vmem:[#allocation2 + $0x388] sm:$0xff] 1e+38
      %1251 = vst [vmem:[#allocation2 + $0x390] sm:$0xff] 1e+38
      %1252 = vst [vmem:[#allocation2 + $0x398] sm:$0xff] 1e+38
      %1253 = vst [vmem:[#allocation2 + $0x3a0] sm:$0xff] 1e+38
      %1254 = vst [vmem:[#allocation2 + $0x3a8] sm:$0xff] 1e+38
      %1255 = vst [vmem:[#allocation2 + $0x3b0] sm:$0xff] 1e+38
      %1256 = vst [vmem:[#allocation2 + $0x3b8] sm:$0xff] 1e+38
      %1257 = vst [vmem:[#allocation2 + $0x3c0] sm:$0xff] 1e+38
      %1258 = vst [vmem:[#allocation2 + $0x3c8] sm:$0xff] 1e+38
      %1259 = vst [vmem:[#allocation2 + $0x3d0] sm:$0xff] 1e+38
      %1260 = vst [vmem:[#allocation2 + $0x3d8] sm:$0xff] 1e+38
      %1261 = vst [vmem:[#allocation2 + $0x3e0] sm:$0xff] 1e+38
      %1262 = vst [vmem:[#allocation2 + $0x3e8] sm:$0xff] 1e+38
      %1263 = vst [vmem:[#allocation2 + $0x3f0] sm:$0xff] 1e+38
      %1264 = vst [vmem:[#allocation2 + $0x3f8] sm:$0xff] 1e+38
      %v1265 = vlaneseq
      %v1266 = vand.u32 %v1265, 127
      %v1267 = vadd.s32 %v1266, 128
      %v1268 = vadd.s32 %v1266, 256
      %v1269 = vadd.s32 %v1266, 384
      %v1270 = vstv 0
      %v1271 = vadd.s32 %v1270, %v1266
      %v1272 = vadd.s32 %v1270, %v1267
      %v1273 = vadd.s32 %v1270, %v1268
      %v1274 = vadd.s32 %v1270, %v1269
      %v1275 = vcvt.s32.f32 %v1271
      %v1276 = vcvt.s32.f32 %v1272
      %v1277 = vcvt.s32.f32 %v1273
      %v1278 = vcvt.s32.f32 %v1274
      %v1279 = vmul.f32 %v1275, %v239
      %v1280 = vmul.f32 %v1276, %v239
      %v1281 = vmul.f32 %v1277, %v239
      %v1282 = vmul.f32 %v1278, %v239
      %v1283 = vfloor.f32 %v1279
      %v1284 = vfloor.f32 %v1280
      %v1285 = vfloor.f32 %v1281
      %v1286 = vfloor.f32 %v1282
      %v1287 = vmul.f32 %v1283, 64.0
      %v1288 = vmul.f32 %v1284, 64.0
      %v1289 = vmul.f32 %v1285, 64.0
      %v1290 = vmul.f32 %v1286, 64.0
      %v1291 = vsub.f32 %v1275, %v1287
      %v1292 = vsub.f32 %v1276, %v1288
      %v1293 = vsub.f32 %v1277, %v1289
      %v1294 = vsub.f32 %v1278, %v1290
      %vm1295 = vcmp.lt.f32.partialorder %v1291, 0.0
      %vm1296 = vcmp.lt.f32.partialorder %v1292, 0.0
      %vm1297 = vcmp.lt.f32.partialorder %v1293, 0.0
      %vm1298 = vcmp.lt.f32.partialorder %v1294, 0.0
      %v1299 = vsub.f32 %v1283, 1.0
      %v1300 = vsub.f32 %v1284, 1.0
      %v1301 = vsub.f32 %v1285, 1.0
      %v1302 = vsub.f32 %v1286, 1.0
      %v1303 = vsel %vm1295, %v1299, %v1283
      %v1304 = vsel %vm1296, %v1300, %v1284
      %v1305 = vsel %vm1297, %v1301, %v1285
      %v1306 = vsel %vm1298, %v1302, %v1286
      %v1307 = vadd.f32 %v1291, 64.0
      %v1308 = vadd.f32 %v1292, 64.0
      %v1309 = vadd.f32 %v1293, 64.0
      %v1310 = vadd.f32 %v1294, 64.0
      %v1311 = vsel %vm1295, %v1307, %v1291
      %v1312 = vsel %vm1296, %v1308, %v1292
      %v1313 = vsel %vm1297, %v1309, %v1293
      %v1314 = vsel %vm1298, %v1310, %v1294
      %vm1315 = vcmp.ge.f32.partialorder %v1311, 64.0
      %vm1316 = vcmp.ge.f32.partialorder %v1312, 64.0
      %vm1317 = vcmp.ge.f32.partialorder %v1313, 64.0
      %vm1318 = vcmp.ge.f32.partialorder %v1314, 64.0
      %v1319 = vadd.f32 %v1303, 1.0
      %v1320 = vadd.f32 %v1304, 1.0
      %v1321 = vadd.f32 %v1305, 1.0
      %v1322 = vadd.f32 %v1306, 1.0
      %v1323 = vsel %vm1315, %v1319, %v1303
      %v1324 = vsel %vm1316, %v1320, %v1304
      %v1325 = vsel %vm1317, %v1321, %v1305
      %v1326 = vsel %vm1318, %v1322, %v1306
      %v1327 = vsub.f32 %v1311, 64.0
      %v1328 = vsub.f32 %v1312, 64.0
      %v1329 = vsub.f32 %v1313, 64.0
      %v1330 = vsub.f32 %v1314, 64.0
      %v1331 = vsel %vm1315, %v1327, %v1311
      %v1332 = vsel %vm1316, %v1328, %v1312
      %v1333 = vsel %vm1317, %v1329, %v1313
      %v1334 = vsel %vm1318, %v1330, %v1314
      %v1335 = vmul.f32 %v1331, %v688
      %v1336 = vmul.f32 %v1332, %v688
      %v1337 = vmul.f32 %v1333, %v688
      %v1338 = vmul.f32 %v1334, %v688
      %v1339 = vfloor.f32 %v1335
      %v1340 = vfloor.f32 %v1336
      %v1341 = vfloor.f32 %v1337
      %v1342 = vfloor.f32 %v1338
      %v1343 = vmul.f32 %v1339, 8.0
      %v1344 = vmul.f32 %v1340, 8.0
      %v1345 = vmul.f32 %v1341, 8.0
      %v1346 = vmul.f32 %v1342, 8.0
      %v1347 = vsub.f32 %v1331, %v1343
      %v1348 = vsub.f32 %v1332, %v1344
      %v1349 = vsub.f32 %v1333, %v1345
      %v1350 = vsub.f32 %v1334, %v1346
      %vm1351 = vcmp.lt.f32.partialorder %v1347, 0.0
      %vm1352 = vcmp.lt.f32.partialorder %v1348, 0.0
      %vm1353 = vcmp.lt.f32.partialorder %v1349, 0.0
      %vm1354 = vcmp.lt.f32.partialorder %v1350, 0.0
      %v1355 = vsub.f32 %v1339, 1.0
      %v1356 = vsub.f32 %v1340, 1.0
      %v1357 = vsub.f32 %v1341, 1.0
      %v1358 = vsub.f32 %v1342, 1.0
      %v1359 = vsel %vm1351, %v1355, %v1339
      %v1360 = vsel %vm1352, %v1356, %v1340
      %v1361 = vsel %vm1353, %v1357, %v1341
      %v1362 = vsel %vm1354, %v1358, %v1342
      %v1363 = vadd.f32 %v1347, 8.0
      %v1364 = vadd.f32 %v1348, 8.0
      %v1365 = vadd.f32 %v1349, 8.0
      %v1366 = vadd.f32 %v1350, 8.0
      %v1367 = vsel %vm1351, %v1363, %v1347
      %v1368 = vsel %vm1352, %v1364, %v1348
      %v1369 = vsel %vm1353, %v1365, %v1349
      %v1370 = vsel %vm1354, %v1366, %v1350
      %vm1371 = vcmp.ge.f32.partialorder %v1367, 8.0
      %vm1372 = vcmp.ge.f32.partialorder %v1368, 8.0
      %vm1373 = vcmp.ge.f32.partialorder %v1369, 8.0
      %vm1374 = vcmp.ge.f32.partialorder %v1370, 8.0
      %v1375 = vadd.f32 %v1359, 1.0
      %v1376 = vadd.f32 %v1360, 1.0
      %v1377 = vadd.f32 %v1361, 1.0
      %v1378 = vadd.f32 %v1362, 1.0
      %v1379 = vsel %vm1371, %v1375, %v1359
      %v1380 = vsel %vm1372, %v1376, %v1360
      %v1381 = vsel %vm1373, %v1377, %v1361
      %v1382 = vsel %vm1374, %v1378, %v1362
      %v1383 = vsub.f32 %v1367, 8.0
      %v1384 = vsub.f32 %v1368, 8.0
      %v1385 = vsub.f32 %v1369, 8.0
      %v1386 = vsub.f32 %v1370, 8.0
      %v1387 = vsel %vm1371, %v1383, %v1367
      %v1388 = vsel %vm1372, %v1384, %v1368
      %v1389 = vsel %vm1373, %v1385, %v1369
      %v1390 = vsel %vm1374, %v1386, %v1370
      %v1391 = vld [vmem:[%s129] ss:$4 sm:$0xf]
      %s1392 = scalar_lea.vmem %s129, 1
      %v1393 = vld [vmem:[%s1392] ss:$4 sm:$0xf]
      %s1394 = scalar_lea.vmem %s129, 2
      %v1395 = vld [vmem:[%s1394] ss:$4 sm:$0xf]
      %v1397 = vlaneseq
      %v1398 = vshrl.u32 %v1397, 7
      %v1399 = vsub.s32 0, %v1398
      %v1400 = vrot.slane %v1391, %v1399
      %v1401 = vlaneseq
      %v1402 = vshrl.u32 %v1401, 7
      %v1403 = vsub.s32 1, %v1402
      %v1404 = vrot.slane %v1391, %v1403
      %v1405 = vlaneseq
      %v1406 = vshrl.u32 %v1405, 7
      %v1407 = vsub.s32 2, %v1406
      %v1408 = vrot.slane %v1391, %v1407
      %v1409 = vlaneseq
      %v1410 = vshrl.u32 %v1409, 7
      %v1411 = vsub.s32 3, %v1410
      %v1412 = vrot.slane %v1391, %v1411
      %v1417 = vadd.f32 %v1323, %v1400
      %v1418 = vadd.f32 %v1324, %v1404
      %v1419 = vadd.f32 %v1325, %v1408
      %v1420 = vadd.f32 %v1326, %v1412
      %v1421 = vlaneseq
      %v1422 = vshrl.u32 %v1421, 7
      %v1423 = vsub.s32 0, %v1422
      %v1424 = vrot.slane %v1417, %v1423
      %v1425 = vlaneseq
      %v1426 = vshrl.u32 %v1425, 7
      %v1427 = vsub.s32 0, %v1426
      %v1428 = vrot.slane %v1418, %v1427
      %v1429 = vlaneseq
      %v1430 = vshrl.u32 %v1429, 7
      %v1431 = vsub.s32 0, %v1430
      %v1432 = vrot.slane %v1419, %v1431
      %v1433 = vlaneseq
      %v1434 = vshrl.u32 %v1433, 7
      %v1435 = vsub.s32 0, %v1434
      %v1436 = vrot.slane %v1420, %v1435
      %v1437 = vsub.f32 %v592, %v1424
      %v1438 = vsub.f32 %v592, %v1428
      %v1439 = vsub.f32 %v592, %v1432
      %v1440 = vsub.f32 %v592, %v1436
      %v1441 = vsub.f32 %v593, %v1424
      %v1442 = vsub.f32 %v593, %v1428
      %v1443 = vsub.f32 %v593, %v1432
      %v1444 = vsub.f32 %v593, %v1436
      %v1445 = vsub.f32 %v594, %v1424
      %v1446 = vsub.f32 %v594, %v1428
      %v1447 = vsub.f32 %v594, %v1432
      %v1448 = vsub.f32 %v594, %v1436
      %v1449 = vsub.f32 %v595, %v1424
      %v1450 = vsub.f32 %v595, %v1428
      %v1451 = vsub.f32 %v595, %v1432
      %v1452 = vsub.f32 %v595, %v1436
      %v1453 = vsub.f32 %v596, %v1424
      %v1454 = vsub.f32 %v596, %v1428
      %v1455 = vsub.f32 %v596, %v1432
      %v1456 = vsub.f32 %v596, %v1436
      %v1457 = vsub.f32 %v597, %v1424
      %v1458 = vsub.f32 %v597, %v1428
      %v1459 = vsub.f32 %v597, %v1432
      %v1460 = vsub.f32 %v597, %v1436
      %v1461 = vsub.f32 %v598, %v1424
      %v1462 = vsub.f32 %v598, %v1428
      %v1463 = vsub.f32 %v598, %v1432
      %v1464 = vsub.f32 %v598, %v1436
      %v1465 = vsub.f32 %v599, %v1424
      %v1466 = vsub.f32 %v599, %v1428
      %v1467 = vsub.f32 %v599, %v1432
      %v1468 = vsub.f32 %v599, %v1436
      %v1469 = vsub.f32 %v600, %v1424
      %v1470 = vsub.f32 %v600, %v1428
      %v1471 = vsub.f32 %v600, %v1432
      %v1472 = vsub.f32 %v600, %v1436
      %v1473 = vsub.f32 %v601, %v1424
      %v1474 = vsub.f32 %v601, %v1428
      %v1475 = vsub.f32 %v601, %v1432
      %v1476 = vsub.f32 %v601, %v1436
      %v1477 = vsub.f32 %v602, %v1424
      %v1478 = vsub.f32 %v602, %v1428
      %v1479 = vsub.f32 %v602, %v1432
      %v1480 = vsub.f32 %v602, %v1436
      %v1481 = vsub.f32 %v603, %v1424
      %v1482 = vsub.f32 %v603, %v1428
      %v1483 = vsub.f32 %v603, %v1432
      %v1484 = vsub.f32 %v603, %v1436
      %v1485 = vsub.f32 %v604, %v1424
      %v1486 = vsub.f32 %v604, %v1428
      %v1487 = vsub.f32 %v604, %v1432
      %v1488 = vsub.f32 %v604, %v1436
      %v1489 = vsub.f32 %v605, %v1424
      %v1490 = vsub.f32 %v605, %v1428
      %v1491 = vsub.f32 %v605, %v1432
      %v1492 = vsub.f32 %v605, %v1436
      %v1493 = vsub.f32 %v606, %v1424
      %v1494 = vsub.f32 %v606, %v1428
      %v1495 = vsub.f32 %v606, %v1432
      %v1496 = vsub.f32 %v606, %v1436
      %v1497 = vsub.f32 %v607, %v1424
      %v1498 = vsub.f32 %v607, %v1428
      %v1499 = vsub.f32 %v607, %v1432
      %v1500 = vsub.f32 %v607, %v1436
      %v1501 = vsub.f32 %v608, %v1424
      %v1502 = vsub.f32 %v608, %v1428
      %v1503 = vsub.f32 %v608, %v1432
      %v1504 = vsub.f32 %v608, %v1436
      %v1505 = vsub.f32 %v609, %v1424
      %v1506 = vsub.f32 %v609, %v1428
      %v1507 = vsub.f32 %v609, %v1432
      %v1508 = vsub.f32 %v609, %v1436
      %v1509 = vsub.f32 %v610, %v1424
      %v1510 = vsub.f32 %v610, %v1428
      %v1511 = vsub.f32 %v610, %v1432
      %v1512 = vsub.f32 %v610, %v1436
      %v1513 = vsub.f32 %v611, %v1424
      %v1514 = vsub.f32 %v611, %v1428
      %v1515 = vsub.f32 %v611, %v1432
      %v1516 = vsub.f32 %v611, %v1436
      %v1517 = vsub.f32 %v612, %v1424
      %v1518 = vsub.f32 %v612, %v1428
      %v1519 = vsub.f32 %v612, %v1432
      %v1520 = vsub.f32 %v612, %v1436
      %v1521 = vsub.f32 %v613, %v1424
      %v1522 = vsub.f32 %v613, %v1428
      %v1523 = vsub.f32 %v613, %v1432
      %v1524 = vsub.f32 %v613, %v1436
      %v1525 = vsub.f32 %v614, %v1424
      %v1526 = vsub.f32 %v614, %v1428
      %v1527 = vsub.f32 %v614, %v1432
      %v1528 = vsub.f32 %v614, %v1436
      %v1529 = vsub.f32 %v615, %v1424
      %v1530 = vsub.f32 %v615, %v1428
      %v1531 = vsub.f32 %v615, %v1432
      %v1532 = vsub.f32 %v615, %v1436
      %v1533 = vsub.f32 %v616, %v1424
      %v1534 = vsub.f32 %v616, %v1428
      %v1535 = vsub.f32 %v616, %v1432
      %v1536 = vsub.f32 %v616, %v1436
      %v1537 = vsub.f32 %v617, %v1424
      %v1538 = vsub.f32 %v617, %v1428
      %v1539 = vsub.f32 %v617, %v1432
      %v1540 = vsub.f32 %v617, %v1436
      %v1541 = vsub.f32 %v618, %v1424
      %v1542 = vsub.f32 %v618, %v1428
      %v1543 = vsub.f32 %v618, %v1432
      %v1544 = vsub.f32 %v618, %v1436
      %v1545 = vsub.f32 %v619, %v1424
      %v1546 = vsub.f32 %v619, %v1428
      %v1547 = vsub.f32 %v619, %v1432
      %v1548 = vsub.f32 %v619, %v1436
      %v1549 = vsub.f32 %v620, %v1424
      %v1550 = vsub.f32 %v620, %v1428
      %v1551 = vsub.f32 %v620, %v1432
      %v1552 = vsub.f32 %v620, %v1436
      %v1553 = vsub.f32 %v621, %v1424
      %v1554 = vsub.f32 %v621, %v1428
      %v1555 = vsub.f32 %v621, %v1432
      %v1556 = vsub.f32 %v621, %v1436
      %v1557 = vsub.f32 %v622, %v1424
      %v1558 = vsub.f32 %v622, %v1428
      %v1559 = vsub.f32 %v622, %v1432
      %v1560 = vsub.f32 %v622, %v1436
      %v1561 = vsub.f32 %v623, %v1424
      %v1562 = vsub.f32 %v623, %v1428
      %v1563 = vsub.f32 %v623, %v1432
      %v1564 = vsub.f32 %v623, %v1436
      %v1566 = vlaneseq
      %v1567 = vshrl.u32 %v1566, 7
      %v1568 = vsub.s32 0, %v1567
      %v1569 = vrot.slane %v1393, %v1568
      %v1570 = vlaneseq
      %v1571 = vshrl.u32 %v1570, 7
      %v1572 = vsub.s32 1, %v1571
      %v1573 = vrot.slane %v1393, %v1572
      %v1574 = vlaneseq
      %v1575 = vshrl.u32 %v1574, 7
      %v1576 = vsub.s32 2, %v1575
      %v1577 = vrot.slane %v1393, %v1576
      %v1578 = vlaneseq
      %v1579 = vshrl.u32 %v1578, 7
      %v1580 = vsub.s32 3, %v1579
      %v1581 = vrot.slane %v1393, %v1580
      %v1586 = vadd.f32 %v1379, %v1569
      %v1587 = vadd.f32 %v1380, %v1573
      %v1588 = vadd.f32 %v1381, %v1577
      %v1589 = vadd.f32 %v1382, %v1581
      %v1590 = vlaneseq
      %v1591 = vshrl.u32 %v1590, 7
      %v1592 = vsub.s32 0, %v1591
      %v1593 = vrot.slane %v1586, %v1592
      %v1594 = vlaneseq
      %v1595 = vshrl.u32 %v1594, 7
      %v1596 = vsub.s32 0, %v1595
      %v1597 = vrot.slane %v1587, %v1596
      %v1598 = vlaneseq
      %v1599 = vshrl.u32 %v1598, 7
      %v1600 = vsub.s32 0, %v1599
      %v1601 = vrot.slane %v1588, %v1600
      %v1602 = vlaneseq
      %v1603 = vshrl.u32 %v1602, 7
      %v1604 = vsub.s32 0, %v1603
      %v1605 = vrot.slane %v1589, %v1604
      %v1606 = vsub.f32 %v1041, %v1593
      %v1607 = vsub.f32 %v1041, %v1597
      %v1608 = vsub.f32 %v1041, %v1601
      %v1609 = vsub.f32 %v1041, %v1605
      %v1610 = vsub.f32 %v1042, %v1593
      %v1611 = vsub.f32 %v1042, %v1597
      %v1612 = vsub.f32 %v1042, %v1601
      %v1613 = vsub.f32 %v1042, %v1605
      %v1614 = vsub.f32 %v1043, %v1593
      %v1615 = vsub.f32 %v1043, %v1597
      %v1616 = vsub.f32 %v1043, %v1601
      %v1617 = vsub.f32 %v1043, %v1605
      %v1618 = vsub.f32 %v1044, %v1593
      %v1619 = vsub.f32 %v1044, %v1597
      %v1620 = vsub.f32 %v1044, %v1601
      %v1621 = vsub.f32 %v1044, %v1605
      %v1622 = vsub.f32 %v1045, %v1593
      %v1623 = vsub.f32 %v1045, %v1597
      %v1624 = vsub.f32 %v1045, %v1601
      %v1625 = vsub.f32 %v1045, %v1605
      %v1626 = vsub.f32 %v1046, %v1593
      %v1627 = vsub.f32 %v1046, %v1597
      %v1628 = vsub.f32 %v1046, %v1601
      %v1629 = vsub.f32 %v1046, %v1605
      %v1630 = vsub.f32 %v1047, %v1593
      %v1631 = vsub.f32 %v1047, %v1597
      %v1632 = vsub.f32 %v1047, %v1601
      %v1633 = vsub.f32 %v1047, %v1605
      %v1634 = vsub.f32 %v1048, %v1593
      %v1635 = vsub.f32 %v1048, %v1597
      %v1636 = vsub.f32 %v1048, %v1601
      %v1637 = vsub.f32 %v1048, %v1605
      %v1638 = vsub.f32 %v1049, %v1593
      %v1639 = vsub.f32 %v1049, %v1597
      %v1640 = vsub.f32 %v1049, %v1601
      %v1641 = vsub.f32 %v1049, %v1605
      %v1642 = vsub.f32 %v1050, %v1593
      %v1643 = vsub.f32 %v1050, %v1597
      %v1644 = vsub.f32 %v1050, %v1601
      %v1645 = vsub.f32 %v1050, %v1605
      %v1646 = vsub.f32 %v1051, %v1593
      %v1647 = vsub.f32 %v1051, %v1597
      %v1648 = vsub.f32 %v1051, %v1601
      %v1649 = vsub.f32 %v1051, %v1605
      %v1650 = vsub.f32 %v1052, %v1593
      %v1651 = vsub.f32 %v1052, %v1597
      %v1652 = vsub.f32 %v1052, %v1601
      %v1653 = vsub.f32 %v1052, %v1605
      %v1654 = vsub.f32 %v1053, %v1593
      %v1655 = vsub.f32 %v1053, %v1597
      %v1656 = vsub.f32 %v1053, %v1601
      %v1657 = vsub.f32 %v1053, %v1605
      %v1658 = vsub.f32 %v1054, %v1593
      %v1659 = vsub.f32 %v1054, %v1597
      %v1660 = vsub.f32 %v1054, %v1601
      %v1661 = vsub.f32 %v1054, %v1605
      %v1662 = vsub.f32 %v1055, %v1593
      %v1663 = vsub.f32 %v1055, %v1597
      %v1664 = vsub.f32 %v1055, %v1601
      %v1665 = vsub.f32 %v1055, %v1605
      %v1666 = vsub.f32 %v1056, %v1593
      %v1667 = vsub.f32 %v1056, %v1597
      %v1668 = vsub.f32 %v1056, %v1601
      %v1669 = vsub.f32 %v1056, %v1605
      %v1670 = vsub.f32 %v1057, %v1593
      %v1671 = vsub.f32 %v1057, %v1597
      %v1672 = vsub.f32 %v1057, %v1601
      %v1673 = vsub.f32 %v1057, %v1605
      %v1674 = vsub.f32 %v1058, %v1593
      %v1675 = vsub.f32 %v1058, %v1597
      %v1676 = vsub.f32 %v1058, %v1601
      %v1677 = vsub.f32 %v1058, %v1605
      %v1678 = vsub.f32 %v1059, %v1593
      %v1679 = vsub.f32 %v1059, %v1597
      %v1680 = vsub.f32 %v1059, %v1601
      %v1681 = vsub.f32 %v1059, %v1605
      %v1682 = vsub.f32 %v1060, %v1593
      %v1683 = vsub.f32 %v1060, %v1597
      %v1684 = vsub.f32 %v1060, %v1601
      %v1685 = vsub.f32 %v1060, %v1605
      %v1686 = vsub.f32 %v1061, %v1593
      %v1687 = vsub.f32 %v1061, %v1597
      %v1688 = vsub.f32 %v1061, %v1601
      %v1689 = vsub.f32 %v1061, %v1605
      %v1690 = vsub.f32 %v1062, %v1593
      %v1691 = vsub.f32 %v1062, %v1597
      %v1692 = vsub.f32 %v1062, %v1601
      %v1693 = vsub.f32 %v1062, %v1605
      %v1694 = vsub.f32 %v1063, %v1593
      %v1695 = vsub.f32 %v1063, %v1597
      %v1696 = vsub.f32 %v1063, %v1601
      %v1697 = vsub.f32 %v1063, %v1605
      %v1698 = vsub.f32 %v1064, %v1593
      %v1699 = vsub.f32 %v1064, %v1597
      %v1700 = vsub.f32 %v1064, %v1601
      %v1701 = vsub.f32 %v1064, %v1605
      %v1702 = vsub.f32 %v1065, %v1593
      %v1703 = vsub.f32 %v1065, %v1597
      %v1704 = vsub.f32 %v1065, %v1601
      %v1705 = vsub.f32 %v1065, %v1605
      %v1706 = vsub.f32 %v1066, %v1593
      %v1707 = vsub.f32 %v1066, %v1597
      %v1708 = vsub.f32 %v1066, %v1601
      %v1709 = vsub.f32 %v1066, %v1605
      %v1710 = vsub.f32 %v1067, %v1593
      %v1711 = vsub.f32 %v1067, %v1597
      %v1712 = vsub.f32 %v1067, %v1601
      %v1713 = vsub.f32 %v1067, %v1605
      %v1714 = vsub.f32 %v1068, %v1593
      %v1715 = vsub.f32 %v1068, %v1597
      %v1716 = vsub.f32 %v1068, %v1601
      %v1717 = vsub.f32 %v1068, %v1605
      %v1718 = vsub.f32 %v1069, %v1593
      %v1719 = vsub.f32 %v1069, %v1597
      %v1720 = vsub.f32 %v1069, %v1601
      %v1721 = vsub.f32 %v1069, %v1605
      %v1722 = vsub.f32 %v1070, %v1593
      %v1723 = vsub.f32 %v1070, %v1597
      %v1724 = vsub.f32 %v1070, %v1601
      %v1725 = vsub.f32 %v1070, %v1605
      %v1726 = vsub.f32 %v1071, %v1593
      %v1727 = vsub.f32 %v1071, %v1597
      %v1728 = vsub.f32 %v1071, %v1601
      %v1729 = vsub.f32 %v1071, %v1605
      %v1730 = vsub.f32 %v1072, %v1593
      %v1731 = vsub.f32 %v1072, %v1597
      %v1732 = vsub.f32 %v1072, %v1601
      %v1733 = vsub.f32 %v1072, %v1605
      %v1735 = vlaneseq
      %v1736 = vshrl.u32 %v1735, 7
      %v1737 = vsub.s32 0, %v1736
      %v1738 = vrot.slane %v1395, %v1737
      %v1739 = vlaneseq
      %v1740 = vshrl.u32 %v1739, 7
      %v1741 = vsub.s32 1, %v1740
      %v1742 = vrot.slane %v1395, %v1741
      %v1743 = vlaneseq
      %v1744 = vshrl.u32 %v1743, 7
      %v1745 = vsub.s32 2, %v1744
      %v1746 = vrot.slane %v1395, %v1745
      %v1747 = vlaneseq
      %v1748 = vshrl.u32 %v1747, 7
      %v1749 = vsub.s32 3, %v1748
      %v1750 = vrot.slane %v1395, %v1749
      %v1755 = vadd.f32 %v1387, %v1738
      %v1756 = vadd.f32 %v1388, %v1742
      %v1757 = vadd.f32 %v1389, %v1746
      %v1758 = vadd.f32 %v1390, %v1750
      %v1759 = vlaneseq
      %v1760 = vshrl.u32 %v1759, 7
      %v1761 = vsub.s32 0, %v1760
      %v1762 = vrot.slane %v1755, %v1761
      %v1763 = vlaneseq
      %v1764 = vshrl.u32 %v1763, 7
      %v1765 = vsub.s32 0, %v1764
      %v1766 = vrot.slane %v1756, %v1765
      %v1767 = vlaneseq
      %v1768 = vshrl.u32 %v1767, 7
      %v1769 = vsub.s32 0, %v1768
      %v1770 = vrot.slane %v1757, %v1769
      %v1771 = vlaneseq
      %v1772 = vshrl.u32 %v1771, 7
      %v1773 = vsub.s32 0, %v1772
      %v1774 = vrot.slane %v1758, %v1773
      %v1775 = vsub.f32 %v1105, %v1762
      %v1776 = vsub.f32 %v1105, %v1766
      %v1777 = vsub.f32 %v1105, %v1770
      %v1778 = vsub.f32 %v1105, %v1774
      %v1779 = vsub.f32 %v1106, %v1762
      %v1780 = vsub.f32 %v1106, %v1766
      %v1781 = vsub.f32 %v1106, %v1770
      %v1782 = vsub.f32 %v1106, %v1774
      %v1783 = vsub.f32 %v1107, %v1762
      %v1784 = vsub.f32 %v1107, %v1766
      %v1785 = vsub.f32 %v1107, %v1770
      %v1786 = vsub.f32 %v1107, %v1774
      %v1787 = vsub.f32 %v1108, %v1762
      %v1788 = vsub.f32 %v1108, %v1766
      %v1789 = vsub.f32 %v1108, %v1770
      %v1790 = vsub.f32 %v1108, %v1774
      %v1791 = vsub.f32 %v1109, %v1762
      %v1792 = vsub.f32 %v1109, %v1766
      %v1793 = vsub.f32 %v1109, %v1770
      %v1794 = vsub.f32 %v1109, %v1774
      %v1795 = vsub.f32 %v1110, %v1762
      %v1796 = vsub.f32 %v1110, %v1766
      %v1797 = vsub.f32 %v1110, %v1770
      %v1798 = vsub.f32 %v1110, %v1774
      %v1799 = vsub.f32 %v1111, %v1762
      %v1800 = vsub.f32 %v1111, %v1766
      %v1801 = vsub.f32 %v1111, %v1770
      %v1802 = vsub.f32 %v1111, %v1774
      %v1803 = vsub.f32 %v1112, %v1762
      %v1804 = vsub.f32 %v1112, %v1766
      %v1805 = vsub.f32 %v1112, %v1770
      %v1806 = vsub.f32 %v1112, %v1774
      %v1807 = vsub.f32 %v1113, %v1762
      %v1808 = vsub.f32 %v1113, %v1766
      %v1809 = vsub.f32 %v1113, %v1770
      %v1810 = vsub.f32 %v1113, %v1774
      %v1811 = vsub.f32 %v1114, %v1762
      %v1812 = vsub.f32 %v1114, %v1766
      %v1813 = vsub.f32 %v1114, %v1770
      %v1814 = vsub.f32 %v1114, %v1774
      %v1815 = vsub.f32 %v1115, %v1762
      %v1816 = vsub.f32 %v1115, %v1766
      %v1817 = vsub.f32 %v1115, %v1770
      %v1818 = vsub.f32 %v1115, %v1774
      %v1819 = vsub.f32 %v1116, %v1762
      %v1820 = vsub.f32 %v1116, %v1766
      %v1821 = vsub.f32 %v1116, %v1770
      %v1822 = vsub.f32 %v1116, %v1774
      %v1823 = vsub.f32 %v1117, %v1762
      %v1824 = vsub.f32 %v1117, %v1766
      %v1825 = vsub.f32 %v1117, %v1770
      %v1826 = vsub.f32 %v1117, %v1774
      %v1827 = vsub.f32 %v1118, %v1762
      %v1828 = vsub.f32 %v1118, %v1766
      %v1829 = vsub.f32 %v1118, %v1770
      %v1830 = vsub.f32 %v1118, %v1774
      %v1831 = vsub.f32 %v1119, %v1762
      %v1832 = vsub.f32 %v1119, %v1766
      %v1833 = vsub.f32 %v1119, %v1770
      %v1834 = vsub.f32 %v1119, %v1774
      %v1835 = vsub.f32 %v1120, %v1762
      %v1836 = vsub.f32 %v1120, %v1766
      %v1837 = vsub.f32 %v1120, %v1770
      %v1838 = vsub.f32 %v1120, %v1774
      %v1839 = vsub.f32 %v1121, %v1762
      %v1840 = vsub.f32 %v1121, %v1766
      %v1841 = vsub.f32 %v1121, %v1770
      %v1842 = vsub.f32 %v1121, %v1774
      %v1843 = vsub.f32 %v1122, %v1762
      %v1844 = vsub.f32 %v1122, %v1766
      %v1845 = vsub.f32 %v1122, %v1770
      %v1846 = vsub.f32 %v1122, %v1774
      %v1847 = vsub.f32 %v1123, %v1762
      %v1848 = vsub.f32 %v1123, %v1766
      %v1849 = vsub.f32 %v1123, %v1770
      %v1850 = vsub.f32 %v1123, %v1774
      %v1851 = vsub.f32 %v1124, %v1762
      %v1852 = vsub.f32 %v1124, %v1766
      %v1853 = vsub.f32 %v1124, %v1770
      %v1854 = vsub.f32 %v1124, %v1774
      %v1855 = vsub.f32 %v1125, %v1762
      %v1856 = vsub.f32 %v1125, %v1766
      %v1857 = vsub.f32 %v1125, %v1770
      %v1858 = vsub.f32 %v1125, %v1774
      %v1859 = vsub.f32 %v1126, %v1762
      %v1860 = vsub.f32 %v1126, %v1766
      %v1861 = vsub.f32 %v1126, %v1770
      %v1862 = vsub.f32 %v1126, %v1774
      %v1863 = vsub.f32 %v1127, %v1762
      %v1864 = vsub.f32 %v1127, %v1766
      %v1865 = vsub.f32 %v1127, %v1770
      %v1866 = vsub.f32 %v1127, %v1774
      %v1867 = vsub.f32 %v1128, %v1762
      %v1868 = vsub.f32 %v1128, %v1766
      %v1869 = vsub.f32 %v1128, %v1770
      %v1870 = vsub.f32 %v1128, %v1774
      %v1871 = vsub.f32 %v1129, %v1762
      %v1872 = vsub.f32 %v1129, %v1766
      %v1873 = vsub.f32 %v1129, %v1770
      %v1874 = vsub.f32 %v1129, %v1774
      %v1875 = vsub.f32 %v1130, %v1762
      %v1876 = vsub.f32 %v1130, %v1766
      %v1877 = vsub.f32 %v1130, %v1770
      %v1878 = vsub.f32 %v1130, %v1774
      %v1879 = vsub.f32 %v1131, %v1762
      %v1880 = vsub.f32 %v1131, %v1766
      %v1881 = vsub.f32 %v1131, %v1770
      %v1882 = vsub.f32 %v1131, %v1774
      %v1883 = vsub.f32 %v1132, %v1762
      %v1884 = vsub.f32 %v1132, %v1766
      %v1885 = vsub.f32 %v1132, %v1770
      %v1886 = vsub.f32 %v1132, %v1774
      %v1887 = vsub.f32 %v1133, %v1762
      %v1888 = vsub.f32 %v1133, %v1766
      %v1889 = vsub.f32 %v1133, %v1770
      %v1890 = vsub.f32 %v1133, %v1774
      %v1891 = vsub.f32 %v1134, %v1762
      %v1892 = vsub.f32 %v1134, %v1766
      %v1893 = vsub.f32 %v1134, %v1770
      %v1894 = vsub.f32 %v1134, %v1774
      %v1895 = vsub.f32 %v1135, %v1762
      %v1896 = vsub.f32 %v1135, %v1766
      %v1897 = vsub.f32 %v1135, %v1770
      %v1898 = vsub.f32 %v1135, %v1774
      %v1899 = vsub.f32 %v1136, %v1762
      %v1900 = vsub.f32 %v1136, %v1766
      %v1901 = vsub.f32 %v1136, %v1770
      %v1902 = vsub.f32 %v1136, %v1774
      %v1903 = vmul.f32 %v1437, %v1437
      %v1904 = vmul.f32 %v1438, %v1438
      %v1905 = vmul.f32 %v1439, %v1439
      %v1906 = vmul.f32 %v1440, %v1440
      %v1907 = vmul.f32 %v1441, %v1441
      %v1908 = vmul.f32 %v1442, %v1442
      %v1909 = vmul.f32 %v1443, %v1443
      %v1910 = vmul.f32 %v1444, %v1444
      %v1911 = vmul.f32 %v1445, %v1445
      %v1912 = vmul.f32 %v1446, %v1446
      %v1913 = vmul.f32 %v1447, %v1447
      %v1914 = vmul.f32 %v1448, %v1448
      %v1915 = vmul.f32 %v1449, %v1449
      %v1916 = vmul.f32 %v1450, %v1450
      %v1917 = vmul.f32 %v1451, %v1451
      %v1918 = vmul.f32 %v1452, %v1452
      %v1919 = vmul.f32 %v1453, %v1453
      %v1920 = vmul.f32 %v1454, %v1454
      %v1921 = vmul.f32 %v1455, %v1455
      %v1922 = vmul.f32 %v1456, %v1456
      %v1923 = vmul.f32 %v1457, %v1457
      %v1924 = vmul.f32 %v1458, %v1458
      %v1925 = vmul.f32 %v1459, %v1459
      %v1926 = vmul.f32 %v1460, %v1460
      %v1927 = vmul.f32 %v1461, %v1461
      %v1928 = vmul.f32 %v1462, %v1462
      %v1929 = vmul.f32 %v1463, %v1463
      %v1930 = vmul.f32 %v1464, %v1464
      %v1931 = vmul.f32 %v1465, %v1465
      %v1932 = vmul.f32 %v1466, %v1466
      %v1933 = vmul.f32 %v1467, %v1467
      %v1934 = vmul.f32 %v1468, %v1468
      %v1935 = vmul.f32 %v1469, %v1469
      %v1936 = vmul.f32 %v1470, %v1470
      %v1937 = vmul.f32 %v1471, %v1471
      %v1938 = vmul.f32 %v1472, %v1472
      %v1939 = vmul.f32 %v1473, %v1473
      %v1940 = vmul.f32 %v1474, %v1474
      %v1941 = vmul.f32 %v1475, %v1475
      %v1942 = vmul.f32 %v1476, %v1476
      %v1943 = vmul.f32 %v1477, %v1477
      %v1944 = vmul.f32 %v1478, %v1478
      %v1945 = vmul.f32 %v1479, %v1479
      %v1946 = vmul.f32 %v1480, %v1480
      %v1947 = vmul.f32 %v1481, %v1481
      %v1948 = vmul.f32 %v1482, %v1482
      %v1949 = vmul.f32 %v1483, %v1483
      %v1950 = vmul.f32 %v1484, %v1484
      %v1951 = vmul.f32 %v1485, %v1485
      %v1952 = vmul.f32 %v1486, %v1486
      %v1953 = vmul.f32 %v1487, %v1487
      %v1954 = vmul.f32 %v1488, %v1488
      %v1955 = vmul.f32 %v1489, %v1489
      %v1956 = vmul.f32 %v1490, %v1490
      %v1957 = vmul.f32 %v1491, %v1491
      %v1958 = vmul.f32 %v1492, %v1492
      %v1959 = vmul.f32 %v1493, %v1493
      %v1960 = vmul.f32 %v1494, %v1494
      %v1961 = vmul.f32 %v1495, %v1495
      %v1962 = vmul.f32 %v1496, %v1496
      %v1963 = vmul.f32 %v1497, %v1497
      %v1964 = vmul.f32 %v1498, %v1498
      %v1965 = vmul.f32 %v1499, %v1499
      %v1966 = vmul.f32 %v1500, %v1500
      %v1967 = vmul.f32 %v1501, %v1501
      %v1968 = vmul.f32 %v1502, %v1502
      %v1969 = vmul.f32 %v1503, %v1503
      %v1970 = vmul.f32 %v1504, %v1504
      %v1971 = vmul.f32 %v1505, %v1505
      %v1972 = vmul.f32 %v1506, %v1506
      %v1973 = vmul.f32 %v1507, %v1507
      %v1974 = vmul.f32 %v1508, %v1508
      %v1975 = vmul.f32 %v1509, %v1509
      %v1976 = vmul.f32 %v1510, %v1510
      %v1977 = vmul.f32 %v1511, %v1511
      %v1978 = vmul.f32 %v1512, %v1512
      %v1979 = vmul.f32 %v1513, %v1513
      %v1980 = vmul.f32 %v1514, %v1514
      %v1981 = vmul.f32 %v1515, %v1515
      %v1982 = vmul.f32 %v1516, %v1516
      %v1983 = vmul.f32 %v1517, %v1517
      %v1984 = vmul.f32 %v1518, %v1518
      %v1985 = vmul.f32 %v1519, %v1519
      %v1986 = vmul.f32 %v1520, %v1520
      %v1987 = vmul.f32 %v1521, %v1521
      %v1988 = vmul.f32 %v1522, %v1522
      %v1989 = vmul.f32 %v1523, %v1523
      %v1990 = vmul.f32 %v1524, %v1524
      %v1991 = vmul.f32 %v1525, %v1525
      %v1992 = vmul.f32 %v1526, %v1526
      %v1993 = vmul.f32 %v1527, %v1527
      %v1994 = vmul.f32 %v1528, %v1528
      %v1995 = vmul.f32 %v1529, %v1529
      %v1996 = vmul.f32 %v1530, %v1530
      %v1997 = vmul.f32 %v1531, %v1531
      %v1998 = vmul.f32 %v1532, %v1532
      %v1999 = vmul.f32 %v1533, %v1533
      %v2000 = vmul.f32 %v1534, %v1534
      %v2001 = vmul.f32 %v1535, %v1535
      %v2002 = vmul.f32 %v1536, %v1536
      %v2003 = vmul.f32 %v1537, %v1537
      %v2004 = vmul.f32 %v1538, %v1538
      %v2005 = vmul.f32 %v1539, %v1539
      %v2006 = vmul.f32 %v1540, %v1540
      %v2007 = vmul.f32 %v1541, %v1541
      %v2008 = vmul.f32 %v1542, %v1542
      %v2009 = vmul.f32 %v1543, %v1543
      %v2010 = vmul.f32 %v1544, %v1544
      %v2011 = vmul.f32 %v1545, %v1545
      %v2012 = vmul.f32 %v1546, %v1546
      %v2013 = vmul.f32 %v1547, %v1547
      %v2014 = vmul.f32 %v1548, %v1548
      %v2015 = vmul.f32 %v1549, %v1549
      %v2016 = vmul.f32 %v1550, %v1550
      %v2017 = vmul.f32 %v1551, %v1551
      %v2018 = vmul.f32 %v1552, %v1552
      %v2019 = vmul.f32 %v1553, %v1553
      %v2020 = vmul.f32 %v1554, %v1554
      %v2021 = vmul.f32 %v1555, %v1555
      %v2022 = vmul.f32 %v1556, %v1556
      %v2023 = vmul.f32 %v1557, %v1557
      %v2024 = vmul.f32 %v1558, %v1558
      %v2025 = vmul.f32 %v1559, %v1559
      %v2026 = vmul.f32 %v1560, %v1560
      %v2027 = vmul.f32 %v1561, %v1561
      %v2028 = vmul.f32 %v1562, %v1562
      %v2029 = vmul.f32 %v1563, %v1563
      %v2030 = vmul.f32 %v1564, %v1564
      %v2031 = vmul.f32 %v1606, %v1606
      %v2032 = vmul.f32 %v1607, %v1607
      %v2033 = vmul.f32 %v1608, %v1608
      %v2034 = vmul.f32 %v1609, %v1609
      %v2035 = vmul.f32 %v1610, %v1610
      %v2036 = vmul.f32 %v1611, %v1611
      %v2037 = vmul.f32 %v1612, %v1612
      %v2038 = vmul.f32 %v1613, %v1613
      %v2039 = vmul.f32 %v1614, %v1614
      %v2040 = vmul.f32 %v1615, %v1615
      %v2041 = vmul.f32 %v1616, %v1616
      %v2042 = vmul.f32 %v1617, %v1617
      %v2043 = vmul.f32 %v1618, %v1618
      %v2044 = vmul.f32 %v1619, %v1619
      %v2045 = vmul.f32 %v1620, %v1620
      %v2046 = vmul.f32 %v1621, %v1621
      %v2047 = vmul.f32 %v1622, %v1622
      %v2048 = vmul.f32 %v1623, %v1623
      %v2049 = vmul.f32 %v1624, %v1624
      %v2050 = vmul.f32 %v1625, %v1625
      %v2051 = vmul.f32 %v1626, %v1626
      %v2052 = vmul.f32 %v1627, %v1627
      %v2053 = vmul.f32 %v1628, %v1628
      %v2054 = vmul.f32 %v1629, %v1629
      %v2055 = vmul.f32 %v1630, %v1630
      %v2056 = vmul.f32 %v1631, %v1631
      %v2057 = vmul.f32 %v1632, %v1632
      %v2058 = vmul.f32 %v1633, %v1633
      %v2059 = vmul.f32 %v1634, %v1634
      %v2060 = vmul.f32 %v1635, %v1635
      %v2061 = vmul.f32 %v1636, %v1636
      %v2062 = vmul.f32 %v1637, %v1637
      %v2063 = vmul.f32 %v1638, %v1638
      %v2064 = vmul.f32 %v1639, %v1639
      %v2065 = vmul.f32 %v1640, %v1640
      %v2066 = vmul.f32 %v1641, %v1641
      %v2067 = vmul.f32 %v1642, %v1642
      %v2068 = vmul.f32 %v1643, %v1643
      %v2069 = vmul.f32 %v1644, %v1644
      %v2070 = vmul.f32 %v1645, %v1645
      %v2071 = vmul.f32 %v1646, %v1646
      %v2072 = vmul.f32 %v1647, %v1647
      %v2073 = vmul.f32 %v1648, %v1648
      %v2074 = vmul.f32 %v1649, %v1649
      %v2075 = vmul.f32 %v1650, %v1650
      %v2076 = vmul.f32 %v1651, %v1651
      %v2077 = vmul.f32 %v1652, %v1652
      %v2078 = vmul.f32 %v1653, %v1653
      %v2079 = vmul.f32 %v1654, %v1654
      %v2080 = vmul.f32 %v1655, %v1655
      %v2081 = vmul.f32 %v1656, %v1656
      %v2082 = vmul.f32 %v1657, %v1657
      %v2083 = vmul.f32 %v1658, %v1658
      %v2084 = vmul.f32 %v1659, %v1659
      %v2085 = vmul.f32 %v1660, %v1660
      %v2086 = vmul.f32 %v1661, %v1661
      %v2087 = vmul.f32 %v1662, %v1662
      %v2088 = vmul.f32 %v1663, %v1663
      %v2089 = vmul.f32 %v1664, %v1664
      %v2090 = vmul.f32 %v1665, %v1665
      %v2091 = vmul.f32 %v1666, %v1666
      %v2092 = vmul.f32 %v1667, %v1667
      %v2093 = vmul.f32 %v1668, %v1668
      %v2094 = vmul.f32 %v1669, %v1669
      %v2095 = vmul.f32 %v1670, %v1670
      %v2096 = vmul.f32 %v1671, %v1671
      %v2097 = vmul.f32 %v1672, %v1672
      %v2098 = vmul.f32 %v1673, %v1673
      %v2099 = vmul.f32 %v1674, %v1674
      %v2100 = vmul.f32 %v1675, %v1675
      %v2101 = vmul.f32 %v1676, %v1676
      %v2102 = vmul.f32 %v1677, %v1677
      %v2103 = vmul.f32 %v1678, %v1678
      %v2104 = vmul.f32 %v1679, %v1679
      %v2105 = vmul.f32 %v1680, %v1680
      %v2106 = vmul.f32 %v1681, %v1681
      %v2107 = vmul.f32 %v1682, %v1682
      %v2108 = vmul.f32 %v1683, %v1683
      %v2109 = vmul.f32 %v1684, %v1684
      %v2110 = vmul.f32 %v1685, %v1685
      %v2111 = vmul.f32 %v1686, %v1686
      %v2112 = vmul.f32 %v1687, %v1687
      %v2113 = vmul.f32 %v1688, %v1688
      %v2114 = vmul.f32 %v1689, %v1689
      %v2115 = vmul.f32 %v1690, %v1690
      %v2116 = vmul.f32 %v1691, %v1691
      %v2117 = vmul.f32 %v1692, %v1692
      %v2118 = vmul.f32 %v1693, %v1693
      %v2119 = vmul.f32 %v1694, %v1694
      %v2120 = vmul.f32 %v1695, %v1695
      %v2121 = vmul.f32 %v1696, %v1696
      %v2122 = vmul.f32 %v1697, %v1697
      %v2123 = vmul.f32 %v1698, %v1698
      %v2124 = vmul.f32 %v1699, %v1699
      %v2125 = vmul.f32 %v1700, %v1700
      %v2126 = vmul.f32 %v1701, %v1701
      %v2127 = vmul.f32 %v1702, %v1702
      %v2128 = vmul.f32 %v1703, %v1703
      %v2129 = vmul.f32 %v1704, %v1704
      %v2130 = vmul.f32 %v1705, %v1705
      %v2131 = vmul.f32 %v1706, %v1706
      %v2132 = vmul.f32 %v1707, %v1707
      %v2133 = vmul.f32 %v1708, %v1708
      %v2134 = vmul.f32 %v1709, %v1709
      %v2135 = vmul.f32 %v1710, %v1710
      %v2136 = vmul.f32 %v1711, %v1711
      %v2137 = vmul.f32 %v1712, %v1712
      %v2138 = vmul.f32 %v1713, %v1713
      %v2139 = vmul.f32 %v1714, %v1714
      %v2140 = vmul.f32 %v1715, %v1715
      %v2141 = vmul.f32 %v1716, %v1716
      %v2142 = vmul.f32 %v1717, %v1717
      %v2143 = vmul.f32 %v1718, %v1718
      %v2144 = vmul.f32 %v1719, %v1719
      %v2145 = vmul.f32 %v1720, %v1720
      %v2146 = vmul.f32 %v1721, %v1721
      %v2147 = vmul.f32 %v1722, %v1722
      %v2148 = vmul.f32 %v1723, %v1723
      %v2149 = vmul.f32 %v1724, %v1724
      %v2150 = vmul.f32 %v1725, %v1725
      %v2151 = vmul.f32 %v1726, %v1726
      %v2152 = vmul.f32 %v1727, %v1727
      %v2153 = vmul.f32 %v1728, %v1728
      %v2154 = vmul.f32 %v1729, %v1729
      %v2155 = vmul.f32 %v1730, %v1730
      %v2156 = vmul.f32 %v1731, %v1731
      %v2157 = vmul.f32 %v1732, %v1732
      %v2158 = vmul.f32 %v1733, %v1733
      %v2159 = vadd.f32 %v1903, %v2031
      %v2160 = vadd.f32 %v1904, %v2032
      %v2161 = vadd.f32 %v1905, %v2033
      %v2162 = vadd.f32 %v1906, %v2034
      %v2163 = vadd.f32 %v1907, %v2035
      %v2164 = vadd.f32 %v1908, %v2036
      %v2165 = vadd.f32 %v1909, %v2037
      %v2166 = vadd.f32 %v1910, %v2038
      %v2167 = vadd.f32 %v1911, %v2039
      %v2168 = vadd.f32 %v1912, %v2040
      %v2169 = vadd.f32 %v1913, %v2041
      %v2170 = vadd.f32 %v1914, %v2042
      %v2171 = vadd.f32 %v1915, %v2043
      %v2172 = vadd.f32 %v1916, %v2044
      %v2173 = vadd.f32 %v1917, %v2045
      %v2174 = vadd.f32 %v1918, %v2046
      %v2175 = vadd.f32 %v1919, %v2047
      %v2176 = vadd.f32 %v1920, %v2048
      %v2177 = vadd.f32 %v1921, %v2049
      %v2178 = vadd.f32 %v1922, %v2050
      %v2179 = vadd.f32 %v1923, %v2051
      %v2180 = vadd.f32 %v1924, %v2052
      %v2181 = vadd.f32 %v1925, %v2053
      %v2182 = vadd.f32 %v1926, %v2054
      %v2183 = vadd.f32 %v1927, %v2055
      %v2184 = vadd.f32 %v1928, %v2056
      %v2185 = vadd.f32 %v1929, %v2057
      %v2186 = vadd.f32 %v1930, %v2058
      %v2187 = vadd.f32 %v1931, %v2059
      %v2188 = vadd.f32 %v1932, %v2060
      %v2189 = vadd.f32 %v1933, %v2061
      %v2190 = vadd.f32 %v1934, %v2062
      %v2191 = vadd.f32 %v1935, %v2063
      %v2192 = vadd.f32 %v1936, %v2064
      %v2193 = vadd.f32 %v1937, %v2065
      %v2194 = vadd.f32 %v1938, %v2066
      %v2195 = vadd.f32 %v1939, %v2067
      %v2196 = vadd.f32 %v1940, %v2068
      %v2197 = vadd.f32 %v1941, %v2069
      %v2198 = vadd.f32 %v1942, %v2070
      %v2199 = vadd.f32 %v1943, %v2071
      %v2200 = vadd.f32 %v1944, %v2072
      %v2201 = vadd.f32 %v1945, %v2073
      %v2202 = vadd.f32 %v1946, %v2074
      %v2203 = vadd.f32 %v1947, %v2075
      %v2204 = vadd.f32 %v1948, %v2076
      %v2205 = vadd.f32 %v1949, %v2077
      %v2206 = vadd.f32 %v1950, %v2078
      %v2207 = vadd.f32 %v1951, %v2079
      %v2208 = vadd.f32 %v1952, %v2080
      %v2209 = vadd.f32 %v1953, %v2081
      %v2210 = vadd.f32 %v1954, %v2082
      %v2211 = vadd.f32 %v1955, %v2083
      %v2212 = vadd.f32 %v1956, %v2084
      %v2213 = vadd.f32 %v1957, %v2085
      %v2214 = vadd.f32 %v1958, %v2086
      %v2215 = vadd.f32 %v1959, %v2087
      %v2216 = vadd.f32 %v1960, %v2088
      %v2217 = vadd.f32 %v1961, %v2089
      %v2218 = vadd.f32 %v1962, %v2090
      %v2219 = vadd.f32 %v1963, %v2091
      %v2220 = vadd.f32 %v1964, %v2092
      %v2221 = vadd.f32 %v1965, %v2093
      %v2222 = vadd.f32 %v1966, %v2094
      %v2223 = vadd.f32 %v1967, %v2095
      %v2224 = vadd.f32 %v1968, %v2096
      %v2225 = vadd.f32 %v1969, %v2097
      %v2226 = vadd.f32 %v1970, %v2098
      %v2227 = vadd.f32 %v1971, %v2099
      %v2228 = vadd.f32 %v1972, %v2100
      %v2229 = vadd.f32 %v1973, %v2101
      %v2230 = vadd.f32 %v1974, %v2102
      %v2231 = vadd.f32 %v1975, %v2103
      %v2232 = vadd.f32 %v1976, %v2104
      %v2233 = vadd.f32 %v1977, %v2105
      %v2234 = vadd.f32 %v1978, %v2106
      %v2235 = vadd.f32 %v1979, %v2107
      %v2236 = vadd.f32 %v1980, %v2108
      %v2237 = vadd.f32 %v1981, %v2109
      %v2238 = vadd.f32 %v1982, %v2110
      %v2239 = vadd.f32 %v1983, %v2111
      %v2240 = vadd.f32 %v1984, %v2112
      %v2241 = vadd.f32 %v1985, %v2113
      %v2242 = vadd.f32 %v1986, %v2114
      %v2243 = vadd.f32 %v1987, %v2115
      %v2244 = vadd.f32 %v1988, %v2116
      %v2245 = vadd.f32 %v1989, %v2117
      %v2246 = vadd.f32 %v1990, %v2118
      %v2247 = vadd.f32 %v1991, %v2119
      %v2248 = vadd.f32 %v1992, %v2120
      %v2249 = vadd.f32 %v1993, %v2121
      %v2250 = vadd.f32 %v1994, %v2122
      %v2251 = vadd.f32 %v1995, %v2123
      %v2252 = vadd.f32 %v1996, %v2124
      %v2253 = vadd.f32 %v1997, %v2125
      %v2254 = vadd.f32 %v1998, %v2126
      %v2255 = vadd.f32 %v1999, %v2127
      %v2256 = vadd.f32 %v2000, %v2128
      %v2257 = vadd.f32 %v2001, %v2129
      %v2258 = vadd.f32 %v2002, %v2130
      %v2259 = vadd.f32 %v2003, %v2131
      %v2260 = vadd.f32 %v2004, %v2132
      %v2261 = vadd.f32 %v2005, %v2133
      %v2262 = vadd.f32 %v2006, %v2134
      %v2263 = vadd.f32 %v2007, %v2135
      %v2264 = vadd.f32 %v2008, %v2136
      %v2265 = vadd.f32 %v2009, %v2137
      %v2266 = vadd.f32 %v2010, %v2138
      %v2267 = vadd.f32 %v2011, %v2139
      %v2268 = vadd.f32 %v2012, %v2140
      %v2269 = vadd.f32 %v2013, %v2141
      %v2270 = vadd.f32 %v2014, %v2142
      %v2271 = vadd.f32 %v2015, %v2143
      %v2272 = vadd.f32 %v2016, %v2144
      %v2273 = vadd.f32 %v2017, %v2145
      %v2274 = vadd.f32 %v2018, %v2146
      %v2275 = vadd.f32 %v2019, %v2147
      %v2276 = vadd.f32 %v2020, %v2148
      %v2277 = vadd.f32 %v2021, %v2149
      %v2278 = vadd.f32 %v2022, %v2150
      %v2279 = vadd.f32 %v2023, %v2151
      %v2280 = vadd.f32 %v2024, %v2152
      %v2281 = vadd.f32 %v2025, %v2153
      %v2282 = vadd.f32 %v2026, %v2154
      %v2283 = vadd.f32 %v2027, %v2155
      %v2284 = vadd.f32 %v2028, %v2156
      %v2285 = vadd.f32 %v2029, %v2157
      %v2286 = vadd.f32 %v2030, %v2158
      %v2287 = vmul.f32 %v1775, %v1775
      %v2288 = vmul.f32 %v1776, %v1776
      %v2289 = vmul.f32 %v1777, %v1777
      %v2290 = vmul.f32 %v1778, %v1778
      %v2291 = vmul.f32 %v1779, %v1779
      %v2292 = vmul.f32 %v1780, %v1780
      %v2293 = vmul.f32 %v1781, %v1781
      %v2294 = vmul.f32 %v1782, %v1782
      %v2295 = vmul.f32 %v1783, %v1783
      %v2296 = vmul.f32 %v1784, %v1784
      %v2297 = vmul.f32 %v1785, %v1785
      %v2298 = vmul.f32 %v1786, %v1786
      %v2299 = vmul.f32 %v1787, %v1787
      %v2300 = vmul.f32 %v1788, %v1788
      %v2301 = vmul.f32 %v1789, %v1789
      %v2302 = vmul.f32 %v1790, %v1790
      %v2303 = vmul.f32 %v1791, %v1791
      %v2304 = vmul.f32 %v1792, %v1792
      %v2305 = vmul.f32 %v1793, %v1793
      %v2306 = vmul.f32 %v1794, %v1794
      %v2307 = vmul.f32 %v1795, %v1795
      %v2308 = vmul.f32 %v1796, %v1796
      %v2309 = vmul.f32 %v1797, %v1797
      %v2310 = vmul.f32 %v1798, %v1798
      %v2311 = vmul.f32 %v1799, %v1799
      %v2312 = vmul.f32 %v1800, %v1800
      %v2313 = vmul.f32 %v1801, %v1801
      %v2314 = vmul.f32 %v1802, %v1802
      %v2315 = vmul.f32 %v1803, %v1803
      %v2316 = vmul.f32 %v1804, %v1804
      %v2317 = vmul.f32 %v1805, %v1805
      %v2318 = vmul.f32 %v1806, %v1806
      %v2319 = vmul.f32 %v1807, %v1807
      %v2320 = vmul.f32 %v1808, %v1808
      %v2321 = vmul.f32 %v1809, %v1809
      %v2322 = vmul.f32 %v1810, %v1810
      %v2323 = vmul.f32 %v1811, %v1811
      %v2324 = vmul.f32 %v1812, %v1812
      %v2325 = vmul.f32 %v1813, %v1813
      %v2326 = vmul.f32 %v1814, %v1814
      %v2327 = vmul.f32 %v1815, %v1815
      %v2328 = vmul.f32 %v1816, %v1816
      %v2329 = vmul.f32 %v1817, %v1817
      %v2330 = vmul.f32 %v1818, %v1818
      %v2331 = vmul.f32 %v1819, %v1819
      %v2332 = vmul.f32 %v1820, %v1820
      %v2333 = vmul.f32 %v1821, %v1821
      %v2334 = vmul.f32 %v1822, %v1822
      %v2335 = vmul.f32 %v1823, %v1823
      %v2336 = vmul.f32 %v1824, %v1824
      %v2337 = vmul.f32 %v1825, %v1825
      %v2338 = vmul.f32 %v1826, %v1826
      %v2339 = vmul.f32 %v1827, %v1827
      %v2340 = vmul.f32 %v1828, %v1828
      %v2341 = vmul.f32 %v1829, %v1829
      %v2342 = vmul.f32 %v1830, %v1830
      %v2343 = vmul.f32 %v1831, %v1831
      %v2344 = vmul.f32 %v1832, %v1832
      %v2345 = vmul.f32 %v1833, %v1833
      %v2346 = vmul.f32 %v1834, %v1834
      %v2347 = vmul.f32 %v1835, %v1835
      %v2348 = vmul.f32 %v1836, %v1836
      %v2349 = vmul.f32 %v1837, %v1837
      %v2350 = vmul.f32 %v1838, %v1838
      %v2351 = vmul.f32 %v1839, %v1839
      %v2352 = vmul.f32 %v1840, %v1840
      %v2353 = vmul.f32 %v1841, %v1841
      %v2354 = vmul.f32 %v1842, %v1842
      %v2355 = vmul.f32 %v1843, %v1843
      %v2356 = vmul.f32 %v1844, %v1844
      %v2357 = vmul.f32 %v1845, %v1845
      %v2358 = vmul.f32 %v1846, %v1846
      %v2359 = vmul.f32 %v1847, %v1847
      %v2360 = vmul.f32 %v1848, %v1848
      %v2361 = vmul.f32 %v1849, %v1849
      %v2362 = vmul.f32 %v1850, %v1850
      %v2363 = vmul.f32 %v1851, %v1851
      %v2364 = vmul.f32 %v1852, %v1852
      %v2365 = vmul.f32 %v1853, %v1853
      %v2366 = vmul.f32 %v1854, %v1854
      %v2367 = vmul.f32 %v1855, %v1855
      %v2368 = vmul.f32 %v1856, %v1856
      %v2369 = vmul.f32 %v1857, %v1857
      %v2370 = vmul.f32 %v1858, %v1858
      %v2371 = vmul.f32 %v1859, %v1859
      %v2372 = vmul.f32 %v1860, %v1860
      %v2373 = vmul.f32 %v1861, %v1861
      %v2374 = vmul.f32 %v1862, %v1862
      %v2375 = vmul.f32 %v1863, %v1863
      %v2376 = vmul.f32 %v1864, %v1864
      %v2377 = vmul.f32 %v1865, %v1865
      %v2378 = vmul.f32 %v1866, %v1866
      %v2379 = vmul.f32 %v1867, %v1867
      %v2380 = vmul.f32 %v1868, %v1868
      %v2381 = vmul.f32 %v1869, %v1869
      %v2382 = vmul.f32 %v1870, %v1870
      %v2383 = vmul.f32 %v1871, %v1871
      %v2384 = vmul.f32 %v1872, %v1872
      %v2385 = vmul.f32 %v1873, %v1873
      %v2386 = vmul.f32 %v1874, %v1874
      %v2387 = vmul.f32 %v1875, %v1875
      %v2388 = vmul.f32 %v1876, %v1876
      %v2389 = vmul.f32 %v1877, %v1877
      %v2390 = vmul.f32 %v1878, %v1878
      %v2391 = vmul.f32 %v1879, %v1879
      %v2392 = vmul.f32 %v1880, %v1880
      %v2393 = vmul.f32 %v1881, %v1881
      %v2394 = vmul.f32 %v1882, %v1882
      %v2395 = vmul.f32 %v1883, %v1883
      %v2396 = vmul.f32 %v1884, %v1884
      %v2397 = vmul.f32 %v1885, %v1885
      %v2398 = vmul.f32 %v1886, %v1886
      %v2399 = vmul.f32 %v1887, %v1887
      %v2400 = vmul.f32 %v1888, %v1888
      %v2401 = vmul.f32 %v1889, %v1889
      %v2402 = vmul.f32 %v1890, %v1890
      %v2403 = vmul.f32 %v1891, %v1891
      %v2404 = vmul.f32 %v1892, %v1892
      %v2405 = vmul.f32 %v1893, %v1893
      %v2406 = vmul.f32 %v1894, %v1894
      %v2407 = vmul.f32 %v1895, %v1895
      %v2408 = vmul.f32 %v1896, %v1896
      %v2409 = vmul.f32 %v1897, %v1897
      %v2410 = vmul.f32 %v1898, %v1898
      %v2411 = vmul.f32 %v1899, %v1899
      %v2412 = vmul.f32 %v1900, %v1900
      %v2413 = vmul.f32 %v1901, %v1901
      %v2414 = vmul.f32 %v1902, %v1902
      %v2415 = vadd.f32 %v2159, %v2287
      %v2416 = vadd.f32 %v2160, %v2288
      %v2417 = vadd.f32 %v2161, %v2289
      %v2418 = vadd.f32 %v2162, %v2290
      %v2419 = vadd.f32 %v2163, %v2291
      %v2420 = vadd.f32 %v2164, %v2292
      %v2421 = vadd.f32 %v2165, %v2293
      %v2422 = vadd.f32 %v2166, %v2294
      %v2423 = vadd.f32 %v2167, %v2295
      %v2424 = vadd.f32 %v2168, %v2296
      %v2425 = vadd.f32 %v2169, %v2297
      %v2426 = vadd.f32 %v2170, %v2298
      %v2427 = vadd.f32 %v2171, %v2299
      %v2428 = vadd.f32 %v2172, %v2300
      %v2429 = vadd.f32 %v2173, %v2301
      %v2430 = vadd.f32 %v2174, %v2302
      %v2431 = vadd.f32 %v2175, %v2303
      %v2432 = vadd.f32 %v2176, %v2304
      %v2433 = vadd.f32 %v2177, %v2305
      %v2434 = vadd.f32 %v2178, %v2306
      %v2435 = vadd.f32 %v2179, %v2307
      %v2436 = vadd.f32 %v2180, %v2308
      %v2437 = vadd.f32 %v2181, %v2309
      %v2438 = vadd.f32 %v2182, %v2310
      %v2439 = vadd.f32 %v2183, %v2311
      %v2440 = vadd.f32 %v2184, %v2312
      %v2441 = vadd.f32 %v2185, %v2313
      %v2442 = vadd.f32 %v2186, %v2314
      %v2443 = vadd.f32 %v2187, %v2315
      %v2444 = vadd.f32 %v2188, %v2316
      %v2445 = vadd.f32 %v2189, %v2317
      %v2446 = vadd.f32 %v2190, %v2318
      %v2447 = vadd.f32 %v2191, %v2319
      %v2448 = vadd.f32 %v2192, %v2320
      %v2449 = vadd.f32 %v2193, %v2321
      %v2450 = vadd.f32 %v2194, %v2322
      %v2451 = vadd.f32 %v2195, %v2323
      %v2452 = vadd.f32 %v2196, %v2324
      %v2453 = vadd.f32 %v2197, %v2325
      %v2454 = vadd.f32 %v2198, %v2326
      %v2455 = vadd.f32 %v2199, %v2327
      %v2456 = vadd.f32 %v2200, %v2328
      %v2457 = vadd.f32 %v2201, %v2329
      %v2458 = vadd.f32 %v2202, %v2330
      %v2459 = vadd.f32 %v2203, %v2331
      %v2460 = vadd.f32 %v2204, %v2332
      %v2461 = vadd.f32 %v2205, %v2333
      %v2462 = vadd.f32 %v2206, %v2334
      %v2463 = vadd.f32 %v2207, %v2335
      %v2464 = vadd.f32 %v2208, %v2336
      %v2465 = vadd.f32 %v2209, %v2337
      %v2466 = vadd.f32 %v2210, %v2338
      %v2467 = vadd.f32 %v2211, %v2339
      %v2468 = vadd.f32 %v2212, %v2340
      %v2469 = vadd.f32 %v2213, %v2341
      %v2470 = vadd.f32 %v2214, %v2342
      %v2471 = vadd.f32 %v2215, %v2343
      %v2472 = vadd.f32 %v2216, %v2344
      %v2473 = vadd.f32 %v2217, %v2345
      %v2474 = vadd.f32 %v2218, %v2346
      %v2475 = vadd.f32 %v2219, %v2347
      %v2476 = vadd.f32 %v2220, %v2348
      %v2477 = vadd.f32 %v2221, %v2349
      %v2478 = vadd.f32 %v2222, %v2350
      %v2479 = vadd.f32 %v2223, %v2351
      %v2480 = vadd.f32 %v2224, %v2352
      %v2481 = vadd.f32 %v2225, %v2353
      %v2482 = vadd.f32 %v2226, %v2354
      %v2483 = vadd.f32 %v2227, %v2355
      %v2484 = vadd.f32 %v2228, %v2356
      %v2485 = vadd.f32 %v2229, %v2357
      %v2486 = vadd.f32 %v2230, %v2358
      %v2487 = vadd.f32 %v2231, %v2359
      %v2488 = vadd.f32 %v2232, %v2360
      %v2489 = vadd.f32 %v2233, %v2361
      %v2490 = vadd.f32 %v2234, %v2362
      %v2491 = vadd.f32 %v2235, %v2363
      %v2492 = vadd.f32 %v2236, %v2364
      %v2493 = vadd.f32 %v2237, %v2365
      %v2494 = vadd.f32 %v2238, %v2366
      %v2495 = vadd.f32 %v2239, %v2367
      %v2496 = vadd.f32 %v2240, %v2368
      %v2497 = vadd.f32 %v2241, %v2369
      %v2498 = vadd.f32 %v2242, %v2370
      %v2499 = vadd.f32 %v2243, %v2371
      %v2500 = vadd.f32 %v2244, %v2372
      %v2501 = vadd.f32 %v2245, %v2373
      %v2502 = vadd.f32 %v2246, %v2374
      %v2503 = vadd.f32 %v2247, %v2375
      %v2504 = vadd.f32 %v2248, %v2376
      %v2505 = vadd.f32 %v2249, %v2377
      %v2506 = vadd.f32 %v2250, %v2378
      %v2507 = vadd.f32 %v2251, %v2379
      %v2508 = vadd.f32 %v2252, %v2380
      %v2509 = vadd.f32 %v2253, %v2381
      %v2510 = vadd.f32 %v2254, %v2382
      %v2511 = vadd.f32 %v2255, %v2383
      %v2512 = vadd.f32 %v2256, %v2384
      %v2513 = vadd.f32 %v2257, %v2385
      %v2514 = vadd.f32 %v2258, %v2386
      %v2515 = vadd.f32 %v2259, %v2387
      %v2516 = vadd.f32 %v2260, %v2388
      %v2517 = vadd.f32 %v2261, %v2389
      %v2518 = vadd.f32 %v2262, %v2390
      %v2519 = vadd.f32 %v2263, %v2391
      %v2520 = vadd.f32 %v2264, %v2392
      %v2521 = vadd.f32 %v2265, %v2393
      %v2522 = vadd.f32 %v2266, %v2394
      %v2523 = vadd.f32 %v2267, %v2395
      %v2524 = vadd.f32 %v2268, %v2396
      %v2525 = vadd.f32 %v2269, %v2397
      %v2526 = vadd.f32 %v2270, %v2398
      %v2527 = vadd.f32 %v2271, %v2399
      %v2528 = vadd.f32 %v2272, %v2400
      %v2529 = vadd.f32 %v2273, %v2401
      %v2530 = vadd.f32 %v2274, %v2402
      %v2531 = vadd.f32 %v2275, %v2403
      %v2532 = vadd.f32 %v2276, %v2404
      %v2533 = vadd.f32 %v2277, %v2405
      %v2534 = vadd.f32 %v2278, %v2406
      %v2535 = vadd.f32 %v2279, %v2407
      %v2536 = vadd.f32 %v2280, %v2408
      %v2537 = vadd.f32 %v2281, %v2409
      %v2538 = vadd.f32 %v2282, %v2410
      %v2539 = vadd.f32 %v2283, %v2411
      %v2540 = vadd.f32 %v2284, %v2412
      %v2541 = vadd.f32 %v2285, %v2413
      %v2542 = vadd.f32 %v2286, %v2414
      %v2543 = vld [vmem:[#allocation2] sm:$0xff]
      %v2544 = vld [vmem:[#allocation2 + $0x8] sm:$0xff]
      %v2545 = vld [vmem:[#allocation2 + $0x10] sm:$0xff]
      %v2546 = vld [vmem:[#allocation2 + $0x18] sm:$0xff]
      %v2547 = vld [vmem:[#allocation2 + $0x20] sm:$0xff]
      %v2548 = vld [vmem:[#allocation2 + $0x28] sm:$0xff]
      %v2549 = vld [vmem:[#allocation2 + $0x30] sm:$0xff]
      %v2550 = vld [vmem:[#allocation2 + $0x38] sm:$0xff]
      %v2551 = vld [vmem:[#allocation2 + $0x40] sm:$0xff]
      %v2552 = vld [vmem:[#allocation2 + $0x48] sm:$0xff]
      %v2553 = vld [vmem:[#allocation2 + $0x50] sm:$0xff]
      %v2554 = vld [vmem:[#allocation2 + $0x58] sm:$0xff]
      %v2555 = vld [vmem:[#allocation2 + $0x60] sm:$0xff]
      %v2556 = vld [vmem:[#allocation2 + $0x68] sm:$0xff]
      %v2557 = vld [vmem:[#allocation2 + $0x70] sm:$0xff]
      %v2558 = vld [vmem:[#allocation2 + $0x78] sm:$0xff]
      %v2559 = vld [vmem:[#allocation2 + $0x80] sm:$0xff]
      %v2560 = vld [vmem:[#allocation2 + $0x88] sm:$0xff]
      %v2561 = vld [vmem:[#allocation2 + $0x90] sm:$0xff]
      %v2562 = vld [vmem:[#allocation2 + $0x98] sm:$0xff]
      %v2563 = vld [vmem:[#allocation2 + $0xa0] sm:$0xff]
      %v2564 = vld [vmem:[#allocation2 + $0xa8] sm:$0xff]
      %v2565 = vld [vmem:[#allocation2 + $0xb0] sm:$0xff]
      %v2566 = vld [vmem:[#allocation2 + $0xb8] sm:$0xff]
      %v2567 = vld [vmem:[#allocation2 + $0xc0] sm:$0xff]
      %v2568 = vld [vmem:[#allocation2 + $0xc8] sm:$0xff]
      %v2569 = vld [vmem:[#allocation2 + $0xd0] sm:$0xff]
      %v2570 = vld [vmem:[#allocation2 + $0xd8] sm:$0xff]
      %v2571 = vld [vmem:[#allocation2 + $0xe0] sm:$0xff]
      %v2572 = vld [vmem:[#allocation2 + $0xe8] sm:$0xff]
      %v2573 = vld [vmem:[#allocation2 + $0xf0] sm:$0xff]
      %v2574 = vld [vmem:[#allocation2 + $0xf8] sm:$0xff]
      %v2575 = vld [vmem:[#allocation2 + $0x100] sm:$0xff]
      %v2576 = vld [vmem:[#allocation2 + $0x108] sm:$0xff]
      %v2577 = vld [vmem:[#allocation2 + $0x110] sm:$0xff]
      %v2578 = vld [vmem:[#allocation2 + $0x118] sm:$0xff]
      %v2579 = vld [vmem:[#allocation2 + $0x120] sm:$0xff]
      %v2580 = vld [vmem:[#allocation2 + $0x128] sm:$0xff]
      %v2581 = vld [vmem:[#allocation2 + $0x130] sm:$0xff]
      %v2582 = vld [vmem:[#allocation2 + $0x138] sm:$0xff]
      %v2583 = vld [vmem:[#allocation2 + $0x140] sm:$0xff]
      %v2584 = vld [vmem:[#allocation2 + $0x148] sm:$0xff]
      %v2585 = vld [vmem:[#allocation2 + $0x150] sm:$0xff]
      %v2586 = vld [vmem:[#allocation2 + $0x158] sm:$0xff]
      %v2587 = vld [vmem:[#allocation2 + $0x160] sm:$0xff]
      %v2588 = vld [vmem:[#allocation2 + $0x168] sm:$0xff]
      %v2589 = vld [vmem:[#allocation2 + $0x170] sm:$0xff]
      %v2590 = vld [vmem:[#allocation2 + $0x178] sm:$0xff]
      %v2591 = vld [vmem:[#allocation2 + $0x180] sm:$0xff]
      %v2592 = vld [vmem:[#allocation2 + $0x188] sm:$0xff]
      %v2593 = vld [vmem:[#allocation2 + $0x190] sm:$0xff]
      %v2594 = vld [vmem:[#allocation2 + $0x198] sm:$0xff]
      %v2595 = vld [vmem:[#allocation2 + $0x1a0] sm:$0xff]
      %v2596 = vld [vmem:[#allocation2 + $0x1a8] sm:$0xff]
      %v2597 = vld [vmem:[#allocation2 + $0x1b0] sm:$0xff]
      %v2598 = vld [vmem:[#allocation2 + $0x1b8] sm:$0xff]
      %v2599 = vld [vmem:[#allocation2 + $0x1c0] sm:$0xff]
      %v2600 = vld [vmem:[#allocation2 + $0x1c8] sm:$0xff]
      %v2601 = vld [vmem:[#allocation2 + $0x1d0] sm:$0xff]
      %v2602 = vld [vmem:[#allocation2 + $0x1d8] sm:$0xff]
      %v2603 = vld [vmem:[#allocation2 + $0x1e0] sm:$0xff]
      %v2604 = vld [vmem:[#allocation2 + $0x1e8] sm:$0xff]
      %v2605 = vld [vmem:[#allocation2 + $0x1f0] sm:$0xff]
      %v2606 = vld [vmem:[#allocation2 + $0x1f8] sm:$0xff]
      %v2607 = vld [vmem:[#allocation2 + $0x200] sm:$0xff]
      %v2608 = vld [vmem:[#allocation2 + $0x208] sm:$0xff]
      %v2609 = vld [vmem:[#allocation2 + $0x210] sm:$0xff]
      %v2610 = vld [vmem:[#allocation2 + $0x218] sm:$0xff]
      %v2611 = vld [vmem:[#allocation2 + $0x220] sm:$0xff]
      %v2612 = vld [vmem:[#allocation2 + $0x228] sm:$0xff]
      %v2613 = vld [vmem:[#allocation2 + $0x230] sm:$0xff]
      %v2614 = vld [vmem:[#allocation2 + $0x238] sm:$0xff]
      %v2615 = vld [vmem:[#allocation2 + $0x240] sm:$0xff]
      %v2616 = vld [vmem:[#allocation2 + $0x248] sm:$0xff]
      %v2617 = vld [vmem:[#allocation2 + $0x250] sm:$0xff]
      %v2618 = vld [vmem:[#allocation2 + $0x258] sm:$0xff]
      %v2619 = vld [vmem:[#allocation2 + $0x260] sm:$0xff]
      %v2620 = vld [vmem:[#allocation2 + $0x268] sm:$0xff]
      %v2621 = vld [vmem:[#allocation2 + $0x270] sm:$0xff]
      %v2622 = vld [vmem:[#allocation2 + $0x278] sm:$0xff]
      %v2623 = vld [vmem:[#allocation2 + $0x280] sm:$0xff]
      %v2624 = vld [vmem:[#allocation2 + $0x288] sm:$0xff]
      %v2625 = vld [vmem:[#allocation2 + $0x290] sm:$0xff]
      %v2626 = vld [vmem:[#allocation2 + $0x298] sm:$0xff]
      %v2627 = vld [vmem:[#allocation2 + $0x2a0] sm:$0xff]
      %v2628 = vld [vmem:[#allocation2 + $0x2a8] sm:$0xff]
      %v2629 = vld [vmem:[#allocation2 + $0x2b0] sm:$0xff]
      %v2630 = vld [vmem:[#allocation2 + $0x2b8] sm:$0xff]
      %v2631 = vld [vmem:[#allocation2 + $0x2c0] sm:$0xff]
      %v2632 = vld [vmem:[#allocation2 + $0x2c8] sm:$0xff]
      %v2633 = vld [vmem:[#allocation2 + $0x2d0] sm:$0xff]
      %v2634 = vld [vmem:[#allocation2 + $0x2d8] sm:$0xff]
      %v2635 = vld [vmem:[#allocation2 + $0x2e0] sm:$0xff]
      %v2636 = vld [vmem:[#allocation2 + $0x2e8] sm:$0xff]
      %v2637 = vld [vmem:[#allocation2 + $0x2f0] sm:$0xff]
      %v2638 = vld [vmem:[#allocation2 + $0x2f8] sm:$0xff]
      %v2639 = vld [vmem:[#allocation2 + $0x300] sm:$0xff]
      %v2640 = vld [vmem:[#allocation2 + $0x308] sm:$0xff]
      %v2641 = vld [vmem:[#allocation2 + $0x310] sm:$0xff]
      %v2642 = vld [vmem:[#allocation2 + $0x318] sm:$0xff]
      %v2643 = vld [vmem:[#allocation2 + $0x320] sm:$0xff]
      %v2644 = vld [vmem:[#allocation2 + $0x328] sm:$0xff]
      %v2645 = vld [vmem:[#allocation2 + $0x330] sm:$0xff]
      %v2646 = vld [vmem:[#allocation2 + $0x338] sm:$0xff]
      %v2647 = vld [vmem:[#allocation2 + $0x340] sm:$0xff]
      %v2648 = vld [vmem:[#allocation2 + $0x348] sm:$0xff]
      %v2649 = vld [vmem:[#allocation2 + $0x350] sm:$0xff]
      %v2650 = vld [vmem:[#allocation2 + $0x358] sm:$0xff]
      %v2651 = vld [vmem:[#allocation2 + $0x360] sm:$0xff]
      %v2652 = vld [vmem:[#allocation2 + $0x368] sm:$0xff]
      %v2653 = vld [vmem:[#allocation2 + $0x370] sm:$0xff]
      %v2654 = vld [vmem:[#allocation2 + $0x378] sm:$0xff]
      %v2655 = vld [vmem:[#allocation2 + $0x380] sm:$0xff]
      %v2656 = vld [vmem:[#allocation2 + $0x388] sm:$0xff]
      %v2657 = vld [vmem:[#allocation2 + $0x390] sm:$0xff]
      %v2658 = vld [vmem:[#allocation2 + $0x398] sm:$0xff]
      %v2659 = vld [vmem:[#allocation2 + $0x3a0] sm:$0xff]
      %v2660 = vld [vmem:[#allocation2 + $0x3a8] sm:$0xff]
      %v2661 = vld [vmem:[#allocation2 + $0x3b0] sm:$0xff]
      %v2662 = vld [vmem:[#allocation2 + $0x3b8] sm:$0xff]
      %v2663 = vld [vmem:[#allocation2 + $0x3c0] sm:$0xff]
      %v2664 = vld [vmem:[#allocation2 + $0x3c8] sm:$0xff]
      %v2665 = vld [vmem:[#allocation2 + $0x3d0] sm:$0xff]
      %v2666 = vld [vmem:[#allocation2 + $0x3d8] sm:$0xff]
      %v2667 = vld [vmem:[#allocation2 + $0x3e0] sm:$0xff]
      %v2668 = vld [vmem:[#allocation2 + $0x3e8] sm:$0xff]
      %v2669 = vld [vmem:[#allocation2 + $0x3f0] sm:$0xff]
      %v2670 = vld [vmem:[#allocation2 + $0x3f8] sm:$0xff]
      %vm2671 = vcmp.lt.f32.partialorder %v2415, %v2543
      %vm2672 = vcmp.lt.f32.partialorder %v2416, %v2544
      %vm2673 = vcmp.lt.f32.partialorder %v2417, %v2545
      %vm2674 = vcmp.lt.f32.partialorder %v2418, %v2546
      %vm2675 = vcmp.lt.f32.partialorder %v2419, %v2547
      %vm2676 = vcmp.lt.f32.partialorder %v2420, %v2548
      %vm2677 = vcmp.lt.f32.partialorder %v2421, %v2549
      %vm2678 = vcmp.lt.f32.partialorder %v2422, %v2550
      %vm2679 = vcmp.lt.f32.partialorder %v2423, %v2551
      %vm2680 = vcmp.lt.f32.partialorder %v2424, %v2552
      %vm2681 = vcmp.lt.f32.partialorder %v2425, %v2553
      %vm2682 = vcmp.lt.f32.partialorder %v2426, %v2554
      %vm2683 = vcmp.lt.f32.partialorder %v2427, %v2555
      %vm2684 = vcmp.lt.f32.partialorder %v2428, %v2556
      %vm2685 = vcmp.lt.f32.partialorder %v2429, %v2557
      %vm2686 = vcmp.lt.f32.partialorder %v2430, %v2558
      %vm2687 = vcmp.lt.f32.partialorder %v2431, %v2559
      %vm2688 = vcmp.lt.f32.partialorder %v2432, %v2560
      %vm2689 = vcmp.lt.f32.partialorder %v2433, %v2561
      %vm2690 = vcmp.lt.f32.partialorder %v2434, %v2562
      %vm2691 = vcmp.lt.f32.partialorder %v2435, %v2563
      %vm2692 = vcmp.lt.f32.partialorder %v2436, %v2564
      %vm2693 = vcmp.lt.f32.partialorder %v2437, %v2565
      %vm2694 = vcmp.lt.f32.partialorder %v2438, %v2566
      %vm2695 = vcmp.lt.f32.partialorder %v2439, %v2567
      %vm2696 = vcmp.lt.f32.partialorder %v2440, %v2568
      %vm2697 = vcmp.lt.f32.partialorder %v2441, %v2569
      %vm2698 = vcmp.lt.f32.partialorder %v2442, %v2570
      %vm2699 = vcmp.lt.f32.partialorder %v2443, %v2571
      %vm2700 = vcmp.lt.f32.partialorder %v2444, %v2572
      %vm2701 = vcmp.lt.f32.partialorder %v2445, %v2573
      %vm2702 = vcmp.lt.f32.partialorder %v2446, %v2574
      %vm2703 = vcmp.lt.f32.partialorder %v2447, %v2575
      %vm2704 = vcmp.lt.f32.partialorder %v2448, %v2576
      %vm2705 = vcmp.lt.f32.partialorder %v2449, %v2577
      %vm2706 = vcmp.lt.f32.partialorder %v2450, %v2578
      %vm2707 = vcmp.lt.f32.partialorder %v2451, %v2579
      %vm2708 = vcmp.lt.f32.partialorder %v2452, %v2580
      %vm2709 = vcmp.lt.f32.partialorder %v2453, %v2581
      %vm2710 = vcmp.lt.f32.partialorder %v2454, %v2582
      %vm2711 = vcmp.lt.f32.partialorder %v2455, %v2583
      %vm2712 = vcmp.lt.f32.partialorder %v2456, %v2584
      %vm2713 = vcmp.lt.f32.partialorder %v2457, %v2585
      %vm2714 = vcmp.lt.f32.partialorder %v2458, %v2586
      %vm2715 = vcmp.lt.f32.partialorder %v2459, %v2587
      %vm2716 = vcmp.lt.f32.partialorder %v2460, %v2588
      %vm2717 = vcmp.lt.f32.partialorder %v2461, %v2589
      %vm2718 = vcmp.lt.f32.partialorder %v2462, %v2590
      %vm2719 = vcmp.lt.f32.partialorder %v2463, %v2591
      %vm2720 = vcmp.lt.f32.partialorder %v2464, %v2592
      %vm2721 = vcmp.lt.f32.partialorder %v2465, %v2593
      %vm2722 = vcmp.lt.f32.partialorder %v2466, %v2594
      %vm2723 = vcmp.lt.f32.partialorder %v2467, %v2595
      %vm2724 = vcmp.lt.f32.partialorder %v2468, %v2596
      %vm2725 = vcmp.lt.f32.partialorder %v2469, %v2597
      %vm2726 = vcmp.lt.f32.partialorder %v2470, %v2598
      %vm2727 = vcmp.lt.f32.partialorder %v2471, %v2599
      %vm2728 = vcmp.lt.f32.partialorder %v2472, %v2600
      %vm2729 = vcmp.lt.f32.partialorder %v2473, %v2601
      %vm2730 = vcmp.lt.f32.partialorder %v2474, %v2602
      %vm2731 = vcmp.lt.f32.partialorder %v2475, %v2603
      %vm2732 = vcmp.lt.f32.partialorder %v2476, %v2604
      %vm2733 = vcmp.lt.f32.partialorder %v2477, %v2605
      %vm2734 = vcmp.lt.f32.partialorder %v2478, %v2606
      %vm2735 = vcmp.lt.f32.partialorder %v2479, %v2607
      %vm2736 = vcmp.lt.f32.partialorder %v2480, %v2608
      %vm2737 = vcmp.lt.f32.partialorder %v2481, %v2609
      %vm2738 = vcmp.lt.f32.partialorder %v2482, %v2610
      %vm2739 = vcmp.lt.f32.partialorder %v2483, %v2611
      %vm2740 = vcmp.lt.f32.partialorder %v2484, %v2612
      %vm2741 = vcmp.lt.f32.partialorder %v2485, %v2613
      %vm2742 = vcmp.lt.f32.partialorder %v2486, %v2614
      %vm2743 = vcmp.lt.f32.partialorder %v2487, %v2615
      %vm2744 = vcmp.lt.f32.partialorder %v2488, %v2616
      %vm2745 = vcmp.lt.f32.partialorder %v2489, %v2617
      %vm2746 = vcmp.lt.f32.partialorder %v2490, %v2618
      %vm2747 = vcmp.lt.f32.partialorder %v2491, %v2619
      %vm2748 = vcmp.lt.f32.partialorder %v2492, %v2620
      %vm2749 = vcmp.lt.f32.partialorder %v2493, %v2621
      %vm2750 = vcmp.lt.f32.partialorder %v2494, %v2622
      %vm2751 = vcmp.lt.f32.partialorder %v2495, %v2623
      %vm2752 = vcmp.lt.f32.partialorder %v2496, %v2624
      %vm2753 = vcmp.lt.f32.partialorder %v2497, %v2625
      %vm2754 = vcmp.lt.f32.partialorder %v2498, %v2626
      %vm2755 = vcmp.lt.f32.partialorder %v2499, %v2627
      %vm2756 = vcmp.lt.f32.partialorder %v2500, %v2628
      %vm2757 = vcmp.lt.f32.partialorder %v2501, %v2629
      %vm2758 = vcmp.lt.f32.partialorder %v2502, %v2630
      %vm2759 = vcmp.lt.f32.partialorder %v2503, %v2631
      %vm2760 = vcmp.lt.f32.partialorder %v2504, %v2632
      %vm2761 = vcmp.lt.f32.partialorder %v2505, %v2633
      %vm2762 = vcmp.lt.f32.partialorder %v2506, %v2634
      %vm2763 = vcmp.lt.f32.partialorder %v2507, %v2635
      %vm2764 = vcmp.lt.f32.partialorder %v2508, %v2636
      %vm2765 = vcmp.lt.f32.partialorder %v2509, %v2637
      %vm2766 = vcmp.lt.f32.partialorder %v2510, %v2638
      %vm2767 = vcmp.lt.f32.partialorder %v2511, %v2639
      %vm2768 = vcmp.lt.f32.partialorder %v2512, %v2640
      %vm2769 = vcmp.lt.f32.partialorder %v2513, %v2641
      %vm2770 = vcmp.lt.f32.partialorder %v2514, %v2642
      %vm2771 = vcmp.lt.f32.partialorder %v2515, %v2643
      %vm2772 = vcmp.lt.f32.partialorder %v2516, %v2644
      %vm2773 = vcmp.lt.f32.partialorder %v2517, %v2645
      %vm2774 = vcmp.lt.f32.partialorder %v2518, %v2646
      %vm2775 = vcmp.lt.f32.partialorder %v2519, %v2647
      %vm2776 = vcmp.lt.f32.partialorder %v2520, %v2648
      %vm2777 = vcmp.lt.f32.partialorder %v2521, %v2649
      %vm2778 = vcmp.lt.f32.partialorder %v2522, %v2650
      %vm2779 = vcmp.lt.f32.partialorder %v2523, %v2651
      %vm2780 = vcmp.lt.f32.partialorder %v2524, %v2652
      %vm2781 = vcmp.lt.f32.partialorder %v2525, %v2653
      %vm2782 = vcmp.lt.f32.partialorder %v2526, %v2654
      %vm2783 = vcmp.lt.f32.partialorder %v2527, %v2655
      %vm2784 = vcmp.lt.f32.partialorder %v2528, %v2656
      %vm2785 = vcmp.lt.f32.partialorder %v2529, %v2657
      %vm2786 = vcmp.lt.f32.partialorder %v2530, %v2658
      %vm2787 = vcmp.lt.f32.partialorder %v2531, %v2659
      %vm2788 = vcmp.lt.f32.partialorder %v2532, %v2660
      %vm2789 = vcmp.lt.f32.partialorder %v2533, %v2661
      %vm2790 = vcmp.lt.f32.partialorder %v2534, %v2662
      %vm2791 = vcmp.lt.f32.partialorder %v2535, %v2663
      %vm2792 = vcmp.lt.f32.partialorder %v2536, %v2664
      %vm2793 = vcmp.lt.f32.partialorder %v2537, %v2665
      %vm2794 = vcmp.lt.f32.partialorder %v2538, %v2666
      %vm2795 = vcmp.lt.f32.partialorder %v2539, %v2667
      %vm2796 = vcmp.lt.f32.partialorder %v2540, %v2668
      %vm2797 = vcmp.lt.f32.partialorder %v2541, %v2669
      %vm2798 = vcmp.lt.f32.partialorder %v2542, %v2670
      %v2799 = vsel %vm2671, %v2415, %v2543
      %v2800 = vsel %vm2672, %v2416, %v2544
      %v2801 = vsel %vm2673, %v2417, %v2545
      %v2802 = vsel %vm2674, %v2418, %v2546
      %v2803 = vsel %vm2675, %v2419, %v2547
      %v2804 = vsel %vm2676, %v2420, %v2548
      %v2805 = vsel %vm2677, %v2421, %v2549
      %v2806 = vsel %vm2678, %v2422, %v2550
      %v2807 = vsel %vm2679, %v2423, %v2551
      %v2808 = vsel %vm2680, %v2424, %v2552
      %v2809 = vsel %vm2681, %v2425, %v2553
      %v2810 = vsel %vm2682, %v2426, %v2554
      %v2811 = vsel %vm2683, %v2427, %v2555
      %v2812 = vsel %vm2684, %v2428, %v2556
      %v2813 = vsel %vm2685, %v2429, %v2557
      %v2814 = vsel %vm2686, %v2430, %v2558
      %v2815 = vsel %vm2687, %v2431, %v2559
      %v2816 = vsel %vm2688, %v2432, %v2560
      %v2817 = vsel %vm2689, %v2433, %v2561
      %v2818 = vsel %vm2690, %v2434, %v2562
      %v2819 = vsel %vm2691, %v2435, %v2563
      %v2820 = vsel %vm2692, %v2436, %v2564
      %v2821 = vsel %vm2693, %v2437, %v2565
      %v2822 = vsel %vm2694, %v2438, %v2566
      %v2823 = vsel %vm2695, %v2439, %v2567
      %v2824 = vsel %vm2696, %v2440, %v2568
      %v2825 = vsel %vm2697, %v2441, %v2569
      %v2826 = vsel %vm2698, %v2442, %v2570
      %v2827 = vsel %vm2699, %v2443, %v2571
      %v2828 = vsel %vm2700, %v2444, %v2572
      %v2829 = vsel %vm2701, %v2445, %v2573
      %v2830 = vsel %vm2702, %v2446, %v2574
      %v2831 = vsel %vm2703, %v2447, %v2575
      %v2832 = vsel %vm2704, %v2448, %v2576
      %v2833 = vsel %vm2705, %v2449, %v2577
      %v2834 = vsel %vm2706, %v2450, %v2578
      %v2835 = vsel %vm2707, %v2451, %v2579
      %v2836 = vsel %vm2708, %v2452, %v2580
      %v2837 = vsel %vm2709, %v2453, %v2581
      %v2838 = vsel %vm2710, %v2454, %v2582
      %v2839 = vsel %vm2711, %v2455, %v2583
      %v2840 = vsel %vm2712, %v2456, %v2584
      %v2841 = vsel %vm2713, %v2457, %v2585
      %v2842 = vsel %vm2714, %v2458, %v2586
      %v2843 = vsel %vm2715, %v2459, %v2587
      %v2844 = vsel %vm2716, %v2460, %v2588
      %v2845 = vsel %vm2717, %v2461, %v2589
      %v2846 = vsel %vm2718, %v2462, %v2590
      %v2847 = vsel %vm2719, %v2463, %v2591
      %v2848 = vsel %vm2720, %v2464, %v2592
      %v2849 = vsel %vm2721, %v2465, %v2593
      %v2850 = vsel %vm2722, %v2466, %v2594
      %v2851 = vsel %vm2723, %v2467, %v2595
      %v2852 = vsel %vm2724, %v2468, %v2596
      %v2853 = vsel %vm2725, %v2469, %v2597
      %v2854 = vsel %vm2726, %v2470, %v2598
      %v2855 = vsel %vm2727, %v2471, %v2599
      %v2856 = vsel %vm2728, %v2472, %v2600
      %v2857 = vsel %vm2729, %v2473, %v2601
      %v2858 = vsel %vm2730, %v2474, %v2602
      %v2859 = vsel %vm2731, %v2475, %v2603
      %v2860 = vsel %vm2732, %v2476, %v2604
      %v2861 = vsel %vm2733, %v2477, %v2605
      %v2862 = vsel %vm2734, %v2478, %v2606
      %v2863 = vsel %vm2735, %v2479, %v2607
      %v2864 = vsel %vm2736, %v2480, %v2608
      %v2865 = vsel %vm2737, %v2481, %v2609
      %v2866 = vsel %vm2738, %v2482, %v2610
      %v2867 = vsel %vm2739, %v2483, %v2611
      %v2868 = vsel %vm2740, %v2484, %v2612
      %v2869 = vsel %vm2741, %v2485, %v2613
      %v2870 = vsel %vm2742, %v2486, %v2614
      %v2871 = vsel %vm2743, %v2487, %v2615
      %v2872 = vsel %vm2744, %v2488, %v2616
      %v2873 = vsel %vm2745, %v2489, %v2617
      %v2874 = vsel %vm2746, %v2490, %v2618
      %v2875 = vsel %vm2747, %v2491, %v2619
      %v2876 = vsel %vm2748, %v2492, %v2620
      %v2877 = vsel %vm2749, %v2493, %v2621
      %v2878 = vsel %vm2750, %v2494, %v2622
      %v2879 = vsel %vm2751, %v2495, %v2623
      %v2880 = vsel %vm2752, %v2496, %v2624
      %v2881 = vsel %vm2753, %v2497, %v2625
      %v2882 = vsel %vm2754, %v2498, %v2626
      %v2883 = vsel %vm2755, %v2499, %v2627
      %v2884 = vsel %vm2756, %v2500, %v2628
      %v2885 = vsel %vm2757, %v2501, %v2629
      %v2886 = vsel %vm2758, %v2502, %v2630
      %v2887 = vsel %vm2759, %v2503, %v2631
      %v2888 = vsel %vm2760, %v2504, %v2632
      %v2889 = vsel %vm2761, %v2505, %v2633
      %v2890 = vsel %vm2762, %v2506, %v2634
      %v2891 = vsel %vm2763, %v2507, %v2635
      %v2892 = vsel %vm2764, %v2508, %v2636
      %v2893 = vsel %vm2765, %v2509, %v2637
      %v2894 = vsel %vm2766, %v2510, %v2638
      %v2895 = vsel %vm2767, %v2511, %v2639
      %v2896 = vsel %vm2768, %v2512, %v2640
      %v2897 = vsel %vm2769, %v2513, %v2641
      %v2898 = vsel %vm2770, %v2514, %v2642
      %v2899 = vsel %vm2771, %v2515, %v2643
      %v2900 = vsel %vm2772, %v2516, %v2644
      %v2901 = vsel %vm2773, %v2517, %v2645
      %v2902 = vsel %vm2774, %v2518, %v2646
      %v2903 = vsel %vm2775, %v2519, %v2647
      %v2904 = vsel %vm2776, %v2520, %v2648
      %v2905 = vsel %vm2777, %v2521, %v2649
      %v2906 = vsel %vm2778, %v2522, %v2650
      %v2907 = vsel %vm2779, %v2523, %v2651
      %v2908 = vsel %vm2780, %v2524, %v2652
      %v2909 = vsel %vm2781, %v2525, %v2653
      %v2910 = vsel %vm2782, %v2526, %v2654
      %v2911 = vsel %vm2783, %v2527, %v2655
      %v2912 = vsel %vm2784, %v2528, %v2656
      %v2913 = vsel %vm2785, %v2529, %v2657
      %v2914 = vsel %vm2786, %v2530, %v2658
      %v2915 = vsel %vm2787, %v2531, %v2659
      %v2916 = vsel %vm2788, %v2532, %v2660
      %v2917 = vsel %vm2789, %v2533, %v2661
      %v2918 = vsel %vm2790, %v2534, %v2662
      %v2919 = vsel %vm2791, %v2535, %v2663
      %v2920 = vsel %vm2792, %v2536, %v2664
      %v2921 = vsel %vm2793, %v2537, %v2665
      %v2922 = vsel %vm2794, %v2538, %v2666
      %v2923 = vsel %vm2795, %v2539, %v2667
      %v2924 = vsel %vm2796, %v2540, %v2668
      %v2925 = vsel %vm2797, %v2541, %v2669
      %v2926 = vsel %vm2798, %v2542, %v2670
      %2927 = vst [vmem:[#allocation2] sm:$0xff] %v2799
      %2928 = vst [vmem:[#allocation2 + $0x8] sm:$0xff] %v2800
      %2929 = vst [vmem:[#allocation2 + $0x10] sm:$0xff] %v2801
      %2930 = vst [vmem:[#allocation2 + $0x18] sm:$0xff] %v2802
      %2931 = vst [vmem:[#allocation2 + $0x20] sm:$0xff] %v2803
      %2932 = vst [vmem:[#allocation2 + $0x28] sm:$0xff] %v2804
      %2933 = vst [vmem:[#allocation2 + $0x30] sm:$0xff] %v2805
      %2934 = vst [vmem:[#allocation2 + $0x38] sm:$0xff] %v2806
      %2935 = vst [vmem:[#allocation2 + $0x40] sm:$0xff] %v2807
      %2936 = vst [vmem:[#allocation2 + $0x48] sm:$0xff] %v2808
      %2937 = vst [vmem:[#allocation2 + $0x50] sm:$0xff] %v2809
      %2938 = vst [vmem:[#allocation2 + $0x58] sm:$0xff] %v2810
      %2939 = vst [vmem:[#allocation2 + $0x60] sm:$0xff] %v2811
      %2940 = vst [vmem:[#allocation2 + $0x68] sm:$0xff] %v2812
      %2941 = vst [vmem:[#allocation2 + $0x70] sm:$0xff] %v2813
      %2942 = vst [vmem:[#allocation2 + $0x78] sm:$0xff] %v2814
      %2943 = vst [vmem:[#allocation2 + $0x80] sm:$0xff] %v2815
      %2944 = vst [vmem:[#allocation2 + $0x88] sm:$0xff] %v2816
      %2945 = vst [vmem:[#allocation2 + $0x90] sm:$0xff] %v2817
      %2946 = vst [vmem:[#allocation2 + $0x98] sm:$0xff] %v2818
      %2947 = vst [vmem:[#allocation2 + $0xa0] sm:$0xff] %v2819
      %2948 = vst [vmem:[#allocation2 + $0xa8] sm:$0xff] %v2820
      %2949 = vst [vmem:[#allocation2 + $0xb0] sm:$0xff] %v2821
      %2950 = vst [vmem:[#allocation2 + $0xb8] sm:$0xff] %v2822
      %2951 = vst [vmem:[#allocation2 + $0xc0] sm:$0xff] %v2823
      %2952 = vst [vmem:[#allocation2 + $0xc8] sm:$0xff] %v2824
      %2953 = vst [vmem:[#allocation2 + $0xd0] sm:$0xff] %v2825
      %2954 = vst [vmem:[#allocation2 + $0xd8] sm:$0xff] %v2826
      %2955 = vst [vmem:[#allocation2 + $0xe0] sm:$0xff] %v2827
      %2956 = vst [vmem:[#allocation2 + $0xe8] sm:$0xff] %v2828
      %2957 = vst [vmem:[#allocation2 + $0xf0] sm:$0xff] %v2829
      %2958 = vst [vmem:[#allocation2 + $0xf8] sm:$0xff] %v2830
      %2959 = vst [vmem:[#allocation2 + $0x100] sm:$0xff] %v2831
      %2960 = vst [vmem:[#allocation2 + $0x108] sm:$0xff] %v2832
      %2961 = vst [vmem:[#allocation2 + $0x110] sm:$0xff] %v2833
      %2962 = vst [vmem:[#allocation2 + $0x118] sm:$0xff] %v2834
      %2963 = vst [vmem:[#allocation2 + $0x120] sm:$0xff] %v2835
      %2964 = vst [vmem:[#allocation2 + $0x128] sm:$0xff] %v2836
      %2965 = vst [vmem:[#allocation2 + $0x130] sm:$0xff] %v2837
      %2966 = vst [vmem:[#allocation2 + $0x138] sm:$0xff] %v2838
      %2967 = vst [vmem:[#allocation2 + $0x140] sm:$0xff] %v2839
      %2968 = vst [vmem:[#allocation2 + $0x148] sm:$0xff] %v2840
      %2969 = vst [vmem:[#allocation2 + $0x150] sm:$0xff] %v2841
      %2970 = vst [vmem:[#allocation2 + $0x158] sm:$0xff] %v2842
      %2971 = vst [vmem:[#allocation2 + $0x160] sm:$0xff] %v2843
      %2972 = vst [vmem:[#allocation2 + $0x168] sm:$0xff] %v2844
      %2973 = vst [vmem:[#allocation2 + $0x170] sm:$0xff] %v2845
      %2974 = vst [vmem:[#allocation2 + $0x178] sm:$0xff] %v2846
      %2975 = vst [vmem:[#allocation2 + $0x180] sm:$0xff] %v2847
      %2976 = vst [vmem:[#allocation2 + $0x188] sm:$0xff] %v2848
      %2977 = vst [vmem:[#allocation2 + $0x190] sm:$0xff] %v2849
      %2978 = vst [vmem:[#allocation2 + $0x198] sm:$0xff] %v2850
      %2979 = vst [vmem:[#allocation2 + $0x1a0] sm:$0xff] %v2851
      %2980 = vst [vmem:[#allocation2 + $0x1a8] sm:$0xff] %v2852
      %2981 = vst [vmem:[#allocation2 + $0x1b0] sm:$0xff] %v2853
      %2982 = vst [vmem:[#allocation2 + $0x1b8] sm:$0xff] %v2854
      %2983 = vst [vmem:[#allocation2 + $0x1c0] sm:$0xff] %v2855
      %2984 = vst [vmem:[#allocation2 + $0x1c8] sm:$0xff] %v2856
      %2985 = vst [vmem:[#allocation2 + $0x1d0] sm:$0xff] %v2857
      %2986 = vst [vmem:[#allocation2 + $0x1d8] sm:$0xff] %v2858
      %2987 = vst [vmem:[#allocation2 + $0x1e0] sm:$0xff] %v2859
      %2988 = vst [vmem:[#allocation2 + $0x1e8] sm:$0xff] %v2860
      %2989 = vst [vmem:[#allocation2 + $0x1f0] sm:$0xff] %v2861
      %2990 = vst [vmem:[#allocation2 + $0x1f8] sm:$0xff] %v2862
      %2991 = vst [vmem:[#allocation2 + $0x200] sm:$0xff] %v2863
      %2992 = vst [vmem:[#allocation2 + $0x208] sm:$0xff] %v2864
      %2993 = vst [vmem:[#allocation2 + $0x210] sm:$0xff] %v2865
      %2994 = vst [vmem:[#allocation2 + $0x218] sm:$0xff] %v2866
      %2995 = vst [vmem:[#allocation2 + $0x220] sm:$0xff] %v2867
      %2996 = vst [vmem:[#allocation2 + $0x228] sm:$0xff] %v2868
      %2997 = vst [vmem:[#allocation2 + $0x230] sm:$0xff] %v2869
      %2998 = vst [vmem:[#allocation2 + $0x238] sm:$0xff] %v2870
      %2999 = vst [vmem:[#allocation2 + $0x240] sm:$0xff] %v2871
      %3000 = vst [vmem:[#allocation2 + $0x248] sm:$0xff] %v2872
      %3001 = vst [vmem:[#allocation2 + $0x250] sm:$0xff] %v2873
      %3002 = vst [vmem:[#allocation2 + $0x258] sm:$0xff] %v2874
      %3003 = vst [vmem:[#allocation2 + $0x260] sm:$0xff] %v2875
      %3004 = vst [vmem:[#allocation2 + $0x268] sm:$0xff] %v2876
      %3005 = vst [vmem:[#allocation2 + $0x270] sm:$0xff] %v2877
      %3006 = vst [vmem:[#allocation2 + $0x278] sm:$0xff] %v2878
      %3007 = vst [vmem:[#allocation2 + $0x280] sm:$0xff] %v2879
      %3008 = vst [vmem:[#allocation2 + $0x288] sm:$0xff] %v2880
      %3009 = vst [vmem:[#allocation2 + $0x290] sm:$0xff] %v2881
      %3010 = vst [vmem:[#allocation2 + $0x298] sm:$0xff] %v2882
      %3011 = vst [vmem:[#allocation2 + $0x2a0] sm:$0xff] %v2883
      %3012 = vst [vmem:[#allocation2 + $0x2a8] sm:$0xff] %v2884
      %3013 = vst [vmem:[#allocation2 + $0x2b0] sm:$0xff] %v2885
      %3014 = vst [vmem:[#allocation2 + $0x2b8] sm:$0xff] %v2886
      %3015 = vst [vmem:[#allocation2 + $0x2c0] sm:$0xff] %v2887
      %3016 = vst [vmem:[#allocation2 + $0x2c8] sm:$0xff] %v2888
      %3017 = vst [vmem:[#allocation2 + $0x2d0] sm:$0xff] %v2889
      %3018 = vst [vmem:[#allocation2 + $0x2d8] sm:$0xff] %v2890
      %3019 = vst [vmem:[#allocation2 + $0x2e0] sm:$0xff] %v2891
      %3020 = vst [vmem:[#allocation2 + $0x2e8] sm:$0xff] %v2892
      %3021 = vst [vmem:[#allocation2 + $0x2f0] sm:$0xff] %v2893
      %3022 = vst [vmem:[#allocation2 + $0x2f8] sm:$0xff] %v2894
      %3023 = vst [vmem:[#allocation2 + $0x300] sm:$0xff] %v2895
      %3024 = vst [vmem:[#allocation2 + $0x308] sm:$0xff] %v2896
      %3025 = vst [vmem:[#allocation2 + $0x310] sm:$0xff] %v2897
      %3026 = vst [vmem:[#allocation2 + $0x318] sm:$0xff] %v2898
      %3027 = vst [vmem:[#allocation2 + $0x320] sm:$0xff] %v2899
      %3028 = vst [vmem:[#allocation2 + $0x328] sm:$0xff] %v2900
      %3029 = vst [vmem:[#allocation2 + $0x330] sm:$0xff] %v2901
      %3030 = vst [vmem:[#allocation2 + $0x338] sm:$0xff] %v2902
      %3031 = vst [vmem:[#allocation2 + $0x340] sm:$0xff] %v2903
      %3032 = vst [vmem:[#allocation2 + $0x348] sm:$0xff] %v2904
      %3033 = vst [vmem:[#allocation2 + $0x350] sm:$0xff] %v2905
      %3034 = vst [vmem:[#allocation2 + $0x358] sm:$0xff] %v2906
      %3035 = vst [vmem:[#allocation2 + $0x360] sm:$0xff] %v2907
      %3036 = vst [vmem:[#allocation2 + $0x368] sm:$0xff] %v2908
      %3037 = vst [vmem:[#allocation2 + $0x370] sm:$0xff] %v2909
      %3038 = vst [vmem:[#allocation2 + $0x378] sm:$0xff] %v2910
      %3039 = vst [vmem:[#allocation2 + $0x380] sm:$0xff] %v2911
      %3040 = vst [vmem:[#allocation2 + $0x388] sm:$0xff] %v2912
      %3041 = vst [vmem:[#allocation2 + $0x390] sm:$0xff] %v2913
      %3042 = vst [vmem:[#allocation2 + $0x398] sm:$0xff] %v2914
      %3043 = vst [vmem:[#allocation2 + $0x3a0] sm:$0xff] %v2915
      %3044 = vst [vmem:[#allocation2 + $0x3a8] sm:$0xff] %v2916
      %3045 = vst [vmem:[#allocation2 + $0x3b0] sm:$0xff] %v2917
      %3046 = vst [vmem:[#allocation2 + $0x3b8] sm:$0xff] %v2918
      %3047 = vst [vmem:[#allocation2 + $0x3c0] sm:$0xff] %v2919
      %3048 = vst [vmem:[#allocation2 + $0x3c8] sm:$0xff] %v2920
      %3049 = vst [vmem:[#allocation2 + $0x3d0] sm:$0xff] %v2921
      %3050 = vst [vmem:[#allocation2 + $0x3d8] sm:$0xff] %v2922
      %3051 = vst [vmem:[#allocation2 + $0x3e0] sm:$0xff] %v2923
      %3052 = vst [vmem:[#allocation2 + $0x3e8] sm:$0xff] %v2924
      %3053 = vst [vmem:[#allocation2 + $0x3f0] sm:$0xff] %v2925
      %3054 = vst [vmem:[#allocation2 + $0x3f8] sm:$0xff] %v2926
      %3055 = vst.msk [vmem:[#allocation3] sm:$0xff] %vm2671, %v1400
      %3056 = vst.msk [vmem:[#allocation3 + $0x8] sm:$0xff] %vm2672, %v1404
      %3057 = vst.msk [vmem:[#allocation3 + $0x10] sm:$0xff] %vm2673, %v1408
      %3058 = vst.msk [vmem:[#allocation3 + $0x18] sm:$0xff] %vm2674, %v1412
      %3059 = vst.msk [vmem:[#allocation3 + $0x20] sm:$0xff] %vm2675, %v1400
      %3060 = vst.msk [vmem:[#allocation3 + $0x28] sm:$0xff] %vm2676, %v1404
      %3061 = vst.msk [vmem:[#allocation3 + $0x30] sm:$0xff] %vm2677, %v1408
      %3062 = vst.msk [vmem:[#allocation3 + $0x38] sm:$0xff] %vm2678, %v1412
      %3063 = vst.msk [vmem:[#allocation3 + $0x40] sm:$0xff] %vm2679, %v1400
      %3064 = vst.msk [vmem:[#allocation3 + $0x48] sm:$0xff] %vm2680, %v1404
      %3065 = vst.msk [vmem:[#allocation3 + $0x50] sm:$0xff] %vm2681, %v1408
      %3066 = vst.msk [vmem:[#allocation3 + $0x58] sm:$0xff] %vm2682, %v1412
      %3067 = vst.msk [vmem:[#allocation3 + $0x60] sm:$0xff] %vm2683, %v1400
      %3068 = vst.msk [vmem:[#allocation3 + $0x68] sm:$0xff] %vm2684, %v1404
      %3069 = vst.msk [vmem:[#allocation3 + $0x70] sm:$0xff] %vm2685, %v1408
      %3070 = vst.msk [vmem:[#allocation3 + $0x78] sm:$0xff] %vm2686, %v1412
      %3071 = vst.msk [vmem:[#allocation3 + $0x80] sm:$0xff] %vm2687, %v1400
      %3072 = vst.msk [vmem:[#allocation3 + $0x88] sm:$0xff] %vm2688, %v1404
      %3073 = vst.msk [vmem:[#allocation3 + $0x90] sm:$0xff] %vm2689, %v1408
      %3074 = vst.msk [vmem:[#allocation3 + $0x98] sm:$0xff] %vm2690, %v1412
      %3075 = vst.msk [vmem:[#allocation3 + $0xa0] sm:$0xff] %vm2691, %v1400
      %3076 = vst.msk [vmem:[#allocation3 + $0xa8] sm:$0xff] %vm2692, %v1404
      %3077 = vst.msk [vmem:[#allocation3 + $0xb0] sm:$0xff] %vm2693, %v1408
      %3078 = vst.msk [vmem:[#allocation3 + $0xb8] sm:$0xff] %vm2694, %v1412
      %3079 = vst.msk [vmem:[#allocation3 + $0xc0] sm:$0xff] %vm2695, %v1400
      %3080 = vst.msk [vmem:[#allocation3 + $0xc8] sm:$0xff] %vm2696, %v1404
      %3081 = vst.msk [vmem:[#allocation3 + $0xd0] sm:$0xff] %vm2697, %v1408
      %3082 = vst.msk [vmem:[#allocation3 + $0xd8] sm:$0xff] %vm2698, %v1412
      %3083 = vst.msk [vmem:[#allocation3 + $0xe0] sm:$0xff] %vm2699, %v1400
      %3084 = vst.msk [vmem:[#allocation3 + $0xe8] sm:$0xff] %vm2700, %v1404
      %3085 = vst.msk [vmem:[#allocation3 + $0xf0] sm:$0xff] %vm2701, %v1408
      %3086 = vst.msk [vmem:[#allocation3 + $0xf8] sm:$0xff] %vm2702, %v1412
      %3087 = vst.msk [vmem:[#allocation3 + $0x100] sm:$0xff] %vm2703, %v1400
      %3088 = vst.msk [vmem:[#allocation3 + $0x108] sm:$0xff] %vm2704, %v1404
      %3089 = vst.msk [vmem:[#allocation3 + $0x110] sm:$0xff] %vm2705, %v1408
      %3090 = vst.msk [vmem:[#allocation3 + $0x118] sm:$0xff] %vm2706, %v1412
      %3091 = vst.msk [vmem:[#allocation3 + $0x120] sm:$0xff] %vm2707, %v1400
      %3092 = vst.msk [vmem:[#allocation3 + $0x128] sm:$0xff] %vm2708, %v1404
      %3093 = vst.msk [vmem:[#allocation3 + $0x130] sm:$0xff] %vm2709, %v1408
      %3094 = vst.msk [vmem:[#allocation3 + $0x138] sm:$0xff] %vm2710, %v1412
      %3095 = vst.msk [vmem:[#allocation3 + $0x140] sm:$0xff] %vm2711, %v1400
      %3096 = vst.msk [vmem:[#allocation3 + $0x148] sm:$0xff] %vm2712, %v1404
      %3097 = vst.msk [vmem:[#allocation3 + $0x150] sm:$0xff] %vm2713, %v1408
      %3098 = vst.msk [vmem:[#allocation3 + $0x158] sm:$0xff] %vm2714, %v1412
      %3099 = vst.msk [vmem:[#allocation3 + $0x160] sm:$0xff] %vm2715, %v1400
      %3100 = vst.msk [vmem:[#allocation3 + $0x168] sm:$0xff] %vm2716, %v1404
      %3101 = vst.msk [vmem:[#allocation3 + $0x170] sm:$0xff] %vm2717, %v1408
      %3102 = vst.msk [vmem:[#allocation3 + $0x178] sm:$0xff] %vm2718, %v1412
      %3103 = vst.msk [vmem:[#allocation3 + $0x180] sm:$0xff] %vm2719, %v1400
      %3104 = vst.msk [vmem:[#allocation3 + $0x188] sm:$0xff] %vm2720, %v1404
      %3105 = vst.msk [vmem:[#allocation3 + $0x190] sm:$0xff] %vm2721, %v1408
      %3106 = vst.msk [vmem:[#allocation3 + $0x198] sm:$0xff] %vm2722, %v1412
      %3107 = vst.msk [vmem:[#allocation3 + $0x1a0] sm:$0xff] %vm2723, %v1400
      %3108 = vst.msk [vmem:[#allocation3 + $0x1a8] sm:$0xff] %vm2724, %v1404
      %3109 = vst.msk [vmem:[#allocation3 + $0x1b0] sm:$0xff] %vm2725, %v1408
      %3110 = vst.msk [vmem:[#allocation3 + $0x1b8] sm:$0xff] %vm2726, %v1412
      %3111 = vst.msk [vmem:[#allocation3 + $0x1c0] sm:$0xff] %vm2727, %v1400
      %3112 = vst.msk [vmem:[#allocation3 + $0x1c8] sm:$0xff] %vm2728, %v1404
      %3113 = vst.msk [vmem:[#allocation3 + $0x1d0] sm:$0xff] %vm2729, %v1408
      %3114 = vst.msk [vmem:[#allocation3 + $0x1d8] sm:$0xff] %vm2730, %v1412
      %3115 = vst.msk [vmem:[#allocation3 + $0x1e0] sm:$0xff] %vm2731, %v1400
      %3116 = vst.msk [vmem:[#allocation3 + $0x1e8] sm:$0xff] %vm2732, %v1404
      %3117 = vst.msk [vmem:[#allocation3 + $0x1f0] sm:$0xff] %vm2733, %v1408
      %3118 = vst.msk [vmem:[#allocation3 + $0x1f8] sm:$0xff] %vm2734, %v1412
      %3119 = vst.msk [vmem:[#allocation3 + $0x200] sm:$0xff] %vm2735, %v1400
      %3120 = vst.msk [vmem:[#allocation3 + $0x208] sm:$0xff] %vm2736, %v1404
      %3121 = vst.msk [vmem:[#allocation3 + $0x210] sm:$0xff] %vm2737, %v1408
      %3122 = vst.msk [vmem:[#allocation3 + $0x218] sm:$0xff] %vm2738, %v1412
      %3123 = vst.msk [vmem:[#allocation3 + $0x220] sm:$0xff] %vm2739, %v1400
      %3124 = vst.msk [vmem:[#allocation3 + $0x228] sm:$0xff] %vm2740, %v1404
      %3125 = vst.msk [vmem:[#allocation3 + $0x230] sm:$0xff] %vm2741, %v1408
      %3126 = vst.msk [vmem:[#allocation3 + $0x238] sm:$0xff] %vm2742, %v1412
      %3127 = vst.msk [vmem:[#allocation3 + $0x240] sm:$0xff] %vm2743, %v1400
      %3128 = vst.msk [vmem:[#allocation3 + $0x248] sm:$0xff] %vm2744, %v1404
      %3129 = vst.msk [vmem:[#allocation3 + $0x250] sm:$0xff] %vm2745, %v1408
      %3130 = vst.msk [vmem:[#allocation3 + $0x258] sm:$0xff] %vm2746, %v1412
      %3131 = vst.msk [vmem:[#allocation3 + $0x260] sm:$0xff] %vm2747, %v1400
      %3132 = vst.msk [vmem:[#allocation3 + $0x268] sm:$0xff] %vm2748, %v1404
      %3133 = vst.msk [vmem:[#allocation3 + $0x270] sm:$0xff] %vm2749, %v1408
      %3134 = vst.msk [vmem:[#allocation3 + $0x278] sm:$0xff] %vm2750, %v1412
      %3135 = vst.msk [vmem:[#allocation3 + $0x280] sm:$0xff] %vm2751, %v1400
      %3136 = vst.msk [vmem:[#allocation3 + $0x288] sm:$0xff] %vm2752, %v1404
      %3137 = vst.msk [vmem:[#allocation3 + $0x290] sm:$0xff] %vm2753, %v1408
      %3138 = vst.msk [vmem:[#allocation3 + $0x298] sm:$0xff] %vm2754, %v1412
      %3139 = vst.msk [vmem:[#allocation3 + $0x2a0] sm:$0xff] %vm2755, %v1400
      %3140 = vst.msk [vmem:[#allocation3 + $0x2a8] sm:$0xff] %vm2756, %v1404
      %3141 = vst.msk [vmem:[#allocation3 + $0x2b0] sm:$0xff] %vm2757, %v1408
      %3142 = vst.msk [vmem:[#allocation3 + $0x2b8] sm:$0xff] %vm2758, %v1412
      %3143 = vst.msk [vmem:[#allocation3 + $0x2c0] sm:$0xff] %vm2759, %v1400
      %3144 = vst.msk [vmem:[#allocation3 + $0x2c8] sm:$0xff] %vm2760, %v1404
      %3145 = vst.msk [vmem:[#allocation3 + $0x2d0] sm:$0xff] %vm2761, %v1408
      %3146 = vst.msk [vmem:[#allocation3 + $0x2d8] sm:$0xff] %vm2762, %v1412
      %3147 = vst.msk [vmem:[#allocation3 + $0x2e0] sm:$0xff] %vm2763, %v1400
      %3148 = vst.msk [vmem:[#allocation3 + $0x2e8] sm:$0xff] %vm2764, %v1404
      %3149 = vst.msk [vmem:[#allocation3 + $0x2f0] sm:$0xff] %vm2765, %v1408
      %3150 = vst.msk [vmem:[#allocation3 + $0x2f8] sm:$0xff] %vm2766, %v1412
      %3151 = vst.msk [vmem:[#allocation3 + $0x300] sm:$0xff] %vm2767, %v1400
      %3152 = vst.msk [vmem:[#allocation3 + $0x308] sm:$0xff] %vm2768, %v1404
      %3153 = vst.msk [vmem:[#allocation3 + $0x310] sm:$0xff] %vm2769, %v1408
      %3154 = vst.msk [vmem:[#allocation3 + $0x318] sm:$0xff] %vm2770, %v1412
      %3155 = vst.msk [vmem:[#allocation3 + $0x320] sm:$0xff] %vm2771, %v1400
      %3156 = vst.msk [vmem:[#allocation3 + $0x328] sm:$0xff] %vm2772, %v1404
      %3157 = vst.msk [vmem:[#allocation3 + $0x330] sm:$0xff] %vm2773, %v1408
      %3158 = vst.msk [vmem:[#allocation3 + $0x338] sm:$0xff] %vm2774, %v1412
      %3159 = vst.msk [vmem:[#allocation3 + $0x340] sm:$0xff] %vm2775, %v1400
      %3160 = vst.msk [vmem:[#allocation3 + $0x348] sm:$0xff] %vm2776, %v1404
      %3161 = vst.msk [vmem:[#allocation3 + $0x350] sm:$0xff] %vm2777, %v1408
      %3162 = vst.msk [vmem:[#allocation3 + $0x358] sm:$0xff] %vm2778, %v1412
      %3163 = vst.msk [vmem:[#allocation3 + $0x360] sm:$0xff] %vm2779, %v1400
      %3164 = vst.msk [vmem:[#allocation3 + $0x368] sm:$0xff] %vm2780, %v1404
      %3165 = vst.msk [vmem:[#allocation3 + $0x370] sm:$0xff] %vm2781, %v1408
      %3166 = vst.msk [vmem:[#allocation3 + $0x378] sm:$0xff] %vm2782, %v1412
      %3167 = vst.msk [vmem:[#allocation3 + $0x380] sm:$0xff] %vm2783, %v1400
      %3168 = vst.msk [vmem:[#allocation3 + $0x388] sm:$0xff] %vm2784, %v1404
      %3169 = vst.msk [vmem:[#allocation3 + $0x390] sm:$0xff] %vm2785, %v1408
      %3170 = vst.msk [vmem:[#allocation3 + $0x398] sm:$0xff] %vm2786, %v1412
      %3171 = vst.msk [vmem:[#allocation3 + $0x3a0] sm:$0xff] %vm2787, %v1400
      %3172 = vst.msk [vmem:[#allocation3 + $0x3a8] sm:$0xff] %vm2788, %v1404
      %3173 = vst.msk [vmem:[#allocation3 + $0x3b0] sm:$0xff] %vm2789, %v1408
      %3174 = vst.msk [vmem:[#allocation3 + $0x3b8] sm:$0xff] %vm2790, %v1412
      %3175 = vst.msk [vmem:[#allocation3 + $0x3c0] sm:$0xff] %vm2791, %v1400
      %3176 = vst.msk [vmem:[#allocation3 + $0x3c8] sm:$0xff] %vm2792, %v1404
      %3177 = vst.msk [vmem:[#allocation3 + $0x3d0] sm:$0xff] %vm2793, %v1408
      %3178 = vst.msk [vmem:[#allocation3 + $0x3d8] sm:$0xff] %vm2794, %v1412
      %3179 = vst.msk [vmem:[#allocation3 + $0x3e0] sm:$0xff] %vm2795, %v1400
      %3180 = vst.msk [vmem:[#allocation3 + $0x3e8] sm:$0xff] %vm2796, %v1404
      %3181 = vst.msk [vmem:[#allocation3 + $0x3f0] sm:$0xff] %vm2797, %v1408
      %3182 = vst.msk [vmem:[#allocation3 + $0x3f8] sm:$0xff] %vm2798, %v1412
      %3183 = vst.msk [vmem:[#allocation4] sm:$0xff] %vm2671, %v1569
      %3184 = vst.msk [vmem:[#allocation4 + $0x8] sm:$0xff] %vm2672, %v1573
      %3185 = vst.msk [vmem:[#allocation4 + $0x10] sm:$0xff] %vm2673, %v1577
      %3186 = vst.msk [vmem:[#allocation4 + $0x18] sm:$0xff] %vm2674, %v1581
      %3187 = vst.msk [vmem:[#allocation4 + $0x20] sm:$0xff] %vm2675, %v1569
      %3188 = vst.msk [vmem:[#allocation4 + $0x28] sm:$0xff] %vm2676, %v1573
      %3189 = vst.msk [vmem:[#allocation4 + $0x30] sm:$0xff] %vm2677, %v1577
      %3190 = vst.msk [vmem:[#allocation4 + $0x38] sm:$0xff] %vm2678, %v1581
      %3191 = vst.msk [vmem:[#allocation4 + $0x40] sm:$0xff] %vm2679, %v1569
      %3192 = vst.msk [vmem:[#allocation4 + $0x48] sm:$0xff] %vm2680, %v1573
      %3193 = vst.msk [vmem:[#allocation4 + $0x50] sm:$0xff] %vm2681, %v1577
      %3194 = vst.msk [vmem:[#allocation4 + $0x58] sm:$0xff] %vm2682, %v1581
      %3195 = vst.msk [vmem:[#allocation4 + $0x60] sm:$0xff] %vm2683, %v1569
      %3196 = vst.msk [vmem:[#allocation4 + $0x68] sm:$0xff] %vm2684, %v1573
      %3197 = vst.msk [vmem:[#allocation4 + $0x70] sm:$0xff] %vm2685, %v1577
      %3198 = vst.msk [vmem:[#allocation4 + $0x78] sm:$0xff] %vm2686, %v1581
      %3199 = vst.msk [vmem:[#allocation4 + $0x80] sm:$0xff] %vm2687, %v1569
      %3200 = vst.msk [vmem:[#allocation4 + $0x88] sm:$0xff] %vm2688, %v1573
      %3201 = vst.msk [vmem:[#allocation4 + $0x90] sm:$0xff] %vm2689, %v1577
      %3202 = vst.msk [vmem:[#allocation4 + $0x98] sm:$0xff] %vm2690, %v1581
      %3203 = vst.msk [vmem:[#allocation4 + $0xa0] sm:$0xff] %vm2691, %v1569
      %3204 = vst.msk [vmem:[#allocation4 + $0xa8] sm:$0xff] %vm2692, %v1573
      %3205 = vst.msk [vmem:[#allocation4 + $0xb0] sm:$0xff] %vm2693, %v1577
      %3206 = vst.msk [vmem:[#allocation4 + $0xb8] sm:$0xff] %vm2694, %v1581
      %3207 = vst.msk [vmem:[#allocation4 + $0xc0] sm:$0xff] %vm2695, %v1569
      %3208 = vst.msk [vmem:[#allocation4 + $0xc8] sm:$0xff] %vm2696, %v1573
      %3209 = vst.msk [vmem:[#allocation4 + $0xd0] sm:$0xff] %vm2697, %v1577
      %3210 = vst.msk [vmem:[#allocation4 + $0xd8] sm:$0xff] %vm2698, %v1581
      %3211 = vst.msk [vmem:[#allocation4 + $0xe0] sm:$0xff] %vm2699, %v1569
      %3212 = vst.msk [vmem:[#allocation4 + $0xe8] sm:$0xff] %vm2700, %v1573
      %3213 = vst.msk [vmem:[#allocation4 + $0xf0] sm:$0xff] %vm2701, %v1577
      %3214 = vst.msk [vmem:[#allocation4 + $0xf8] sm:$0xff] %vm2702, %v1581
      %3215 = vst.msk [vmem:[#allocation4 + $0x100] sm:$0xff] %vm2703, %v1569
      %3216 = vst.msk [vmem:[#allocation4 + $0x108] sm:$0xff] %vm2704, %v1573
      %3217 = vst.msk [vmem:[#allocation4 + $0x110] sm:$0xff] %vm2705, %v1577
      %3218 = vst.msk [vmem:[#allocation4 + $0x118] sm:$0xff] %vm2706, %v1581
      %3219 = vst.msk [vmem:[#allocation4 + $0x120] sm:$0xff] %vm2707, %v1569
      %3220 = vst.msk [vmem:[#allocation4 + $0x128] sm:$0xff] %vm2708, %v1573
      %3221 = vst.msk [vmem:[#allocation4 + $0x130] sm:$0xff] %vm2709, %v1577
      %3222 = vst.msk [vmem:[#allocation4 + $0x138] sm:$0xff] %vm2710, %v1581
      %3223 = vst.msk [vmem:[#allocation4 + $0x140] sm:$0xff] %vm2711, %v1569
      %3224 = vst.msk [vmem:[#allocation4 + $0x148] sm:$0xff] %vm2712, %v1573
      %3225 = vst.msk [vmem:[#allocation4 + $0x150] sm:$0xff] %vm2713, %v1577
      %3226 = vst.msk [vmem:[#allocation4 + $0x158] sm:$0xff] %vm2714, %v1581
      %3227 = vst.msk [vmem:[#allocation4 + $0x160] sm:$0xff] %vm2715, %v1569
      %3228 = vst.msk [vmem:[#allocation4 + $0x168] sm:$0xff] %vm2716, %v1573
      %3229 = vst.msk [vmem:[#allocation4 + $0x170] sm:$0xff] %vm2717, %v1577
      %3230 = vst.msk [vmem:[#allocation4 + $0x178] sm:$0xff] %vm2718, %v1581
      %3231 = vst.msk [vmem:[#allocation4 + $0x180] sm:$0xff] %vm2719, %v1569
      %3232 = vst.msk [vmem:[#allocation4 + $0x188] sm:$0xff] %vm2720, %v1573
      %3233 = vst.msk [vmem:[#allocation4 + $0x190] sm:$0xff] %vm2721, %v1577
      %3234 = vst.msk [vmem:[#allocation4 + $0x198] sm:$0xff] %vm2722, %v1581
      %3235 = vst.msk [vmem:[#allocation4 + $0x1a0] sm:$0xff] %vm2723, %v1569
      %3236 = vst.msk [vmem:[#allocation4 + $0x1a8] sm:$0xff] %vm2724, %v1573
      %3237 = vst.msk [vmem:[#allocation4 + $0x1b0] sm:$0xff] %vm2725, %v1577
      %3238 = vst.msk [vmem:[#allocation4 + $0x1b8] sm:$0xff] %vm2726, %v1581
      %3239 = vst.msk [vmem:[#allocation4 + $0x1c0] sm:$0xff] %vm2727, %v1569
      %3240 = vst.msk [vmem:[#allocation4 + $0x1c8] sm:$0xff] %vm2728, %v1573
      %3241 = vst.msk [vmem:[#allocation4 + $0x1d0] sm:$0xff] %vm2729, %v1577
      %3242 = vst.msk [vmem:[#allocation4 + $0x1d8] sm:$0xff] %vm2730, %v1581
      %3243 = vst.msk [vmem:[#allocation4 + $0x1e0] sm:$0xff] %vm2731, %v1569
      %3244 = vst.msk [vmem:[#allocation4 + $0x1e8] sm:$0xff] %vm2732, %v1573
      %3245 = vst.msk [vmem:[#allocation4 + $0x1f0] sm:$0xff] %vm2733, %v1577
      %3246 = vst.msk [vmem:[#allocation4 + $0x1f8] sm:$0xff] %vm2734, %v1581
      %3247 = vst.msk [vmem:[#allocation4 + $0x200] sm:$0xff] %vm2735, %v1569
      %3248 = vst.msk [vmem:[#allocation4 + $0x208] sm:$0xff] %vm2736, %v1573
      %3249 = vst.msk [vmem:[#allocation4 + $0x210] sm:$0xff] %vm2737, %v1577
      %3250 = vst.msk [vmem:[#allocation4 + $0x218] sm:$0xff] %vm2738, %v1581
      %3251 = vst.msk [vmem:[#allocation4 + $0x220] sm:$0xff] %vm2739, %v1569
      %3252 = vst.msk [vmem:[#allocation4 + $0x228] sm:$0xff] %vm2740, %v1573
      %3253 = vst.msk [vmem:[#allocation4 + $0x230] sm:$0xff] %vm2741, %v1577
      %3254 = vst.msk [vmem:[#allocation4 + $0x238] sm:$0xff] %vm2742, %v1581
      %3255 = vst.msk [vmem:[#allocation4 + $0x240] sm:$0xff] %vm2743, %v1569
      %3256 = vst.msk [vmem:[#allocation4 + $0x248] sm:$0xff] %vm2744, %v1573
      %3257 = vst.msk [vmem:[#allocation4 + $0x250] sm:$0xff] %vm2745, %v1577
      %3258 = vst.msk [vmem:[#allocation4 + $0x258] sm:$0xff] %vm2746, %v1581
      %3259 = vst.msk [vmem:[#allocation4 + $0x260] sm:$0xff] %vm2747, %v1569
      %3260 = vst.msk [vmem:[#allocation4 + $0x268] sm:$0xff] %vm2748, %v1573
      %3261 = vst.msk [vmem:[#allocation4 + $0x270] sm:$0xff] %vm2749, %v1577
      %3262 = vst.msk [vmem:[#allocation4 + $0x278] sm:$0xff] %vm2750, %v1581
      %3263 = vst.msk [vmem:[#allocation4 + $0x280] sm:$0xff] %vm2751, %v1569
      %3264 = vst.msk [vmem:[#allocation4 + $0x288] sm:$0xff] %vm2752, %v1573
      %3265 = vst.msk [vmem:[#allocation4 + $0x290] sm:$0xff] %vm2753, %v1577
      %3266 = vst.msk [vmem:[#allocation4 + $0x298] sm:$0xff] %vm2754, %v1581
      %3267 = vst.msk [vmem:[#allocation4 + $0x2a0] sm:$0xff] %vm2755, %v1569
      %3268 = vst.msk [vmem:[#allocation4 + $0x2a8] sm:$0xff] %vm2756, %v1573
      %3269 = vst.msk [vmem:[#allocation4 + $0x2b0] sm:$0xff] %vm2757, %v1577
      %3270 = vst.msk [vmem:[#allocation4 + $0x2b8] sm:$0xff] %vm2758, %v1581
      %3271 = vst.msk [vmem:[#allocation4 + $0x2c0] sm:$0xff] %vm2759, %v1569
      %3272 = vst.msk [vmem:[#allocation4 + $0x2c8] sm:$0xff] %vm2760, %v1573
      %3273 = vst.msk [vmem:[#allocation4 + $0x2d0] sm:$0xff] %vm2761, %v1577
      %3274 = vst.msk [vmem:[#allocation4 + $0x2d8] sm:$0xff] %vm2762, %v1581
      %3275 = vst.msk [vmem:[#allocation4 + $0x2e0] sm:$0xff] %vm2763, %v1569
      %3276 = vst.msk [vmem:[#allocation4 + $0x2e8] sm:$0xff] %vm2764, %v1573
      %3277 = vst.msk [vmem:[#allocation4 + $0x2f0] sm:$0xff] %vm2765, %v1577
      %3278 = vst.msk [vmem:[#allocation4 + $0x2f8] sm:$0xff] %vm2766, %v1581
      %3279 = vst.msk [vmem:[#allocation4 + $0x300] sm:$0xff] %vm2767, %v1569
      %3280 = vst.msk [vmem:[#allocation4 + $0x308] sm:$0xff] %vm2768, %v1573
      %3281 = vst.msk [vmem:[#allocation4 + $0x310] sm:$0xff] %vm2769, %v1577
      %3282 = vst.msk [vmem:[#allocation4 + $0x318] sm:$0xff] %vm2770, %v1581
      %3283 = vst.msk [vmem:[#allocation4 + $0x320] sm:$0xff] %vm2771, %v1569
      %3284 = vst.msk [vmem:[#allocation4 + $0x328] sm:$0xff] %vm2772, %v1573
      %3285 = vst.msk [vmem:[#allocation4 + $0x330] sm:$0xff] %vm2773, %v1577
      %3286 = vst.msk [vmem:[#allocation4 + $0x338] sm:$0xff] %vm2774, %v1581
      %3287 = vst.msk [vmem:[#allocation4 + $0x340] sm:$0xff] %vm2775, %v1569
      %3288 = vst.msk [vmem:[#allocation4 + $0x348] sm:$0xff] %vm2776, %v1573
      %3289 = vst.msk [vmem:[#allocation4 + $0x350] sm:$0xff] %vm2777, %v1577
      %3290 = vst.msk [vmem:[#allocation4 + $0x358] sm:$0xff] %vm2778, %v1581
      %3291 = vst.msk [vmem:[#allocation4 + $0x360] sm:$0xff] %vm2779, %v1569
      %3292 = vst.msk [vmem:[#allocation4 + $0x368] sm:$0xff] %vm2780, %v1573
      %3293 = vst.msk [vmem:[#allocation4 + $0x370] sm:$0xff] %vm2781, %v1577
      %3294 = vst.msk [vmem:[#allocation4 + $0x378] sm:$0xff] %vm2782, %v1581
      %3295 = vst.msk [vmem:[#allocation4 + $0x380] sm:$0xff] %vm2783, %v1569
      %3296 = vst.msk [vmem:[#allocation4 + $0x388] sm:$0xff] %vm2784, %v1573
      %3297 = vst.msk [vmem:[#allocation4 + $0x390] sm:$0xff] %vm2785, %v1577
      %3298 = vst.msk [vmem:[#allocation4 + $0x398] sm:$0xff] %vm2786, %v1581
      %3299 = vst.msk [vmem:[#allocation4 + $0x3a0] sm:$0xff] %vm2787, %v1569
      %3300 = vst.msk [vmem:[#allocation4 + $0x3a8] sm:$0xff] %vm2788, %v1573
      %3301 = vst.msk [vmem:[#allocation4 + $0x3b0] sm:$0xff] %vm2789, %v1577
      %3302 = vst.msk [vmem:[#allocation4 + $0x3b8] sm:$0xff] %vm2790, %v1581
      %3303 = vst.msk [vmem:[#allocation4 + $0x3c0] sm:$0xff] %vm2791, %v1569
      %3304 = vst.msk [vmem:[#allocation4 + $0x3c8] sm:$0xff] %vm2792, %v1573
      %3305 = vst.msk [vmem:[#allocation4 + $0x3d0] sm:$0xff] %vm2793, %v1577
      %3306 = vst.msk [vmem:[#allocation4 + $0x3d8] sm:$0xff] %vm2794, %v1581
      %3307 = vst.msk [vmem:[#allocation4 + $0x3e0] sm:$0xff] %vm2795, %v1569
      %3308 = vst.msk [vmem:[#allocation4 + $0x3e8] sm:$0xff] %vm2796, %v1573
      %3309 = vst.msk [vmem:[#allocation4 + $0x3f0] sm:$0xff] %vm2797, %v1577
      %3310 = vst.msk [vmem:[#allocation4 + $0x3f8] sm:$0xff] %vm2798, %v1581
      %3311 = vst.msk [vmem:[#allocation5] sm:$0xff] %vm2671, %v1738
      %3312 = vst.msk [vmem:[#allocation5 + $0x8] sm:$0xff] %vm2672, %v1742
      %3313 = vst.msk [vmem:[#allocation5 + $0x10] sm:$0xff] %vm2673, %v1746
      %3314 = vst.msk [vmem:[#allocation5 + $0x18] sm:$0xff] %vm2674, %v1750
      %3315 = vst.msk [vmem:[#allocation5 + $0x20] sm:$0xff] %vm2675, %v1738
      %3316 = vst.msk [vmem:[#allocation5 + $0x28] sm:$0xff] %vm2676, %v1742
      %3317 = vst.msk [vmem:[#allocation5 + $0x30] sm:$0xff] %vm2677, %v1746
      %3318 = vst.msk [vmem:[#allocation5 + $0x38] sm:$0xff] %vm2678, %v1750
      %3319 = vst.msk [vmem:[#allocation5 + $0x40] sm:$0xff] %vm2679, %v1738
      %3320 = vst.msk [vmem:[#allocation5 + $0x48] sm:$0xff] %vm2680, %v1742
      %3321 = vst.msk [vmem:[#allocation5 + $0x50] sm:$0xff] %vm2681, %v1746
      %3322 = vst.msk [vmem:[#allocation5 + $0x58] sm:$0xff] %vm2682, %v1750
      %3323 = vst.msk [vmem:[#allocation5 + $0x60] sm:$0xff] %vm2683, %v1738
      %3324 = vst.msk [vmem:[#allocation5 + $0x68] sm:$0xff] %vm2684, %v1742
      %3325 = vst.msk [vmem:[#allocation5 + $0x70] sm:$0xff] %vm2685, %v1746
      %3326 = vst.msk [vmem:[#allocation5 + $0x78] sm:$0xff] %vm2686, %v1750
      %3327 = vst.msk [vmem:[#allocation5 + $0x80] sm:$0xff] %vm2687, %v1738
      %3328 = vst.msk [vmem:[#allocation5 + $0x88] sm:$0xff] %vm2688, %v1742
      %3329 = vst.msk [vmem:[#allocation5 + $0x90] sm:$0xff] %vm2689, %v1746
      %3330 = vst.msk [vmem:[#allocation5 + $0x98] sm:$0xff] %vm2690, %v1750
      %3331 = vst.msk [vmem:[#allocation5 + $0xa0] sm:$0xff] %vm2691, %v1738
      %3332 = vst.msk [vmem:[#allocation5 + $0xa8] sm:$0xff] %vm2692, %v1742
      %3333 = vst.msk [vmem:[#allocation5 + $0xb0] sm:$0xff] %vm2693, %v1746
      %3334 = vst.msk [vmem:[#allocation5 + $0xb8] sm:$0xff] %vm2694, %v1750
      %3335 = vst.msk [vmem:[#allocation5 + $0xc0] sm:$0xff] %vm2695, %v1738
      %3336 = vst.msk [vmem:[#allocation5 + $0xc8] sm:$0xff] %vm2696, %v1742
      %3337 = vst.msk [vmem:[#allocation5 + $0xd0] sm:$0xff] %vm2697, %v1746
      %3338 = vst.msk [vmem:[#allocation5 + $0xd8] sm:$0xff] %vm2698, %v1750
      %3339 = vst.msk [vmem:[#allocation5 + $0xe0] sm:$0xff] %vm2699, %v1738
      %3340 = vst.msk [vmem:[#allocation5 + $0xe8] sm:$0xff] %vm2700, %v1742
      %3341 = vst.msk [vmem:[#allocation5 + $0xf0] sm:$0xff] %vm2701, %v1746
      %3342 = vst.msk [vmem:[#allocation5 + $0xf8] sm:$0xff] %vm2702, %v1750
      %3343 = vst.msk [vmem:[#allocation5 + $0x100] sm:$0xff] %vm2703, %v1738
      %3344 = vst.msk [vmem:[#allocation5 + $0x108] sm:$0xff] %vm2704, %v1742
      %3345 = vst.msk [vmem:[#allocation5 + $0x110] sm:$0xff] %vm2705, %v1746
      %3346 = vst.msk [vmem:[#allocation5 + $0x118] sm:$0xff] %vm2706, %v1750
      %3347 = vst.msk [vmem:[#allocation5 + $0x120] sm:$0xff] %vm2707, %v1738
      %3348 = vst.msk [vmem:[#allocation5 + $0x128] sm:$0xff] %vm2708, %v1742
      %3349 = vst.msk [vmem:[#allocation5 + $0x130] sm:$0xff] %vm2709, %v1746
      %3350 = vst.msk [vmem:[#allocation5 + $0x138] sm:$0xff] %vm2710, %v1750
      %3351 = vst.msk [vmem:[#allocation5 + $0x140] sm:$0xff] %vm2711, %v1738
      %3352 = vst.msk [vmem:[#allocation5 + $0x148] sm:$0xff] %vm2712, %v1742
      %3353 = vst.msk [vmem:[#allocation5 + $0x150] sm:$0xff] %vm2713, %v1746
      %3354 = vst.msk [vmem:[#allocation5 + $0x158] sm:$0xff] %vm2714, %v1750
      %3355 = vst.msk [vmem:[#allocation5 + $0x160] sm:$0xff] %vm2715, %v1738
      %3356 = vst.msk [vmem:[#allocation5 + $0x168] sm:$0xff] %vm2716, %v1742
      %3357 = vst.msk [vmem:[#allocation5 + $0x170] sm:$0xff] %vm2717, %v1746
      %3358 = vst.msk [vmem:[#allocation5 + $0x178] sm:$0xff] %vm2718, %v1750
      %3359 = vst.msk [vmem:[#allocation5 + $0x180] sm:$0xff] %vm2719, %v1738
      %3360 = vst.msk [vmem:[#allocation5 + $0x188] sm:$0xff] %vm2720, %v1742
      %3361 = vst.msk [vmem:[#allocation5 + $0x190] sm:$0xff] %vm2721, %v1746
      %3362 = vst.msk [vmem:[#allocation5 + $0x198] sm:$0xff] %vm2722, %v1750
      %3363 = vst.msk [vmem:[#allocation5 + $0x1a0] sm:$0xff] %vm2723, %v1738
      %3364 = vst.msk [vmem:[#allocation5 + $0x1a8] sm:$0xff] %vm2724, %v1742
      %3365 = vst.msk [vmem:[#allocation5 + $0x1b0] sm:$0xff] %vm2725, %v1746
      %3366 = vst.msk [vmem:[#allocation5 + $0x1b8] sm:$0xff] %vm2726, %v1750
      %3367 = vst.msk [vmem:[#allocation5 + $0x1c0] sm:$0xff] %vm2727, %v1738
      %3368 = vst.msk [vmem:[#allocation5 + $0x1c8] sm:$0xff] %vm2728, %v1742
      %3369 = vst.msk [vmem:[#allocation5 + $0x1d0] sm:$0xff] %vm2729, %v1746
      %3370 = vst.msk [vmem:[#allocation5 + $0x1d8] sm:$0xff] %vm2730, %v1750
      %3371 = vst.msk [vmem:[#allocation5 + $0x1e0] sm:$0xff] %vm2731, %v1738
      %3372 = vst.msk [vmem:[#allocation5 + $0x1e8] sm:$0xff] %vm2732, %v1742
      %3373 = vst.msk [vmem:[#allocation5 + $0x1f0] sm:$0xff] %vm2733, %v1746
      %3374 = vst.msk [vmem:[#allocation5 + $0x1f8] sm:$0xff] %vm2734, %v1750
      %3375 = vst.msk [vmem:[#allocation5 + $0x200] sm:$0xff] %vm2735, %v1738
      %3376 = vst.msk [vmem:[#allocation5 + $0x208] sm:$0xff] %vm2736, %v1742
      %3377 = vst.msk [vmem:[#allocation5 + $0x210] sm:$0xff] %vm2737, %v1746
      %3378 = vst.msk [vmem:[#allocation5 + $0x218] sm:$0xff] %vm2738, %v1750
      %3379 = vst.msk [vmem:[#allocation5 + $0x220] sm:$0xff] %vm2739, %v1738
      %3380 = vst.msk [vmem:[#allocation5 + $0x228] sm:$0xff] %vm2740, %v1742
      %3381 = vst.msk [vmem:[#allocation5 + $0x230] sm:$0xff] %vm2741, %v1746
      %3382 = vst.msk [vmem:[#allocation5 + $0x238] sm:$0xff] %vm2742, %v1750
      %3383 = vst.msk [vmem:[#allocation5 + $0x240] sm:$0xff] %vm2743, %v1738
      %3384 = vst.msk [vmem:[#allocation5 + $0x248] sm:$0xff] %vm2744, %v1742
      %3385 = vst.msk [vmem:[#allocation5 + $0x250] sm:$0xff] %vm2745, %v1746
      %3386 = vst.msk [vmem:[#allocation5 + $0x258] sm:$0xff] %vm2746, %v1750
      %3387 = vst.msk [vmem:[#allocation5 + $0x260] sm:$0xff] %vm2747, %v1738
      %3388 = vst.msk [vmem:[#allocation5 + $0x268] sm:$0xff] %vm2748, %v1742
      %3389 = vst.msk [vmem:[#allocation5 + $0x270] sm:$0xff] %vm2749, %v1746
      %3390 = vst.msk [vmem:[#allocation5 + $0x278] sm:$0xff] %vm2750, %v1750
      %3391 = vst.msk [vmem:[#allocation5 + $0x280] sm:$0xff] %vm2751, %v1738
      %3392 = vst.msk [vmem:[#allocation5 + $0x288] sm:$0xff] %vm2752, %v1742
      %3393 = vst.msk [vmem:[#allocation5 + $0x290] sm:$0xff] %vm2753, %v1746
      %3394 = vst.msk [vmem:[#allocation5 + $0x298] sm:$0xff] %vm2754, %v1750
      %3395 = vst.msk [vmem:[#allocation5 + $0x2a0] sm:$0xff] %vm2755, %v1738
      %3396 = vst.msk [vmem:[#allocation5 + $0x2a8] sm:$0xff] %vm2756, %v1742
      %3397 = vst.msk [vmem:[#allocation5 + $0x2b0] sm:$0xff] %vm2757, %v1746
      %3398 = vst.msk [vmem:[#allocation5 + $0x2b8] sm:$0xff] %vm2758, %v1750
      %3399 = vst.msk [vmem:[#allocation5 + $0x2c0] sm:$0xff] %vm2759, %v1738
      %3400 = vst.msk [vmem:[#allocation5 + $0x2c8] sm:$0xff] %vm2760, %v1742
      %3401 = vst.msk [vmem:[#allocation5 + $0x2d0] sm:$0xff] %vm2761, %v1746
      %3402 = vst.msk [vmem:[#allocation5 + $0x2d8] sm:$0xff] %vm2762, %v1750
      %3403 = vst.msk [vmem:[#allocation5 + $0x2e0] sm:$0xff] %vm2763, %v1738
      %3404 = vst.msk [vmem:[#allocation5 + $0x2e8] sm:$0xff] %vm2764, %v1742
      %3405 = vst.msk [vmem:[#allocation5 + $0x2f0] sm:$0xff] %vm2765, %v1746
      %3406 = vst.msk [vmem:[#allocation5 + $0x2f8] sm:$0xff] %vm2766, %v1750
      %3407 = vst.msk [vmem:[#allocation5 + $0x300] sm:$0xff] %vm2767, %v1738
      %3408 = vst.msk [vmem:[#allocation5 + $0x308] sm:$0xff] %vm2768, %v1742
      %3409 = vst.msk [vmem:[#allocation5 + $0x310] sm:$0xff] %vm2769, %v1746
      %3410 = vst.msk [vmem:[#allocation5 + $0x318] sm:$0xff] %vm2770, %v1750
      %3411 = vst.msk [vmem:[#allocation5 + $0x320] sm:$0xff] %vm2771, %v1738
      %3412 = vst.msk [vmem:[#allocation5 + $0x328] sm:$0xff] %vm2772, %v1742
      %3413 = vst.msk [vmem:[#allocation5 + $0x330] sm:$0xff] %vm2773, %v1746
      %3414 = vst.msk [vmem:[#allocation5 + $0x338] sm:$0xff] %vm2774, %v1750
      %3415 = vst.msk [vmem:[#allocation5 + $0x340] sm:$0xff] %vm2775, %v1738
      %3416 = vst.msk [vmem:[#allocation5 + $0x348] sm:$0xff] %vm2776, %v1742
      %3417 = vst.msk [vmem:[#allocation5 + $0x350] sm:$0xff] %vm2777, %v1746
      %3418 = vst.msk [vmem:[#allocation5 + $0x358] sm:$0xff] %vm2778, %v1750
      %3419 = vst.msk [vmem:[#allocation5 + $0x360] sm:$0xff] %vm2779, %v1738
      %3420 = vst.msk [vmem:[#allocation5 + $0x368] sm:$0xff] %vm2780, %v1742
      %3421 = vst.msk [vmem:[#allocation5 + $0x370] sm:$0xff] %vm2781, %v1746
      %3422 = vst.msk [vmem:[#allocation5 + $0x378] sm:$0xff] %vm2782, %v1750
      %3423 = vst.msk [vmem:[#allocation5 + $0x380] sm:$0xff] %vm2783, %v1738
      %3424 = vst.msk [vmem:[#allocation5 + $0x388] sm:$0xff] %vm2784, %v1742
      %3425 = vst.msk [vmem:[#allocation5 + $0x390] sm:$0xff] %vm2785, %v1746
      %3426 = vst.msk [vmem:[#allocation5 + $0x398] sm:$0xff] %vm2786, %v1750
      %3427 = vst.msk [vmem:[#allocation5 + $0x3a0] sm:$0xff] %vm2787, %v1738
      %3428 = vst.msk [vmem:[#allocation5 + $0x3a8] sm:$0xff] %vm2788, %v1742
      %3429 = vst.msk [vmem:[#allocation5 + $0x3b0] sm:$0xff] %vm2789, %v1746
      %3430 = vst.msk [vmem:[#allocation5 + $0x3b8] sm:$0xff] %vm2790, %v1750
      %3431 = vst.msk [vmem:[#allocation5 + $0x3c0] sm:$0xff] %vm2791, %v1738
      %3432 = vst.msk [vmem:[#allocation5 + $0x3c8] sm:$0xff] %vm2792, %v1742
      %3433 = vst.msk [vmem:[#allocation5 + $0x3d0] sm:$0xff] %vm2793, %v1746
      %3434 = vst.msk [vmem:[#allocation5 + $0x3d8] sm:$0xff] %vm2794, %v1750
      %3435 = vst.msk [vmem:[#allocation5 + $0x3e0] sm:$0xff] %vm2795, %v1738
      %3436 = vst.msk [vmem:[#allocation5 + $0x3e8] sm:$0xff] %vm2796, %v1742
      %3437 = vst.msk [vmem:[#allocation5 + $0x3f0] sm:$0xff] %vm2797, %v1746
      %3438 = vst.msk [vmem:[#allocation5 + $0x3f8] sm:$0xff] %vm2798, %v1750
      %v3439 = vld [vmem:[#allocation2] sm:$0xff]
      %v3440 = vld [vmem:[#allocation2 + $0x8] sm:$0xff]
      %v3441 = vld [vmem:[#allocation2 + $0x10] sm:$0xff]
      %v3442 = vld [vmem:[#allocation2 + $0x18] sm:$0xff]
      %v3443 = vld [vmem:[#allocation2 + $0x20] sm:$0xff]
      %v3444 = vld [vmem:[#allocation2 + $0x28] sm:$0xff]
      %v3445 = vld [vmem:[#allocation2 + $0x30] sm:$0xff]
      %v3446 = vld [vmem:[#allocation2 + $0x38] sm:$0xff]
      %v3447 = vld [vmem:[#allocation2 + $0x40] sm:$0xff]
      %v3448 = vld [vmem:[#allocation2 + $0x48] sm:$0xff]
      %v3449 = vld [vmem:[#allocation2 + $0x50] sm:$0xff]
      %v3450 = vld [vmem:[#allocation2 + $0x58] sm:$0xff]
      %v3451 = vld [vmem:[#allocation2 + $0x60] sm:$0xff]
      %v3452 = vld [vmem:[#allocation2 + $0x68] sm:$0xff]
      %v3453 = vld [vmem:[#allocation2 + $0x70] sm:$0xff]
      %v3454 = vld [vmem:[#allocation2 + $0x78] sm:$0xff]
      %v3455 = vld [vmem:[#allocation2 + $0x80] sm:$0xff]
      %v3456 = vld [vmem:[#allocation2 + $0x88] sm:$0xff]
      %v3457 = vld [vmem:[#allocation2 + $0x90] sm:$0xff]
      %v3458 = vld [vmem:[#allocation2 + $0x98] sm:$0xff]
      %v3459 = vld [vmem:[#allocation2 + $0xa0] sm:$0xff]
      %v3460 = vld [vmem:[#allocation2 + $0xa8] sm:$0xff]
      %v3461 = vld [vmem:[#allocation2 + $0xb0] sm:$0xff]
      %v3462 = vld [vmem:[#allocation2 + $0xb8] sm:$0xff]
      %v3463 = vld [vmem:[#allocation2 + $0xc0] sm:$0xff]
      %v3464 = vld [vmem:[#allocation2 + $0xc8] sm:$0xff]
      %v3465 = vld [vmem:[#allocation2 + $0xd0] sm:$0xff]
      %v3466 = vld [vmem:[#allocation2 + $0xd8] sm:$0xff]
      %v3467 = vld [vmem:[#allocation2 + $0xe0] sm:$0xff]
      %v3468 = vld [vmem:[#allocation2 + $0xe8] sm:$0xff]
      %v3469 = vld [vmem:[#allocation2 + $0xf0] sm:$0xff]
      %v3470 = vld [vmem:[#allocation2 + $0xf8] sm:$0xff]
      %v3471 = vld [vmem:[#allocation2 + $0x100] sm:$0xff]
      %v3472 = vld [vmem:[#allocation2 + $0x108] sm:$0xff]
      %v3473 = vld [vmem:[#allocation2 + $0x110] sm:$0xff]
      %v3474 = vld [vmem:[#allocation2 + $0x118] sm:$0xff]
      %v3475 = vld [vmem:[#allocation2 + $0x120] sm:$0xff]
      %v3476 = vld [vmem:[#allocation2 + $0x128] sm:$0xff]
      %v3477 = vld [vmem:[#allocation2 + $0x130] sm:$0xff]
      %v3478 = vld [vmem:[#allocation2 + $0x138] sm:$0xff]
      %v3479 = vld [vmem:[#allocation2 + $0x140] sm:$0xff]
      %v3480 = vld [vmem:[#allocation2 + $0x148] sm:$0xff]
      %v3481 = vld [vmem:[#allocation2 + $0x150] sm:$0xff]
      %v3482 = vld [vmem:[#allocation2 + $0x158] sm:$0xff]
      %v3483 = vld [vmem:[#allocation2 + $0x160] sm:$0xff]
      %v3484 = vld [vmem:[#allocation2 + $0x168] sm:$0xff]
      %v3485 = vld [vmem:[#allocation2 + $0x170] sm:$0xff]
      %v3486 = vld [vmem:[#allocation2 + $0x178] sm:$0xff]
      %v3487 = vld [vmem:[#allocation2 + $0x180] sm:$0xff]
      %v3488 = vld [vmem:[#allocation2 + $0x188] sm:$0xff]
      %v3489 = vld [vmem:[#allocation2 + $0x190] sm:$0xff]
      %v3490 = vld [vmem:[#allocation2 + $0x198] sm:$0xff]
      %v3491 = vld [vmem:[#allocation2 + $0x1a0] sm:$0xff]
      %v3492 = vld [vmem:[#allocation2 + $0x1a8] sm:$0xff]
      %v3493 = vld [vmem:[#allocation2 + $0x1b0] sm:$0xff]
      %v3494 = vld [vmem:[#allocation2 + $0x1b8] sm:$0xff]
      %v3495 = vld [vmem:[#allocation2 + $0x1c0] sm:$0xff]
      %v3496 = vld [vmem:[#allocation2 + $0x1c8] sm:$0xff]
      %v3497 = vld [vmem:[#allocation2 + $0x1d0] sm:$0xff]
      %v3498 = vld [vmem:[#allocation2 + $0x1d8] sm:$0xff]
      %v3499 = vld [vmem:[#allocation2 + $0x1e0] sm:$0xff]
      %v3500 = vld [vmem:[#allocation2 + $0x1e8] sm:$0xff]
      %v3501 = vld [vmem:[#allocation2 + $0x1f0] sm:$0xff]
      %v3502 = vld [vmem:[#allocation2 + $0x1f8] sm:$0xff]
      %v3503 = vld [vmem:[#allocation2 + $0x200] sm:$0xff]
      %v3504 = vld [vmem:[#allocation2 + $0x208] sm:$0xff]
      %v3505 = vld [vmem:[#allocation2 + $0x210] sm:$0xff]
      %v3506 = vld [vmem:[#allocation2 + $0x218] sm:$0xff]
      %v3507 = vld [vmem:[#allocation2 + $0x220] sm:$0xff]
      %v3508 = vld [vmem:[#allocation2 + $0x228] sm:$0xff]
      %v3509 = vld [vmem:[#allocation2 + $0x230] sm:$0xff]
      %v3510 = vld [vmem:[#allocation2 + $0x238] sm:$0xff]
      %v3511 = vld [vmem:[#allocation2 + $0x240] sm:$0xff]
      %v3512 = vld [vmem:[#allocation2 + $0x248] sm:$0xff]
      %v3513 = vld [vmem:[#allocation2 + $0x250] sm:$0xff]
      %v3514 = vld [vmem:[#allocation2 + $0x258] sm:$0xff]
      %v3515 = vld [vmem:[#allocation2 + $0x260] sm:$0xff]
      %v3516 = vld [vmem:[#allocation2 + $0x268] sm:$0xff]
      %v3517 = vld [vmem:[#allocation2 + $0x270] sm:$0xff]
      %v3518 = vld [vmem:[#allocation2 + $0x278] sm:$0xff]
      %v3519 = vld [vmem:[#allocation2 + $0x280] sm:$0xff]
      %v3520 = vld [vmem:[#allocation2 + $0x288] sm:$0xff]
      %v3521 = vld [vmem:[#allocation2 + $0x290] sm:$0xff]
      %v3522 = vld [vmem:[#allocation2 + $0x298] sm:$0xff]
      %v3523 = vld [vmem:[#allocation2 + $0x2a0] sm:$0xff]
      %v3524 = vld [vmem:[#allocation2 + $0x2a8] sm:$0xff]
      %v3525 = vld [vmem:[#allocation2 + $0x2b0] sm:$0xff]
      %v3526 = vld [vmem:[#allocation2 + $0x2b8] sm:$0xff]
      %v3527 = vld [vmem:[#allocation2 + $0x2c0] sm:$0xff]
      %v3528 = vld [vmem:[#allocation2 + $0x2c8] sm:$0xff]
      %v3529 = vld [vmem:[#allocation2 + $0x2d0] sm:$0xff]
      %v3530 = vld [vmem:[#allocation2 + $0x2d8] sm:$0xff]
      %v3531 = vld [vmem:[#allocation2 + $0x2e0] sm:$0xff]
      %v3532 = vld [vmem:[#allocation2 + $0x2e8] sm:$0xff]
      %v3533 = vld [vmem:[#allocation2 + $0x2f0] sm:$0xff]
      %v3534 = vld [vmem:[#allocation2 + $0x2f8] sm:$0xff]
      %v3535 = vld [vmem:[#allocation2 + $0x300] sm:$0xff]
      %v3536 = vld [vmem:[#allocation2 + $0x308] sm:$0xff]
      %v3537 = vld [vmem:[#allocation2 + $0x310] sm:$0xff]
      %v3538 = vld [vmem:[#allocation2 + $0x318] sm:$0xff]
      %v3539 = vld [vmem:[#allocation2 + $0x320] sm:$0xff]
      %v3540 = vld [vmem:[#allocation2 + $0x328] sm:$0xff]
      %v3541 = vld [vmem:[#allocation2 + $0x330] sm:$0xff]
      %v3542 = vld [vmem:[#allocation2 + $0x338] sm:$0xff]
      %v3543 = vld [vmem:[#allocation2 + $0x340] sm:$0xff]
      %v3544 = vld [vmem:[#allocation2 + $0x348] sm:$0xff]
      %v3545 = vld [vmem:[#allocation2 + $0x350] sm:$0xff]
      %v3546 = vld [vmem:[#allocation2 + $0x358] sm:$0xff]
      %v3547 = vld [vmem:[#allocation2 + $0x360] sm:$0xff]
      %v3548 = vld [vmem:[#allocation2 + $0x368] sm:$0xff]
      %v3549 = vld [vmem:[#allocation2 + $0x370] sm:$0xff]
      %v3550 = vld [vmem:[#allocation2 + $0x378] sm:$0xff]
      %v3551 = vld [vmem:[#allocation2 + $0x380] sm:$0xff]
      %v3552 = vld [vmem:[#allocation2 + $0x388] sm:$0xff]
      %v3553 = vld [vmem:[#allocation2 + $0x390] sm:$0xff]
      %v3554 = vld [vmem:[#allocation2 + $0x398] sm:$0xff]
      %v3555 = vld [vmem:[#allocation2 + $0x3a0] sm:$0xff]
      %v3556 = vld [vmem:[#allocation2 + $0x3a8] sm:$0xff]
      %v3557 = vld [vmem:[#allocation2 + $0x3b0] sm:$0xff]
      %v3558 = vld [vmem:[#allocation2 + $0x3b8] sm:$0xff]
      %v3559 = vld [vmem:[#allocation2 + $0x3c0] sm:$0xff]
      %v3560 = vld [vmem:[#allocation2 + $0x3c8] sm:$0xff]
      %v3561 = vld [vmem:[#allocation2 + $0x3d0] sm:$0xff]
      %v3562 = vld [vmem:[#allocation2 + $0x3d8] sm:$0xff]
      %v3563 = vld [vmem:[#allocation2 + $0x3e0] sm:$0xff]
      %v3564 = vld [vmem:[#allocation2 + $0x3e8] sm:$0xff]
      %v3565 = vld [vmem:[#allocation2 + $0x3f0] sm:$0xff]
      %v3566 = vld [vmem:[#allocation2 + $0x3f8] sm:$0xff]
      %v3567 = vmin.f32 %v3439, %v3440
      %v3568 = vmin.f32 %v3567, %v3441
      %v3569 = vmin.f32 %v3568, %v3442
      %3570 = vmin.xlane.f32.xlu0 %v3569
      %v3571 = vpop.xlane.xlu0 %3570
      %v3572 = vmin.f32 %v3443, %v3444
      %v3573 = vmin.f32 %v3572, %v3445
      %v3574 = vmin.f32 %v3573, %v3446
      %3575 = vmin.xlane.f32.xlu0 %v3574
      %v3576 = vpop.xlane.xlu0 %3575
      %v3577 = vmin.f32 %v3447, %v3448
      %v3578 = vmin.f32 %v3577, %v3449
      %v3579 = vmin.f32 %v3578, %v3450
      %3580 = vmin.xlane.f32.xlu0 %v3579
      %v3581 = vpop.xlane.xlu0 %3580
      %v3582 = vmin.f32 %v3451, %v3452
      %v3583 = vmin.f32 %v3582, %v3453
      %v3584 = vmin.f32 %v3583, %v3454
      %3585 = vmin.xlane.f32.xlu0 %v3584
      %v3586 = vpop.xlane.xlu0 %3585
      %v3587 = vmin.f32 %v3455, %v3456
      %v3588 = vmin.f32 %v3587, %v3457
      %v3589 = vmin.f32 %v3588, %v3458
      %3590 = vmin.xlane.f32.xlu0 %v3589
      %v3591 = vpop.xlane.xlu0 %3590
      %v3592 = vmin.f32 %v3459, %v3460
      %v3593 = vmin.f32 %v3592, %v3461
      %v3594 = vmin.f32 %v3593, %v3462
      %3595 = vmin.xlane.f32.xlu0 %v3594
      %v3596 = vpop.xlane.xlu0 %3595
      %v3597 = vmin.f32 %v3463, %v3464
      %v3598 = vmin.f32 %v3597, %v3465
      %v3599 = vmin.f32 %v3598, %v3466
      %3600 = vmin.xlane.f32.xlu0 %v3599
      %v3601 = vpop.xlane.xlu0 %3600
      %v3602 = vmin.f32 %v3467, %v3468
      %v3603 = vmin.f32 %v3602, %v3469
      %v3604 = vmin.f32 %v3603, %v3470
      %3605 = vmin.xlane.f32.xlu0 %v3604
      %v3606 = vpop.xlane.xlu0 %3605
      %v3607 = vmin.f32 %v3471, %v3472
      %v3608 = vmin.f32 %v3607, %v3473
      %v3609 = vmin.f32 %v3608, %v3474
      %3610 = vmin.xlane.f32.xlu0 %v3609
      %v3611 = vpop.xlane.xlu0 %3610
      %v3612 = vmin.f32 %v3475, %v3476
      %v3613 = vmin.f32 %v3612, %v3477
      %v3614 = vmin.f32 %v3613, %v3478
      %3615 = vmin.xlane.f32.xlu0 %v3614
      %v3616 = vpop.xlane.xlu0 %3615
      %v3617 = vmin.f32 %v3479, %v3480
      %v3618 = vmin.f32 %v3617, %v3481
      %v3619 = vmin.f32 %v3618, %v3482
      %3620 = vmin.xlane.f32.xlu0 %v3619
      %v3621 = vpop.xlane.xlu0 %3620
      %v3622 = vmin.f32 %v3483, %v3484
      %v3623 = vmin.f32 %v3622, %v3485
      %v3624 = vmin.f32 %v3623, %v3486
      %3625 = vmin.xlane.f32.xlu0 %v3624
      %v3626 = vpop.xlane.xlu0 %3625
      %v3627 = vmin.f32 %v3487, %v3488
      %v3628 = vmin.f32 %v3627, %v3489
      %v3629 = vmin.f32 %v3628, %v3490
      %3630 = vmin.xlane.f32.xlu0 %v3629
      %v3631 = vpop.xlane.xlu0 %3630
      %v3632 = vmin.f32 %v3491, %v3492
      %v3633 = vmin.f32 %v3632, %v3493
      %v3634 = vmin.f32 %v3633, %v3494
      %3635 = vmin.xlane.f32.xlu0 %v3634
      %v3636 = vpop.xlane.xlu0 %3635
      %v3637 = vmin.f32 %v3495, %v3496
      %v3638 = vmin.f32 %v3637, %v3497
      %v3639 = vmin.f32 %v3638, %v3498
      %3640 = vmin.xlane.f32.xlu0 %v3639
      %v3641 = vpop.xlane.xlu0 %3640
      %v3642 = vmin.f32 %v3499, %v3500
      %v3643 = vmin.f32 %v3642, %v3501
      %v3644 = vmin.f32 %v3643, %v3502
      %3645 = vmin.xlane.f32.xlu0 %v3644
      %v3646 = vpop.xlane.xlu0 %3645
      %v3647 = vmin.f32 %v3503, %v3504
      %v3648 = vmin.f32 %v3647, %v3505
      %v3649 = vmin.f32 %v3648, %v3506
      %3650 = vmin.xlane.f32.xlu0 %v3649
      %v3651 = vpop.xlane.xlu0 %3650
      %v3652 = vmin.f32 %v3507, %v3508
      %v3653 = vmin.f32 %v3652, %v3509
      %v3654 = vmin.f32 %v3653, %v3510
      %3655 = vmin.xlane.f32.xlu0 %v3654
      %v3656 = vpop.xlane.xlu0 %3655
      %v3657 = vmin.f32 %v3511, %v3512
      %v3658 = vmin.f32 %v3657, %v3513
      %v3659 = vmin.f32 %v3658, %v3514
      %3660 = vmin.xlane.f32.xlu0 %v3659
      %v3661 = vpop.xlane.xlu0 %3660
      %v3662 = vmin.f32 %v3515, %v3516
      %v3663 = vmin.f32 %v3662, %v3517
      %v3664 = vmin.f32 %v3663, %v3518
      %3665 = vmin.xlane.f32.xlu0 %v3664
      %v3666 = vpop.xlane.xlu0 %3665
      %v3667 = vmin.f32 %v3519, %v3520
      %v3668 = vmin.f32 %v3667, %v3521
      %v3669 = vmin.f32 %v3668, %v3522
      %3670 = vmin.xlane.f32.xlu0 %v3669
      %v3671 = vpop.xlane.xlu0 %3670
      %v3672 = vmin.f32 %v3523, %v3524
      %v3673 = vmin.f32 %v3672, %v3525
      %v3674 = vmin.f32 %v3673, %v3526
      %3675 = vmin.xlane.f32.xlu0 %v3674
      %v3676 = vpop.xlane.xlu0 %3675
      %v3677 = vmin.f32 %v3527, %v3528
      %v3678 = vmin.f32 %v3677, %v3529
      %v3679 = vmin.f32 %v3678, %v3530
      %3680 = vmin.xlane.f32.xlu0 %v3679
      %v3681 = vpop.xlane.xlu0 %3680
      %v3682 = vmin.f32 %v3531, %v3532
      %v3683 = vmin.f32 %v3682, %v3533
      %v3684 = vmin.f32 %v3683, %v3534
      %3685 = vmin.xlane.f32.xlu0 %v3684
      %v3686 = vpop.xlane.xlu0 %3685
      %v3687 = vmin.f32 %v3535, %v3536
      %v3688 = vmin.f32 %v3687, %v3537
      %v3689 = vmin.f32 %v3688, %v3538
      %3690 = vmin.xlane.f32.xlu0 %v3689
      %v3691 = vpop.xlane.xlu0 %3690
      %v3692 = vmin.f32 %v3539, %v3540
      %v3693 = vmin.f32 %v3692, %v3541
      %v3694 = vmin.f32 %v3693, %v3542
      %3695 = vmin.xlane.f32.xlu0 %v3694
      %v3696 = vpop.xlane.xlu0 %3695
      %v3697 = vmin.f32 %v3543, %v3544
      %v3698 = vmin.f32 %v3697, %v3545
      %v3699 = vmin.f32 %v3698, %v3546
      %3700 = vmin.xlane.f32.xlu0 %v3699
      %v3701 = vpop.xlane.xlu0 %3700
      %v3702 = vmin.f32 %v3547, %v3548
      %v3703 = vmin.f32 %v3702, %v3549
      %v3704 = vmin.f32 %v3703, %v3550
      %3705 = vmin.xlane.f32.xlu0 %v3704
      %v3706 = vpop.xlane.xlu0 %3705
      %v3707 = vmin.f32 %v3551, %v3552
      %v3708 = vmin.f32 %v3707, %v3553
      %v3709 = vmin.f32 %v3708, %v3554
      %3710 = vmin.xlane.f32.xlu0 %v3709
      %v3711 = vpop.xlane.xlu0 %3710
      %v3712 = vmin.f32 %v3555, %v3556
      %v3713 = vmin.f32 %v3712, %v3557
      %v3714 = vmin.f32 %v3713, %v3558
      %3715 = vmin.xlane.f32.xlu0 %v3714
      %v3716 = vpop.xlane.xlu0 %3715
      %v3717 = vmin.f32 %v3559, %v3560
      %v3718 = vmin.f32 %v3717, %v3561
      %v3719 = vmin.f32 %v3718, %v3562
      %3720 = vmin.xlane.f32.xlu0 %v3719
      %v3721 = vpop.xlane.xlu0 %3720
      %v3722 = vmin.f32 %v3563, %v3564
      %v3723 = vmin.f32 %v3722, %v3565
      %v3724 = vmin.f32 %v3723, %v3566
      %3725 = vmin.xlane.f32.xlu0 %v3724
      %v3726 = vpop.xlane.xlu0 %3725
      %vm3727 = vcmp.eq.f32.partialorder %v3439, %v3571
      %vm3728 = vcmp.eq.f32.partialorder %v3440, %v3571
      %vm3729 = vcmp.eq.f32.partialorder %v3441, %v3571
      %vm3730 = vcmp.eq.f32.partialorder %v3442, %v3571
      %vm3731 = vcmp.eq.f32.partialorder %v3443, %v3576
      %vm3732 = vcmp.eq.f32.partialorder %v3444, %v3576
      %vm3733 = vcmp.eq.f32.partialorder %v3445, %v3576
      %vm3734 = vcmp.eq.f32.partialorder %v3446, %v3576
      %vm3735 = vcmp.eq.f32.partialorder %v3447, %v3581
      %vm3736 = vcmp.eq.f32.partialorder %v3448, %v3581
      %vm3737 = vcmp.eq.f32.partialorder %v3449, %v3581
      %vm3738 = vcmp.eq.f32.partialorder %v3450, %v3581
      %vm3739 = vcmp.eq.f32.partialorder %v3451, %v3586
      %vm3740 = vcmp.eq.f32.partialorder %v3452, %v3586
      %vm3741 = vcmp.eq.f32.partialorder %v3453, %v3586
      %vm3742 = vcmp.eq.f32.partialorder %v3454, %v3586
      %vm3743 = vcmp.eq.f32.partialorder %v3455, %v3591
      %vm3744 = vcmp.eq.f32.partialorder %v3456, %v3591
      %vm3745 = vcmp.eq.f32.partialorder %v3457, %v3591
      %vm3746 = vcmp.eq.f32.partialorder %v3458, %v3591
      %vm3747 = vcmp.eq.f32.partialorder %v3459, %v3596
      %vm3748 = vcmp.eq.f32.partialorder %v3460, %v3596
      %vm3749 = vcmp.eq.f32.partialorder %v3461, %v3596
      %vm3750 = vcmp.eq.f32.partialorder %v3462, %v3596
      %vm3751 = vcmp.eq.f32.partialorder %v3463, %v3601
      %vm3752 = vcmp.eq.f32.partialorder %v3464, %v3601
      %vm3753 = vcmp.eq.f32.partialorder %v3465, %v3601
      %vm3754 = vcmp.eq.f32.partialorder %v3466, %v3601
      %vm3755 = vcmp.eq.f32.partialorder %v3467, %v3606
      %vm3756 = vcmp.eq.f32.partialorder %v3468, %v3606
      %vm3757 = vcmp.eq.f32.partialorder %v3469, %v3606
      %vm3758 = vcmp.eq.f32.partialorder %v3470, %v3606
      %vm3759 = vcmp.eq.f32.partialorder %v3471, %v3611
      %vm3760 = vcmp.eq.f32.partialorder %v3472, %v3611
      %vm3761 = vcmp.eq.f32.partialorder %v3473, %v3611
      %vm3762 = vcmp.eq.f32.partialorder %v3474, %v3611
      %vm3763 = vcmp.eq.f32.partialorder %v3475, %v3616
      %vm3764 = vcmp.eq.f32.partialorder %v3476, %v3616
      %vm3765 = vcmp.eq.f32.partialorder %v3477, %v3616
      %vm3766 = vcmp.eq.f32.partialorder %v3478, %v3616
      %vm3767 = vcmp.eq.f32.partialorder %v3479, %v3621
      %vm3768 = vcmp.eq.f32.partialorder %v3480, %v3621
      %vm3769 = vcmp.eq.f32.partialorder %v3481, %v3621
      %vm3770 = vcmp.eq.f32.partialorder %v3482, %v3621
      %vm3771 = vcmp.eq.f32.partialorder %v3483, %v3626
      %vm3772 = vcmp.eq.f32.partialorder %v3484, %v3626
      %vm3773 = vcmp.eq.f32.partialorder %v3485, %v3626
      %vm3774 = vcmp.eq.f32.partialorder %v3486, %v3626
      %vm3775 = vcmp.eq.f32.partialorder %v3487, %v3631
      %vm3776 = vcmp.eq.f32.partialorder %v3488, %v3631
      %vm3777 = vcmp.eq.f32.partialorder %v3489, %v3631
      %vm3778 = vcmp.eq.f32.partialorder %v3490, %v3631
      %vm3779 = vcmp.eq.f32.partialorder %v3491, %v3636
      %vm3780 = vcmp.eq.f32.partialorder %v3492, %v3636
      %vm3781 = vcmp.eq.f32.partialorder %v3493, %v3636
      %vm3782 = vcmp.eq.f32.partialorder %v3494, %v3636
      %vm3783 = vcmp.eq.f32.partialorder %v3495, %v3641
      %vm3784 = vcmp.eq.f32.partialorder %v3496, %v3641
      %vm3785 = vcmp.eq.f32.partialorder %v3497, %v3641
      %vm3786 = vcmp.eq.f32.partialorder %v3498, %v3641
      %vm3787 = vcmp.eq.f32.partialorder %v3499, %v3646
      %vm3788 = vcmp.eq.f32.partialorder %v3500, %v3646
      %vm3789 = vcmp.eq.f32.partialorder %v3501, %v3646
      %vm3790 = vcmp.eq.f32.partialorder %v3502, %v3646
      %vm3791 = vcmp.eq.f32.partialorder %v3503, %v3651
      %vm3792 = vcmp.eq.f32.partialorder %v3504, %v3651
      %vm3793 = vcmp.eq.f32.partialorder %v3505, %v3651
      %vm3794 = vcmp.eq.f32.partialorder %v3506, %v3651
      %vm3795 = vcmp.eq.f32.partialorder %v3507, %v3656
      %vm3796 = vcmp.eq.f32.partialorder %v3508, %v3656
      %vm3797 = vcmp.eq.f32.partialorder %v3509, %v3656
      %vm3798 = vcmp.eq.f32.partialorder %v3510, %v3656
      %vm3799 = vcmp.eq.f32.partialorder %v3511, %v3661
      %vm3800 = vcmp.eq.f32.partialorder %v3512, %v3661
      %vm3801 = vcmp.eq.f32.partialorder %v3513, %v3661
      %vm3802 = vcmp.eq.f32.partialorder %v3514, %v3661
      %vm3803 = vcmp.eq.f32.partialorder %v3515, %v3666
      %vm3804 = vcmp.eq.f32.partialorder %v3516, %v3666
      %vm3805 = vcmp.eq.f32.partialorder %v3517, %v3666
      %vm3806 = vcmp.eq.f32.partialorder %v3518, %v3666
      %vm3807 = vcmp.eq.f32.partialorder %v3519, %v3671
      %vm3808 = vcmp.eq.f32.partialorder %v3520, %v3671
      %vm3809 = vcmp.eq.f32.partialorder %v3521, %v3671
      %vm3810 = vcmp.eq.f32.partialorder %v3522, %v3671
      %vm3811 = vcmp.eq.f32.partialorder %v3523, %v3676
      %vm3812 = vcmp.eq.f32.partialorder %v3524, %v3676
      %vm3813 = vcmp.eq.f32.partialorder %v3525, %v3676
      %vm3814 = vcmp.eq.f32.partialorder %v3526, %v3676
      %vm3815 = vcmp.eq.f32.partialorder %v3527, %v3681
      %vm3816 = vcmp.eq.f32.partialorder %v3528, %v3681
      %vm3817 = vcmp.eq.f32.partialorder %v3529, %v3681
      %vm3818 = vcmp.eq.f32.partialorder %v3530, %v3681
      %vm3819 = vcmp.eq.f32.partialorder %v3531, %v3686
      %vm3820 = vcmp.eq.f32.partialorder %v3532, %v3686
      %vm3821 = vcmp.eq.f32.partialorder %v3533, %v3686
      %vm3822 = vcmp.eq.f32.partialorder %v3534, %v3686
      %vm3823 = vcmp.eq.f32.partialorder %v3535, %v3691
      %vm3824 = vcmp.eq.f32.partialorder %v3536, %v3691
      %vm3825 = vcmp.eq.f32.partialorder %v3537, %v3691
      %vm3826 = vcmp.eq.f32.partialorder %v3538, %v3691
      %vm3827 = vcmp.eq.f32.partialorder %v3539, %v3696
      %vm3828 = vcmp.eq.f32.partialorder %v3540, %v3696
      %vm3829 = vcmp.eq.f32.partialorder %v3541, %v3696
      %vm3830 = vcmp.eq.f32.partialorder %v3542, %v3696
      %vm3831 = vcmp.eq.f32.partialorder %v3543, %v3701
      %vm3832 = vcmp.eq.f32.partialorder %v3544, %v3701
      %vm3833 = vcmp.eq.f32.partialorder %v3545, %v3701
      %vm3834 = vcmp.eq.f32.partialorder %v3546, %v3701
      %vm3835 = vcmp.eq.f32.partialorder %v3547, %v3706
      %vm3836 = vcmp.eq.f32.partialorder %v3548, %v3706
      %vm3837 = vcmp.eq.f32.partialorder %v3549, %v3706
      %vm3838 = vcmp.eq.f32.partialorder %v3550, %v3706
      %vm3839 = vcmp.eq.f32.partialorder %v3551, %v3711
      %vm3840 = vcmp.eq.f32.partialorder %v3552, %v3711
      %vm3841 = vcmp.eq.f32.partialorder %v3553, %v3711
      %vm3842 = vcmp.eq.f32.partialorder %v3554, %v3711
      %vm3843 = vcmp.eq.f32.partialorder %v3555, %v3716
      %vm3844 = vcmp.eq.f32.partialorder %v3556, %v3716
      %vm3845 = vcmp.eq.f32.partialorder %v3557, %v3716
      %vm3846 = vcmp.eq.f32.partialorder %v3558, %v3716
      %vm3847 = vcmp.eq.f32.partialorder %v3559, %v3721
      %vm3848 = vcmp.eq.f32.partialorder %v3560, %v3721
      %vm3849 = vcmp.eq.f32.partialorder %v3561, %v3721
      %vm3850 = vcmp.eq.f32.partialorder %v3562, %v3721
      %vm3851 = vcmp.eq.f32.partialorder %v3563, %v3726
      %vm3852 = vcmp.eq.f32.partialorder %v3564, %v3726
      %vm3853 = vcmp.eq.f32.partialorder %v3565, %v3726
      %vm3854 = vcmp.eq.f32.partialorder %v3566, %v3726
      %v3855 = vsel %vm3727, %v1266, 512
      %v3856 = vsel %vm3728, %v1267, 512
      %v3857 = vsel %vm3729, %v1268, 512
      %v3858 = vsel %vm3730, %v1269, 512
      %v3859 = vsel %vm3731, %v1266, 512
      %v3860 = vsel %vm3732, %v1267, 512
      %v3861 = vsel %vm3733, %v1268, 512
      %v3862 = vsel %vm3734, %v1269, 512
      %v3863 = vsel %vm3735, %v1266, 512
      %v3864 = vsel %vm3736, %v1267, 512
      %v3865 = vsel %vm3737, %v1268, 512
      %v3866 = vsel %vm3738, %v1269, 512
      %v3867 = vsel %vm3739, %v1266, 512
      %v3868 = vsel %vm3740, %v1267, 512
      %v3869 = vsel %vm3741, %v1268, 512
      %v3870 = vsel %vm3742, %v1269, 512
      %v3871 = vsel %vm3743, %v1266, 512
      %v3872 = vsel %vm3744, %v1267, 512
      %v3873 = vsel %vm3745, %v1268, 512
      %v3874 = vsel %vm3746, %v1269, 512
      %v3875 = vsel %vm3747, %v1266, 512
      %v3876 = vsel %vm3748, %v1267, 512
      %v3877 = vsel %vm3749, %v1268, 512
      %v3878 = vsel %vm3750, %v1269, 512
      %v3879 = vsel %vm3751, %v1266, 512
      %v3880 = vsel %vm3752, %v1267, 512
      %v3881 = vsel %vm3753, %v1268, 512
      %v3882 = vsel %vm3754, %v1269, 512
      %v3883 = vsel %vm3755, %v1266, 512
      %v3884 = vsel %vm3756, %v1267, 512
      %v3885 = vsel %vm3757, %v1268, 512
      %v3886 = vsel %vm3758, %v1269, 512
      %v3887 = vsel %vm3759, %v1266, 512
      %v3888 = vsel %vm3760, %v1267, 512
      %v3889 = vsel %vm3761, %v1268, 512
      %v3890 = vsel %vm3762, %v1269, 512
      %v3891 = vsel %vm3763, %v1266, 512
      %v3892 = vsel %vm3764, %v1267, 512
      %v3893 = vsel %vm3765, %v1268, 512
      %v3894 = vsel %vm3766, %v1269, 512
      %v3895 = vsel %vm3767, %v1266, 512
      %v3896 = vsel %vm3768, %v1267, 512
      %v3897 = vsel %vm3769, %v1268, 512
      %v3898 = vsel %vm3770, %v1269, 512
      %v3899 = vsel %vm3771, %v1266, 512
      %v3900 = vsel %vm3772, %v1267, 512
      %v3901 = vsel %vm3773, %v1268, 512
      %v3902 = vsel %vm3774, %v1269, 512
      %v3903 = vsel %vm3775, %v1266, 512
      %v3904 = vsel %vm3776, %v1267, 512
      %v3905 = vsel %vm3777, %v1268, 512
      %v3906 = vsel %vm3778, %v1269, 512
      %v3907 = vsel %vm3779, %v1266, 512
      %v3908 = vsel %vm3780, %v1267, 512
      %v3909 = vsel %vm3781, %v1268, 512
      %v3910 = vsel %vm3782, %v1269, 512
      %v3911 = vsel %vm3783, %v1266, 512
      %v3912 = vsel %vm3784, %v1267, 512
      %v3913 = vsel %vm3785, %v1268, 512
      %v3914 = vsel %vm3786, %v1269, 512
      %v3915 = vsel %vm3787, %v1266, 512
      %v3916 = vsel %vm3788, %v1267, 512
      %v3917 = vsel %vm3789, %v1268, 512
      %v3918 = vsel %vm3790, %v1269, 512
      %v3919 = vsel %vm3791, %v1266, 512
      %v3920 = vsel %vm3792, %v1267, 512
      %v3921 = vsel %vm3793, %v1268, 512
      %v3922 = vsel %vm3794, %v1269, 512
      %v3923 = vsel %vm3795, %v1266, 512
      %v3924 = vsel %vm3796, %v1267, 512
      %v3925 = vsel %vm3797, %v1268, 512
      %v3926 = vsel %vm3798, %v1269, 512
      %v3927 = vsel %vm3799, %v1266, 512
      %v3928 = vsel %vm3800, %v1267, 512
      %v3929 = vsel %vm3801, %v1268, 512
      %v3930 = vsel %vm3802, %v1269, 512
      %v3931 = vsel %vm3803, %v1266, 512
      %v3932 = vsel %vm3804, %v1267, 512
      %v3933 = vsel %vm3805, %v1268, 512
      %v3934 = vsel %vm3806, %v1269, 512
      %v3935 = vsel %vm3807, %v1266, 512
      %v3936 = vsel %vm3808, %v1267, 512
      %v3937 = vsel %vm3809, %v1268, 512
      %v3938 = vsel %vm3810, %v1269, 512
      %v3939 = vsel %vm3811, %v1266, 512
      %v3940 = vsel %vm3812, %v1267, 512
      %v3941 = vsel %vm3813, %v1268, 512
      %v3942 = vsel %vm3814, %v1269, 512
      %v3943 = vsel %vm3815, %v1266, 512
      %v3944 = vsel %vm3816, %v1267, 512
      %v3945 = vsel %vm3817, %v1268, 512
      %v3946 = vsel %vm3818, %v1269, 512
      %v3947 = vsel %vm3819, %v1266, 512
      %v3948 = vsel %vm3820, %v1267, 512
      %v3949 = vsel %vm3821, %v1268, 512
      %v3950 = vsel %vm3822, %v1269, 512
      %v3951 = vsel %vm3823, %v1266, 512
      %v3952 = vsel %vm3824, %v1267, 512
      %v3953 = vsel %vm3825, %v1268, 512
      %v3954 = vsel %vm3826, %v1269, 512
      %v3955 = vsel %vm3827, %v1266, 512
      %v3956 = vsel %vm3828, %v1267, 512
      %v3957 = vsel %vm3829, %v1268, 512
      %v3958 = vsel %vm3830, %v1269, 512
      %v3959 = vsel %vm3831, %v1266, 512
      %v3960 = vsel %vm3832, %v1267, 512
      %v3961 = vsel %vm3833, %v1268, 512
      %v3962 = vsel %vm3834, %v1269, 512
      %v3963 = vsel %vm3835, %v1266, 512
      %v3964 = vsel %vm3836, %v1267, 512
      %v3965 = vsel %vm3837, %v1268, 512
      %v3966 = vsel %vm3838, %v1269, 512
      %v3967 = vsel %vm3839, %v1266, 512
      %v3968 = vsel %vm3840, %v1267, 512
      %v3969 = vsel %vm3841, %v1268, 512
      %v3970 = vsel %vm3842, %v1269, 512
      %v3971 = vsel %vm3843, %v1266, 512
      %v3972 = vsel %vm3844, %v1267, 512
      %v3973 = vsel %vm3845, %v1268, 512
      %v3974 = vsel %vm3846, %v1269, 512
      %v3975 = vsel %vm3847, %v1266, 512
      %v3976 = vsel %vm3848, %v1267, 512
      %v3977 = vsel %vm3849, %v1268, 512
      %v3978 = vsel %vm3850, %v1269, 512
      %v3979 = vsel %vm3851, %v1266, 512
      %v3980 = vsel %vm3852, %v1267, 512
      %v3981 = vsel %vm3853, %v1268, 512
      %v3982 = vsel %vm3854, %v1269, 512
      %vm3983 = vcmp.lt.s32.totalorder %v3855, %v3856
      %v3984 = vsel %vm3983, %v3855, %v3856
      %vm3985 = vcmp.lt.s32.totalorder %v3984, %v3857
      %v3986 = vsel %vm3985, %v3984, %v3857
      %vm3987 = vcmp.lt.s32.totalorder %v3986, %v3858
      %v3988 = vsel %vm3987, %v3986, %v3858
      %v3989 = vand.u32 %v3988, 65535
      %v3990 = vshra.s32 %v3988, 16
      %v3991 = vcvt.s32.f32 %v3989
      %v3992 = vcvt.s32.f32 %v3990
      %3993 = vmin.xlane.f32.xlu0 %v3992
      %v3994 = vpop.xlane.xlu0 %3993
      %vm3995 = vcmp.eq.f32.partialorder %v3992, %v3994
      %v3996 = vsel %vm3995, %v3991, inf
      %3997 = vmin.xlane.f32.xlu0 %v3996
      %v3998 = vpop.xlane.xlu0 %3997
      %v3999 = vcvt.f32.s32 %v3998
      %v4000 = vcvt.f32.s32 %v3994
      %v4001 = vshll.u32 %v4000, 16
      %v4002 = vadd.s32 %v4001, %v3999
      %vm4003 = vcmp.lt.s32.totalorder %v3859, %v3860
      %v4004 = vsel %vm4003, %v3859, %v3860
      %vm4005 = vcmp.lt.s32.totalorder %v4004, %v3861
      %v4006 = vsel %vm4005, %v4004, %v3861
      %vm4007 = vcmp.lt.s32.totalorder %v4006, %v3862
      %v4008 = vsel %vm4007, %v4006, %v3862
      %v4009 = vand.u32 %v4008, 65535
      %v4010 = vshra.s32 %v4008, 16
      %v4011 = vcvt.s32.f32 %v4009
      %v4012 = vcvt.s32.f32 %v4010
      %4013 = vmin.xlane.f32.xlu0 %v4012
      %v4014 = vpop.xlane.xlu0 %4013
      %vm4015 = vcmp.eq.f32.partialorder %v4012, %v4014
      %v4016 = vsel %vm4015, %v4011, inf
      %4017 = vmin.xlane.f32.xlu0 %v4016
      %v4018 = vpop.xlane.xlu0 %4017
      %v4019 = vcvt.f32.s32 %v4018
      %v4020 = vcvt.f32.s32 %v4014
      %v4021 = vshll.u32 %v4020, 16
      %v4022 = vadd.s32 %v4021, %v4019
      %vm4023 = vcmp.lt.s32.totalorder %v3863, %v3864
      %v4024 = vsel %vm4023, %v3863, %v3864
      %vm4025 = vcmp.lt.s32.totalorder %v4024, %v3865
      %v4026 = vsel %vm4025, %v4024, %v3865
      %vm4027 = vcmp.lt.s32.totalorder %v4026, %v3866
      %v4028 = vsel %vm4027, %v4026, %v3866
      %v4029 = vand.u32 %v4028, 65535
      %v4030 = vshra.s32 %v4028, 16
      %v4031 = vcvt.s32.f32 %v4029
      %v4032 = vcvt.s32.f32 %v4030
      %4033 = vmin.xlane.f32.xlu0 %v4032
      %v4034 = vpop.xlane.xlu0 %4033
      %vm4035 = vcmp.eq.f32.partialorder %v4032, %v4034
      %v4036 = vsel %vm4035, %v4031, inf
      %4037 = vmin.xlane.f32.xlu0 %v4036
      %v4038 = vpop.xlane.xlu0 %4037
      %v4039 = vcvt.f32.s32 %v4038
      %v4040 = vcvt.f32.s32 %v4034
      %v4041 = vshll.u32 %v4040, 16
      %v4042 = vadd.s32 %v4041, %v4039
      %vm4043 = vcmp.lt.s32.totalorder %v3867, %v3868
      %v4044 = vsel %vm4043, %v3867, %v3868
      %vm4045 = vcmp.lt.s32.totalorder %v4044, %v3869
      %v4046 = vsel %vm4045, %v4044, %v3869
      %vm4047 = vcmp.lt.s32.totalorder %v4046, %v3870
      %v4048 = vsel %vm4047, %v4046, %v3870
      %v4049 = vand.u32 %v4048, 65535
      %v4050 = vshra.s32 %v4048, 16
      %v4051 = vcvt.s32.f32 %v4049
      %v4052 = vcvt.s32.f32 %v4050
      %4053 = vmin.xlane.f32.xlu0 %v4052
      %v4054 = vpop.xlane.xlu0 %4053
      %vm4055 = vcmp.eq.f32.partialorder %v4052, %v4054
      %v4056 = vsel %vm4055, %v4051, inf
      %4057 = vmin.xlane.f32.xlu0 %v4056
      %v4058 = vpop.xlane.xlu0 %4057
      %v4059 = vcvt.f32.s32 %v4058
      %v4060 = vcvt.f32.s32 %v4054
      %v4061 = vshll.u32 %v4060, 16
      %v4062 = vadd.s32 %v4061, %v4059
      %vm4063 = vcmp.lt.s32.totalorder %v3871, %v3872
      %v4064 = vsel %vm4063, %v3871, %v3872
      %vm4065 = vcmp.lt.s32.totalorder %v4064, %v3873
      %v4066 = vsel %vm4065, %v4064, %v3873
      %vm4067 = vcmp.lt.s32.totalorder %v4066, %v3874
      %v4068 = vsel %vm4067, %v4066, %v3874
      %v4069 = vand.u32 %v4068, 65535
      %v4070 = vshra.s32 %v4068, 16
      %v4071 = vcvt.s32.f32 %v4069
      %v4072 = vcvt.s32.f32 %v4070
      %4073 = vmin.xlane.f32.xlu0 %v4072
      %v4074 = vpop.xlane.xlu0 %4073
      %vm4075 = vcmp.eq.f32.partialorder %v4072, %v4074
      %v4076 = vsel %vm4075, %v4071, inf
      %4077 = vmin.xlane.f32.xlu0 %v4076
      %v4078 = vpop.xlane.xlu0 %4077
      %v4079 = vcvt.f32.s32 %v4078
      %v4080 = vcvt.f32.s32 %v4074
      %v4081 = vshll.u32 %v4080, 16
      %v4082 = vadd.s32 %v4081, %v4079
      %vm4083 = vcmp.lt.s32.totalorder %v3875, %v3876
      %v4084 = vsel %vm4083, %v3875, %v3876
      %vm4085 = vcmp.lt.s32.totalorder %v4084, %v3877
      %v4086 = vsel %vm4085, %v4084, %v3877
      %vm4087 = vcmp.lt.s32.totalorder %v4086, %v3878
      %v4088 = vsel %vm4087, %v4086, %v3878
      %v4089 = vand.u32 %v4088, 65535
      %v4090 = vshra.s32 %v4088, 16
      %v4091 = vcvt.s32.f32 %v4089
      %v4092 = vcvt.s32.f32 %v4090
      %4093 = vmin.xlane.f32.xlu0 %v4092
      %v4094 = vpop.xlane.xlu0 %4093
      %vm4095 = vcmp.eq.f32.partialorder %v4092, %v4094
      %v4096 = vsel %vm4095, %v4091, inf
      %4097 = vmin.xlane.f32.xlu0 %v4096
      %v4098 = vpop.xlane.xlu0 %4097
      %v4099 = vcvt.f32.s32 %v4098
      %v4100 = vcvt.f32.s32 %v4094
      %v4101 = vshll.u32 %v4100, 16
      %v4102 = vadd.s32 %v4101, %v4099
      %vm4103 = vcmp.lt.s32.totalorder %v3879, %v3880
      %v4104 = vsel %vm4103, %v3879, %v3880
      %vm4105 = vcmp.lt.s32.totalorder %v4104, %v3881
      %v4106 = vsel %vm4105, %v4104, %v3881
      %vm4107 = vcmp.lt.s32.totalorder %v4106, %v3882
      %v4108 = vsel %vm4107, %v4106, %v3882
      %v4109 = vand.u32 %v4108, 65535
      %v4110 = vshra.s32 %v4108, 16
      %v4111 = vcvt.s32.f32 %v4109
      %v4112 = vcvt.s32.f32 %v4110
      %4113 = vmin.xlane.f32.xlu0 %v4112
      %v4114 = vpop.xlane.xlu0 %4113
      %vm4115 = vcmp.eq.f32.partialorder %v4112, %v4114
      %v4116 = vsel %vm4115, %v4111, inf
      %4117 = vmin.xlane.f32.xlu0 %v4116
      %v4118 = vpop.xlane.xlu0 %4117
      %v4119 = vcvt.f32.s32 %v4118
      %v4120 = vcvt.f32.s32 %v4114
      %v4121 = vshll.u32 %v4120, 16
      %v4122 = vadd.s32 %v4121, %v4119
      %vm4123 = vcmp.lt.s32.totalorder %v3883, %v3884
      %v4124 = vsel %vm4123, %v3883, %v3884
      %vm4125 = vcmp.lt.s32.totalorder %v4124, %v3885
      %v4126 = vsel %vm4125, %v4124, %v3885
      %vm4127 = vcmp.lt.s32.totalorder %v4126, %v3886
      %v4128 = vsel %vm4127, %v4126, %v3886
      %v4129 = vand.u32 %v4128, 65535
      %v4130 = vshra.s32 %v4128, 16
      %v4131 = vcvt.s32.f32 %v4129
      %v4132 = vcvt.s32.f32 %v4130
      %4133 = vmin.xlane.f32.xlu0 %v4132
      %v4134 = vpop.xlane.xlu0 %4133
      %vm4135 = vcmp.eq.f32.partialorder %v4132, %v4134
      %v4136 = vsel %vm4135, %v4131, inf
      %4137 = vmin.xlane.f32.xlu0 %v4136
      %v4138 = vpop.xlane.xlu0 %4137
      %v4139 = vcvt.f32.s32 %v4138
      %v4140 = vcvt.f32.s32 %v4134
      %v4141 = vshll.u32 %v4140, 16
      %v4142 = vadd.s32 %v4141, %v4139
      %vm4143 = vcmp.lt.s32.totalorder %v3887, %v3888
      %v4144 = vsel %vm4143, %v3887, %v3888
      %vm4145 = vcmp.lt.s32.totalorder %v4144, %v3889
      %v4146 = vsel %vm4145, %v4144, %v3889
      %vm4147 = vcmp.lt.s32.totalorder %v4146, %v3890
      %v4148 = vsel %vm4147, %v4146, %v3890
      %v4149 = vand.u32 %v4148, 65535
      %v4150 = vshra.s32 %v4148, 16
      %v4151 = vcvt.s32.f32 %v4149
      %v4152 = vcvt.s32.f32 %v4150
      %4153 = vmin.xlane.f32.xlu0 %v4152
      %v4154 = vpop.xlane.xlu0 %4153
      %vm4155 = vcmp.eq.f32.partialorder %v4152, %v4154
      %v4156 = vsel %vm4155, %v4151, inf
      %4157 = vmin.xlane.f32.xlu0 %v4156
      %v4158 = vpop.xlane.xlu0 %4157
      %v4159 = vcvt.f32.s32 %v4158
      %v4160 = vcvt.f32.s32 %v4154
      %v4161 = vshll.u32 %v4160, 16
      %v4162 = vadd.s32 %v4161, %v4159
      %vm4163 = vcmp.lt.s32.totalorder %v3891, %v3892
      %v4164 = vsel %vm4163, %v3891, %v3892
      %vm4165 = vcmp.lt.s32.totalorder %v4164, %v3893
      %v4166 = vsel %vm4165, %v4164, %v3893
      %vm4167 = vcmp.lt.s32.totalorder %v4166, %v3894
      %v4168 = vsel %vm4167, %v4166, %v3894
      %v4169 = vand.u32 %v4168, 65535
      %v4170 = vshra.s32 %v4168, 16
      %v4171 = vcvt.s32.f32 %v4169
      %v4172 = vcvt.s32.f32 %v4170
      %4173 = vmin.xlane.f32.xlu0 %v4172
      %v4174 = vpop.xlane.xlu0 %4173
      %vm4175 = vcmp.eq.f32.partialorder %v4172, %v4174
      %v4176 = vsel %vm4175, %v4171, inf
      %4177 = vmin.xlane.f32.xlu0 %v4176
      %v4178 = vpop.xlane.xlu0 %4177
      %v4179 = vcvt.f32.s32 %v4178
      %v4180 = vcvt.f32.s32 %v4174
      %v4181 = vshll.u32 %v4180, 16
      %v4182 = vadd.s32 %v4181, %v4179
      %vm4183 = vcmp.lt.s32.totalorder %v3895, %v3896
      %v4184 = vsel %vm4183, %v3895, %v3896
      %vm4185 = vcmp.lt.s32.totalorder %v4184, %v3897
      %v4186 = vsel %vm4185, %v4184, %v3897
      %vm4187 = vcmp.lt.s32.totalorder %v4186, %v3898
      %v4188 = vsel %vm4187, %v4186, %v3898
      %v4189 = vand.u32 %v4188, 65535
      %v4190 = vshra.s32 %v4188, 16
      %v4191 = vcvt.s32.f32 %v4189
      %v4192 = vcvt.s32.f32 %v4190
      %4193 = vmin.xlane.f32.xlu0 %v4192
      %v4194 = vpop.xlane.xlu0 %4193
      %vm4195 = vcmp.eq.f32.partialorder %v4192, %v4194
      %v4196 = vsel %vm4195, %v4191, inf
      %4197 = vmin.xlane.f32.xlu0 %v4196
      %v4198 = vpop.xlane.xlu0 %4197
      %v4199 = vcvt.f32.s32 %v4198
      %v4200 = vcvt.f32.s32 %v4194
      %v4201 = vshll.u32 %v4200, 16
      %v4202 = vadd.s32 %v4201, %v4199
      %vm4203 = vcmp.lt.s32.totalorder %v3899, %v3900
      %v4204 = vsel %vm4203, %v3899, %v3900
      %vm4205 = vcmp.lt.s32.totalorder %v4204, %v3901
      %v4206 = vsel %vm4205, %v4204, %v3901
      %vm4207 = vcmp.lt.s32.totalorder %v4206, %v3902
      %v4208 = vsel %vm4207, %v4206, %v3902
      %v4209 = vand.u32 %v4208, 65535
      %v4210 = vshra.s32 %v4208, 16
      %v4211 = vcvt.s32.f32 %v4209
      %v4212 = vcvt.s32.f32 %v4210
      %4213 = vmin.xlane.f32.xlu0 %v4212
      %v4214 = vpop.xlane.xlu0 %4213
      %vm4215 = vcmp.eq.f32.partialorder %v4212, %v4214
      %v4216 = vsel %vm4215, %v4211, inf
      %4217 = vmin.xlane.f32.xlu0 %v4216
      %v4218 = vpop.xlane.xlu0 %4217
      %v4219 = vcvt.f32.s32 %v4218
      %v4220 = vcvt.f32.s32 %v4214
      %v4221 = vshll.u32 %v4220, 16
      %v4222 = vadd.s32 %v4221, %v4219
      %vm4223 = vcmp.lt.s32.totalorder %v3903, %v3904
      %v4224 = vsel %vm4223, %v3903, %v3904
      %vm4225 = vcmp.lt.s32.totalorder %v4224, %v3905
      %v4226 = vsel %vm4225, %v4224, %v3905
      %vm4227 = vcmp.lt.s32.totalorder %v4226, %v3906
      %v4228 = vsel %vm4227, %v4226, %v3906
      %v4229 = vand.u32 %v4228, 65535
      %v4230 = vshra.s32 %v4228, 16
      %v4231 = vcvt.s32.f32 %v4229
      %v4232 = vcvt.s32.f32 %v4230
      %4233 = vmin.xlane.f32.xlu0 %v4232
      %v4234 = vpop.xlane.xlu0 %4233
      %vm4235 = vcmp.eq.f32.partialorder %v4232, %v4234
      %v4236 = vsel %vm4235, %v4231, inf
      %4237 = vmin.xlane.f32.xlu0 %v4236
      %v4238 = vpop.xlane.xlu0 %4237
      %v4239 = vcvt.f32.s32 %v4238
      %v4240 = vcvt.f32.s32 %v4234
      %v4241 = vshll.u32 %v4240, 16
      %v4242 = vadd.s32 %v4241, %v4239
      %vm4243 = vcmp.lt.s32.totalorder %v3907, %v3908
      %v4244 = vsel %vm4243, %v3907, %v3908
      %vm4245 = vcmp.lt.s32.totalorder %v4244, %v3909
      %v4246 = vsel %vm4245, %v4244, %v3909
      %vm4247 = vcmp.lt.s32.totalorder %v4246, %v3910
      %v4248 = vsel %vm4247, %v4246, %v3910
      %v4249 = vand.u32 %v4248, 65535
      %v4250 = vshra.s32 %v4248, 16
      %v4251 = vcvt.s32.f32 %v4249
      %v4252 = vcvt.s32.f32 %v4250
      %4253 = vmin.xlane.f32.xlu0 %v4252
      %v4254 = vpop.xlane.xlu0 %4253
      %vm4255 = vcmp.eq.f32.partialorder %v4252, %v4254
      %v4256 = vsel %vm4255, %v4251, inf
      %4257 = vmin.xlane.f32.xlu0 %v4256
      %v4258 = vpop.xlane.xlu0 %4257
      %v4259 = vcvt.f32.s32 %v4258
      %v4260 = vcvt.f32.s32 %v4254
      %v4261 = vshll.u32 %v4260, 16
      %v4262 = vadd.s32 %v4261, %v4259
      %vm4263 = vcmp.lt.s32.totalorder %v3911, %v3912
      %v4264 = vsel %vm4263, %v3911, %v3912
      %vm4265 = vcmp.lt.s32.totalorder %v4264, %v3913
      %v4266 = vsel %vm4265, %v4264, %v3913
      %vm4267 = vcmp.lt.s32.totalorder %v4266, %v3914
      %v4268 = vsel %vm4267, %v4266, %v3914
      %v4269 = vand.u32 %v4268, 65535
      %v4270 = vshra.s32 %v4268, 16
      %v4271 = vcvt.s32.f32 %v4269
      %v4272 = vcvt.s32.f32 %v4270
      %4273 = vmin.xlane.f32.xlu0 %v4272
      %v4274 = vpop.xlane.xlu0 %4273
      %vm4275 = vcmp.eq.f32.partialorder %v4272, %v4274
      %v4276 = vsel %vm4275, %v4271, inf
      %4277 = vmin.xlane.f32.xlu0 %v4276
      %v4278 = vpop.xlane.xlu0 %4277
      %v4279 = vcvt.f32.s32 %v4278
      %v4280 = vcvt.f32.s32 %v4274
      %v4281 = vshll.u32 %v4280, 16
      %v4282 = vadd.s32 %v4281, %v4279
      %vm4283 = vcmp.lt.s32.totalorder %v3915, %v3916
      %v4284 = vsel %vm4283, %v3915, %v3916
      %vm4285 = vcmp.lt.s32.totalorder %v4284, %v3917
      %v4286 = vsel %vm4285, %v4284, %v3917
      %vm4287 = vcmp.lt.s32.totalorder %v4286, %v3918
      %v4288 = vsel %vm4287, %v4286, %v3918
      %v4289 = vand.u32 %v4288, 65535
      %v4290 = vshra.s32 %v4288, 16
      %v4291 = vcvt.s32.f32 %v4289
      %v4292 = vcvt.s32.f32 %v4290
      %4293 = vmin.xlane.f32.xlu0 %v4292
      %v4294 = vpop.xlane.xlu0 %4293
      %vm4295 = vcmp.eq.f32.partialorder %v4292, %v4294
      %v4296 = vsel %vm4295, %v4291, inf
      %4297 = vmin.xlane.f32.xlu0 %v4296
      %v4298 = vpop.xlane.xlu0 %4297
      %v4299 = vcvt.f32.s32 %v4298
      %v4300 = vcvt.f32.s32 %v4294
      %v4301 = vshll.u32 %v4300, 16
      %v4302 = vadd.s32 %v4301, %v4299
      %vm4303 = vcmp.lt.s32.totalorder %v3919, %v3920
      %v4304 = vsel %vm4303, %v3919, %v3920
      %vm4305 = vcmp.lt.s32.totalorder %v4304, %v3921
      %v4306 = vsel %vm4305, %v4304, %v3921
      %vm4307 = vcmp.lt.s32.totalorder %v4306, %v3922
      %v4308 = vsel %vm4307, %v4306, %v3922
      %v4309 = vand.u32 %v4308, 65535
      %v4310 = vshra.s32 %v4308, 16
      %v4311 = vcvt.s32.f32 %v4309
      %v4312 = vcvt.s32.f32 %v4310
      %4313 = vmin.xlane.f32.xlu0 %v4312
      %v4314 = vpop.xlane.xlu0 %4313
      %vm4315 = vcmp.eq.f32.partialorder %v4312, %v4314
      %v4316 = vsel %vm4315, %v4311, inf
      %4317 = vmin.xlane.f32.xlu0 %v4316
      %v4318 = vpop.xlane.xlu0 %4317
      %v4319 = vcvt.f32.s32 %v4318
      %v4320 = vcvt.f32.s32 %v4314
      %v4321 = vshll.u32 %v4320, 16
      %v4322 = vadd.s32 %v4321, %v4319
      %vm4323 = vcmp.lt.s32.totalorder %v3923, %v3924
      %v4324 = vsel %vm4323, %v3923, %v3924
      %vm4325 = vcmp.lt.s32.totalorder %v4324, %v3925
      %v4326 = vsel %vm4325, %v4324, %v3925
      %vm4327 = vcmp.lt.s32.totalorder %v4326, %v3926
      %v4328 = vsel %vm4327, %v4326, %v3926
      %v4329 = vand.u32 %v4328, 65535
      %v4330 = vshra.s32 %v4328, 16
      %v4331 = vcvt.s32.f32 %v4329
      %v4332 = vcvt.s32.f32 %v4330
      %4333 = vmin.xlane.f32.xlu0 %v4332
      %v4334 = vpop.xlane.xlu0 %4333
      %vm4335 = vcmp.eq.f32.partialorder %v4332, %v4334
      %v4336 = vsel %vm4335, %v4331, inf
      %4337 = vmin.xlane.f32.xlu0 %v4336
      %v4338 = vpop.xlane.xlu0 %4337
      %v4339 = vcvt.f32.s32 %v4338
      %v4340 = vcvt.f32.s32 %v4334
      %v4341 = vshll.u32 %v4340, 16
      %v4342 = vadd.s32 %v4341, %v4339
      %vm4343 = vcmp.lt.s32.totalorder %v3927, %v3928
      %v4344 = vsel %vm4343, %v3927, %v3928
      %vm4345 = vcmp.lt.s32.totalorder %v4344, %v3929
      %v4346 = vsel %vm4345, %v4344, %v3929
      %vm4347 = vcmp.lt.s32.totalorder %v4346, %v3930
      %v4348 = vsel %vm4347, %v4346, %v3930
      %v4349 = vand.u32 %v4348, 65535
      %v4350 = vshra.s32 %v4348, 16
      %v4351 = vcvt.s32.f32 %v4349
      %v4352 = vcvt.s32.f32 %v4350
      %4353 = vmin.xlane.f32.xlu0 %v4352
      %v4354 = vpop.xlane.xlu0 %4353
      %vm4355 = vcmp.eq.f32.partialorder %v4352, %v4354
      %v4356 = vsel %vm4355, %v4351, inf
      %4357 = vmin.xlane.f32.xlu0 %v4356
      %v4358 = vpop.xlane.xlu0 %4357
      %v4359 = vcvt.f32.s32 %v4358
      %v4360 = vcvt.f32.s32 %v4354
      %v4361 = vshll.u32 %v4360, 16
      %v4362 = vadd.s32 %v4361, %v4359
      %vm4363 = vcmp.lt.s32.totalorder %v3931, %v3932
      %v4364 = vsel %vm4363, %v3931, %v3932
      %vm4365 = vcmp.lt.s32.totalorder %v4364, %v3933
      %v4366 = vsel %vm4365, %v4364, %v3933
      %vm4367 = vcmp.lt.s32.totalorder %v4366, %v3934
      %v4368 = vsel %vm4367, %v4366, %v3934
      %v4369 = vand.u32 %v4368, 65535
      %v4370 = vshra.s32 %v4368, 16
      %v4371 = vcvt.s32.f32 %v4369
      %v4372 = vcvt.s32.f32 %v4370
      %4373 = vmin.xlane.f32.xlu0 %v4372
      %v4374 = vpop.xlane.xlu0 %4373
      %vm4375 = vcmp.eq.f32.partialorder %v4372, %v4374
      %v4376 = vsel %vm4375, %v4371, inf
      %4377 = vmin.xlane.f32.xlu0 %v4376
      %v4378 = vpop.xlane.xlu0 %4377
      %v4379 = vcvt.f32.s32 %v4378
      %v4380 = vcvt.f32.s32 %v4374
      %v4381 = vshll.u32 %v4380, 16
      %v4382 = vadd.s32 %v4381, %v4379
      %vm4383 = vcmp.lt.s32.totalorder %v3935, %v3936
      %v4384 = vsel %vm4383, %v3935, %v3936
      %vm4385 = vcmp.lt.s32.totalorder %v4384, %v3937
      %v4386 = vsel %vm4385, %v4384, %v3937
      %vm4387 = vcmp.lt.s32.totalorder %v4386, %v3938
      %v4388 = vsel %vm4387, %v4386, %v3938
      %v4389 = vand.u32 %v4388, 65535
      %v4390 = vshra.s32 %v4388, 16
      %v4391 = vcvt.s32.f32 %v4389
      %v4392 = vcvt.s32.f32 %v4390
      %4393 = vmin.xlane.f32.xlu0 %v4392
      %v4394 = vpop.xlane.xlu0 %4393
      %vm4395 = vcmp.eq.f32.partialorder %v4392, %v4394
      %v4396 = vsel %vm4395, %v4391, inf
      %4397 = vmin.xlane.f32.xlu0 %v4396
      %v4398 = vpop.xlane.xlu0 %4397
      %v4399 = vcvt.f32.s32 %v4398
      %v4400 = vcvt.f32.s32 %v4394
      %v4401 = vshll.u32 %v4400, 16
      %v4402 = vadd.s32 %v4401, %v4399
      %vm4403 = vcmp.lt.s32.totalorder %v3939, %v3940
      %v4404 = vsel %vm4403, %v3939, %v3940
      %vm4405 = vcmp.lt.s32.totalorder %v4404, %v3941
      %v4406 = vsel %vm4405, %v4404, %v3941
      %vm4407 = vcmp.lt.s32.totalorder %v4406, %v3942
      %v4408 = vsel %vm4407, %v4406, %v3942
      %v4409 = vand.u32 %v4408, 65535
      %v4410 = vshra.s32 %v4408, 16
      %v4411 = vcvt.s32.f32 %v4409
      %v4412 = vcvt.s32.f32 %v4410
      %4413 = vmin.xlane.f32.xlu0 %v4412
      %v4414 = vpop.xlane.xlu0 %4413
      %vm4415 = vcmp.eq.f32.partialorder %v4412, %v4414
      %v4416 = vsel %vm4415, %v4411, inf
      %4417 = vmin.xlane.f32.xlu0 %v4416
      %v4418 = vpop.xlane.xlu0 %4417
      %v4419 = vcvt.f32.s32 %v4418
      %v4420 = vcvt.f32.s32 %v4414
      %v4421 = vshll.u32 %v4420, 16
      %v4422 = vadd.s32 %v4421, %v4419
      %vm4423 = vcmp.lt.s32.totalorder %v3943, %v3944
      %v4424 = vsel %vm4423, %v3943, %v3944
      %vm4425 = vcmp.lt.s32.totalorder %v4424, %v3945
      %v4426 = vsel %vm4425, %v4424, %v3945
      %vm4427 = vcmp.lt.s32.totalorder %v4426, %v3946
      %v4428 = vsel %vm4427, %v4426, %v3946
      %v4429 = vand.u32 %v4428, 65535
      %v4430 = vshra.s32 %v4428, 16
      %v4431 = vcvt.s32.f32 %v4429
      %v4432 = vcvt.s32.f32 %v4430
      %4433 = vmin.xlane.f32.xlu0 %v4432
      %v4434 = vpop.xlane.xlu0 %4433
      %vm4435 = vcmp.eq.f32.partialorder %v4432, %v4434
      %v4436 = vsel %vm4435, %v4431, inf
      %4437 = vmin.xlane.f32.xlu0 %v4436
      %v4438 = vpop.xlane.xlu0 %4437
      %v4439 = vcvt.f32.s32 %v4438
      %v4440 = vcvt.f32.s32 %v4434
      %v4441 = vshll.u32 %v4440, 16
      %v4442 = vadd.s32 %v4441, %v4439
      %vm4443 = vcmp.lt.s32.totalorder %v3947, %v3948
      %v4444 = vsel %vm4443, %v3947, %v3948
      %vm4445 = vcmp.lt.s32.totalorder %v4444, %v3949
      %v4446 = vsel %vm4445, %v4444, %v3949
      %vm4447 = vcmp.lt.s32.totalorder %v4446, %v3950
      %v4448 = vsel %vm4447, %v4446, %v3950
      %v4449 = vand.u32 %v4448, 65535
      %v4450 = vshra.s32 %v4448, 16
      %v4451 = vcvt.s32.f32 %v4449
      %v4452 = vcvt.s32.f32 %v4450
      %4453 = vmin.xlane.f32.xlu0 %v4452
      %v4454 = vpop.xlane.xlu0 %4453
      %vm4455 = vcmp.eq.f32.partialorder %v4452, %v4454
      %v4456 = vsel %vm4455, %v4451, inf
      %4457 = vmin.xlane.f32.xlu0 %v4456
      %v4458 = vpop.xlane.xlu0 %4457
      %v4459 = vcvt.f32.s32 %v4458
      %v4460 = vcvt.f32.s32 %v4454
      %v4461 = vshll.u32 %v4460, 16
      %v4462 = vadd.s32 %v4461, %v4459
      %vm4463 = vcmp.lt.s32.totalorder %v3951, %v3952
      %v4464 = vsel %vm4463, %v3951, %v3952
      %vm4465 = vcmp.lt.s32.totalorder %v4464, %v3953
      %v4466 = vsel %vm4465, %v4464, %v3953
      %vm4467 = vcmp.lt.s32.totalorder %v4466, %v3954
      %v4468 = vsel %vm4467, %v4466, %v3954
      %v4469 = vand.u32 %v4468, 65535
      %v4470 = vshra.s32 %v4468, 16
      %v4471 = vcvt.s32.f32 %v4469
      %v4472 = vcvt.s32.f32 %v4470
      %4473 = vmin.xlane.f32.xlu0 %v4472
      %v4474 = vpop.xlane.xlu0 %4473
      %vm4475 = vcmp.eq.f32.partialorder %v4472, %v4474
      %v4476 = vsel %vm4475, %v4471, inf
      %4477 = vmin.xlane.f32.xlu0 %v4476
      %v4478 = vpop.xlane.xlu0 %4477
      %v4479 = vcvt.f32.s32 %v4478
      %v4480 = vcvt.f32.s32 %v4474
      %v4481 = vshll.u32 %v4480, 16
      %v4482 = vadd.s32 %v4481, %v4479
      %vm4483 = vcmp.lt.s32.totalorder %v3955, %v3956
      %v4484 = vsel %vm4483, %v3955, %v3956
      %vm4485 = vcmp.lt.s32.totalorder %v4484, %v3957
      %v4486 = vsel %vm4485, %v4484, %v3957
      %vm4487 = vcmp.lt.s32.totalorder %v4486, %v3958
      %v4488 = vsel %vm4487, %v4486, %v3958
      %v4489 = vand.u32 %v4488, 65535
      %v4490 = vshra.s32 %v4488, 16
      %v4491 = vcvt.s32.f32 %v4489
      %v4492 = vcvt.s32.f32 %v4490
      %4493 = vmin.xlane.f32.xlu0 %v4492
      %v4494 = vpop.xlane.xlu0 %4493
      %vm4495 = vcmp.eq.f32.partialorder %v4492, %v4494
      %v4496 = vsel %vm4495, %v4491, inf
      %4497 = vmin.xlane.f32.xlu0 %v4496
      %v4498 = vpop.xlane.xlu0 %4497
      %v4499 = vcvt.f32.s32 %v4498
      %v4500 = vcvt.f32.s32 %v4494
      %v4501 = vshll.u32 %v4500, 16
      %v4502 = vadd.s32 %v4501, %v4499
      %vm4503 = vcmp.lt.s32.totalorder %v3959, %v3960
      %v4504 = vsel %vm4503, %v3959, %v3960
      %vm4505 = vcmp.lt.s32.totalorder %v4504, %v3961
      %v4506 = vsel %vm4505, %v4504, %v3961
      %vm4507 = vcmp.lt.s32.totalorder %v4506, %v3962
      %v4508 = vsel %vm4507, %v4506, %v3962
      %v4509 = vand.u32 %v4508, 65535
      %v4510 = vshra.s32 %v4508, 16
      %v4511 = vcvt.s32.f32 %v4509
      %v4512 = vcvt.s32.f32 %v4510
      %4513 = vmin.xlane.f32.xlu0 %v4512
      %v4514 = vpop.xlane.xlu0 %4513
      %vm4515 = vcmp.eq.f32.partialorder %v4512, %v4514
      %v4516 = vsel %vm4515, %v4511, inf
      %4517 = vmin.xlane.f32.xlu0 %v4516
      %v4518 = vpop.xlane.xlu0 %4517
      %v4519 = vcvt.f32.s32 %v4518
      %v4520 = vcvt.f32.s32 %v4514
      %v4521 = vshll.u32 %v4520, 16
      %v4522 = vadd.s32 %v4521, %v4519
      %vm4523 = vcmp.lt.s32.totalorder %v3963, %v3964
      %v4524 = vsel %vm4523, %v3963, %v3964
      %vm4525 = vcmp.lt.s32.totalorder %v4524, %v3965
      %v4526 = vsel %vm4525, %v4524, %v3965
      %vm4527 = vcmp.lt.s32.totalorder %v4526, %v3966
      %v4528 = vsel %vm4527, %v4526, %v3966
      %v4529 = vand.u32 %v4528, 65535
      %v4530 = vshra.s32 %v4528, 16
      %v4531 = vcvt.s32.f32 %v4529
      %v4532 = vcvt.s32.f32 %v4530
      %4533 = vmin.xlane.f32.xlu0 %v4532
      %v4534 = vpop.xlane.xlu0 %4533
      %vm4535 = vcmp.eq.f32.partialorder %v4532, %v4534
      %v4536 = vsel %vm4535, %v4531, inf
      %4537 = vmin.xlane.f32.xlu0 %v4536
      %v4538 = vpop.xlane.xlu0 %4537
      %v4539 = vcvt.f32.s32 %v4538
      %v4540 = vcvt.f32.s32 %v4534
      %v4541 = vshll.u32 %v4540, 16
      %v4542 = vadd.s32 %v4541, %v4539
      %vm4543 = vcmp.lt.s32.totalorder %v3967, %v3968
      %v4544 = vsel %vm4543, %v3967, %v3968
      %vm4545 = vcmp.lt.s32.totalorder %v4544, %v3969
      %v4546 = vsel %vm4545, %v4544, %v3969
      %vm4547 = vcmp.lt.s32.totalorder %v4546, %v3970
      %v4548 = vsel %vm4547, %v4546, %v3970
      %v4549 = vand.u32 %v4548, 65535
      %v4550 = vshra.s32 %v4548, 16
      %v4551 = vcvt.s32.f32 %v4549
      %v4552 = vcvt.s32.f32 %v4550
      %4553 = vmin.xlane.f32.xlu0 %v4552
      %v4554 = vpop.xlane.xlu0 %4553
      %vm4555 = vcmp.eq.f32.partialorder %v4552, %v4554
      %v4556 = vsel %vm4555, %v4551, inf
      %4557 = vmin.xlane.f32.xlu0 %v4556
      %v4558 = vpop.xlane.xlu0 %4557
      %v4559 = vcvt.f32.s32 %v4558
      %v4560 = vcvt.f32.s32 %v4554
      %v4561 = vshll.u32 %v4560, 16
      %v4562 = vadd.s32 %v4561, %v4559
      %vm4563 = vcmp.lt.s32.totalorder %v3971, %v3972
      %v4564 = vsel %vm4563, %v3971, %v3972
      %vm4565 = vcmp.lt.s32.totalorder %v4564, %v3973
      %v4566 = vsel %vm4565, %v4564, %v3973
      %vm4567 = vcmp.lt.s32.totalorder %v4566, %v3974
      %v4568 = vsel %vm4567, %v4566, %v3974
      %v4569 = vand.u32 %v4568, 65535
      %v4570 = vshra.s32 %v4568, 16
      %v4571 = vcvt.s32.f32 %v4569
      %v4572 = vcvt.s32.f32 %v4570
      %4573 = vmin.xlane.f32.xlu0 %v4572
      %v4574 = vpop.xlane.xlu0 %4573
      %vm4575 = vcmp.eq.f32.partialorder %v4572, %v4574
      %v4576 = vsel %vm4575, %v4571, inf
      %4577 = vmin.xlane.f32.xlu0 %v4576
      %v4578 = vpop.xlane.xlu0 %4577
      %v4579 = vcvt.f32.s32 %v4578
      %v4580 = vcvt.f32.s32 %v4574
      %v4581 = vshll.u32 %v4580, 16
      %v4582 = vadd.s32 %v4581, %v4579
      %vm4583 = vcmp.lt.s32.totalorder %v3975, %v3976
      %v4584 = vsel %vm4583, %v3975, %v3976
      %vm4585 = vcmp.lt.s32.totalorder %v4584, %v3977
      %v4586 = vsel %vm4585, %v4584, %v3977
      %vm4587 = vcmp.lt.s32.totalorder %v4586, %v3978
      %v4588 = vsel %vm4587, %v4586, %v3978
      %v4589 = vand.u32 %v4588, 65535
      %v4590 = vshra.s32 %v4588, 16
      %v4591 = vcvt.s32.f32 %v4589
      %v4592 = vcvt.s32.f32 %v4590
      %4593 = vmin.xlane.f32.xlu0 %v4592
      %v4594 = vpop.xlane.xlu0 %4593
      %vm4595 = vcmp.eq.f32.partialorder %v4592, %v4594
      %v4596 = vsel %vm4595, %v4591, inf
      %4597 = vmin.xlane.f32.xlu0 %v4596
      %v4598 = vpop.xlane.xlu0 %4597
      %v4599 = vcvt.f32.s32 %v4598
      %v4600 = vcvt.f32.s32 %v4594
      %v4601 = vshll.u32 %v4600, 16
      %v4602 = vadd.s32 %v4601, %v4599
      %vm4603 = vcmp.lt.s32.totalorder %v3979, %v3980
      %v4604 = vsel %vm4603, %v3979, %v3980
      %vm4605 = vcmp.lt.s32.totalorder %v4604, %v3981
      %v4606 = vsel %vm4605, %v4604, %v3981
      %vm4607 = vcmp.lt.s32.totalorder %v4606, %v3982
      %v4608 = vsel %vm4607, %v4606, %v3982
      %v4609 = vand.u32 %v4608, 65535
      %v4610 = vshra.s32 %v4608, 16
      %v4611 = vcvt.s32.f32 %v4609
      %v4612 = vcvt.s32.f32 %v4610
      %4613 = vmin.xlane.f32.xlu0 %v4612
      %v4614 = vpop.xlane.xlu0 %4613
      %vm4615 = vcmp.eq.f32.partialorder %v4612, %v4614
      %v4616 = vsel %vm4615, %v4611, inf
      %4617 = vmin.xlane.f32.xlu0 %v4616
      %v4618 = vpop.xlane.xlu0 %4617
      %v4619 = vcvt.f32.s32 %v4618
      %v4620 = vcvt.f32.s32 %v4614
      %v4621 = vshll.u32 %v4620, 16
      %v4622 = vadd.s32 %v4621, %v4619
      %vm4623 = vcmp.eq.s32.totalorder %v1266, %v4002
      %vm4624 = vcmp.eq.s32.totalorder %v1267, %v4002
      %vm4625 = vcmp.eq.s32.totalorder %v1268, %v4002
      %vm4626 = vcmp.eq.s32.totalorder %v1269, %v4002
      %vm4627 = vcmp.eq.s32.totalorder %v1266, %v4022
      %vm4628 = vcmp.eq.s32.totalorder %v1267, %v4022
      %vm4629 = vcmp.eq.s32.totalorder %v1268, %v4022
      %vm4630 = vcmp.eq.s32.totalorder %v1269, %v4022
      %vm4631 = vcmp.eq.s32.totalorder %v1266, %v4042
      %vm4632 = vcmp.eq.s32.totalorder %v1267, %v4042
      %vm4633 = vcmp.eq.s32.totalorder %v1268, %v4042
      %vm4634 = vcmp.eq.s32.totalorder %v1269, %v4042
      %vm4635 = vcmp.eq.s32.totalorder %v1266, %v4062
      %vm4636 = vcmp.eq.s32.totalorder %v1267, %v4062
      %vm4637 = vcmp.eq.s32.totalorder %v1268, %v4062
      %vm4638 = vcmp.eq.s32.totalorder %v1269, %v4062
      %vm4639 = vcmp.eq.s32.totalorder %v1266, %v4082
      %vm4640 = vcmp.eq.s32.totalorder %v1267, %v4082
      %vm4641 = vcmp.eq.s32.totalorder %v1268, %v4082
      %vm4642 = vcmp.eq.s32.totalorder %v1269, %v4082
      %vm4643 = vcmp.eq.s32.totalorder %v1266, %v4102
      %vm4644 = vcmp.eq.s32.totalorder %v1267, %v4102
      %vm4645 = vcmp.eq.s32.totalorder %v1268, %v4102
      %vm4646 = vcmp.eq.s32.totalorder %v1269, %v4102
      %vm4647 = vcmp.eq.s32.totalorder %v1266, %v4122
      %vm4648 = vcmp.eq.s32.totalorder %v1267, %v4122
      %vm4649 = vcmp.eq.s32.totalorder %v1268, %v4122
      %vm4650 = vcmp.eq.s32.totalorder %v1269, %v4122
      %vm4651 = vcmp.eq.s32.totalorder %v1266, %v4142
      %vm4652 = vcmp.eq.s32.totalorder %v1267, %v4142
      %vm4653 = vcmp.eq.s32.totalorder %v1268, %v4142
      %vm4654 = vcmp.eq.s32.totalorder %v1269, %v4142
      %vm4655 = vcmp.eq.s32.totalorder %v1266, %v4162
      %vm4656 = vcmp.eq.s32.totalorder %v1267, %v4162
      %vm4657 = vcmp.eq.s32.totalorder %v1268, %v4162
      %vm4658 = vcmp.eq.s32.totalorder %v1269, %v4162
      %vm4659 = vcmp.eq.s32.totalorder %v1266, %v4182
      %vm4660 = vcmp.eq.s32.totalorder %v1267, %v4182
      %vm4661 = vcmp.eq.s32.totalorder %v1268, %v4182
      %vm4662 = vcmp.eq.s32.totalorder %v1269, %v4182
      %vm4663 = vcmp.eq.s32.totalorder %v1266, %v4202
      %vm4664 = vcmp.eq.s32.totalorder %v1267, %v4202
      %vm4665 = vcmp.eq.s32.totalorder %v1268, %v4202
      %vm4666 = vcmp.eq.s32.totalorder %v1269, %v4202
      %vm4667 = vcmp.eq.s32.totalorder %v1266, %v4222
      %vm4668 = vcmp.eq.s32.totalorder %v1267, %v4222
      %vm4669 = vcmp.eq.s32.totalorder %v1268, %v4222
      %vm4670 = vcmp.eq.s32.totalorder %v1269, %v4222
      %vm4671 = vcmp.eq.s32.totalorder %v1266, %v4242
      %vm4672 = vcmp.eq.s32.totalorder %v1267, %v4242
      %vm4673 = vcmp.eq.s32.totalorder %v1268, %v4242
      %vm4674 = vcmp.eq.s32.totalorder %v1269, %v4242
      %vm4675 = vcmp.eq.s32.totalorder %v1266, %v4262
      %vm4676 = vcmp.eq.s32.totalorder %v1267, %v4262
      %vm4677 = vcmp.eq.s32.totalorder %v1268, %v4262
      %vm4678 = vcmp.eq.s32.totalorder %v1269, %v4262
      %vm4679 = vcmp.eq.s32.totalorder %v1266, %v4282
      %vm4680 = vcmp.eq.s32.totalorder %v1267, %v4282
      %vm4681 = vcmp.eq.s32.totalorder %v1268, %v4282
      %vm4682 = vcmp.eq.s32.totalorder %v1269, %v4282
      %vm4683 = vcmp.eq.s32.totalorder %v1266, %v4302
      %vm4684 = vcmp.eq.s32.totalorder %v1267, %v4302
      %vm4685 = vcmp.eq.s32.totalorder %v1268, %v4302
      %vm4686 = vcmp.eq.s32.totalorder %v1269, %v4302
      %vm4687 = vcmp.eq.s32.totalorder %v1266, %v4322
      %vm4688 = vcmp.eq.s32.totalorder %v1267, %v4322
      %vm4689 = vcmp.eq.s32.totalorder %v1268, %v4322
      %vm4690 = vcmp.eq.s32.totalorder %v1269, %v4322
      %vm4691 = vcmp.eq.s32.totalorder %v1266, %v4342
      %vm4692 = vcmp.eq.s32.totalorder %v1267, %v4342
      %vm4693 = vcmp.eq.s32.totalorder %v1268, %v4342
      %vm4694 = vcmp.eq.s32.totalorder %v1269, %v4342
      %vm4695 = vcmp.eq.s32.totalorder %v1266, %v4362
      %vm4696 = vcmp.eq.s32.totalorder %v1267, %v4362
      %vm4697 = vcmp.eq.s32.totalorder %v1268, %v4362
      %vm4698 = vcmp.eq.s32.totalorder %v1269, %v4362
      %vm4699 = vcmp.eq.s32.totalorder %v1266, %v4382
      %vm4700 = vcmp.eq.s32.totalorder %v1267, %v4382
      %vm4701 = vcmp.eq.s32.totalorder %v1268, %v4382
      %vm4702 = vcmp.eq.s32.totalorder %v1269, %v4382
      %vm4703 = vcmp.eq.s32.totalorder %v1266, %v4402
      %vm4704 = vcmp.eq.s32.totalorder %v1267, %v4402
      %vm4705 = vcmp.eq.s32.totalorder %v1268, %v4402
      %vm4706 = vcmp.eq.s32.totalorder %v1269, %v4402
      %vm4707 = vcmp.eq.s32.totalorder %v1266, %v4422
      %vm4708 = vcmp.eq.s32.totalorder %v1267, %v4422
      %vm4709 = vcmp.eq.s32.totalorder %v1268, %v4422
      %vm4710 = vcmp.eq.s32.totalorder %v1269, %v4422
      %vm4711 = vcmp.eq.s32.totalorder %v1266, %v4442
      %vm4712 = vcmp.eq.s32.totalorder %v1267, %v4442
      %vm4713 = vcmp.eq.s32.totalorder %v1268, %v4442
      %vm4714 = vcmp.eq.s32.totalorder %v1269, %v4442
      %vm4715 = vcmp.eq.s32.totalorder %v1266, %v4462
      %vm4716 = vcmp.eq.s32.totalorder %v1267, %v4462
      %vm4717 = vcmp.eq.s32.totalorder %v1268, %v4462
      %vm4718 = vcmp.eq.s32.totalorder %v1269, %v4462
      %vm4719 = vcmp.eq.s32.totalorder %v1266, %v4482
      %vm4720 = vcmp.eq.s32.totalorder %v1267, %v4482
      %vm4721 = vcmp.eq.s32.totalorder %v1268, %v4482
      %vm4722 = vcmp.eq.s32.totalorder %v1269, %v4482
      %vm4723 = vcmp.eq.s32.totalorder %v1266, %v4502
      %vm4724 = vcmp.eq.s32.totalorder %v1267, %v4502
      %vm4725 = vcmp.eq.s32.totalorder %v1268, %v4502
      %vm4726 = vcmp.eq.s32.totalorder %v1269, %v4502
      %vm4727 = vcmp.eq.s32.totalorder %v1266, %v4522
      %vm4728 = vcmp.eq.s32.totalorder %v1267, %v4522
      %vm4729 = vcmp.eq.s32.totalorder %v1268, %v4522
      %vm4730 = vcmp.eq.s32.totalorder %v1269, %v4522
      %vm4731 = vcmp.eq.s32.totalorder %v1266, %v4542
      %vm4732 = vcmp.eq.s32.totalorder %v1267, %v4542
      %vm4733 = vcmp.eq.s32.totalorder %v1268, %v4542
      %vm4734 = vcmp.eq.s32.totalorder %v1269, %v4542
      %vm4735 = vcmp.eq.s32.totalorder %v1266, %v4562
      %vm4736 = vcmp.eq.s32.totalorder %v1267, %v4562
      %vm4737 = vcmp.eq.s32.totalorder %v1268, %v4562
      %vm4738 = vcmp.eq.s32.totalorder %v1269, %v4562
      %vm4739 = vcmp.eq.s32.totalorder %v1266, %v4582
      %vm4740 = vcmp.eq.s32.totalorder %v1267, %v4582
      %vm4741 = vcmp.eq.s32.totalorder %v1268, %v4582
      %vm4742 = vcmp.eq.s32.totalorder %v1269, %v4582
      %vm4743 = vcmp.eq.s32.totalorder %v1266, %v4602
      %vm4744 = vcmp.eq.s32.totalorder %v1267, %v4602
      %vm4745 = vcmp.eq.s32.totalorder %v1268, %v4602
      %vm4746 = vcmp.eq.s32.totalorder %v1269, %v4602
      %vm4747 = vcmp.eq.s32.totalorder %v1266, %v4622
      %vm4748 = vcmp.eq.s32.totalorder %v1267, %v4622
      %vm4749 = vcmp.eq.s32.totalorder %v1268, %v4622
      %vm4750 = vcmp.eq.s32.totalorder %v1269, %v4622
      %v4751 = vsel %vm4623, 1, 0
      %v4752 = vsel %vm4624, 1, 0
      %v4753 = vsel %vm4625, 1, 0
      %v4754 = vsel %vm4626, 1, 0
      %v4755 = vsel %vm4627, 1, 0
      %v4756 = vsel %vm4628, 1, 0
      %v4757 = vsel %vm4629, 1, 0
      %v4758 = vsel %vm4630, 1, 0
      %v4759 = vsel %vm4631, 1, 0
      %v4760 = vsel %vm4632, 1, 0
      %v4761 = vsel %vm4633, 1, 0
      %v4762 = vsel %vm4634, 1, 0
      %v4763 = vsel %vm4635, 1, 0
      %v4764 = vsel %vm4636, 1, 0
      %v4765 = vsel %vm4637, 1, 0
      %v4766 = vsel %vm4638, 1, 0
      %v4767 = vsel %vm4639, 1, 0
      %v4768 = vsel %vm4640, 1, 0
      %v4769 = vsel %vm4641, 1, 0
      %v4770 = vsel %vm4642, 1, 0
      %v4771 = vsel %vm4643, 1, 0
      %v4772 = vsel %vm4644, 1, 0
      %v4773 = vsel %vm4645, 1, 0
      %v4774 = vsel %vm4646, 1, 0
      %v4775 = vsel %vm4647, 1, 0
      %v4776 = vsel %vm4648, 1, 0
      %v4777 = vsel %vm4649, 1, 0
      %v4778 = vsel %vm4650, 1, 0
      %v4779 = vsel %vm4651, 1, 0
      %v4780 = vsel %vm4652, 1, 0
      %v4781 = vsel %vm4653, 1, 0
      %v4782 = vsel %vm4654, 1, 0
      %v4783 = vsel %vm4655, 1, 0
      %v4784 = vsel %vm4656, 1, 0
      %v4785 = vsel %vm4657, 1, 0
      %v4786 = vsel %vm4658, 1, 0
      %v4787 = vsel %vm4659, 1, 0
      %v4788 = vsel %vm4660, 1, 0
      %v4789 = vsel %vm4661, 1, 0
      %v4790 = vsel %vm4662, 1, 0
      %v4791 = vsel %vm4663, 1, 0
      %v4792 = vsel %vm4664, 1, 0
      %v4793 = vsel %vm4665, 1, 0
      %v4794 = vsel %vm4666, 1, 0
      %v4795 = vsel %vm4667, 1, 0
      %v4796 = vsel %vm4668, 1, 0
      %v4797 = vsel %vm4669, 1, 0
      %v4798 = vsel %vm4670, 1, 0
      %v4799 = vsel %vm4671, 1, 0
      %v4800 = vsel %vm4672, 1, 0
      %v4801 = vsel %vm4673, 1, 0
      %v4802 = vsel %vm4674, 1, 0
      %v4803 = vsel %vm4675, 1, 0
      %v4804 = vsel %vm4676, 1, 0
      %v4805 = vsel %vm4677, 1, 0
      %v4806 = vsel %vm4678, 1, 0
      %v4807 = vsel %vm4679, 1, 0
      %v4808 = vsel %vm4680, 1, 0
      %v4809 = vsel %vm4681, 1, 0
      %v4810 = vsel %vm4682, 1, 0
      %v4811 = vsel %vm4683, 1, 0
      %v4812 = vsel %vm4684, 1, 0
      %v4813 = vsel %vm4685, 1, 0
      %v4814 = vsel %vm4686, 1, 0
      %v4815 = vsel %vm4687, 1, 0
      %v4816 = vsel %vm4688, 1, 0
      %v4817 = vsel %vm4689, 1, 0
      %v4818 = vsel %vm4690, 1, 0
      %v4819 = vsel %vm4691, 1, 0
      %v4820 = vsel %vm4692, 1, 0
      %v4821 = vsel %vm4693, 1, 0
      %v4822 = vsel %vm4694, 1, 0
      %v4823 = vsel %vm4695, 1, 0
      %v4824 = vsel %vm4696, 1, 0
      %v4825 = vsel %vm4697, 1, 0
      %v4826 = vsel %vm4698, 1, 0
      %v4827 = vsel %vm4699, 1, 0
      %v4828 = vsel %vm4700, 1, 0
      %v4829 = vsel %vm4701, 1, 0
      %v4830 = vsel %vm4702, 1, 0
      %v4831 = vsel %vm4703, 1, 0
      %v4832 = vsel %vm4704, 1, 0
      %v4833 = vsel %vm4705, 1, 0
      %v4834 = vsel %vm4706, 1, 0
      %v4835 = vsel %vm4707, 1, 0
      %v4836 = vsel %vm4708, 1, 0
      %v4837 = vsel %vm4709, 1, 0
      %v4838 = vsel %vm4710, 1, 0
      %v4839 = vsel %vm4711, 1, 0
      %v4840 = vsel %vm4712, 1, 0
      %v4841 = vsel %vm4713, 1, 0
      %v4842 = vsel %vm4714, 1, 0
      %v4843 = vsel %vm4715, 1, 0
      %v4844 = vsel %vm4716, 1, 0
      %v4845 = vsel %vm4717, 1, 0
      %v4846 = vsel %vm4718, 1, 0
      %v4847 = vsel %vm4719, 1, 0
      %v4848 = vsel %vm4720, 1, 0
      %v4849 = vsel %vm4721, 1, 0
      %v4850 = vsel %vm4722, 1, 0
      %v4851 = vsel %vm4723, 1, 0
      %v4852 = vsel %vm4724, 1, 0
      %v4853 = vsel %vm4725, 1, 0
      %v4854 = vsel %vm4726, 1, 0
      %v4855 = vsel %vm4727, 1, 0
      %v4856 = vsel %vm4728, 1, 0
      %v4857 = vsel %vm4729, 1, 0
      %v4858 = vsel %vm4730, 1, 0
      %v4859 = vsel %vm4731, 1, 0
      %v4860 = vsel %vm4732, 1, 0
      %v4861 = vsel %vm4733, 1, 0
      %v4862 = vsel %vm4734, 1, 0
      %v4863 = vsel %vm4735, 1, 0
      %v4864 = vsel %vm4736, 1, 0
      %v4865 = vsel %vm4737, 1, 0
      %v4866 = vsel %vm4738, 1, 0
      %v4867 = vsel %vm4739, 1, 0
      %v4868 = vsel %vm4740, 1, 0
      %v4869 = vsel %vm4741, 1, 0
      %v4870 = vsel %vm4742, 1, 0
      %v4871 = vsel %vm4743, 1, 0
      %v4872 = vsel %vm4744, 1, 0
      %v4873 = vsel %vm4745, 1, 0
      %v4874 = vsel %vm4746, 1, 0
      %v4875 = vsel %vm4747, 1, 0
      %v4876 = vsel %vm4748, 1, 0
      %v4877 = vsel %vm4749, 1, 0
      %v4878 = vsel %vm4750, 1, 0
      %v4879 = vcvt.s32.f32 %v4751
      %v4880 = vcvt.s32.f32 %v4752
      %v4881 = vcvt.s32.f32 %v4753
      %v4882 = vcvt.s32.f32 %v4754
      %v4883 = vcvt.s32.f32 %v4755
      %v4884 = vcvt.s32.f32 %v4756
      %v4885 = vcvt.s32.f32 %v4757
      %v4886 = vcvt.s32.f32 %v4758
      %v4887 = vcvt.s32.f32 %v4759
      %v4888 = vcvt.s32.f32 %v4760
      %v4889 = vcvt.s32.f32 %v4761
      %v4890 = vcvt.s32.f32 %v4762
      %v4891 = vcvt.s32.f32 %v4763
      %v4892 = vcvt.s32.f32 %v4764
      %v4893 = vcvt.s32.f32 %v4765
      %v4894 = vcvt.s32.f32 %v4766
      %v4895 = vcvt.s32.f32 %v4767
      %v4896 = vcvt.s32.f32 %v4768
      %v4897 = vcvt.s32.f32 %v4769
      %v4898 = vcvt.s32.f32 %v4770
      %v4899 = vcvt.s32.f32 %v4771
      %v4900 = vcvt.s32.f32 %v4772
      %v4901 = vcvt.s32.f32 %v4773
      %v4902 = vcvt.s32.f32 %v4774
      %v4903 = vcvt.s32.f32 %v4775
      %v4904 = vcvt.s32.f32 %v4776
      %v4905 = vcvt.s32.f32 %v4777
      %v4906 = vcvt.s32.f32 %v4778
      %v4907 = vcvt.s32.f32 %v4779
      %v4908 = vcvt.s32.f32 %v4780
      %v4909 = vcvt.s32.f32 %v4781
      %v4910 = vcvt.s32.f32 %v4782
      %v4911 = vcvt.s32.f32 %v4783
      %v4912 = vcvt.s32.f32 %v4784
      %v4913 = vcvt.s32.f32 %v4785
      %v4914 = vcvt.s32.f32 %v4786
      %v4915 = vcvt.s32.f32 %v4787
      %v4916 = vcvt.s32.f32 %v4788
      %v4917 = vcvt.s32.f32 %v4789
      %v4918 = vcvt.s32.f32 %v4790
      %v4919 = vcvt.s32.f32 %v4791
      %v4920 = vcvt.s32.f32 %v4792
      %v4921 = vcvt.s32.f32 %v4793
      %v4922 = vcvt.s32.f32 %v4794
      %v4923 = vcvt.s32.f32 %v4795
      %v4924 = vcvt.s32.f32 %v4796
      %v4925 = vcvt.s32.f32 %v4797
      %v4926 = vcvt.s32.f32 %v4798
      %v4927 = vcvt.s32.f32 %v4799
      %v4928 = vcvt.s32.f32 %v4800
      %v4929 = vcvt.s32.f32 %v4801
      %v4930 = vcvt.s32.f32 %v4802
      %v4931 = vcvt.s32.f32 %v4803
      %v4932 = vcvt.s32.f32 %v4804
      %v4933 = vcvt.s32.f32 %v4805
      %v4934 = vcvt.s32.f32 %v4806
      %v4935 = vcvt.s32.f32 %v4807
      %v4936 = vcvt.s32.f32 %v4808
      %v4937 = vcvt.s32.f32 %v4809
      %v4938 = vcvt.s32.f32 %v4810
      %v4939 = vcvt.s32.f32 %v4811
      %v4940 = vcvt.s32.f32 %v4812
      %v4941 = vcvt.s32.f32 %v4813
      %v4942 = vcvt.s32.f32 %v4814
      %v4943 = vcvt.s32.f32 %v4815
      %v4944 = vcvt.s32.f32 %v4816
      %v4945 = vcvt.s32.f32 %v4817
      %v4946 = vcvt.s32.f32 %v4818
      %v4947 = vcvt.s32.f32 %v4819
      %v4948 = vcvt.s32.f32 %v4820
      %v4949 = vcvt.s32.f32 %v4821
      %v4950 = vcvt.s32.f32 %v4822
      %v4951 = vcvt.s32.f32 %v4823
      %v4952 = vcvt.s32.f32 %v4824
      %v4953 = vcvt.s32.f32 %v4825
      %v4954 = vcvt.s32.f32 %v4826
      %v4955 = vcvt.s32.f32 %v4827
      %v4956 = vcvt.s32.f32 %v4828
      %v4957 = vcvt.s32.f32 %v4829
      %v4958 = vcvt.s32.f32 %v4830
      %v4959 = vcvt.s32.f32 %v4831
      %v4960 = vcvt.s32.f32 %v4832
      %v4961 = vcvt.s32.f32 %v4833
      %v4962 = vcvt.s32.f32 %v4834
      %v4963 = vcvt.s32.f32 %v4835
      %v4964 = vcvt.s32.f32 %v4836
      %v4965 = vcvt.s32.f32 %v4837
      %v4966 = vcvt.s32.f32 %v4838
      %v4967 = vcvt.s32.f32 %v4839
      %v4968 = vcvt.s32.f32 %v4840
      %v4969 = vcvt.s32.f32 %v4841
      %v4970 = vcvt.s32.f32 %v4842
      %v4971 = vcvt.s32.f32 %v4843
      %v4972 = vcvt.s32.f32 %v4844
      %v4973 = vcvt.s32.f32 %v4845
      %v4974 = vcvt.s32.f32 %v4846
      %v4975 = vcvt.s32.f32 %v4847
      %v4976 = vcvt.s32.f32 %v4848
      %v4977 = vcvt.s32.f32 %v4849
      %v4978 = vcvt.s32.f32 %v4850
      %v4979 = vcvt.s32.f32 %v4851
      %v4980 = vcvt.s32.f32 %v4852
      %v4981 = vcvt.s32.f32 %v4853
      %v4982 = vcvt.s32.f32 %v4854
      %v4983 = vcvt.s32.f32 %v4855
      %v4984 = vcvt.s32.f32 %v4856
      %v4985 = vcvt.s32.f32 %v4857
      %v4986 = vcvt.s32.f32 %v4858
      %v4987 = vcvt.s32.f32 %v4859
      %v4988 = vcvt.s32.f32 %v4860
      %v4989 = vcvt.s32.f32 %v4861
      %v4990 = vcvt.s32.f32 %v4862
      %v4991 = vcvt.s32.f32 %v4863
      %v4992 = vcvt.s32.f32 %v4864
      %v4993 = vcvt.s32.f32 %v4865
      %v4994 = vcvt.s32.f32 %v4866
      %v4995 = vcvt.s32.f32 %v4867
      %v4996 = vcvt.s32.f32 %v4868
      %v4997 = vcvt.s32.f32 %v4869
      %v4998 = vcvt.s32.f32 %v4870
      %v4999 = vcvt.s32.f32 %v4871
      %v5000 = vcvt.s32.f32 %v4872
      %v5001 = vcvt.s32.f32 %v4873
      %v5002 = vcvt.s32.f32 %v4874
      %v5003 = vcvt.s32.f32 %v4875
      %v5004 = vcvt.s32.f32 %v4876
      %v5005 = vcvt.s32.f32 %v4877
      %v5006 = vcvt.s32.f32 %v4878
      %v5007 = vld [vmem:[#allocation3] sm:$0xff]
      %v5008 = vld [vmem:[#allocation3 + $0x8] sm:$0xff]
      %v5009 = vld [vmem:[#allocation3 + $0x10] sm:$0xff]
      %v5010 = vld [vmem:[#allocation3 + $0x18] sm:$0xff]
      %v5011 = vld [vmem:[#allocation3 + $0x20] sm:$0xff]
      %v5012 = vld [vmem:[#allocation3 + $0x28] sm:$0xff]
      %v5013 = vld [vmem:[#allocation3 + $0x30] sm:$0xff]
      %v5014 = vld [vmem:[#allocation3 + $0x38] sm:$0xff]
      %v5015 = vld [vmem:[#allocation3 + $0x40] sm:$0xff]
      %v5016 = vld [vmem:[#allocation3 + $0x48] sm:$0xff]
      %v5017 = vld [vmem:[#allocation3 + $0x50] sm:$0xff]
      %v5018 = vld [vmem:[#allocation3 + $0x58] sm:$0xff]
      %v5019 = vld [vmem:[#allocation3 + $0x60] sm:$0xff]
      %v5020 = vld [vmem:[#allocation3 + $0x68] sm:$0xff]
      %v5021 = vld [vmem:[#allocation3 + $0x70] sm:$0xff]
      %v5022 = vld [vmem:[#allocation3 + $0x78] sm:$0xff]
      %v5023 = vld [vmem:[#allocation3 + $0x80] sm:$0xff]
      %v5024 = vld [vmem:[#allocation3 + $0x88] sm:$0xff]
      %v5025 = vld [vmem:[#allocation3 + $0x90] sm:$0xff]
      %v5026 = vld [vmem:[#allocation3 + $0x98] sm:$0xff]
      %v5027 = vld [vmem:[#allocation3 + $0xa0] sm:$0xff]
      %v5028 = vld [vmem:[#allocation3 + $0xa8] sm:$0xff]
      %v5029 = vld [vmem:[#allocation3 + $0xb0] sm:$0xff]
      %v5030 = vld [vmem:[#allocation3 + $0xb8] sm:$0xff]
      %v5031 = vld [vmem:[#allocation3 + $0xc0] sm:$0xff]
      %v5032 = vld [vmem:[#allocation3 + $0xc8] sm:$0xff]
      %v5033 = vld [vmem:[#allocation3 + $0xd0] sm:$0xff]
      %v5034 = vld [vmem:[#allocation3 + $0xd8] sm:$0xff]
      %v5035 = vld [vmem:[#allocation3 + $0xe0] sm:$0xff]
      %v5036 = vld [vmem:[#allocation3 + $0xe8] sm:$0xff]
      %v5037 = vld [vmem:[#allocation3 + $0xf0] sm:$0xff]
      %v5038 = vld [vmem:[#allocation3 + $0xf8] sm:$0xff]
      %v5039 = vld [vmem:[#allocation3 + $0x100] sm:$0xff]
      %v5040 = vld [vmem:[#allocation3 + $0x108] sm:$0xff]
      %v5041 = vld [vmem:[#allocation3 + $0x110] sm:$0xff]
      %v5042 = vld [vmem:[#allocation3 + $0x118] sm:$0xff]
      %v5043 = vld [vmem:[#allocation3 + $0x120] sm:$0xff]
      %v5044 = vld [vmem:[#allocation3 + $0x128] sm:$0xff]
      %v5045 = vld [vmem:[#allocation3 + $0x130] sm:$0xff]
      %v5046 = vld [vmem:[#allocation3 + $0x138] sm:$0xff]
      %v5047 = vld [vmem:[#allocation3 + $0x140] sm:$0xff]
      %v5048 = vld [vmem:[#allocation3 + $0x148] sm:$0xff]
      %v5049 = vld [vmem:[#allocation3 + $0x150] sm:$0xff]
      %v5050 = vld [vmem:[#allocation3 + $0x158] sm:$0xff]
      %v5051 = vld [vmem:[#allocation3 + $0x160] sm:$0xff]
      %v5052 = vld [vmem:[#allocation3 + $0x168] sm:$0xff]
      %v5053 = vld [vmem:[#allocation3 + $0x170] sm:$0xff]
      %v5054 = vld [vmem:[#allocation3 + $0x178] sm:$0xff]
      %v5055 = vld [vmem:[#allocation3 + $0x180] sm:$0xff]
      %v5056 = vld [vmem:[#allocation3 + $0x188] sm:$0xff]
      %v5057 = vld [vmem:[#allocation3 + $0x190] sm:$0xff]
      %v5058 = vld [vmem:[#allocation3 + $0x198] sm:$0xff]
      %v5059 = vld [vmem:[#allocation3 + $0x1a0] sm:$0xff]
      %v5060 = vld [vmem:[#allocation3 + $0x1a8] sm:$0xff]
      %v5061 = vld [vmem:[#allocation3 + $0x1b0] sm:$0xff]
      %v5062 = vld [vmem:[#allocation3 + $0x1b8] sm:$0xff]
      %v5063 = vld [vmem:[#allocation3 + $0x1c0] sm:$0xff]
      %v5064 = vld [vmem:[#allocation3 + $0x1c8] sm:$0xff]
      %v5065 = vld [vmem:[#allocation3 + $0x1d0] sm:$0xff]
      %v5066 = vld [vmem:[#allocation3 + $0x1d8] sm:$0xff]
      %v5067 = vld [vmem:[#allocation3 + $0x1e0] sm:$0xff]
      %v5068 = vld [vmem:[#allocation3 + $0x1e8] sm:$0xff]
      %v5069 = vld [vmem:[#allocation3 + $0x1f0] sm:$0xff]
      %v5070 = vld [vmem:[#allocation3 + $0x1f8] sm:$0xff]
      %v5071 = vld [vmem:[#allocation3 + $0x200] sm:$0xff]
      %v5072 = vld [vmem:[#allocation3 + $0x208] sm:$0xff]
      %v5073 = vld [vmem:[#allocation3 + $0x210] sm:$0xff]
      %v5074 = vld [vmem:[#allocation3 + $0x218] sm:$0xff]
      %v5075 = vld [vmem:[#allocation3 + $0x220] sm:$0xff]
      %v5076 = vld [vmem:[#allocation3 + $0x228] sm:$0xff]
      %v5077 = vld [vmem:[#allocation3 + $0x230] sm:$0xff]
      %v5078 = vld [vmem:[#allocation3 + $0x238] sm:$0xff]
      %v5079 = vld [vmem:[#allocation3 + $0x240] sm:$0xff]
      %v5080 = vld [vmem:[#allocation3 + $0x248] sm:$0xff]
      %v5081 = vld [vmem:[#allocation3 + $0x250] sm:$0xff]
      %v5082 = vld [vmem:[#allocation3 + $0x258] sm:$0xff]
      %v5083 = vld [vmem:[#allocation3 + $0x260] sm:$0xff]
      %v5084 = vld [vmem:[#allocation3 + $0x268] sm:$0xff]
      %v5085 = vld [vmem:[#allocation3 + $0x270] sm:$0xff]
      %v5086 = vld [vmem:[#allocation3 + $0x278] sm:$0xff]
      %v5087 = vld [vmem:[#allocation3 + $0x280] sm:$0xff]
      %v5088 = vld [vmem:[#allocation3 + $0x288] sm:$0xff]
      %v5089 = vld [vmem:[#allocation3 + $0x290] sm:$0xff]
      %v5090 = vld [vmem:[#allocation3 + $0x298] sm:$0xff]
      %v5091 = vld [vmem:[#allocation3 + $0x2a0] sm:$0xff]
      %v5092 = vld [vmem:[#allocation3 + $0x2a8] sm:$0xff]
      %v5093 = vld [vmem:[#allocation3 + $0x2b0] sm:$0xff]
      %v5094 = vld [vmem:[#allocation3 + $0x2b8] sm:$0xff]
      %v5095 = vld [vmem:[#allocation3 + $0x2c0] sm:$0xff]
      %v5096 = vld [vmem:[#allocation3 + $0x2c8] sm:$0xff]
      %v5097 = vld [vmem:[#allocation3 + $0x2d0] sm:$0xff]
      %v5098 = vld [vmem:[#allocation3 + $0x2d8] sm:$0xff]
      %v5099 = vld [vmem:[#allocation3 + $0x2e0] sm:$0xff]
      %v5100 = vld [vmem:[#allocation3 + $0x2e8] sm:$0xff]
      %v5101 = vld [vmem:[#allocation3 + $0x2f0] sm:$0xff]
      %v5102 = vld [vmem:[#allocation3 + $0x2f8] sm:$0xff]
      %v5103 = vld [vmem:[#allocation3 + $0x300] sm:$0xff]
      %v5104 = vld [vmem:[#allocation3 + $0x308] sm:$0xff]
      %v5105 = vld [vmem:[#allocation3 + $0x310] sm:$0xff]
      %v5106 = vld [vmem:[#allocation3 + $0x318] sm:$0xff]
      %v5107 = vld [vmem:[#allocation3 + $0x320] sm:$0xff]
      %v5108 = vld [vmem:[#allocation3 + $0x328] sm:$0xff]
      %v5109 = vld [vmem:[#allocation3 + $0x330] sm:$0xff]
      %v5110 = vld [vmem:[#allocation3 + $0x338] sm:$0xff]
      %v5111 = vld [vmem:[#allocation3 + $0x340] sm:$0xff]
      %v5112 = vld [vmem:[#allocation3 + $0x348] sm:$0xff]
      %v5113 = vld [vmem:[#allocation3 + $0x350] sm:$0xff]
      %v5114 = vld [vmem:[#allocation3 + $0x358] sm:$0xff]
      %v5115 = vld [vmem:[#allocation3 + $0x360] sm:$0xff]
      %v5116 = vld [vmem:[#allocation3 + $0x368] sm:$0xff]
      %v5117 = vld [vmem:[#allocation3 + $0x370] sm:$0xff]
      %v5118 = vld [vmem:[#allocation3 + $0x378] sm:$0xff]
      %v5119 = vld [vmem:[#allocation3 + $0x380] sm:$0xff]
      %v5120 = vld [vmem:[#allocation3 + $0x388] sm:$0xff]
      %v5121 = vld [vmem:[#allocation3 + $0x390] sm:$0xff]
      %v5122 = vld [vmem:[#allocation3 + $0x398] sm:$0xff]
      %v5123 = vld [vmem:[#allocation3 + $0x3a0] sm:$0xff]
      %v5124 = vld [vmem:[#allocation3 + $0x3a8] sm:$0xff]
      %v5125 = vld [vmem:[#allocation3 + $0x3b0] sm:$0xff]
      %v5126 = vld [vmem:[#allocation3 + $0x3b8] sm:$0xff]
      %v5127 = vld [vmem:[#allocation3 + $0x3c0] sm:$0xff]
      %v5128 = vld [vmem:[#allocation3 + $0x3c8] sm:$0xff]
      %v5129 = vld [vmem:[#allocation3 + $0x3d0] sm:$0xff]
      %v5130 = vld [vmem:[#allocation3 + $0x3d8] sm:$0xff]
      %v5131 = vld [vmem:[#allocation3 + $0x3e0] sm:$0xff]
      %v5132 = vld [vmem:[#allocation3 + $0x3e8] sm:$0xff]
      %v5133 = vld [vmem:[#allocation3 + $0x3f0] sm:$0xff]
      %v5134 = vld [vmem:[#allocation3 + $0x3f8] sm:$0xff]
      %v5135 = vmul.f32 %v4879, %v5007
      %v5136 = vmul.f32 %v4880, %v5008
      %v5137 = vmul.f32 %v4881, %v5009
      %v5138 = vmul.f32 %v4882, %v5010
      %v5139 = vmul.f32 %v4883, %v5011
      %v5140 = vmul.f32 %v4884, %v5012
      %v5141 = vmul.f32 %v4885, %v5013
      %v5142 = vmul.f32 %v4886, %v5014
      %v5143 = vmul.f32 %v4887, %v5015
      %v5144 = vmul.f32 %v4888, %v5016
      %v5145 = vmul.f32 %v4889, %v5017
      %v5146 = vmul.f32 %v4890, %v5018
      %v5147 = vmul.f32 %v4891, %v5019
      %v5148 = vmul.f32 %v4892, %v5020
      %v5149 = vmul.f32 %v4893, %v5021
      %v5150 = vmul.f32 %v4894, %v5022
      %v5151 = vmul.f32 %v4895, %v5023
      %v5152 = vmul.f32 %v4896, %v5024
      %v5153 = vmul.f32 %v4897, %v5025
      %v5154 = vmul.f32 %v4898, %v5026
      %v5155 = vmul.f32 %v4899, %v5027
      %v5156 = vmul.f32 %v4900, %v5028
      %v5157 = vmul.f32 %v4901, %v5029
      %v5158 = vmul.f32 %v4902, %v5030
      %v5159 = vmul.f32 %v4903, %v5031
      %v5160 = vmul.f32 %v4904, %v5032
      %v5161 = vmul.f32 %v4905, %v5033
      %v5162 = vmul.f32 %v4906, %v5034
      %v5163 = vmul.f32 %v4907, %v5035
      %v5164 = vmul.f32 %v4908, %v5036
      %v5165 = vmul.f32 %v4909, %v5037
      %v5166 = vmul.f32 %v4910, %v5038
      %v5167 = vmul.f32 %v4911, %v5039
      %v5168 = vmul.f32 %v4912, %v5040
      %v5169 = vmul.f32 %v4913, %v5041
      %v5170 = vmul.f32 %v4914, %v5042
      %v5171 = vmul.f32 %v4915, %v5043
      %v5172 = vmul.f32 %v4916, %v5044
      %v5173 = vmul.f32 %v4917, %v5045
      %v5174 = vmul.f32 %v4918, %v5046
      %v5175 = vmul.f32 %v4919, %v5047
      %v5176 = vmul.f32 %v4920, %v5048
      %v5177 = vmul.f32 %v4921, %v5049
      %v5178 = vmul.f32 %v4922, %v5050
      %v5179 = vmul.f32 %v4923, %v5051
      %v5180 = vmul.f32 %v4924, %v5052
      %v5181 = vmul.f32 %v4925, %v5053
      %v5182 = vmul.f32 %v4926, %v5054
      %v5183 = vmul.f32 %v4927, %v5055
      %v5184 = vmul.f32 %v4928, %v5056
      %v5185 = vmul.f32 %v4929, %v5057
      %v5186 = vmul.f32 %v4930, %v5058
      %v5187 = vmul.f32 %v4931, %v5059
      %v5188 = vmul.f32 %v4932, %v5060
      %v5189 = vmul.f32 %v4933, %v5061
      %v5190 = vmul.f32 %v4934, %v5062
      %v5191 = vmul.f32 %v4935, %v5063
      %v5192 = vmul.f32 %v4936, %v5064
      %v5193 = vmul.f32 %v4937, %v5065
      %v5194 = vmul.f32 %v4938, %v5066
      %v5195 = vmul.f32 %v4939, %v5067
      %v5196 = vmul.f32 %v4940, %v5068
      %v5197 = vmul.f32 %v4941, %v5069
      %v5198 = vmul.f32 %v4942, %v5070
      %v5199 = vmul.f32 %v4943, %v5071
      %v5200 = vmul.f32 %v4944, %v5072
      %v5201 = vmul.f32 %v4945, %v5073
      %v5202 = vmul.f32 %v4946, %v5074
      %v5203 = vmul.f32 %v4947, %v5075
      %v5204 = vmul.f32 %v4948, %v5076
      %v5205 = vmul.f32 %v4949, %v5077
      %v5206 = vmul.f32 %v4950, %v5078
      %v5207 = vmul.f32 %v4951, %v5079
      %v5208 = vmul.f32 %v4952, %v5080
      %v5209 = vmul.f32 %v4953, %v5081
      %v5210 = vmul.f32 %v4954, %v5082
      %v5211 = vmul.f32 %v4955, %v5083
      %v5212 = vmul.f32 %v4956, %v5084
      %v5213 = vmul.f32 %v4957, %v5085
      %v5214 = vmul.f32 %v4958, %v5086
      %v5215 = vmul.f32 %v4959, %v5087
      %v5216 = vmul.f32 %v4960, %v5088
      %v5217 = vmul.f32 %v4961, %v5089
      %v5218 = vmul.f32 %v4962, %v5090
      %v5219 = vmul.f32 %v4963, %v5091
      %v5220 = vmul.f32 %v4964, %v5092
      %v5221 = vmul.f32 %v4965, %v5093
      %v5222 = vmul.f32 %v4966, %v5094
      %v5223 = vmul.f32 %v4967, %v5095
      %v5224 = vmul.f32 %v4968, %v5096
      %v5225 = vmul.f32 %v4969, %v5097
      %v5226 = vmul.f32 %v4970, %v5098
      %v5227 = vmul.f32 %v4971, %v5099
      %v5228 = vmul.f32 %v4972, %v5100
      %v5229 = vmul.f32 %v4973, %v5101
      %v5230 = vmul.f32 %v4974, %v5102
      %v5231 = vmul.f32 %v4975, %v5103
      %v5232 = vmul.f32 %v4976, %v5104
      %v5233 = vmul.f32 %v4977, %v5105
      %v5234 = vmul.f32 %v4978, %v5106
      %v5235 = vmul.f32 %v4979, %v5107
      %v5236 = vmul.f32 %v4980, %v5108
      %v5237 = vmul.f32 %v4981, %v5109
      %v5238 = vmul.f32 %v4982, %v5110
      %v5239 = vmul.f32 %v4983, %v5111
      %v5240 = vmul.f32 %v4984, %v5112
      %v5241 = vmul.f32 %v4985, %v5113
      %v5242 = vmul.f32 %v4986, %v5114
      %v5243 = vmul.f32 %v4987, %v5115
      %v5244 = vmul.f32 %v4988, %v5116
      %v5245 = vmul.f32 %v4989, %v5117
      %v5246 = vmul.f32 %v4990, %v5118
      %v5247 = vmul.f32 %v4991, %v5119
      %v5248 = vmul.f32 %v4992, %v5120
      %v5249 = vmul.f32 %v4993, %v5121
      %v5250 = vmul.f32 %v4994, %v5122
      %v5251 = vmul.f32 %v4995, %v5123
      %v5252 = vmul.f32 %v4996, %v5124
      %v5253 = vmul.f32 %v4997, %v5125
      %v5254 = vmul.f32 %v4998, %v5126
      %v5255 = vmul.f32 %v4999, %v5127
      %v5256 = vmul.f32 %v5000, %v5128
      %v5257 = vmul.f32 %v5001, %v5129
      %v5258 = vmul.f32 %v5002, %v5130
      %v5259 = vmul.f32 %v5003, %v5131
      %v5260 = vmul.f32 %v5004, %v5132
      %v5261 = vmul.f32 %v5005, %v5133
      %v5262 = vmul.f32 %v5006, %v5134
      %v5263 = vadd.f32 %v5135, %v5136
      %v5264 = vadd.f32 %v5263, %v5137
      %v5265 = vadd.f32 %v5264, %v5138
      %5266 = vadd.xlane.f32.xlu0 %v5265
      %v5267 = vpop.xlane.xlu0 %5266
      %v5268 = vadd.f32 %v5139, %v5140
      %v5269 = vadd.f32 %v5268, %v5141
      %v5270 = vadd.f32 %v5269, %v5142
      %5271 = vadd.xlane.f32.xlu0 %v5270
      %v5272 = vpop.xlane.xlu0 %5271
      %v5273 = vadd.f32 %v5143, %v5144
      %v5274 = vadd.f32 %v5273, %v5145
      %v5275 = vadd.f32 %v5274, %v5146
      %5276 = vadd.xlane.f32.xlu0 %v5275
      %v5277 = vpop.xlane.xlu0 %5276
      %v5278 = vadd.f32 %v5147, %v5148
      %v5279 = vadd.f32 %v5278, %v5149
      %v5280 = vadd.f32 %v5279, %v5150
      %5281 = vadd.xlane.f32.xlu0 %v5280
      %v5282 = vpop.xlane.xlu0 %5281
      %v5283 = vadd.f32 %v5151, %v5152
      %v5284 = vadd.f32 %v5283, %v5153
      %v5285 = vadd.f32 %v5284, %v5154
      %5286 = vadd.xlane.f32.xlu0 %v5285
      %v5287 = vpop.xlane.xlu0 %5286
      %v5288 = vadd.f32 %v5155, %v5156
      %v5289 = vadd.f32 %v5288, %v5157
      %v5290 = vadd.f32 %v5289, %v5158
      %5291 = vadd.xlane.f32.xlu0 %v5290
      %v5292 = vpop.xlane.xlu0 %5291
      %v5293 = vadd.f32 %v5159, %v5160
      %v5294 = vadd.f32 %v5293, %v5161
      %v5295 = vadd.f32 %v5294, %v5162
      %5296 = vadd.xlane.f32.xlu0 %v5295
      %v5297 = vpop.xlane.xlu0 %5296
      %v5298 = vadd.f32 %v5163, %v5164
      %v5299 = vadd.f32 %v5298, %v5165
      %v5300 = vadd.f32 %v5299, %v5166
      %5301 = vadd.xlane.f32.xlu0 %v5300
      %v5302 = vpop.xlane.xlu0 %5301
      %v5303 = vadd.f32 %v5167, %v5168
      %v5304 = vadd.f32 %v5303, %v5169
      %v5305 = vadd.f32 %v5304, %v5170
      %5306 = vadd.xlane.f32.xlu0 %v5305
      %v5307 = vpop.xlane.xlu0 %5306
      %v5308 = vadd.f32 %v5171, %v5172
      %v5309 = vadd.f32 %v5308, %v5173
      %v5310 = vadd.f32 %v5309, %v5174
      %5311 = vadd.xlane.f32.xlu0 %v5310
      %v5312 = vpop.xlane.xlu0 %5311
      %v5313 = vadd.f32 %v5175, %v5176
      %v5314 = vadd.f32 %v5313, %v5177
      %v5315 = vadd.f32 %v5314, %v5178
      %5316 = vadd.xlane.f32.xlu0 %v5315
      %v5317 = vpop.xlane.xlu0 %5316
      %v5318 = vadd.f32 %v5179, %v5180
      %v5319 = vadd.f32 %v5318, %v5181
      %v5320 = vadd.f32 %v5319, %v5182
      %5321 = vadd.xlane.f32.xlu0 %v5320
      %v5322 = vpop.xlane.xlu0 %5321
      %v5323 = vadd.f32 %v5183, %v5184
      %v5324 = vadd.f32 %v5323, %v5185
      %v5325 = vadd.f32 %v5324, %v5186
      %5326 = vadd.xlane.f32.xlu0 %v5325
      %v5327 = vpop.xlane.xlu0 %5326
      %v5328 = vadd.f32 %v5187, %v5188
      %v5329 = vadd.f32 %v5328, %v5189
      %v5330 = vadd.f32 %v5329, %v5190
      %5331 = vadd.xlane.f32.xlu0 %v5330
      %v5332 = vpop.xlane.xlu0 %5331
      %v5333 = vadd.f32 %v5191, %v5192
      %v5334 = vadd.f32 %v5333, %v5193
      %v5335 = vadd.f32 %v5334, %v5194
      %5336 = vadd.xlane.f32.xlu0 %v5335
      %v5337 = vpop.xlane.xlu0 %5336
      %v5338 = vadd.f32 %v5195, %v5196
      %v5339 = vadd.f32 %v5338, %v5197
      %v5340 = vadd.f32 %v5339, %v5198
      %5341 = vadd.xlane.f32.xlu0 %v5340
      %v5342 = vpop.xlane.xlu0 %5341
      %v5343 = vadd.f32 %v5199, %v5200
      %v5344 = vadd.f32 %v5343, %v5201
      %v5345 = vadd.f32 %v5344, %v5202
      %5346 = vadd.xlane.f32.xlu0 %v5345
      %v5347 = vpop.xlane.xlu0 %5346
      %v5348 = vadd.f32 %v5203, %v5204
      %v5349 = vadd.f32 %v5348, %v5205
      %v5350 = vadd.f32 %v5349, %v5206
      %5351 = vadd.xlane.f32.xlu0 %v5350
      %v5352 = vpop.xlane.xlu0 %5351
      %v5353 = vadd.f32 %v5207, %v5208
      %v5354 = vadd.f32 %v5353, %v5209
      %v5355 = vadd.f32 %v5354, %v5210
      %5356 = vadd.xlane.f32.xlu0 %v5355
      %v5357 = vpop.xlane.xlu0 %5356
      %v5358 = vadd.f32 %v5211, %v5212
      %v5359 = vadd.f32 %v5358, %v5213
      %v5360 = vadd.f32 %v5359, %v5214
      %5361 = vadd.xlane.f32.xlu0 %v5360
      %v5362 = vpop.xlane.xlu0 %5361
      %v5363 = vadd.f32 %v5215, %v5216
      %v5364 = vadd.f32 %v5363, %v5217
      %v5365 = vadd.f32 %v5364, %v5218
      %5366 = vadd.xlane.f32.xlu0 %v5365
      %v5367 = vpop.xlane.xlu0 %5366
      %v5368 = vadd.f32 %v5219, %v5220
      %v5369 = vadd.f32 %v5368, %v5221
      %v5370 = vadd.f32 %v5369, %v5222
      %5371 = vadd.xlane.f32.xlu0 %v5370
      %v5372 = vpop.xlane.xlu0 %5371
      %v5373 = vadd.f32 %v5223, %v5224
      %v5374 = vadd.f32 %v5373, %v5225
      %v5375 = vadd.f32 %v5374, %v5226
      %5376 = vadd.xlane.f32.xlu0 %v5375
      %v5377 = vpop.xlane.xlu0 %5376
      %v5378 = vadd.f32 %v5227, %v5228
      %v5379 = vadd.f32 %v5378, %v5229
      %v5380 = vadd.f32 %v5379, %v5230
      %5381 = vadd.xlane.f32.xlu0 %v5380
      %v5382 = vpop.xlane.xlu0 %5381
      %v5383 = vadd.f32 %v5231, %v5232
      %v5384 = vadd.f32 %v5383, %v5233
      %v5385 = vadd.f32 %v5384, %v5234
      %5386 = vadd.xlane.f32.xlu0 %v5385
      %v5387 = vpop.xlane.xlu0 %5386
      %v5388 = vadd.f32 %v5235, %v5236
      %v5389 = vadd.f32 %v5388, %v5237
      %v5390 = vadd.f32 %v5389, %v5238
      %5391 = vadd.xlane.f32.xlu0 %v5390
      %v5392 = vpop.xlane.xlu0 %5391
      %v5393 = vadd.f32 %v5239, %v5240
      %v5394 = vadd.f32 %v5393, %v5241
      %v5395 = vadd.f32 %v5394, %v5242
      %5396 = vadd.xlane.f32.xlu0 %v5395
      %v5397 = vpop.xlane.xlu0 %5396
      %v5398 = vadd.f32 %v5243, %v5244
      %v5399 = vadd.f32 %v5398, %v5245
      %v5400 = vadd.f32 %v5399, %v5246
      %5401 = vadd.xlane.f32.xlu0 %v5400
      %v5402 = vpop.xlane.xlu0 %5401
      %v5403 = vadd.f32 %v5247, %v5248
      %v5404 = vadd.f32 %v5403, %v5249
      %v5405 = vadd.f32 %v5404, %v5250
      %5406 = vadd.xlane.f32.xlu0 %v5405
      %v5407 = vpop.xlane.xlu0 %5406
      %v5408 = vadd.f32 %v5251, %v5252
      %v5409 = vadd.f32 %v5408, %v5253
      %v5410 = vadd.f32 %v5409, %v5254
      %5411 = vadd.xlane.f32.xlu0 %v5410
      %v5412 = vpop.xlane.xlu0 %5411
      %v5413 = vadd.f32 %v5255, %v5256
      %v5414 = vadd.f32 %v5413, %v5257
      %v5415 = vadd.f32 %v5414, %v5258
      %5416 = vadd.xlane.f32.xlu0 %v5415
      %v5417 = vpop.xlane.xlu0 %5416
      %v5418 = vadd.f32 %v5259, %v5260
      %v5419 = vadd.f32 %v5418, %v5261
      %v5420 = vadd.f32 %v5419, %v5262
      %5421 = vadd.xlane.f32.xlu0 %v5420
      %v5422 = vpop.xlane.xlu0 %5421
      %v5423 = vsub.f32 0.0, %v5267
      %v5424 = vsub.f32 0.0, %v5272
      %v5425 = vsub.f32 0.0, %v5277
      %v5426 = vsub.f32 0.0, %v5282
      %v5427 = vsub.f32 0.0, %v5287
      %v5428 = vsub.f32 0.0, %v5292
      %v5429 = vsub.f32 0.0, %v5297
      %v5430 = vsub.f32 0.0, %v5302
      %v5431 = vsub.f32 0.0, %v5307
      %v5432 = vsub.f32 0.0, %v5312
      %v5433 = vsub.f32 0.0, %v5317
      %v5434 = vsub.f32 0.0, %v5322
      %v5435 = vsub.f32 0.0, %v5327
      %v5436 = vsub.f32 0.0, %v5332
      %v5437 = vsub.f32 0.0, %v5337
      %v5438 = vsub.f32 0.0, %v5342
      %v5439 = vsub.f32 0.0, %v5347
      %v5440 = vsub.f32 0.0, %v5352
      %v5441 = vsub.f32 0.0, %v5357
      %v5442 = vsub.f32 0.0, %v5362
      %v5443 = vsub.f32 0.0, %v5367
      %v5444 = vsub.f32 0.0, %v5372
      %v5445 = vsub.f32 0.0, %v5377
      %v5446 = vsub.f32 0.0, %v5382
      %v5447 = vsub.f32 0.0, %v5387
      %v5448 = vsub.f32 0.0, %v5392
      %v5449 = vsub.f32 0.0, %v5397
      %v5450 = vsub.f32 0.0, %v5402
      %v5451 = vsub.f32 0.0, %v5407
      %v5452 = vsub.f32 0.0, %v5412
      %v5453 = vsub.f32 0.0, %v5417
      %v5454 = vsub.f32 0.0, %v5422
      %v5455 = vld [vmem:[#allocation4] sm:$0xff]
      %v5456 = vld [vmem:[#allocation4 + $0x8] sm:$0xff]
      %v5457 = vld [vmem:[#allocation4 + $0x10] sm:$0xff]
      %v5458 = vld [vmem:[#allocation4 + $0x18] sm:$0xff]
      %v5459 = vld [vmem:[#allocation4 + $0x20] sm:$0xff]
      %v5460 = vld [vmem:[#allocation4 + $0x28] sm:$0xff]
      %v5461 = vld [vmem:[#allocation4 + $0x30] sm:$0xff]
      %v5462 = vld [vmem:[#allocation4 + $0x38] sm:$0xff]
      %v5463 = vld [vmem:[#allocation4 + $0x40] sm:$0xff]
      %v5464 = vld [vmem:[#allocation4 + $0x48] sm:$0xff]
      %v5465 = vld [vmem:[#allocation4 + $0x50] sm:$0xff]
      %v5466 = vld [vmem:[#allocation4 + $0x58] sm:$0xff]
      %v5467 = vld [vmem:[#allocation4 + $0x60] sm:$0xff]
      %v5468 = vld [vmem:[#allocation4 + $0x68] sm:$0xff]
      %v5469 = vld [vmem:[#allocation4 + $0x70] sm:$0xff]
      %v5470 = vld [vmem:[#allocation4 + $0x78] sm:$0xff]
      %v5471 = vld [vmem:[#allocation4 + $0x80] sm:$0xff]
      %v5472 = vld [vmem:[#allocation4 + $0x88] sm:$0xff]
      %v5473 = vld [vmem:[#allocation4 + $0x90] sm:$0xff]
      %v5474 = vld [vmem:[#allocation4 + $0x98] sm:$0xff]
      %v5475 = vld [vmem:[#allocation4 + $0xa0] sm:$0xff]
      %v5476 = vld [vmem:[#allocation4 + $0xa8] sm:$0xff]
      %v5477 = vld [vmem:[#allocation4 + $0xb0] sm:$0xff]
      %v5478 = vld [vmem:[#allocation4 + $0xb8] sm:$0xff]
      %v5479 = vld [vmem:[#allocation4 + $0xc0] sm:$0xff]
      %v5480 = vld [vmem:[#allocation4 + $0xc8] sm:$0xff]
      %v5481 = vld [vmem:[#allocation4 + $0xd0] sm:$0xff]
      %v5482 = vld [vmem:[#allocation4 + $0xd8] sm:$0xff]
      %v5483 = vld [vmem:[#allocation4 + $0xe0] sm:$0xff]
      %v5484 = vld [vmem:[#allocation4 + $0xe8] sm:$0xff]
      %v5485 = vld [vmem:[#allocation4 + $0xf0] sm:$0xff]
      %v5486 = vld [vmem:[#allocation4 + $0xf8] sm:$0xff]
      %v5487 = vld [vmem:[#allocation4 + $0x100] sm:$0xff]
      %v5488 = vld [vmem:[#allocation4 + $0x108] sm:$0xff]
      %v5489 = vld [vmem:[#allocation4 + $0x110] sm:$0xff]
      %v5490 = vld [vmem:[#allocation4 + $0x118] sm:$0xff]
      %v5491 = vld [vmem:[#allocation4 + $0x120] sm:$0xff]
      %v5492 = vld [vmem:[#allocation4 + $0x128] sm:$0xff]
      %v5493 = vld [vmem:[#allocation4 + $0x130] sm:$0xff]
      %v5494 = vld [vmem:[#allocation4 + $0x138] sm:$0xff]
      %v5495 = vld [vmem:[#allocation4 + $0x140] sm:$0xff]
      %v5496 = vld [vmem:[#allocation4 + $0x148] sm:$0xff]
      %v5497 = vld [vmem:[#allocation4 + $0x150] sm:$0xff]
      %v5498 = vld [vmem:[#allocation4 + $0x158] sm:$0xff]
      %v5499 = vld [vmem:[#allocation4 + $0x160] sm:$0xff]
      %v5500 = vld [vmem:[#allocation4 + $0x168] sm:$0xff]
      %v5501 = vld [vmem:[#allocation4 + $0x170] sm:$0xff]
      %v5502 = vld [vmem:[#allocation4 + $0x178] sm:$0xff]
      %v5503 = vld [vmem:[#allocation4 + $0x180] sm:$0xff]
      %v5504 = vld [vmem:[#allocation4 + $0x188] sm:$0xff]
      %v5505 = vld [vmem:[#allocation4 + $0x190] sm:$0xff]
      %v5506 = vld [vmem:[#allocation4 + $0x198] sm:$0xff]
      %v5507 = vld [vmem:[#allocation4 + $0x1a0] sm:$0xff]
      %v5508 = vld [vmem:[#allocation4 + $0x1a8] sm:$0xff]
      %v5509 = vld [vmem:[#allocation4 + $0x1b0] sm:$0xff]
      %v5510 = vld [vmem:[#allocation4 + $0x1b8] sm:$0xff]
      %v5511 = vld [vmem:[#allocation4 + $0x1c0] sm:$0xff]
      %v5512 = vld [vmem:[#allocation4 + $0x1c8] sm:$0xff]
      %v5513 = vld [vmem:[#allocation4 + $0x1d0] sm:$0xff]
      %v5514 = vld [vmem:[#allocation4 + $0x1d8] sm:$0xff]
      %v5515 = vld [vmem:[#allocation4 + $0x1e0] sm:$0xff]
      %v5516 = vld [vmem:[#allocation4 + $0x1e8] sm:$0xff]
      %v5517 = vld [vmem:[#allocation4 + $0x1f0] sm:$0xff]
      %v5518 = vld [vmem:[#allocation4 + $0x1f8] sm:$0xff]
      %v5519 = vld [vmem:[#allocation4 + $0x200] sm:$0xff]
      %v5520 = vld [vmem:[#allocation4 + $0x208] sm:$0xff]
      %v5521 = vld [vmem:[#allocation4 + $0x210] sm:$0xff]
      %v5522 = vld [vmem:[#allocation4 + $0x218] sm:$0xff]
      %v5523 = vld [vmem:[#allocation4 + $0x220] sm:$0xff]
      %v5524 = vld [vmem:[#allocation4 + $0x228] sm:$0xff]
      %v5525 = vld [vmem:[#allocation4 + $0x230] sm:$0xff]
      %v5526 = vld [vmem:[#allocation4 + $0x238] sm:$0xff]
      %v5527 = vld [vmem:[#allocation4 + $0x240] sm:$0xff]
      %v5528 = vld [vmem:[#allocation4 + $0x248] sm:$0xff]
      %v5529 = vld [vmem:[#allocation4 + $0x250] sm:$0xff]
      %v5530 = vld [vmem:[#allocation4 + $0x258] sm:$0xff]
      %v5531 = vld [vmem:[#allocation4 + $0x260] sm:$0xff]
      %v5532 = vld [vmem:[#allocation4 + $0x268] sm:$0xff]
      %v5533 = vld [vmem:[#allocation4 + $0x270] sm:$0xff]
      %v5534 = vld [vmem:[#allocation4 + $0x278] sm:$0xff]
      %v5535 = vld [vmem:[#allocation4 + $0x280] sm:$0xff]
      %v5536 = vld [vmem:[#allocation4 + $0x288] sm:$0xff]
      %v5537 = vld [vmem:[#allocation4 + $0x290] sm:$0xff]
      %v5538 = vld [vmem:[#allocation4 + $0x298] sm:$0xff]
      %v5539 = vld [vmem:[#allocation4 + $0x2a0] sm:$0xff]
      %v5540 = vld [vmem:[#allocation4 + $0x2a8] sm:$0xff]
      %v5541 = vld [vmem:[#allocation4 + $0x2b0] sm:$0xff]
      %v5542 = vld [vmem:[#allocation4 + $0x2b8] sm:$0xff]
      %v5543 = vld [vmem:[#allocation4 + $0x2c0] sm:$0xff]
      %v5544 = vld [vmem:[#allocation4 + $0x2c8] sm:$0xff]
      %v5545 = vld [vmem:[#allocation4 + $0x2d0] sm:$0xff]
      %v5546 = vld [vmem:[#allocation4 + $0x2d8] sm:$0xff]
      %v5547 = vld [vmem:[#allocation4 + $0x2e0] sm:$0xff]
      %v5548 = vld [vmem:[#allocation4 + $0x2e8] sm:$0xff]
      %v5549 = vld [vmem:[#allocation4 + $0x2f0] sm:$0xff]
      %v5550 = vld [vmem:[#allocation4 + $0x2f8] sm:$0xff]
      %v5551 = vld [vmem:[#allocation4 + $0x300] sm:$0xff]
      %v5552 = vld [vmem:[#allocation4 + $0x308] sm:$0xff]
      %v5553 = vld [vmem:[#allocation4 + $0x310] sm:$0xff]
      %v5554 = vld [vmem:[#allocation4 + $0x318] sm:$0xff]
      %v5555 = vld [vmem:[#allocation4 + $0x320] sm:$0xff]
      %v5556 = vld [vmem:[#allocation4 + $0x328] sm:$0xff]
      %v5557 = vld [vmem:[#allocation4 + $0x330] sm:$0xff]
      %v5558 = vld [vmem:[#allocation4 + $0x338] sm:$0xff]
      %v5559 = vld [vmem:[#allocation4 + $0x340] sm:$0xff]
      %v5560 = vld [vmem:[#allocation4 + $0x348] sm:$0xff]
      %v5561 = vld [vmem:[#allocation4 + $0x350] sm:$0xff]
      %v5562 = vld [vmem:[#allocation4 + $0x358] sm:$0xff]
      %v5563 = vld [vmem:[#allocation4 + $0x360] sm:$0xff]
      %v5564 = vld [vmem:[#allocation4 + $0x368] sm:$0xff]
      %v5565 = vld [vmem:[#allocation4 + $0x370] sm:$0xff]
      %v5566 = vld [vmem:[#allocation4 + $0x378] sm:$0xff]
      %v5567 = vld [vmem:[#allocation4 + $0x380] sm:$0xff]
      %v5568 = vld [vmem:[#allocation4 + $0x388] sm:$0xff]
      %v5569 = vld [vmem:[#allocation4 + $0x390] sm:$0xff]
      %v5570 = vld [vmem:[#allocation4 + $0x398] sm:$0xff]
      %v5571 = vld [vmem:[#allocation4 + $0x3a0] sm:$0xff]
      %v5572 = vld [vmem:[#allocation4 + $0x3a8] sm:$0xff]
      %v5573 = vld [vmem:[#allocation4 + $0x3b0] sm:$0xff]
      %v5574 = vld [vmem:[#allocation4 + $0x3b8] sm:$0xff]
      %v5575 = vld [vmem:[#allocation4 + $0x3c0] sm:$0xff]
      %v5576 = vld [vmem:[#allocation4 + $0x3c8] sm:$0xff]
      %v5577 = vld [vmem:[#allocation4 + $0x3d0] sm:$0xff]
      %v5578 = vld [vmem:[#allocation4 + $0x3d8] sm:$0xff]
      %v5579 = vld [vmem:[#allocation4 + $0x3e0] sm:$0xff]
      %v5580 = vld [vmem:[#allocation4 + $0x3e8] sm:$0xff]
      %v5581 = vld [vmem:[#allocation4 + $0x3f0] sm:$0xff]
      %v5582 = vld [vmem:[#allocation4 + $0x3f8] sm:$0xff]
      %v5583 = vmul.f32 %v4879, %v5455
      %v5584 = vmul.f32 %v4880, %v5456
      %v5585 = vmul.f32 %v4881, %v5457
      %v5586 = vmul.f32 %v4882, %v5458
      %v5587 = vmul.f32 %v4883, %v5459
      %v5588 = vmul.f32 %v4884, %v5460
      %v5589 = vmul.f32 %v4885, %v5461
      %v5590 = vmul.f32 %v4886, %v5462
      %v5591 = vmul.f32 %v4887, %v5463
      %v5592 = vmul.f32 %v4888, %v5464
      %v5593 = vmul.f32 %v4889, %v5465
      %v5594 = vmul.f32 %v4890, %v5466
      %v5595 = vmul.f32 %v4891, %v5467
      %v5596 = vmul.f32 %v4892, %v5468
      %v5597 = vmul.f32 %v4893, %v5469
      %v5598 = vmul.f32 %v4894, %v5470
      %v5599 = vmul.f32 %v4895, %v5471
      %v5600 = vmul.f32 %v4896, %v5472
      %v5601 = vmul.f32 %v4897, %v5473
      %v5602 = vmul.f32 %v4898, %v5474
      %v5603 = vmul.f32 %v4899, %v5475
      %v5604 = vmul.f32 %v4900, %v5476
      %v5605 = vmul.f32 %v4901, %v5477
      %v5606 = vmul.f32 %v4902, %v5478
      %v5607 = vmul.f32 %v4903, %v5479
      %v5608 = vmul.f32 %v4904, %v5480
      %v5609 = vmul.f32 %v4905, %v5481
      %v5610 = vmul.f32 %v4906, %v5482
      %v5611 = vmul.f32 %v4907, %v5483
      %v5612 = vmul.f32 %v4908, %v5484
      %v5613 = vmul.f32 %v4909, %v5485
      %v5614 = vmul.f32 %v4910, %v5486
      %v5615 = vmul.f32 %v4911, %v5487
      %v5616 = vmul.f32 %v4912, %v5488
      %v5617 = vmul.f32 %v4913, %v5489
      %v5618 = vmul.f32 %v4914, %v5490
      %v5619 = vmul.f32 %v4915, %v5491
      %v5620 = vmul.f32 %v4916, %v5492
      %v5621 = vmul.f32 %v4917, %v5493
      %v5622 = vmul.f32 %v4918, %v5494
      %v5623 = vmul.f32 %v4919, %v5495
      %v5624 = vmul.f32 %v4920, %v5496
      %v5625 = vmul.f32 %v4921, %v5497
      %v5626 = vmul.f32 %v4922, %v5498
      %v5627 = vmul.f32 %v4923, %v5499
      %v5628 = vmul.f32 %v4924, %v5500
      %v5629 = vmul.f32 %v4925, %v5501
      %v5630 = vmul.f32 %v4926, %v5502
      %v5631 = vmul.f32 %v4927, %v5503
      %v5632 = vmul.f32 %v4928, %v5504
      %v5633 = vmul.f32 %v4929, %v5505
      %v5634 = vmul.f32 %v4930, %v5506
      %v5635 = vmul.f32 %v4931, %v5507
      %v5636 = vmul.f32 %v4932, %v5508
      %v5637 = vmul.f32 %v4933, %v5509
      %v5638 = vmul.f32 %v4934, %v5510
      %v5639 = vmul.f32 %v4935, %v5511
      %v5640 = vmul.f32 %v4936, %v5512
      %v5641 = vmul.f32 %v4937, %v5513
      %v5642 = vmul.f32 %v4938, %v5514
      %v5643 = vmul.f32 %v4939, %v5515
      %v5644 = vmul.f32 %v4940, %v5516
      %v5645 = vmul.f32 %v4941, %v5517
      %v5646 = vmul.f32 %v4942, %v5518
      %v5647 = vmul.f32 %v4943, %v5519
      %v5648 = vmul.f32 %v4944, %v5520
      %v5649 = vmul.f32 %v4945, %v5521
      %v5650 = vmul.f32 %v4946, %v5522
      %v5651 = vmul.f32 %v4947, %v5523
      %v5652 = vmul.f32 %v4948, %v5524
      %v5653 = vmul.f32 %v4949, %v5525
      %v5654 = vmul.f32 %v4950, %v5526
      %v5655 = vmul.f32 %v4951, %v5527
      %v5656 = vmul.f32 %v4952, %v5528
      %v5657 = vmul.f32 %v4953, %v5529
      %v5658 = vmul.f32 %v4954, %v5530
      %v5659 = vmul.f32 %v4955, %v5531
      %v5660 = vmul.f32 %v4956, %v5532
      %v5661 = vmul.f32 %v4957, %v5533
      %v5662 = vmul.f32 %v4958, %v5534
      %v5663 = vmul.f32 %v4959, %v5535
      %v5664 = vmul.f32 %v4960, %v5536
      %v5665 = vmul.f32 %v4961, %v5537
      %v5666 = vmul.f32 %v4962, %v5538
      %v5667 = vmul.f32 %v4963, %v5539
      %v5668 = vmul.f32 %v4964, %v5540
      %v5669 = vmul.f32 %v4965, %v5541
      %v5670 = vmul.f32 %v4966, %v5542
      %v5671 = vmul.f32 %v4967, %v5543
      %v5672 = vmul.f32 %v4968, %v5544
      %v5673 = vmul.f32 %v4969, %v5545
      %v5674 = vmul.f32 %v4970, %v5546
      %v5675 = vmul.f32 %v4971, %v5547
      %v5676 = vmul.f32 %v4972, %v5548
      %v5677 = vmul.f32 %v4973, %v5549
      %v5678 = vmul.f32 %v4974, %v5550
      %v5679 = vmul.f32 %v4975, %v5551
      %v5680 = vmul.f32 %v4976, %v5552
      %v5681 = vmul.f32 %v4977, %v5553
      %v5682 = vmul.f32 %v4978, %v5554
      %v5683 = vmul.f32 %v4979, %v5555
      %v5684 = vmul.f32 %v4980, %v5556
      %v5685 = vmul.f32 %v4981, %v5557
      %v5686 = vmul.f32 %v4982, %v5558
      %v5687 = vmul.f32 %v4983, %v5559
      %v5688 = vmul.f32 %v4984, %v5560
      %v5689 = vmul.f32 %v4985, %v5561
      %v5690 = vmul.f32 %v4986, %v5562
      %v5691 = vmul.f32 %v4987, %v5563
      %v5692 = vmul.f32 %v4988, %v5564
      %v5693 = vmul.f32 %v4989, %v5565
      %v5694 = vmul.f32 %v4990, %v5566
      %v5695 = vmul.f32 %v4991, %v5567
      %v5696 = vmul.f32 %v4992, %v5568
      %v5697 = vmul.f32 %v4993, %v5569
      %v5698 = vmul.f32 %v4994, %v5570
      %v5699 = vmul.f32 %v4995, %v5571
      %v5700 = vmul.f32 %v4996, %v5572
      %v5701 = vmul.f32 %v4997, %v5573
      %v5702 = vmul.f32 %v4998, %v5574
      %v5703 = vmul.f32 %v4999, %v5575
      %v5704 = vmul.f32 %v5000, %v5576
      %v5705 = vmul.f32 %v5001, %v5577
      %v5706 = vmul.f32 %v5002, %v5578
      %v5707 = vmul.f32 %v5003, %v5579
      %v5708 = vmul.f32 %v5004, %v5580
      %v5709 = vmul.f32 %v5005, %v5581
      %v5710 = vmul.f32 %v5006, %v5582
      %v5711 = vadd.f32 %v5583, %v5584
      %v5712 = vadd.f32 %v5711, %v5585
      %v5713 = vadd.f32 %v5712, %v5586
      %5714 = vadd.xlane.f32.xlu0 %v5713
      %v5715 = vpop.xlane.xlu0 %5714
      %v5716 = vadd.f32 %v5587, %v5588
      %v5717 = vadd.f32 %v5716, %v5589
      %v5718 = vadd.f32 %v5717, %v5590
      %5719 = vadd.xlane.f32.xlu0 %v5718
      %v5720 = vpop.xlane.xlu0 %5719
      %v5721 = vadd.f32 %v5591, %v5592
      %v5722 = vadd.f32 %v5721, %v5593
      %v5723 = vadd.f32 %v5722, %v5594
      %5724 = vadd.xlane.f32.xlu0 %v5723
      %v5725 = vpop.xlane.xlu0 %5724
      %v5726 = vadd.f32 %v5595, %v5596
      %v5727 = vadd.f32 %v5726, %v5597
      %v5728 = vadd.f32 %v5727, %v5598
      %5729 = vadd.xlane.f32.xlu0 %v5728
      %v5730 = vpop.xlane.xlu0 %5729
      %v5731 = vadd.f32 %v5599, %v5600
      %v5732 = vadd.f32 %v5731, %v5601
      %v5733 = vadd.f32 %v5732, %v5602
      %5734 = vadd.xlane.f32.xlu0 %v5733
      %v5735 = vpop.xlane.xlu0 %5734
      %v5736 = vadd.f32 %v5603, %v5604
      %v5737 = vadd.f32 %v5736, %v5605
      %v5738 = vadd.f32 %v5737, %v5606
      %5739 = vadd.xlane.f32.xlu0 %v5738
      %v5740 = vpop.xlane.xlu0 %5739
      %v5741 = vadd.f32 %v5607, %v5608
      %v5742 = vadd.f32 %v5741, %v5609
      %v5743 = vadd.f32 %v5742, %v5610
      %5744 = vadd.xlane.f32.xlu0 %v5743
      %v5745 = vpop.xlane.xlu0 %5744
      %v5746 = vadd.f32 %v5611, %v5612
      %v5747 = vadd.f32 %v5746, %v5613
      %v5748 = vadd.f32 %v5747, %v5614
      %5749 = vadd.xlane.f32.xlu0 %v5748
      %v5750 = vpop.xlane.xlu0 %5749
      %v5751 = vadd.f32 %v5615, %v5616
      %v5752 = vadd.f32 %v5751, %v5617
      %v5753 = vadd.f32 %v5752, %v5618
      %5754 = vadd.xlane.f32.xlu0 %v5753
      %v5755 = vpop.xlane.xlu0 %5754
      %v5756 = vadd.f32 %v5619, %v5620
      %v5757 = vadd.f32 %v5756, %v5621
      %v5758 = vadd.f32 %v5757, %v5622
      %5759 = vadd.xlane.f32.xlu0 %v5758
      %v5760 = vpop.xlane.xlu0 %5759
      %v5761 = vadd.f32 %v5623, %v5624
      %v5762 = vadd.f32 %v5761, %v5625
      %v5763 = vadd.f32 %v5762, %v5626
      %5764 = vadd.xlane.f32.xlu0 %v5763
      %v5765 = vpop.xlane.xlu0 %5764
      %v5766 = vadd.f32 %v5627, %v5628
      %v5767 = vadd.f32 %v5766, %v5629
      %v5768 = vadd.f32 %v5767, %v5630
      %5769 = vadd.xlane.f32.xlu0 %v5768
      %v5770 = vpop.xlane.xlu0 %5769
      %v5771 = vadd.f32 %v5631, %v5632
      %v5772 = vadd.f32 %v5771, %v5633
      %v5773 = vadd.f32 %v5772, %v5634
      %5774 = vadd.xlane.f32.xlu0 %v5773
      %v5775 = vpop.xlane.xlu0 %5774
      %v5776 = vadd.f32 %v5635, %v5636
      %v5777 = vadd.f32 %v5776, %v5637
      %v5778 = vadd.f32 %v5777, %v5638
      %5779 = vadd.xlane.f32.xlu0 %v5778
      %v5780 = vpop.xlane.xlu0 %5779
      %v5781 = vadd.f32 %v5639, %v5640
      %v5782 = vadd.f32 %v5781, %v5641
      %v5783 = vadd.f32 %v5782, %v5642
      %5784 = vadd.xlane.f32.xlu0 %v5783
      %v5785 = vpop.xlane.xlu0 %5784
      %v5786 = vadd.f32 %v5643, %v5644
      %v5787 = vadd.f32 %v5786, %v5645
      %v5788 = vadd.f32 %v5787, %v5646
      %5789 = vadd.xlane.f32.xlu0 %v5788
      %v5790 = vpop.xlane.xlu0 %5789
      %v5791 = vadd.f32 %v5647, %v5648
      %v5792 = vadd.f32 %v5791, %v5649
      %v5793 = vadd.f32 %v5792, %v5650
      %5794 = vadd.xlane.f32.xlu0 %v5793
      %v5795 = vpop.xlane.xlu0 %5794
      %v5796 = vadd.f32 %v5651, %v5652
      %v5797 = vadd.f32 %v5796, %v5653
      %v5798 = vadd.f32 %v5797, %v5654
      %5799 = vadd.xlane.f32.xlu0 %v5798
      %v5800 = vpop.xlane.xlu0 %5799
      %v5801 = vadd.f32 %v5655, %v5656
      %v5802 = vadd.f32 %v5801, %v5657
      %v5803 = vadd.f32 %v5802, %v5658
      %5804 = vadd.xlane.f32.xlu0 %v5803
      %v5805 = vpop.xlane.xlu0 %5804
      %v5806 = vadd.f32 %v5659, %v5660
      %v5807 = vadd.f32 %v5806, %v5661
      %v5808 = vadd.f32 %v5807, %v5662
      %5809 = vadd.xlane.f32.xlu0 %v5808
      %v5810 = vpop.xlane.xlu0 %5809
      %v5811 = vadd.f32 %v5663, %v5664
      %v5812 = vadd.f32 %v5811, %v5665
      %v5813 = vadd.f32 %v5812, %v5666
      %5814 = vadd.xlane.f32.xlu0 %v5813
      %v5815 = vpop.xlane.xlu0 %5814
      %v5816 = vadd.f32 %v5667, %v5668
      %v5817 = vadd.f32 %v5816, %v5669
      %v5818 = vadd.f32 %v5817, %v5670
      %5819 = vadd.xlane.f32.xlu0 %v5818
      %v5820 = vpop.xlane.xlu0 %5819
      %v5821 = vadd.f32 %v5671, %v5672
      %v5822 = vadd.f32 %v5821, %v5673
      %v5823 = vadd.f32 %v5822, %v5674
      %5824 = vadd.xlane.f32.xlu0 %v5823
      %v5825 = vpop.xlane.xlu0 %5824
      %v5826 = vadd.f32 %v5675, %v5676
      %v5827 = vadd.f32 %v5826, %v5677
      %v5828 = vadd.f32 %v5827, %v5678
      %5829 = vadd.xlane.f32.xlu0 %v5828
      %v5830 = vpop.xlane.xlu0 %5829
      %v5831 = vadd.f32 %v5679, %v5680
      %v5832 = vadd.f32 %v5831, %v5681
      %v5833 = vadd.f32 %v5832, %v5682
      %5834 = vadd.xlane.f32.xlu0 %v5833
      %v5835 = vpop.xlane.xlu0 %5834
      %v5836 = vadd.f32 %v5683, %v5684
      %v5837 = vadd.f32 %v5836, %v5685
      %v5838 = vadd.f32 %v5837, %v5686
      %5839 = vadd.xlane.f32.xlu0 %v5838
      %v5840 = vpop.xlane.xlu0 %5839
      %v5841 = vadd.f32 %v5687, %v5688
      %v5842 = vadd.f32 %v5841, %v5689
      %v5843 = vadd.f32 %v5842, %v5690
      %5844 = vadd.xlane.f32.xlu0 %v5843
      %v5845 = vpop.xlane.xlu0 %5844
      %v5846 = vadd.f32 %v5691, %v5692
      %v5847 = vadd.f32 %v5846, %v5693
      %v5848 = vadd.f32 %v5847, %v5694
      %5849 = vadd.xlane.f32.xlu0 %v5848
      %v5850 = vpop.xlane.xlu0 %5849
      %v5851 = vadd.f32 %v5695, %v5696
      %v5852 = vadd.f32 %v5851, %v5697
      %v5853 = vadd.f32 %v5852, %v5698
      %5854 = vadd.xlane.f32.xlu0 %v5853
      %v5855 = vpop.xlane.xlu0 %5854
      %v5856 = vadd.f32 %v5699, %v5700
      %v5857 = vadd.f32 %v5856, %v5701
      %v5858 = vadd.f32 %v5857, %v5702
      %5859 = vadd.xlane.f32.xlu0 %v5858
      %v5860 = vpop.xlane.xlu0 %5859
      %v5861 = vadd.f32 %v5703, %v5704
      %v5862 = vadd.f32 %v5861, %v5705
      %v5863 = vadd.f32 %v5862, %v5706
      %5864 = vadd.xlane.f32.xlu0 %v5863
      %v5865 = vpop.xlane.xlu0 %5864
      %v5866 = vadd.f32 %v5707, %v5708
      %v5867 = vadd.f32 %v5866, %v5709
      %v5868 = vadd.f32 %v5867, %v5710
      %5869 = vadd.xlane.f32.xlu0 %v5868
      %v5870 = vpop.xlane.xlu0 %5869
      %v5871 = vsub.f32 0.0, %v5715
      %v5872 = vsub.f32 0.0, %v5720
      %v5873 = vsub.f32 0.0, %v5725
      %v5874 = vsub.f32 0.0, %v5730
      %v5875 = vsub.f32 0.0, %v5735
      %v5876 = vsub.f32 0.0, %v5740
      %v5877 = vsub.f32 0.0, %v5745
      %v5878 = vsub.f32 0.0, %v5750
      %v5879 = vsub.f32 0.0, %v5755
      %v5880 = vsub.f32 0.0, %v5760
      %v5881 = vsub.f32 0.0, %v5765
      %v5882 = vsub.f32 0.0, %v5770
      %v5883 = vsub.f32 0.0, %v5775
      %v5884 = vsub.f32 0.0, %v5780
      %v5885 = vsub.f32 0.0, %v5785
      %v5886 = vsub.f32 0.0, %v5790
      %v5887 = vsub.f32 0.0, %v5795
      %v5888 = vsub.f32 0.0, %v5800
      %v5889 = vsub.f32 0.0, %v5805
      %v5890 = vsub.f32 0.0, %v5810
      %v5891 = vsub.f32 0.0, %v5815
      %v5892 = vsub.f32 0.0, %v5820
      %v5893 = vsub.f32 0.0, %v5825
      %v5894 = vsub.f32 0.0, %v5830
      %v5895 = vsub.f32 0.0, %v5835
      %v5896 = vsub.f32 0.0, %v5840
      %v5897 = vsub.f32 0.0, %v5845
      %v5898 = vsub.f32 0.0, %v5850
      %v5899 = vsub.f32 0.0, %v5855
      %v5900 = vsub.f32 0.0, %v5860
      %v5901 = vsub.f32 0.0, %v5865
      %v5902 = vsub.f32 0.0, %v5870
      %v5903 = vld [vmem:[#allocation5] sm:$0xff]
      %v5904 = vld [vmem:[#allocation5 + $0x8] sm:$0xff]
      %v5905 = vld [vmem:[#allocation5 + $0x10] sm:$0xff]
      %v5906 = vld [vmem:[#allocation5 + $0x18] sm:$0xff]
      %v5907 = vld [vmem:[#allocation5 + $0x20] sm:$0xff]
      %v5908 = vld [vmem:[#allocation5 + $0x28] sm:$0xff]
      %v5909 = vld [vmem:[#allocation5 + $0x30] sm:$0xff]
      %v5910 = vld [vmem:[#allocation5 + $0x38] sm:$0xff]
      %v5911 = vld [vmem:[#allocation5 + $0x40] sm:$0xff]
      %v5912 = vld [vmem:[#allocation5 + $0x48] sm:$0xff]
      %v5913 = vld [vmem:[#allocation5 + $0x50] sm:$0xff]
      %v5914 = vld [vmem:[#allocation5 + $0x58] sm:$0xff]
      %v5915 = vld [vmem:[#allocation5 + $0x60] sm:$0xff]
      %v5916 = vld [vmem:[#allocation5 + $0x68] sm:$0xff]
      %v5917 = vld [vmem:[#allocation5 + $0x70] sm:$0xff]
      %v5918 = vld [vmem:[#allocation5 + $0x78] sm:$0xff]
      %v5919 = vld [vmem:[#allocation5 + $0x80] sm:$0xff]
      %v5920 = vld [vmem:[#allocation5 + $0x88] sm:$0xff]
      %v5921 = vld [vmem:[#allocation5 + $0x90] sm:$0xff]
      %v5922 = vld [vmem:[#allocation5 + $0x98] sm:$0xff]
      %v5923 = vld [vmem:[#allocation5 + $0xa0] sm:$0xff]
      %v5924 = vld [vmem:[#allocation5 + $0xa8] sm:$0xff]
      %v5925 = vld [vmem:[#allocation5 + $0xb0] sm:$0xff]
      %v5926 = vld [vmem:[#allocation5 + $0xb8] sm:$0xff]
      %v5927 = vld [vmem:[#allocation5 + $0xc0] sm:$0xff]
      %v5928 = vld [vmem:[#allocation5 + $0xc8] sm:$0xff]
      %v5929 = vld [vmem:[#allocation5 + $0xd0] sm:$0xff]
      %v5930 = vld [vmem:[#allocation5 + $0xd8] sm:$0xff]
      %v5931 = vld [vmem:[#allocation5 + $0xe0] sm:$0xff]
      %v5932 = vld [vmem:[#allocation5 + $0xe8] sm:$0xff]
      %v5933 = vld [vmem:[#allocation5 + $0xf0] sm:$0xff]
      %v5934 = vld [vmem:[#allocation5 + $0xf8] sm:$0xff]
      %v5935 = vld [vmem:[#allocation5 + $0x100] sm:$0xff]
      %v5936 = vld [vmem:[#allocation5 + $0x108] sm:$0xff]
      %v5937 = vld [vmem:[#allocation5 + $0x110] sm:$0xff]
      %v5938 = vld [vmem:[#allocation5 + $0x118] sm:$0xff]
      %v5939 = vld [vmem:[#allocation5 + $0x120] sm:$0xff]
      %v5940 = vld [vmem:[#allocation5 + $0x128] sm:$0xff]
      %v5941 = vld [vmem:[#allocation5 + $0x130] sm:$0xff]
      %v5942 = vld [vmem:[#allocation5 + $0x138] sm:$0xff]
      %v5943 = vld [vmem:[#allocation5 + $0x140] sm:$0xff]
      %v5944 = vld [vmem:[#allocation5 + $0x148] sm:$0xff]
      %v5945 = vld [vmem:[#allocation5 + $0x150] sm:$0xff]
      %v5946 = vld [vmem:[#allocation5 + $0x158] sm:$0xff]
      %v5947 = vld [vmem:[#allocation5 + $0x160] sm:$0xff]
      %v5948 = vld [vmem:[#allocation5 + $0x168] sm:$0xff]
      %v5949 = vld [vmem:[#allocation5 + $0x170] sm:$0xff]
      %v5950 = vld [vmem:[#allocation5 + $0x178] sm:$0xff]
      %v5951 = vld [vmem:[#allocation5 + $0x180] sm:$0xff]
      %v5952 = vld [vmem:[#allocation5 + $0x188] sm:$0xff]
      %v5953 = vld [vmem:[#allocation5 + $0x190] sm:$0xff]
      %v5954 = vld [vmem:[#allocation5 + $0x198] sm:$0xff]
      %v5955 = vld [vmem:[#allocation5 + $0x1a0] sm:$0xff]
      %v5956 = vld [vmem:[#allocation5 + $0x1a8] sm:$0xff]
      %v5957 = vld [vmem:[#allocation5 + $0x1b0] sm:$0xff]
      %v5958 = vld [vmem:[#allocation5 + $0x1b8] sm:$0xff]
      %v5959 = vld [vmem:[#allocation5 + $0x1c0] sm:$0xff]
      %v5960 = vld [vmem:[#allocation5 + $0x1c8] sm:$0xff]
      %v5961 = vld [vmem:[#allocation5 + $0x1d0] sm:$0xff]
      %v5962 = vld [vmem:[#allocation5 + $0x1d8] sm:$0xff]
      %v5963 = vld [vmem:[#allocation5 + $0x1e0] sm:$0xff]
      %v5964 = vld [vmem:[#allocation5 + $0x1e8] sm:$0xff]
      %v5965 = vld [vmem:[#allocation5 + $0x1f0] sm:$0xff]
      %v5966 = vld [vmem:[#allocation5 + $0x1f8] sm:$0xff]
      %v5967 = vld [vmem:[#allocation5 + $0x200] sm:$0xff]
      %v5968 = vld [vmem:[#allocation5 + $0x208] sm:$0xff]
      %v5969 = vld [vmem:[#allocation5 + $0x210] sm:$0xff]
      %v5970 = vld [vmem:[#allocation5 + $0x218] sm:$0xff]
      %v5971 = vld [vmem:[#allocation5 + $0x220] sm:$0xff]
      %v5972 = vld [vmem:[#allocation5 + $0x228] sm:$0xff]
      %v5973 = vld [vmem:[#allocation5 + $0x230] sm:$0xff]
      %v5974 = vld [vmem:[#allocation5 + $0x238] sm:$0xff]
      %v5975 = vld [vmem:[#allocation5 + $0x240] sm:$0xff]
      %v5976 = vld [vmem:[#allocation5 + $0x248] sm:$0xff]
      %v5977 = vld [vmem:[#allocation5 + $0x250] sm:$0xff]
      %v5978 = vld [vmem:[#allocation5 + $0x258] sm:$0xff]
      %v5979 = vld [vmem:[#allocation5 + $0x260] sm:$0xff]
      %v5980 = vld [vmem:[#allocation5 + $0x268] sm:$0xff]
      %v5981 = vld [vmem:[#allocation5 + $0x270] sm:$0xff]
      %v5982 = vld [vmem:[#allocation5 + $0x278] sm:$0xff]
      %v5983 = vld [vmem:[#allocation5 + $0x280] sm:$0xff]
      %v5984 = vld [vmem:[#allocation5 + $0x288] sm:$0xff]
      %v5985 = vld [vmem:[#allocation5 + $0x290] sm:$0xff]
      %v5986 = vld [vmem:[#allocation5 + $0x298] sm:$0xff]
      %v5987 = vld [vmem:[#allocation5 + $0x2a0] sm:$0xff]
      %v5988 = vld [vmem:[#allocation5 + $0x2a8] sm:$0xff]
      %v5989 = vld [vmem:[#allocation5 + $0x2b0] sm:$0xff]
      %v5990 = vld [vmem:[#allocation5 + $0x2b8] sm:$0xff]
      %v5991 = vld [vmem:[#allocation5 + $0x2c0] sm:$0xff]
      %v5992 = vld [vmem:[#allocation5 + $0x2c8] sm:$0xff]
      %v5993 = vld [vmem:[#allocation5 + $0x2d0] sm:$0xff]
      %v5994 = vld [vmem:[#allocation5 + $0x2d8] sm:$0xff]
      %v5995 = vld [vmem:[#allocation5 + $0x2e0] sm:$0xff]
      %v5996 = vld [vmem:[#allocation5 + $0x2e8] sm:$0xff]
      %v5997 = vld [vmem:[#allocation5 + $0x2f0] sm:$0xff]
      %v5998 = vld [vmem:[#allocation5 + $0x2f8] sm:$0xff]
      %v5999 = vld [vmem:[#allocation5 + $0x300] sm:$0xff]
      %v6000 = vld [vmem:[#allocation5 + $0x308] sm:$0xff]
      %v6001 = vld [vmem:[#allocation5 + $0x310] sm:$0xff]
      %v6002 = vld [vmem:[#allocation5 + $0x318] sm:$0xff]
      %v6003 = vld [vmem:[#allocation5 + $0x320] sm:$0xff]
      %v6004 = vld [vmem:[#allocation5 + $0x328] sm:$0xff]
      %v6005 = vld [vmem:[#allocation5 + $0x330] sm:$0xff]
      %v6006 = vld [vmem:[#allocation5 + $0x338] sm:$0xff]
      %v6007 = vld [vmem:[#allocation5 + $0x340] sm:$0xff]
      %v6008 = vld [vmem:[#allocation5 + $0x348] sm:$0xff]
      %v6009 = vld [vmem:[#allocation5 + $0x350] sm:$0xff]
      %v6010 = vld [vmem:[#allocation5 + $0x358] sm:$0xff]
      %v6011 = vld [vmem:[#allocation5 + $0x360] sm:$0xff]
      %v6012 = vld [vmem:[#allocation5 + $0x368] sm:$0xff]
      %v6013 = vld [vmem:[#allocation5 + $0x370] sm:$0xff]
      %v6014 = vld [vmem:[#allocation5 + $0x378] sm:$0xff]
      %v6015 = vld [vmem:[#allocation5 + $0x380] sm:$0xff]
      %v6016 = vld [vmem:[#allocation5 + $0x388] sm:$0xff]
      %v6017 = vld [vmem:[#allocation5 + $0x390] sm:$0xff]
      %v6018 = vld [vmem:[#allocation5 + $0x398] sm:$0xff]
      %v6019 = vld [vmem:[#allocation5 + $0x3a0] sm:$0xff]
      %v6020 = vld [vmem:[#allocation5 + $0x3a8] sm:$0xff]
      %v6021 = vld [vmem:[#allocation5 + $0x3b0] sm:$0xff]
      %v6022 = vld [vmem:[#allocation5 + $0x3b8] sm:$0xff]
      %v6023 = vld [vmem:[#allocation5 + $0x3c0] sm:$0xff]
      %v6024 = vld [vmem:[#allocation5 + $0x3c8] sm:$0xff]
      %v6025 = vld [vmem:[#allocation5 + $0x3d0] sm:$0xff]
      %v6026 = vld [vmem:[#allocation5 + $0x3d8] sm:$0xff]
      %v6027 = vld [vmem:[#allocation5 + $0x3e0] sm:$0xff]
      %v6028 = vld [vmem:[#allocation5 + $0x3e8] sm:$0xff]
      %v6029 = vld [vmem:[#allocation5 + $0x3f0] sm:$0xff]
      %v6030 = vld [vmem:[#allocation5 + $0x3f8] sm:$0xff]
      %v6031 = vmul.f32 %v4879, %v5903
      %v6032 = vmul.f32 %v4880, %v5904
      %v6033 = vmul.f32 %v4881, %v5905
      %v6034 = vmul.f32 %v4882, %v5906
      %v6035 = vmul.f32 %v4883, %v5907
      %v6036 = vmul.f32 %v4884, %v5908
      %v6037 = vmul.f32 %v4885, %v5909
      %v6038 = vmul.f32 %v4886, %v5910
      %v6039 = vmul.f32 %v4887, %v5911
      %v6040 = vmul.f32 %v4888, %v5912
      %v6041 = vmul.f32 %v4889, %v5913
      %v6042 = vmul.f32 %v4890, %v5914
      %v6043 = vmul.f32 %v4891, %v5915
      %v6044 = vmul.f32 %v4892, %v5916
      %v6045 = vmul.f32 %v4893, %v5917
      %v6046 = vmul.f32 %v4894, %v5918
      %v6047 = vmul.f32 %v4895, %v5919
      %v6048 = vmul.f32 %v4896, %v5920
      %v6049 = vmul.f32 %v4897, %v5921
      %v6050 = vmul.f32 %v4898, %v5922
      %v6051 = vmul.f32 %v4899, %v5923
      %v6052 = vmul.f32 %v4900, %v5924
      %v6053 = vmul.f32 %v4901, %v5925
      %v6054 = vmul.f32 %v4902, %v5926
      %v6055 = vmul.f32 %v4903, %v5927
      %v6056 = vmul.f32 %v4904, %v5928
      %v6057 = vmul.f32 %v4905, %v5929
      %v6058 = vmul.f32 %v4906, %v5930
      %v6059 = vmul.f32 %v4907, %v5931
      %v6060 = vmul.f32 %v4908, %v5932
      %v6061 = vmul.f32 %v4909, %v5933
      %v6062 = vmul.f32 %v4910, %v5934
      %v6063 = vmul.f32 %v4911, %v5935
      %v6064 = vmul.f32 %v4912, %v5936
      %v6065 = vmul.f32 %v4913, %v5937
      %v6066 = vmul.f32 %v4914, %v5938
      %v6067 = vmul.f32 %v4915, %v5939
      %v6068 = vmul.f32 %v4916, %v5940
      %v6069 = vmul.f32 %v4917, %v5941
      %v6070 = vmul.f32 %v4918, %v5942
      %v6071 = vmul.f32 %v4919, %v5943
      %v6072 = vmul.f32 %v4920, %v5944
      %v6073 = vmul.f32 %v4921, %v5945
      %v6074 = vmul.f32 %v4922, %v5946
      %v6075 = vmul.f32 %v4923, %v5947
      %v6076 = vmul.f32 %v4924, %v5948
      %v6077 = vmul.f32 %v4925, %v5949
      %v6078 = vmul.f32 %v4926, %v5950
      %v6079 = vmul.f32 %v4927, %v5951
      %v6080 = vmul.f32 %v4928, %v5952
      %v6081 = vmul.f32 %v4929, %v5953
      %v6082 = vmul.f32 %v4930, %v5954
      %v6083 = vmul.f32 %v4931, %v5955
      %v6084 = vmul.f32 %v4932, %v5956
      %v6085 = vmul.f32 %v4933, %v5957
      %v6086 = vmul.f32 %v4934, %v5958
      %v6087 = vmul.f32 %v4935, %v5959
      %v6088 = vmul.f32 %v4936, %v5960
      %v6089 = vmul.f32 %v4937, %v5961
      %v6090 = vmul.f32 %v4938, %v5962
      %v6091 = vmul.f32 %v4939, %v5963
      %v6092 = vmul.f32 %v4940, %v5964
      %v6093 = vmul.f32 %v4941, %v5965
      %v6094 = vmul.f32 %v4942, %v5966
      %v6095 = vmul.f32 %v4943, %v5967
      %v6096 = vmul.f32 %v4944, %v5968
      %v6097 = vmul.f32 %v4945, %v5969
      %v6098 = vmul.f32 %v4946, %v5970
      %v6099 = vmul.f32 %v4947, %v5971
      %v6100 = vmul.f32 %v4948, %v5972
      %v6101 = vmul.f32 %v4949, %v5973
      %v6102 = vmul.f32 %v4950, %v5974
      %v6103 = vmul.f32 %v4951, %v5975
      %v6104 = vmul.f32 %v4952, %v5976
      %v6105 = vmul.f32 %v4953, %v5977
      %v6106 = vmul.f32 %v4954, %v5978
      %v6107 = vmul.f32 %v4955, %v5979
      %v6108 = vmul.f32 %v4956, %v5980
      %v6109 = vmul.f32 %v4957, %v5981
      %v6110 = vmul.f32 %v4958, %v5982
      %v6111 = vmul.f32 %v4959, %v5983
      %v6112 = vmul.f32 %v4960, %v5984
      %v6113 = vmul.f32 %v4961, %v5985
      %v6114 = vmul.f32 %v4962, %v5986
      %v6115 = vmul.f32 %v4963, %v5987
      %v6116 = vmul.f32 %v4964, %v5988
      %v6117 = vmul.f32 %v4965, %v5989
      %v6118 = vmul.f32 %v4966, %v5990
      %v6119 = vmul.f32 %v4967, %v5991
      %v6120 = vmul.f32 %v4968, %v5992
      %v6121 = vmul.f32 %v4969, %v5993
      %v6122 = vmul.f32 %v4970, %v5994
      %v6123 = vmul.f32 %v4971, %v5995
      %v6124 = vmul.f32 %v4972, %v5996
      %v6125 = vmul.f32 %v4973, %v5997
      %v6126 = vmul.f32 %v4974, %v5998
      %v6127 = vmul.f32 %v4975, %v5999
      %v6128 = vmul.f32 %v4976, %v6000
      %v6129 = vmul.f32 %v4977, %v6001
      %v6130 = vmul.f32 %v4978, %v6002
      %v6131 = vmul.f32 %v4979, %v6003
      %v6132 = vmul.f32 %v4980, %v6004
      %v6133 = vmul.f32 %v4981, %v6005
      %v6134 = vmul.f32 %v4982, %v6006
      %v6135 = vmul.f32 %v4983, %v6007
      %v6136 = vmul.f32 %v4984, %v6008
      %v6137 = vmul.f32 %v4985, %v6009
      %v6138 = vmul.f32 %v4986, %v6010
      %v6139 = vmul.f32 %v4987, %v6011
      %v6140 = vmul.f32 %v4988, %v6012
      %v6141 = vmul.f32 %v4989, %v6013
      %v6142 = vmul.f32 %v4990, %v6014
      %v6143 = vmul.f32 %v4991, %v6015
      %v6144 = vmul.f32 %v4992, %v6016
      %v6145 = vmul.f32 %v4993, %v6017
      %v6146 = vmul.f32 %v4994, %v6018
      %v6147 = vmul.f32 %v4995, %v6019
      %v6148 = vmul.f32 %v4996, %v6020
      %v6149 = vmul.f32 %v4997, %v6021
      %v6150 = vmul.f32 %v4998, %v6022
      %v6151 = vmul.f32 %v4999, %v6023
      %v6152 = vmul.f32 %v5000, %v6024
      %v6153 = vmul.f32 %v5001, %v6025
      %v6154 = vmul.f32 %v5002, %v6026
      %v6155 = vmul.f32 %v5003, %v6027
      %v6156 = vmul.f32 %v5004, %v6028
      %v6157 = vmul.f32 %v5005, %v6029
      %v6158 = vmul.f32 %v5006, %v6030
      %v6159 = vadd.f32 %v6031, %v6032
      %v6160 = vadd.f32 %v6159, %v6033
      %v6161 = vadd.f32 %v6160, %v6034
      %6162 = vadd.xlane.f32.xlu0 %v6161
      %v6163 = vpop.xlane.xlu0 %6162
      %v6164 = vadd.f32 %v6035, %v6036
      %v6165 = vadd.f32 %v6164, %v6037
      %v6166 = vadd.f32 %v6165, %v6038
      %6167 = vadd.xlane.f32.xlu0 %v6166
      %v6168 = vpop.xlane.xlu0 %6167
      %v6169 = vadd.f32 %v6039, %v6040
      %v6170 = vadd.f32 %v6169, %v6041
      %v6171 = vadd.f32 %v6170, %v6042
      %6172 = vadd.xlane.f32.xlu0 %v6171
      %v6173 = vpop.xlane.xlu0 %6172
      %v6174 = vadd.f32 %v6043, %v6044
      %v6175 = vadd.f32 %v6174, %v6045
      %v6176 = vadd.f32 %v6175, %v6046
      %6177 = vadd.xlane.f32.xlu0 %v6176
      %v6178 = vpop.xlane.xlu0 %6177
      %v6179 = vadd.f32 %v6047, %v6048
      %v6180 = vadd.f32 %v6179, %v6049
      %v6181 = vadd.f32 %v6180, %v6050
      %6182 = vadd.xlane.f32.xlu0 %v6181
      %v6183 = vpop.xlane.xlu0 %6182
      %v6184 = vadd.f32 %v6051, %v6052
      %v6185 = vadd.f32 %v6184, %v6053
      %v6186 = vadd.f32 %v6185, %v6054
      %6187 = vadd.xlane.f32.xlu0 %v6186
      %v6188 = vpop.xlane.xlu0 %6187
      %v6189 = vadd.f32 %v6055, %v6056
      %v6190 = vadd.f32 %v6189, %v6057
      %v6191 = vadd.f32 %v6190, %v6058
      %6192 = vadd.xlane.f32.xlu0 %v6191
      %v6193 = vpop.xlane.xlu0 %6192
      %v6194 = vadd.f32 %v6059, %v6060
      %v6195 = vadd.f32 %v6194, %v6061
      %v6196 = vadd.f32 %v6195, %v6062
      %6197 = vadd.xlane.f32.xlu0 %v6196
      %v6198 = vpop.xlane.xlu0 %6197
      %v6199 = vadd.f32 %v6063, %v6064
      %v6200 = vadd.f32 %v6199, %v6065
      %v6201 = vadd.f32 %v6200, %v6066
      %6202 = vadd.xlane.f32.xlu0 %v6201
      %v6203 = vpop.xlane.xlu0 %6202
      %v6204 = vadd.f32 %v6067, %v6068
      %v6205 = vadd.f32 %v6204, %v6069
      %v6206 = vadd.f32 %v6205, %v6070
      %6207 = vadd.xlane.f32.xlu0 %v6206
      %v6208 = vpop.xlane.xlu0 %6207
      %v6209 = vadd.f32 %v6071, %v6072
      %v6210 = vadd.f32 %v6209, %v6073
      %v6211 = vadd.f32 %v6210, %v6074
      %6212 = vadd.xlane.f32.xlu0 %v6211
      %v6213 = vpop.xlane.xlu0 %6212
      %v6214 = vadd.f32 %v6075, %v6076
      %v6215 = vadd.f32 %v6214, %v6077
      %v6216 = vadd.f32 %v6215, %v6078
      %6217 = vadd.xlane.f32.xlu0 %v6216
      %v6218 = vpop.xlane.xlu0 %6217
      %v6219 = vadd.f32 %v6079, %v6080
      %v6220 = vadd.f32 %v6219, %v6081
      %v6221 = vadd.f32 %v6220, %v6082
      %6222 = vadd.xlane.f32.xlu0 %v6221
      %v6223 = vpop.xlane.xlu0 %6222
      %v6224 = vadd.f32 %v6083, %v6084
      %v6225 = vadd.f32 %v6224, %v6085
      %v6226 = vadd.f32 %v6225, %v6086
      %6227 = vadd.xlane.f32.xlu0 %v6226
      %v6228 = vpop.xlane.xlu0 %6227
      %v6229 = vadd.f32 %v6087, %v6088
      %v6230 = vadd.f32 %v6229, %v6089
      %v6231 = vadd.f32 %v6230, %v6090
      %6232 = vadd.xlane.f32.xlu0 %v6231
      %v6233 = vpop.xlane.xlu0 %6232
      %v6234 = vadd.f32 %v6091, %v6092
      %v6235 = vadd.f32 %v6234, %v6093
      %v6236 = vadd.f32 %v6235, %v6094
      %6237 = vadd.xlane.f32.xlu0 %v6236
      %v6238 = vpop.xlane.xlu0 %6237
      %v6239 = vadd.f32 %v6095, %v6096
      %v6240 = vadd.f32 %v6239, %v6097
      %v6241 = vadd.f32 %v6240, %v6098
      %6242 = vadd.xlane.f32.xlu0 %v6241
      %v6243 = vpop.xlane.xlu0 %6242
      %v6244 = vadd.f32 %v6099, %v6100
      %v6245 = vadd.f32 %v6244, %v6101
      %v6246 = vadd.f32 %v6245, %v6102
      %6247 = vadd.xlane.f32.xlu0 %v6246
      %v6248 = vpop.xlane.xlu0 %6247
      %v6249 = vadd.f32 %v6103, %v6104
      %v6250 = vadd.f32 %v6249, %v6105
      %v6251 = vadd.f32 %v6250, %v6106
      %6252 = vadd.xlane.f32.xlu0 %v6251
      %v6253 = vpop.xlane.xlu0 %6252
      %v6254 = vadd.f32 %v6107, %v6108
      %v6255 = vadd.f32 %v6254, %v6109
      %v6256 = vadd.f32 %v6255, %v6110
      %6257 = vadd.xlane.f32.xlu0 %v6256
      %v6258 = vpop.xlane.xlu0 %6257
      %v6259 = vadd.f32 %v6111, %v6112
      %v6260 = vadd.f32 %v6259, %v6113
      %v6261 = vadd.f32 %v6260, %v6114
      %6262 = vadd.xlane.f32.xlu0 %v6261
      %v6263 = vpop.xlane.xlu0 %6262
      %v6264 = vadd.f32 %v6115, %v6116
      %v6265 = vadd.f32 %v6264, %v6117
      %v6266 = vadd.f32 %v6265, %v6118
      %6267 = vadd.xlane.f32.xlu0 %v6266
      %v6268 = vpop.xlane.xlu0 %6267
      %v6269 = vadd.f32 %v6119, %v6120
      %v6270 = vadd.f32 %v6269, %v6121
      %v6271 = vadd.f32 %v6270, %v6122
      %6272 = vadd.xlane.f32.xlu0 %v6271
      %v6273 = vpop.xlane.xlu0 %6272
      %v6274 = vadd.f32 %v6123, %v6124
      %v6275 = vadd.f32 %v6274, %v6125
      %v6276 = vadd.f32 %v6275, %v6126
      %6277 = vadd.xlane.f32.xlu0 %v6276
      %v6278 = vpop.xlane.xlu0 %6277
      %v6279 = vadd.f32 %v6127, %v6128
      %v6280 = vadd.f32 %v6279, %v6129
      %v6281 = vadd.f32 %v6280, %v6130
      %6282 = vadd.xlane.f32.xlu0 %v6281
      %v6283 = vpop.xlane.xlu0 %6282
      %v6284 = vadd.f32 %v6131, %v6132
      %v6285 = vadd.f32 %v6284, %v6133
      %v6286 = vadd.f32 %v6285, %v6134
      %6287 = vadd.xlane.f32.xlu0 %v6286
      %v6288 = vpop.xlane.xlu0 %6287
      %v6289 = vadd.f32 %v6135, %v6136
      %v6290 = vadd.f32 %v6289, %v6137
      %v6291 = vadd.f32 %v6290, %v6138
      %6292 = vadd.xlane.f32.xlu0 %v6291
      %v6293 = vpop.xlane.xlu0 %6292
      %v6294 = vadd.f32 %v6139, %v6140
      %v6295 = vadd.f32 %v6294, %v6141
      %v6296 = vadd.f32 %v6295, %v6142
      %6297 = vadd.xlane.f32.xlu0 %v6296
      %v6298 = vpop.xlane.xlu0 %6297
      %v6299 = vadd.f32 %v6143, %v6144
      %v6300 = vadd.f32 %v6299, %v6145
      %v6301 = vadd.f32 %v6300, %v6146
      %6302 = vadd.xlane.f32.xlu0 %v6301
      %v6303 = vpop.xlane.xlu0 %6302
      %v6304 = vadd.f32 %v6147, %v6148
      %v6305 = vadd.f32 %v6304, %v6149
      %v6306 = vadd.f32 %v6305, %v6150
      %6307 = vadd.xlane.f32.xlu0 %v6306
      %v6308 = vpop.xlane.xlu0 %6307
      %v6309 = vadd.f32 %v6151, %v6152
      %v6310 = vadd.f32 %v6309, %v6153
      %v6311 = vadd.f32 %v6310, %v6154
      %6312 = vadd.xlane.f32.xlu0 %v6311
      %v6313 = vpop.xlane.xlu0 %6312
      %v6314 = vadd.f32 %v6155, %v6156
      %v6315 = vadd.f32 %v6314, %v6157
      %v6316 = vadd.f32 %v6315, %v6158
      %6317 = vadd.xlane.f32.xlu0 %v6316
      %v6318 = vpop.xlane.xlu0 %6317
      %v6319 = vsub.f32 0.0, %v6163
      %v6320 = vsub.f32 0.0, %v6168
      %v6321 = vsub.f32 0.0, %v6173
      %v6322 = vsub.f32 0.0, %v6178
      %v6323 = vsub.f32 0.0, %v6183
      %v6324 = vsub.f32 0.0, %v6188
      %v6325 = vsub.f32 0.0, %v6193
      %v6326 = vsub.f32 0.0, %v6198
      %v6327 = vsub.f32 0.0, %v6203
      %v6328 = vsub.f32 0.0, %v6208
      %v6329 = vsub.f32 0.0, %v6213
      %v6330 = vsub.f32 0.0, %v6218
      %v6331 = vsub.f32 0.0, %v6223
      %v6332 = vsub.f32 0.0, %v6228
      %v6333 = vsub.f32 0.0, %v6233
      %v6334 = vsub.f32 0.0, %v6238
      %v6335 = vsub.f32 0.0, %v6243
      %v6336 = vsub.f32 0.0, %v6248
      %v6337 = vsub.f32 0.0, %v6253
      %v6338 = vsub.f32 0.0, %v6258
      %v6339 = vsub.f32 0.0, %v6263
      %v6340 = vsub.f32 0.0, %v6268
      %v6341 = vsub.f32 0.0, %v6273
      %v6342 = vsub.f32 0.0, %v6278
      %v6343 = vsub.f32 0.0, %v6283
      %v6344 = vsub.f32 0.0, %v6288
      %v6345 = vsub.f32 0.0, %v6293
      %v6346 = vsub.f32 0.0, %v6298
      %v6347 = vsub.f32 0.0, %v6303
      %v6348 = vsub.f32 0.0, %v6308
      %v6349 = vsub.f32 0.0, %v6313
      %v6350 = vsub.f32 0.0, %v6318
      %vm6351 = vcmp.le.f32.partialorder %v3571, 0.64
      %vm6352 = vcmp.le.f32.partialorder %v3576, 0.64
      %vm6353 = vcmp.le.f32.partialorder %v3581, 0.64
      %vm6354 = vcmp.le.f32.partialorder %v3586, 0.64
      %vm6355 = vcmp.le.f32.partialorder %v3591, 0.64
      %vm6356 = vcmp.le.f32.partialorder %v3596, 0.64
      %vm6357 = vcmp.le.f32.partialorder %v3601, 0.64
      %vm6358 = vcmp.le.f32.partialorder %v3606, 0.64
      %vm6359 = vcmp.le.f32.partialorder %v3611, 0.64
      %vm6360 = vcmp.le.f32.partialorder %v3616, 0.64
      %vm6361 = vcmp.le.f32.partialorder %v3621, 0.64
      %vm6362 = vcmp.le.f32.partialorder %v3626, 0.64
      %vm6363 = vcmp.le.f32.partialorder %v3631, 0.64
      %vm6364 = vcmp.le.f32.partialorder %v3636, 0.64
      %vm6365 = vcmp.le.f32.partialorder %v3641, 0.64
      %vm6366 = vcmp.le.f32.partialorder %v3646, 0.64
      %vm6367 = vcmp.le.f32.partialorder %v3651, 0.64
      %vm6368 = vcmp.le.f32.partialorder %v3656, 0.64
      %vm6369 = vcmp.le.f32.partialorder %v3661, 0.64
      %vm6370 = vcmp.le.f32.partialorder %v3666, 0.64
      %vm6371 = vcmp.le.f32.partialorder %v3671, 0.64
      %vm6372 = vcmp.le.f32.partialorder %v3676, 0.64
      %vm6373 = vcmp.le.f32.partialorder %v3681, 0.64
      %vm6374 = vcmp.le.f32.partialorder %v3686, 0.64
      %vm6375 = vcmp.le.f32.partialorder %v3691, 0.64
      %vm6376 = vcmp.le.f32.partialorder %v3696, 0.64
      %vm6377 = vcmp.le.f32.partialorder %v3701, 0.64
      %vm6378 = vcmp.le.f32.partialorder %v3706, 0.64
      %vm6379 = vcmp.le.f32.partialorder %v3711, 0.64
      %vm6380 = vcmp.le.f32.partialorder %v3716, 0.64
      %vm6381 = vcmp.le.f32.partialorder %v3721, 0.64
      %vm6382 = vcmp.le.f32.partialorder %v3726, 0.64
      %v6383 = vsel %vm6351, %v5423, 0.0
      %v6384 = vsel %vm6352, %v5424, 0.0
      %v6385 = vsel %vm6353, %v5425, 0.0
      %v6386 = vsel %vm6354, %v5426, 0.0
      %v6387 = vsel %vm6355, %v5427, 0.0
      %v6388 = vsel %vm6356, %v5428, 0.0
      %v6389 = vsel %vm6357, %v5429, 0.0
      %v6390 = vsel %vm6358, %v5430, 0.0
      %v6391 = vsel %vm6359, %v5431, 0.0
      %v6392 = vsel %vm6360, %v5432, 0.0
      %v6393 = vsel %vm6361, %v5433, 0.0
      %v6394 = vsel %vm6362, %v5434, 0.0
      %v6395 = vsel %vm6363, %v5435, 0.0
      %v6396 = vsel %vm6364, %v5436, 0.0
      %v6397 = vsel %vm6365, %v5437, 0.0
      %v6398 = vsel %vm6366, %v5438, 0.0
      %v6399 = vsel %vm6367, %v5439, 0.0
      %v6400 = vsel %vm6368, %v5440, 0.0
      %v6401 = vsel %vm6369, %v5441, 0.0
      %v6402 = vsel %vm6370, %v5442, 0.0
      %v6403 = vsel %vm6371, %v5443, 0.0
      %v6404 = vsel %vm6372, %v5444, 0.0
      %v6405 = vsel %vm6373, %v5445, 0.0
      %v6406 = vsel %vm6374, %v5446, 0.0
      %v6407 = vsel %vm6375, %v5447, 0.0
      %v6408 = vsel %vm6376, %v5448, 0.0
      %v6409 = vsel %vm6377, %v5449, 0.0
      %v6410 = vsel %vm6378, %v5450, 0.0
      %v6411 = vsel %vm6379, %v5451, 0.0
      %v6412 = vsel %vm6380, %v5452, 0.0
      %v6413 = vsel %vm6381, %v5453, 0.0
      %v6414 = vsel %vm6382, %v5454, 0.0
      %vm6415 = vcmask 7168
      %6416 = vst.msk [vmem:[%s138] sm:$0xff] %vm6415, %v6383
      %6417 = vst.msk [vmem:[%s138 + $0x8] sm:$0xff] %vm6415, %v6384
      %6418 = vst.msk [vmem:[%s138 + $0x10] sm:$0xff] %vm6415, %v6385
      %6419 = vst.msk [vmem:[%s138 + $0x18] sm:$0xff] %vm6415, %v6386
      %6420 = vst.msk [vmem:[%s138 + $0x20] sm:$0xff] %vm6415, %v6387
      %6421 = vst.msk [vmem:[%s138 + $0x28] sm:$0xff] %vm6415, %v6388
      %6422 = vst.msk [vmem:[%s138 + $0x30] sm:$0xff] %vm6415, %v6389
      %6423 = vst.msk [vmem:[%s138 + $0x38] sm:$0xff] %vm6415, %v6390
      %6424 = vst.msk [vmem:[%s138 + $0x40] sm:$0xff] %vm6415, %v6391
      %6425 = vst.msk [vmem:[%s138 + $0x48] sm:$0xff] %vm6415, %v6392
      %6426 = vst.msk [vmem:[%s138 + $0x50] sm:$0xff] %vm6415, %v6393
      %6427 = vst.msk [vmem:[%s138 + $0x58] sm:$0xff] %vm6415, %v6394
      %6428 = vst.msk [vmem:[%s138 + $0x60] sm:$0xff] %vm6415, %v6395
      %6429 = vst.msk [vmem:[%s138 + $0x68] sm:$0xff] %vm6415, %v6396
      %6430 = vst.msk [vmem:[%s138 + $0x70] sm:$0xff] %vm6415, %v6397
      %6431 = vst.msk [vmem:[%s138 + $0x78] sm:$0xff] %vm6415, %v6398
      %6432 = vst.msk [vmem:[%s138 + $0x80] sm:$0xff] %vm6415, %v6399
      %6433 = vst.msk [vmem:[%s138 + $0x88] sm:$0xff] %vm6415, %v6400
      %6434 = vst.msk [vmem:[%s138 + $0x90] sm:$0xff] %vm6415, %v6401
      %6435 = vst.msk [vmem:[%s138 + $0x98] sm:$0xff] %vm6415, %v6402
      %6436 = vst.msk [vmem:[%s138 + $0xa0] sm:$0xff] %vm6415, %v6403
      %6437 = vst.msk [vmem:[%s138 + $0xa8] sm:$0xff] %vm6415, %v6404
      %6438 = vst.msk [vmem:[%s138 + $0xb0] sm:$0xff] %vm6415, %v6405
      %6439 = vst.msk [vmem:[%s138 + $0xb8] sm:$0xff] %vm6415, %v6406
      %6440 = vst.msk [vmem:[%s138 + $0xc0] sm:$0xff] %vm6415, %v6407
      %6441 = vst.msk [vmem:[%s138 + $0xc8] sm:$0xff] %vm6415, %v6408
      %6442 = vst.msk [vmem:[%s138 + $0xd0] sm:$0xff] %vm6415, %v6409
      %6443 = vst.msk [vmem:[%s138 + $0xd8] sm:$0xff] %vm6415, %v6410
      %6444 = vst.msk [vmem:[%s138 + $0xe0] sm:$0xff] %vm6415, %v6411
      %6445 = vst.msk [vmem:[%s138 + $0xe8] sm:$0xff] %vm6415, %v6412
      %6446 = vst.msk [vmem:[%s138 + $0xf0] sm:$0xff] %vm6415, %v6413
      %6447 = vst.msk [vmem:[%s138 + $0xf8] sm:$0xff] %vm6415, %v6414
      %v6448 = vsel %vm6351, %v5871, 0.0
      %v6449 = vsel %vm6352, %v5872, 0.0
      %v6450 = vsel %vm6353, %v5873, 0.0
      %v6451 = vsel %vm6354, %v5874, 0.0
      %v6452 = vsel %vm6355, %v5875, 0.0
      %v6453 = vsel %vm6356, %v5876, 0.0
      %v6454 = vsel %vm6357, %v5877, 0.0
      %v6455 = vsel %vm6358, %v5878, 0.0
      %v6456 = vsel %vm6359, %v5879, 0.0
      %v6457 = vsel %vm6360, %v5880, 0.0
      %v6458 = vsel %vm6361, %v5881, 0.0
      %v6459 = vsel %vm6362, %v5882, 0.0
      %v6460 = vsel %vm6363, %v5883, 0.0
      %v6461 = vsel %vm6364, %v5884, 0.0
      %v6462 = vsel %vm6365, %v5885, 0.0
      %v6463 = vsel %vm6366, %v5886, 0.0
      %v6464 = vsel %vm6367, %v5887, 0.0
      %v6465 = vsel %vm6368, %v5888, 0.0
      %v6466 = vsel %vm6369, %v5889, 0.0
      %v6467 = vsel %vm6370, %v5890, 0.0
      %v6468 = vsel %vm6371, %v5891, 0.0
      %v6469 = vsel %vm6372, %v5892, 0.0
      %v6470 = vsel %vm6373, %v5893, 0.0
      %v6471 = vsel %vm6374, %v5894, 0.0
      %v6472 = vsel %vm6375, %v5895, 0.0
      %v6473 = vsel %vm6376, %v5896, 0.0
      %v6474 = vsel %vm6377, %v5897, 0.0
      %v6475 = vsel %vm6378, %v5898, 0.0
      %v6476 = vsel %vm6379, %v5899, 0.0
      %v6477 = vsel %vm6380, %v5900, 0.0
      %v6478 = vsel %vm6381, %v5901, 0.0
      %v6479 = vsel %vm6382, %v5902, 0.0
      %vm6480 = vcmask 15368
      %6481 = vst.msk [vmem:[%s138] sm:$0xff] %vm6480, %v6448
      %6482 = vst.msk [vmem:[%s138 + $0x8] sm:$0xff] %vm6480, %v6449
      %6483 = vst.msk [vmem:[%s138 + $0x10] sm:$0xff] %vm6480, %v6450
      %6484 = vst.msk [vmem:[%s138 + $0x18] sm:$0xff] %vm6480, %v6451
      %6485 = vst.msk [vmem:[%s138 + $0x20] sm:$0xff] %vm6480, %v6452
      %6486 = vst.msk [vmem:[%s138 + $0x28] sm:$0xff] %vm6480, %v6453
      %6487 = vst.msk [vmem:[%s138 + $0x30] sm:$0xff] %vm6480, %v6454
      %6488 = vst.msk [vmem:[%s138 + $0x38] sm:$0xff] %vm6480, %v6455
      %6489 = vst.msk [vmem:[%s138 + $0x40] sm:$0xff] %vm6480, %v6456
      %6490 = vst.msk [vmem:[%s138 + $0x48] sm:$0xff] %vm6480, %v6457
      %6491 = vst.msk [vmem:[%s138 + $0x50] sm:$0xff] %vm6480, %v6458
      %6492 = vst.msk [vmem:[%s138 + $0x58] sm:$0xff] %vm6480, %v6459
      %6493 = vst.msk [vmem:[%s138 + $0x60] sm:$0xff] %vm6480, %v6460
      %6494 = vst.msk [vmem:[%s138 + $0x68] sm:$0xff] %vm6480, %v6461
      %6495 = vst.msk [vmem:[%s138 + $0x70] sm:$0xff] %vm6480, %v6462
      %6496 = vst.msk [vmem:[%s138 + $0x78] sm:$0xff] %vm6480, %v6463
      %6497 = vst.msk [vmem:[%s138 + $0x80] sm:$0xff] %vm6480, %v6464
      %6498 = vst.msk [vmem:[%s138 + $0x88] sm:$0xff] %vm6480, %v6465
      %6499 = vst.msk [vmem:[%s138 + $0x90] sm:$0xff] %vm6480, %v6466
      %6500 = vst.msk [vmem:[%s138 + $0x98] sm:$0xff] %vm6480, %v6467
      %6501 = vst.msk [vmem:[%s138 + $0xa0] sm:$0xff] %vm6480, %v6468
      %6502 = vst.msk [vmem:[%s138 + $0xa8] sm:$0xff] %vm6480, %v6469
      %6503 = vst.msk [vmem:[%s138 + $0xb0] sm:$0xff] %vm6480, %v6470
      %6504 = vst.msk [vmem:[%s138 + $0xb8] sm:$0xff] %vm6480, %v6471
      %6505 = vst.msk [vmem:[%s138 + $0xc0] sm:$0xff] %vm6480, %v6472
      %6506 = vst.msk [vmem:[%s138 + $0xc8] sm:$0xff] %vm6480, %v6473
      %6507 = vst.msk [vmem:[%s138 + $0xd0] sm:$0xff] %vm6480, %v6474
      %6508 = vst.msk [vmem:[%s138 + $0xd8] sm:$0xff] %vm6480, %v6475
      %6509 = vst.msk [vmem:[%s138 + $0xe0] sm:$0xff] %vm6480, %v6476
      %6510 = vst.msk [vmem:[%s138 + $0xe8] sm:$0xff] %vm6480, %v6477
      %6511 = vst.msk [vmem:[%s138 + $0xf0] sm:$0xff] %vm6480, %v6478
      %6512 = vst.msk [vmem:[%s138 + $0xf8] sm:$0xff] %vm6480, %v6479
      %v6513 = vsel %vm6351, %v6319, 0.0
      %v6514 = vsel %vm6352, %v6320, 0.0
      %v6515 = vsel %vm6353, %v6321, 0.0
      %v6516 = vsel %vm6354, %v6322, 0.0
      %v6517 = vsel %vm6355, %v6323, 0.0
      %v6518 = vsel %vm6356, %v6324, 0.0
      %v6519 = vsel %vm6357, %v6325, 0.0
      %v6520 = vsel %vm6358, %v6326, 0.0
      %v6521 = vsel %vm6359, %v6327, 0.0
      %v6522 = vsel %vm6360, %v6328, 0.0
      %v6523 = vsel %vm6361, %v6329, 0.0
      %v6524 = vsel %vm6362, %v6330, 0.0
      %v6525 = vsel %vm6363, %v6331, 0.0
      %v6526 = vsel %vm6364, %v6332, 0.0
      %v6527 = vsel %vm6365, %v6333, 0.0
      %v6528 = vsel %vm6366, %v6334, 0.0
      %v6529 = vsel %vm6367, %v6335, 0.0
      %v6530 = vsel %vm6368, %v6336, 0.0
      %v6531 = vsel %vm6369, %v6337, 0.0
      %v6532 = vsel %vm6370, %v6338, 0.0
      %v6533 = vsel %vm6371, %v6339, 0.0
      %v6534 = vsel %vm6372, %v6340, 0.0
      %v6535 = vsel %vm6373, %v6341, 0.0
      %v6536 = vsel %vm6374, %v6342, 0.0
      %v6537 = vsel %vm6375, %v6343, 0.0
      %v6538 = vsel %vm6376, %v6344, 0.0
      %v6539 = vsel %vm6377, %v6345, 0.0
      %v6540 = vsel %vm6378, %v6346, 0.0
      %v6541 = vsel %vm6379, %v6347, 0.0
      %v6542 = vsel %vm6380, %v6348, 0.0
      %v6543 = vsel %vm6381, %v6349, 0.0
      %v6544 = vsel %vm6382, %v6350, 0.0
      %vm6545 = vcmask 23568
      %6546 = vst.msk [vmem:[%s138] sm:$0xff] %vm6545, %v6513
      %6547 = vst.msk [vmem:[%s138 + $0x8] sm:$0xff] %vm6545, %v6514
      %6548 = vst.msk [vmem:[%s138 + $0x10] sm:$0xff] %vm6545, %v6515
      %6549 = vst.msk [vmem:[%s138 + $0x18] sm:$0xff] %vm6545, %v6516
      %6550 = vst.msk [vmem:[%s138 + $0x20] sm:$0xff] %vm6545, %v6517
      %6551 = vst.msk [vmem:[%s138 + $0x28] sm:$0xff] %vm6545, %v6518
      %6552 = vst.msk [vmem:[%s138 + $0x30] sm:$0xff] %vm6545, %v6519
      %6553 = vst.msk [vmem:[%s138 + $0x38] sm:$0xff] %vm6545, %v6520
      %6554 = vst.msk [vmem:[%s138 + $0x40] sm:$0xff] %vm6545, %v6521
      %6555 = vst.msk [vmem:[%s138 + $0x48] sm:$0xff] %vm6545, %v6522
      %6556 = vst.msk [vmem:[%s138 + $0x50] sm:$0xff] %vm6545, %v6523
      %6557 = vst.msk [vmem:[%s138 + $0x58] sm:$0xff] %vm6545, %v6524
      %6558 = vst.msk [vmem:[%s138 + $0x60] sm:$0xff] %vm6545, %v6525
      %6559 = vst.msk [vmem:[%s138 + $0x68] sm:$0xff] %vm6545, %v6526
      %6560 = vst.msk [vmem:[%s138 + $0x70] sm:$0xff] %vm6545, %v6527
      %6561 = vst.msk [vmem:[%s138 + $0x78] sm:$0xff] %vm6545, %v6528
      %6562 = vst.msk [vmem:[%s138 + $0x80] sm:$0xff] %vm6545, %v6529
      %6563 = vst.msk [vmem:[%s138 + $0x88] sm:$0xff] %vm6545, %v6530
      %6564 = vst.msk [vmem:[%s138 + $0x90] sm:$0xff] %vm6545, %v6531
      %6565 = vst.msk [vmem:[%s138 + $0x98] sm:$0xff] %vm6545, %v6532
      %6566 = vst.msk [vmem:[%s138 + $0xa0] sm:$0xff] %vm6545, %v6533
      %6567 = vst.msk [vmem:[%s138 + $0xa8] sm:$0xff] %vm6545, %v6534
      %6568 = vst.msk [vmem:[%s138 + $0xb0] sm:$0xff] %vm6545, %v6535
      %6569 = vst.msk [vmem:[%s138 + $0xb8] sm:$0xff] %vm6545, %v6536
      %6570 = vst.msk [vmem:[%s138 + $0xc0] sm:$0xff] %vm6545, %v6537
      %6571 = vst.msk [vmem:[%s138 + $0xc8] sm:$0xff] %vm6545, %v6538
      %6572 = vst.msk [vmem:[%s138 + $0xd0] sm:$0xff] %vm6545, %v6539
      %6573 = vst.msk [vmem:[%s138 + $0xd8] sm:$0xff] %vm6545, %v6540
      %6574 = vst.msk [vmem:[%s138 + $0xe0] sm:$0xff] %vm6545, %v6541
      %6575 = vst.msk [vmem:[%s138 + $0xe8] sm:$0xff] %vm6545, %v6542
      %6576 = vst.msk [vmem:[%s138 + $0xf0] sm:$0xff] %vm6545, %v6543
      %6577 = vst.msk [vmem:[%s138 + $0xf8] sm:$0xff] %vm6545, %v6544
      %s6578 = smul.u32 32, %s17
      %p6579 = scmp.lt.s32.totalorder %s16, 1
      %s6580 = scalar_select %p6579, %s16, 1
      %p6581 = scmp.lt.s32.totalorder %s6578, 63
      %s6582 = scalar_select %p6581, %s6578, 63
      %s6583 = smul.addr %s6580, 64
      %s6584 = sadd.s32 %s6582, %s6583
      %s6585 = smul.addr %s6584, 8
      %s6586 = scalar_lea.vmem %s1, %s6585
      // Predicated region
      $region25: #{tpu_custom_call.1} parent=23 // pred_check
        %p6587 = pneg %p70
      $region26: #{tpu_custom_call.1} parent=23 // pred_check_branch
        %6589 = sbr.rel (%p6587) target = $region28
      $region27: #{tpu_custom_call.1} parent=23 // pred_region
        %s6590 = smul.u32 32, %s17
      $region28: #{tpu_custom_call.1} parent=23 // pred_fallthru
        _
    $region24: #{tpu_custom_call.1} parent=5 // pred_fallthru
      _
    %p6591 = scmp.le.s32.totalorder 2, %s7
    // Predicated region
    $region29: #{tpu_custom_call.1} parent=5 // pred_check
      %p6592 = pneg %p6591
    $region30: #{tpu_custom_call.1} parent=5 // pred_check_branch
      %6594 = sbr.rel (%p6592) target = $region32
    $region31: #{tpu_custom_call.1} parent=5 // pred_region
      %s6595 = ssub.s32 %s7, 2
      // Predicated region
      $region33: #{tpu_custom_call.1} parent=31 // pred_check
        %p6596 = pneg %p76
      $region34: #{tpu_custom_call.1} parent=31 // pred_check_branch
        %6598 = sbr.rel (%p6596) target = $region36
      $region35: #{tpu_custom_call.1} parent=31 // pred_region
        %s6599 = smul.u32 32, %s19
        %p6600 = scmp.lt.s32.totalorder %s18, 1
        %s6601 = scalar_select %p6600, %s18, 1
        %p6602 = scmp.lt.s32.totalorder %s6599, 63
        %s6603 = scalar_select %p6602, %s6599, 63
        %s6604 = smul.addr %s6601, 64
        %s6605 = sadd.s32 %s6603, %s6604
        %s6606 = smul.addr %s6605, 8
        %s6607 = scalar_lea.vmem %s1, %s6606
      $region36: #{tpu_custom_call.1} parent=31 // pred_fallthru
        _
    $region32: #{tpu_custom_call.1} parent=5 // pred_fallthru
      _
  $region6: #{tpu_custom_call.1} parent=0 // loop_footer
    %s11 = sadd.s32 1, %s7
  $region7: #{tpu_custom_call.1} parent=0 // loop_footer_branch
    %6 = sbr.rel target = $region3
  $region8: #{tpu_custom_call.1} parent=0 // loop_exit
    _

</llo_original>
